<compile_context>
chip_gen: v5e
topology: v5e:2x2
jax: 0.10.0
libtpu: 0.0.40
codegen_flags: <defaults>
</compile_context>

<pallas_src>
import math

import jax
import jax.numpy as jnp
import numpy as np
from jax.experimental import pallas as pl
from jax.experimental.pallas import tpu as pltpu

# --- constants from the reference file --------------------------------------
D = 6                  # spatial grid side
F = 32                 # per-cell feature count
K_IN = 34              # F + 2 positional channels (k in the reference file)
K_ = 32                # q/k/v width
W = 8                  # attention head width (w in the reference file)
N_HEADS = 4
MLP1_HIDDEN = 32
MLP2_HIDDEN = 400
FINAL_DIM = 1152
LSTM_HIDDEN = 256
ACTION_SPACE = 8
DD = D * D             # 36 tokens

PARAM_NAMES = (
    "wq", "bq", "wk", "bk", "wv", "bv",
    "w_m11", "b_m11", "w_m12", "b_m12",
    "w_m21", "b_m21", "w_m22", "b_m22",
    "w_ih", "b_ih", "w_hh", "b_hh",
    "w_act", "b_act", "w_cri", "b_cri",
)


def _sigmoid(z):
    return 1.0 / (1.0 + jnp.exp(-z))


def policy_kernel(
    x_ref, hx_ref, cx_ref,
    wq_ref, bq_ref, wk_ref, bk_ref, wv_ref, bv_ref,
    w_m11_ref, b_m11_ref, w_m12_ref, b_m12_ref,
    w_m21_ref, b_m21_ref, w_m22_ref, b_m22_ref,
    w_ih_ref, b_ih_ref, w_hh_ref, b_hh_ref,
    w_act_ref, b_act_ref, w_cri_ref, b_cri_ref,
    value_ref, score_ref, hx_out_ref, cx_out_ref,
):
    f32 = jnp.float32
    bf16 = jnp.bfloat16
    x = x_ref[...]                                                     # (36, 34)

    # q / k / v projections (f32, MXU, f32 accumulate).
    q = jnp.dot(x, wq_ref[...], preferred_element_type=f32) + bq_ref[...]
    k = jnp.dot(x, wk_ref[...], preferred_element_type=f32) + bk_ref[...]
    v = jnp.dot(x, wv_ref[...], preferred_element_type=f32) + bv_ref[...]

    inv_scale = 1.0 / math.sqrt(K_)
    nt_dims = (((1,), (1,)), ((), ()))        # q @ k^T without explicit transpose

    # 4 heads of width 8; each head output goes directly through the matching
    # 8-row slice of MLP1's first weight (== cat(heads) @ W1, never materialize
    # the 8-wide concat).  softmax is over dim=1, as in the reference.
    acc = jnp.zeros((DD, MLP1_HIDDEN), f32)
    for h in range(N_HEADS):
        s = h * W
        qh = q[:, s:s + W]                                             # (36, 8)
        kh = k[:, s:s + W]
        vh = v[:, s:s + W]
        scores = jax.lax.dot_general(qh, kh, nt_dims,
                                     preferred_element_type=f32) * inv_scale
        m = jnp.max(scores, axis=-1, keepdims=True)
        p = jnp.exp(scores - m)
        p = p / jnp.sum(p, axis=-1, keepdims=True)
        head = jnp.dot(p, vh, preferred_element_type=f32)              # (36, 8)
        acc = acc + jnp.dot(head, w_m11_ref[s:s + W, :],
                            preferred_element_type=f32)                # (36, 32)

    # MLP1 = Linear -> ReLU -> Linear, then max over the 36 tokens.
    h1 = jnp.maximum(acc + b_m11_ref[...], 0.0)
    a2 = jnp.dot(h1, w_m12_ref[...], preferred_element_type=f32) + b_m12_ref[...]
    a_max = jnp.max(a2, axis=0, keepdims=True)                         # (1, 32)

    # MLP2 (bf16 weights, f32 accumulate).
    h2 = jnp.dot(a_max.astype(bf16), w_m21_ref[...],
                 preferred_element_type=f32) + b_m21_ref[...]
    h2 = jnp.maximum(h2, 0.0)
    feat = jnp.dot(h2.astype(bf16), w_m22_ref[...],
                   preferred_element_type=f32) + b_m22_ref[...]        # (1, 1152)

    # LSTMCell(1152 -> 256); PyTorch gate order i, f, g, o.
    hx = hx_ref[...]
    cx = cx_ref[...]
    gates = (jnp.dot(feat.astype(bf16), w_ih_ref[...],
                     preferred_element_type=f32) + b_ih_ref[...] +
             jnp.dot(hx.astype(bf16), w_hh_ref[...],
                     preferred_element_type=f32) + b_hh_ref[...])      # (1, 1024)
    i_g = _sigmoid(gates[:, 0 * LSTM_HIDDEN:1 * LSTM_HIDDEN])
    f_g = _sigmoid(gates[:, 1 * LSTM_HIDDEN:2 * LSTM_HIDDEN])
    g_g = jnp.tanh(gates[:, 2 * LSTM_HIDDEN:3 * LSTM_HIDDEN])
    o_g = _sigmoid(gates[:, 3 * LSTM_HIDDEN:4 * LSTM_HIDDEN])
    cx_new = f_g * cx + i_g * g_g
    hx_new = o_g * jnp.tanh(cx_new)

    # Actor / critic heads (raw scores; no softmax in the reference forward).
    score_ref[...] = (jnp.dot(hx_new, w_act_ref[...], preferred_element_type=f32)
                      + b_act_ref[...]).astype(score_ref.dtype)
    value_ref[...] = (jnp.dot(hx_new, w_cri_ref[...], preferred_element_type=f32)
                      + b_cri_ref[...]).astype(value_ref.dtype)
    hx_out_ref[...] = hx_new.astype(hx_out_ref.dtype)
    cx_out_ref[...] = cx_new.astype(cx_out_ref.dtype)


def _build_pos():
    # Faithful replica of the reference code: `id` is never incremented, so only
    # row 0 is (re)written — it ends at ((d-1)/d*2-1, (d-1)/d*2-1); rest stay 0.
    pos = np.zeros((DD, 2), np.float32)
    id_ = 0
    for i in range(D):
        for j in range(D):
            pos[id_, 0] = i / D * 2 - 1.0
            pos[id_, 1] = j / D * 2 - 1.0
    return jnp.asarray(pos)


def policy_forward(x, hx, cx, params):
    """x: (1, F, D, D) f32; hx, cx: (1, 256) f32.
    Returns (state_value, action_score, (hx_new, cx_new))."""
    # Layout plumbing (same as the PyTorch code): permute -> (d, d, f), flatten
    # tokens, append positional channels.  Pure layout/constants -> wrapper-side.
    x_tok = jnp.transpose(x[0], (1, 2, 0)).reshape(DD, F)
    x_cat = jnp.concatenate([x_tok, _build_pos()], axis=1)             # (36, 34)

    vmem = pl.BlockSpec(memory_space=pltpu.MemorySpace.VMEM)
    n_inputs = 3 + len(PARAM_NAMES)
    out_shape = (
        jax.ShapeDtypeStruct((1, 1), jnp.float32),                     # state value
        jax.ShapeDtypeStruct((1, ACTION_SPACE), jnp.float32),          # action score
        jax.ShapeDtypeStruct((1, LSTM_HIDDEN), jnp.float32),           # hx
        jax.ShapeDtypeStruct((1, LSTM_HIDDEN), jnp.float32),           # cx
    )
    value, score, hx_new, cx_new = pl.pallas_call(
        policy_kernel,
        out_shape=out_shape,
        in_specs=[vmem] * n_inputs,
        out_specs=(vmem, vmem, vmem, vmem),
        compiler_params=pltpu.CompilerParams(vmem_limit_bytes=32 * 1024 * 1024),
    )(x_cat, hx, cx, *(params[n] for n in PARAM_NAMES))
    return value, score, (hx_new, cx_new)


def init_params(key):
    """nn.Linear / nn.LSTMCell style init U(-1/sqrt(fan_in), 1/sqrt(fan_in)).
    Weights stored transposed vs PyTorch ([in, out]); big MLP2/LSTM weights in bf16."""
    keys = iter(jax.random.split(key, 32))

    def linear(fan_in, fan_out, dtype=jnp.float32):
        b = 1.0 / math.sqrt(fan_in)
        w = jax.random.uniform(next(keys), (fan_in, fan_out), jnp.float32, -b, b)
        bias = jax.random.uniform(next(keys), (1, fan_out), jnp.float32, -b, b)
        return w.astype(dtype), bias

    p = {}
    p["wq"], p["bq"] = linear(K_IN, K_)
    p["wk"], p["bk"] = linear(K_IN, K_)
    p["wv"], p["bv"] = linear(K_IN, K_)
    p["w_m11"], p["b_m11"] = linear(K_, MLP1_HIDDEN)
    p["w_m12"], p["b_m12"] = linear(MLP1_HIDDEN, K_)
    p["w_m21"], p["b_m21"] = linear(K_, MLP2_HIDDEN, jnp.bfloat16)
    p["w_m22"], p["b_m22"] = linear(MLP2_HIDDEN, FINAL_DIM, jnp.bfloat16)
    b = 1.0 / math.sqrt(LSTM_HIDDEN)
    p["w_ih"] = jax.random.uniform(next(keys), (FINAL_DIM, 4 * LSTM_HIDDEN),
                                   jnp.float32, -b, b).astype(jnp.bfloat16)
    p["b_ih"] = jax.random.uniform(next(keys), (1, 4 * LSTM_HIDDEN), jnp.float32, -b, b)
    p["w_hh"] = jax.random.uniform(next(keys), (LSTM_HIDDEN, 4 * LSTM_HIDDEN),
                                   jnp.float32, -b, b).astype(jnp.bfloat16)
    p["b_hh"] = jax.random.uniform(next(keys), (1, 4 * LSTM_HIDDEN), jnp.float32, -b, b)
    p["w_act"], p["b_act"] = linear(LSTM_HIDDEN, ACTION_SPACE)
    p["w_cri"], p["b_cri"] = linear(LSTM_HIDDEN, 1)
    return p


def reference_forward(x, hx, cx, p):
    """Pure-JAX mirror of the module forward (same bf16 casts / f32 accumulation)."""
    f32, bf16 = jnp.float32, jnp.bfloat16
    x_tok = jnp.transpose(x[0], (1, 2, 0)).reshape(DD, F)
    xc = jnp.concatenate([x_tok, _build_pos()], axis=1)
    q = xc @ p["wq"] + p["bq"]
    k = xc @ p["wk"] + p["bk"]
    v = xc @ p["wv"] + p["bv"]
    heads = []
    for h in range(N_HEADS):
        s = h * W
        scores = (q[:, s:s + W] @ k[:, s:s + W].T) / math.sqrt(K_)
        m = jnp.max(scores, axis=-1, keepdims=True)
        e = jnp.exp(scores - m)
        a = e / jnp.sum(e, axis=-1, keepdims=True)
        heads.append(a @ v[:, s:s + W])
    A = jnp.concatenate(heads, axis=1)
    A = jnp.maximum(A @ p["w_m11"] + p["b_m11"], 0.0) @ p["w_m12"] + p["b_m12"]
    A = jnp.max(A, axis=0, keepdims=True)
    h2 = jnp.maximum(jnp.dot(A.astype(bf16), p["w_m21"],
                             preferred_element_type=f32) + p["b_m21"], 0.0)
    feat = jnp.dot(h2.astype(bf16), p["w_m22"],
                   preferred_element_type=f32) + p["b_m22"]
    gates = (jnp.dot(feat.astype(bf16), p["w_ih"], preferred_element_type=f32)
             + p["b_ih"]
             + jnp.dot(hx.astype(bf16), p["w_hh"], preferred_element_type=f32)
             + p["b_hh"])
    i_g = 1.0 / (1.0 + jnp.exp(-gates[:, 0:256]))
    f_g = 1.0 / (1.0 + jnp.exp(-gates[:, 256:512]))
    g_g = jnp.tanh(gates[:, 512:768])
    o_g = 1.0 / (1.0 + jnp.exp(-gates[:, 768:1024]))
    cx_new = f_g * cx + i_g * g_g
    hx_new = o_g * jnp.tanh(cx_new)
    score = hx_new @ p["w_act"] + p["b_act"]
    value = hx_new @ p["w_cri"] + p["b_cri"]
    return value, score, hx_new, cx_new


if __name__ == "__main__":
    key = jax.random.PRNGKey(0)
    kx, kh, kc, kp = jax.random.split(key, 4)

    # Shapes implied by the module: x[0] is (f, d, d) = (32, 6, 6); LSTM state (1, 256).
    x = jax.random.normal(kx, (1, F, D, D), jnp.float32)
    hx = 0.1 * jax.random.normal(kh, (1, LSTM_HIDDEN), jnp.float32)
    cx = 0.1 * jax.random.normal(kc, (1, LSTM_HIDDEN), jnp.float32)
    params = init_params(kp)

    value, score, (hx_new, cx_new) = policy_forward(x, hx, cx, params)
    value, score, hx_new, cx_new = jax.block_until_ready((value, score, hx_new, cx_new))

    assert value.shape == (1, 1) and score.shape == (1, ACTION_SPACE)
    assert hx_new.shape == (1, LSTM_HIDDEN) and cx_new.shape == (1, LSTM_HIDDEN)

    v_ref, s_ref, h_ref, c_ref = reference_forward(x, hx, cx, params)
    for got, want in ((value, v_ref), (score, s_ref), (hx_new, h_ref), (cx_new, c_ref)):
        err = float(jnp.max(jnp.abs(got - want)))
        assert jnp.allclose(got, want, atol=2e-3, rtol=2e-3), err

    print("KERNEL_OK")
</pallas_src>

<mosaic_0001>
module attributes {stable_mosaic.version = 11 : i64} {
  func.func @policy_kernel(%arg0: memref<36x34xf32, #tpu.memory_space<vmem>>, %arg1: memref<1x256xf32, #tpu.memory_space<vmem>>, %arg2: memref<1x256xf32, #tpu.memory_space<vmem>>, %arg3: memref<34x32xf32, #tpu.memory_space<vmem>>, %arg4: memref<1x32xf32, #tpu.memory_space<vmem>>, %arg5: memref<34x32xf32, #tpu.memory_space<vmem>>, %arg6: memref<1x32xf32, #tpu.memory_space<vmem>>, %arg7: memref<34x32xf32, #tpu.memory_space<vmem>>, %arg8: memref<1x32xf32, #tpu.memory_space<vmem>>, %arg9: memref<32x32xf32, #tpu.memory_space<vmem>>, %arg10: memref<1x32xf32, #tpu.memory_space<vmem>>, %arg11: memref<32x32xf32, #tpu.memory_space<vmem>>, %arg12: memref<1x32xf32, #tpu.memory_space<vmem>>, %arg13: memref<32x400xbf16, #tpu.memory_space<vmem>>, %arg14: memref<1x400xf32, #tpu.memory_space<vmem>>, %arg15: memref<400x1152xbf16, #tpu.memory_space<vmem>>, %arg16: memref<1x1152xf32, #tpu.memory_space<vmem>>, %arg17: memref<1152x1024xbf16, #tpu.memory_space<vmem>>, %arg18: memref<1x1024xf32, #tpu.memory_space<vmem>>, %arg19: memref<256x1024xbf16, #tpu.memory_space<vmem>>, %arg20: memref<1x1024xf32, #tpu.memory_space<vmem>>, %arg21: memref<256x8xf32, #tpu.memory_space<vmem>>, %arg22: memref<1x8xf32, #tpu.memory_space<vmem>>, %arg23: memref<256x1xf32, #tpu.memory_space<vmem>>, %arg24: memref<1x1xf32, #tpu.memory_space<vmem>>, %arg25: memref<1x1xf32, #tpu.memory_space<vmem>>, %arg26: memref<1x8xf32, #tpu.memory_space<vmem>>, %arg27: memref<1x256xf32, #tpu.memory_space<vmem>>, %arg28: memref<1x256xf32, #tpu.memory_space<vmem>>) attributes {dimension_semantics = [], scalar_prefetch = 0 : i64, scratch_operands = 0 : i64, tpu.core_type = #tpu.core_type<tc>} {
    %c0 = arith.constant 0 : index
    %c0_0 = arith.constant 0 : index
    %0 = vector.load %arg0[%c0, %c0_0] : memref<36x34xf32, #tpu.memory_space<vmem>>, vector<36x34xf32>
    %c0_1 = arith.constant 0 : index
    %c0_2 = arith.constant 0 : index
    %1 = vector.load %arg3[%c0_1, %c0_2] : memref<34x32xf32, #tpu.memory_space<vmem>>, vector<34x32xf32>
    %cst = arith.constant dense<0.000000e+00> : vector<36x32xf32>
    %2 = tpu.matmul %0, %1, %cst {dimension_numbers = #tpu.dot_dimension_numbers<[1], [0], [0], [1], [0, 0, 1, 1], [], []>} : vector<36x34xf32>, vector<34x32xf32>, vector<36x32xf32> -> vector<36x32xf32>
    %c0_3 = arith.constant 0 : index
    %c0_4 = arith.constant 0 : index
    %3 = vector.load %arg4[%c0_3, %c0_4] : memref<1x32xf32, #tpu.memory_space<vmem>>, vector<1x32xf32>
    %4 = vector.broadcast %3 : vector<1x32xf32> to vector<36x32xf32>
    %5 = arith.addf %2, %4 : vector<36x32xf32>
    %c0_5 = arith.constant 0 : index
    %c0_6 = arith.constant 0 : index
    %6 = vector.load %arg5[%c0_5, %c0_6] : memref<34x32xf32, #tpu.memory_space<vmem>>, vector<34x32xf32>
    %cst_7 = arith.constant dense<0.000000e+00> : vector<36x32xf32>
    %7 = tpu.matmul %0, %6, %cst_7 {dimension_numbers = #tpu.dot_dimension_numbers<[1], [0], [0], [1], [0, 0, 1, 1], [], []>} : vector<36x34xf32>, vector<34x32xf32>, vector<36x32xf32> -> vector<36x32xf32>
    %c0_8 = arith.constant 0 : index
    %c0_9 = arith.constant 0 : index
    %8 = vector.load %arg6[%c0_8, %c0_9] : memref<1x32xf32, #tpu.memory_space<vmem>>, vector<1x32xf32>
    %9 = vector.broadcast %8 : vector<1x32xf32> to vector<36x32xf32>
    %10 = arith.addf %7, %9 : vector<36x32xf32>
    %c0_10 = arith.constant 0 : index
    %c0_11 = arith.constant 0 : index
    %11 = vector.load %arg7[%c0_10, %c0_11] : memref<34x32xf32, #tpu.memory_space<vmem>>, vector<34x32xf32>
    %cst_12 = arith.constant dense<0.000000e+00> : vector<36x32xf32>
    %12 = tpu.matmul %0, %11, %cst_12 {dimension_numbers = #tpu.dot_dimension_numbers<[1], [0], [0], [1], [0, 0, 1, 1], [], []>} : vector<36x34xf32>, vector<34x32xf32>, vector<36x32xf32> -> vector<36x32xf32>
    %c0_13 = arith.constant 0 : index
    %c0_14 = arith.constant 0 : index
    %13 = vector.load %arg8[%c0_13, %c0_14] : memref<1x32xf32, #tpu.memory_space<vmem>>, vector<1x32xf32>
    %14 = vector.broadcast %13 : vector<1x32xf32> to vector<36x32xf32>
    %15 = arith.addf %12, %14 : vector<36x32xf32>
    %cst_15 = arith.constant 0.000000e+00 : f32
    %16 = vector.broadcast %cst_15 : f32 to vector<36x32xf32>
    %17 = vector.extract_strided_slice %5 {offsets = [0, 0], sizes = [36, 8], strides = [1, 1]} : vector<36x32xf32> to vector<36x8xf32>
    %18 = vector.extract_strided_slice %10 {offsets = [0, 0], sizes = [36, 8], strides = [1, 1]} : vector<36x32xf32> to vector<36x8xf32>
    %19 = vector.extract_strided_slice %15 {offsets = [0, 0], sizes = [36, 8], strides = [1, 1]} : vector<36x32xf32> to vector<36x8xf32>
    %cst_16 = arith.constant dense<0.000000e+00> : vector<36x36xf32>
    %20 = tpu.matmul %17, %18, %cst_16 {dimension_numbers = #tpu.dot_dimension_numbers<[1], [1], [0], [0], [0, 0, 1, 0], [], []>} : vector<36x8xf32>, vector<36x8xf32>, vector<36x36xf32> -> vector<36x36xf32>
    %cst_17 = arith.constant 0.176776692 : f32
    %21 = vector.broadcast %cst_17 : f32 to vector<36x36xf32>
    %22 = arith.mulf %20, %21 : vector<36x36xf32>
    %cst_18 = arith.constant dense<0xFF800000> : vector<36xf32>
    %23 = vector.multi_reduction <maximumf>, %22, %cst_18 [1] : vector<36x36xf32> to vector<36xf32>
    %24 = vector.shape_cast %23 : vector<36xf32> to vector<36x1xf32>
    %25 = vector.broadcast %24 : vector<36x1xf32> to vector<36x36xf32>
    %26 = arith.subf %22, %25 : vector<36x36xf32>
    %27 = math.exp %26 : vector<36x36xf32>
    %cst_19 = arith.constant dense<0.000000e+00> : vector<36xf32>
    %28 = vector.multi_reduction <add>, %27, %cst_19 [1] : vector<36x36xf32> to vector<36xf32>
    %29 = vector.shape_cast %28 : vector<36xf32> to vector<36x1xf32>
    %30 = vector.broadcast %29 : vector<36x1xf32> to vector<36x36xf32>
    %31 = arith.divf %27, %30 : vector<36x36xf32>
    %cst_20 = arith.constant dense<0.000000e+00> : vector<36x8xf32>
    %32 = tpu.matmul %31, %19, %cst_20 {dimension_numbers = #tpu.dot_dimension_numbers<[1], [0], [0], [1], [0, 0, 1, 1], [], []>} : vector<36x36xf32>, vector<36x8xf32>, vector<36x8xf32> -> vector<36x8xf32>
    %c0_21 = arith.constant 0 : index
    %c0_22 = arith.constant 0 : index
    %33 = vector.load %arg9[%c0_21, %c0_22] : memref<32x32xf32, #tpu.memory_space<vmem>>, vector<8x32xf32>
    %cst_23 = arith.constant dense<0.000000e+00> : vector<36x32xf32>
    %34 = tpu.matmul %32, %33, %cst_23 {dimension_numbers = #tpu.dot_dimension_numbers<[1], [0], [0], [1], [0, 0, 1, 1], [], []>} : vector<36x8xf32>, vector<8x32xf32>, vector<36x32xf32> -> vector<36x32xf32>
    %35 = arith.addf %16, %34 : vector<36x32xf32>
    %36 = vector.extract_strided_slice %5 {offsets = [0, 8], sizes = [36, 8], strides = [1, 1]} : vector<36x32xf32> to vector<36x8xf32>
    %37 = vector.extract_strided_slice %10 {offsets = [0, 8], sizes = [36, 8], strides = [1, 1]} : vector<36x32xf32> to vector<36x8xf32>
    %38 = vector.extract_strided_slice %15 {offsets = [0, 8], sizes = [36, 8], strides = [1, 1]} : vector<36x32xf32> to vector<36x8xf32>
    %cst_24 = arith.constant dense<0.000000e+00> : vector<36x36xf32>
    %39 = tpu.matmul %36, %37, %cst_24 {dimension_numbers = #tpu.dot_dimension_numbers<[1], [1], [0], [0], [0, 0, 1, 0], [], []>} : vector<36x8xf32>, vector<36x8xf32>, vector<36x36xf32> -> vector<36x36xf32>
    %cst_25 = arith.constant 0.176776692 : f32
    %40 = vector.broadcast %cst_25 : f32 to vector<36x36xf32>
    %41 = arith.mulf %39, %40 : vector<36x36xf32>
    %cst_26 = arith.constant dense<0xFF800000> : vector<36xf32>
    %42 = vector.multi_reduction <maximumf>, %41, %cst_26 [1] : vector<36x36xf32> to vector<36xf32>
    %43 = vector.shape_cast %42 : vector<36xf32> to vector<36x1xf32>
    %44 = vector.broadcast %43 : vector<36x1xf32> to vector<36x36xf32>
    %45 = arith.subf %41, %44 : vector<36x36xf32>
    %46 = math.exp %45 : vector<36x36xf32>
    %cst_27 = arith.constant dense<0.000000e+00> : vector<36xf32>
    %47 = vector.multi_reduction <add>, %46, %cst_27 [1] : vector<36x36xf32> to vector<36xf32>
    %48 = vector.shape_cast %47 : vector<36xf32> to vector<36x1xf32>
    %49 = vector.broadcast %48 : vector<36x1xf32> to vector<36x36xf32>
    %50 = arith.divf %46, %49 : vector<36x36xf32>
    %cst_28 = arith.constant dense<0.000000e+00> : vector<36x8xf32>
    %51 = tpu.matmul %50, %38, %cst_28 {dimension_numbers = #tpu.dot_dimension_numbers<[1], [0], [0], [1], [0, 0, 1, 1], [], []>} : vector<36x36xf32>, vector<36x8xf32>, vector<36x8xf32> -> vector<36x8xf32>
    %c8 = arith.constant 8 : index
    %c0_29 = arith.constant 0 : index
    %52 = vector.load %arg9[%c8, %c0_29] : memref<32x32xf32, #tpu.memory_space<vmem>>, vector<8x32xf32>
    %cst_30 = arith.constant dense<0.000000e+00> : vector<36x32xf32>
    %53 = tpu.matmul %51, %52, %cst_30 {dimension_numbers = #tpu.dot_dimension_numbers<[1], [0], [0], [1], [0, 0, 1, 1], [], []>} : vector<36x8xf32>, vector<8x32xf32>, vector<36x32xf32> -> vector<36x32xf32>
    %54 = arith.addf %35, %53 : vector<36x32xf32>
    %55 = vector.extract_strided_slice %5 {offsets = [0, 16], sizes = [36, 8], strides = [1, 1]} : vector<36x32xf32> to vector<36x8xf32>
    %56 = vector.extract_strided_slice %10 {offsets = [0, 16], sizes = [36, 8], strides = [1, 1]} : vector<36x32xf32> to vector<36x8xf32>
    %57 = vector.extract_strided_slice %15 {offsets = [0, 16], sizes = [36, 8], strides = [1, 1]} : vector<36x32xf32> to vector<36x8xf32>
    %cst_31 = arith.constant dense<0.000000e+00> : vector<36x36xf32>
    %58 = tpu.matmul %55, %56, %cst_31 {dimension_numbers = #tpu.dot_dimension_numbers<[1], [1], [0], [0], [0, 0, 1, 0], [], []>} : vector<36x8xf32>, vector<36x8xf32>, vector<36x36xf32> -> vector<36x36xf32>
    %cst_32 = arith.constant 0.176776692 : f32
    %59 = vector.broadcast %cst_32 : f32 to vector<36x36xf32>
    %60 = arith.mulf %58, %59 : vector<36x36xf32>
    %cst_33 = arith.constant dense<0xFF800000> : vector<36xf32>
    %61 = vector.multi_reduction <maximumf>, %60, %cst_33 [1] : vector<36x36xf32> to vector<36xf32>
    %62 = vector.shape_cast %61 : vector<36xf32> to vector<36x1xf32>
    %63 = vector.broadcast %62 : vector<36x1xf32> to vector<36x36xf32>
    %64 = arith.subf %60, %63 : vector<36x36xf32>
    %65 = math.exp %64 : vector<36x36xf32>
    %cst_34 = arith.constant dense<0.000000e+00> : vector<36xf32>
    %66 = vector.multi_reduction <add>, %65, %cst_34 [1] : vector<36x36xf32> to vector<36xf32>
    %67 = vector.shape_cast %66 : vector<36xf32> to vector<36x1xf32>
    %68 = vector.broadcast %67 : vector<36x1xf32> to vector<36x36xf32>
    %69 = arith.divf %65, %68 : vector<36x36xf32>
    %cst_35 = arith.constant dense<0.000000e+00> : vector<36x8xf32>
    %70 = tpu.matmul %69, %57, %cst_35 {dimension_numbers = #tpu.dot_dimension_numbers<[1], [0], [0], [1], [0, 0, 1, 1], [], []>} : vector<36x36xf32>, vector<36x8xf32>, vector<36x8xf32> -> vector<36x8xf32>
    %c16 = arith.constant 16 : index
    %c0_36 = arith.constant 0 : index
    %71 = vector.load %arg9[%c16, %c0_36] : memref<32x32xf32, #tpu.memory_space<vmem>>, vector<8x32xf32>
    %cst_37 = arith.constant dense<0.000000e+00> : vector<36x32xf32>
    %72 = tpu.matmul %70, %71, %cst_37 {dimension_numbers = #tpu.dot_dimension_numbers<[1], [0], [0], [1], [0, 0, 1, 1], [], []>} : vector<36x8xf32>, vector<8x32xf32>, vector<36x32xf32> -> vector<36x32xf32>
    %73 = arith.addf %54, %72 : vector<36x32xf32>
    %74 = vector.extract_strided_slice %5 {offsets = [0, 24], sizes = [36, 8], strides = [1, 1]} : vector<36x32xf32> to vector<36x8xf32>
    %75 = vector.extract_strided_slice %10 {offsets = [0, 24], sizes = [36, 8], strides = [1, 1]} : vector<36x32xf32> to vector<36x8xf32>
    %76 = vector.extract_strided_slice %15 {offsets = [0, 24], sizes = [36, 8], strides = [1, 1]} : vector<36x32xf32> to vector<36x8xf32>
    %cst_38 = arith.constant dense<0.000000e+00> : vector<36x36xf32>
    %77 = tpu.matmul %74, %75, %cst_38 {dimension_numbers = #tpu.dot_dimension_numbers<[1], [1], [0], [0], [0, 0, 1, 0], [], []>} : vector<36x8xf32>, vector<36x8xf32>, vector<36x36xf32> -> vector<36x36xf32>
    %cst_39 = arith.constant 0.176776692 : f32
    %78 = vector.broadcast %cst_39 : f32 to vector<36x36xf32>
    %79 = arith.mulf %77, %78 : vector<36x36xf32>
    %cst_40 = arith.constant dense<0xFF800000> : vector<36xf32>
    %80 = vector.multi_reduction <maximumf>, %79, %cst_40 [1] : vector<36x36xf32> to vector<36xf32>
    %81 = vector.shape_cast %80 : vector<36xf32> to vector<36x1xf32>
    %82 = vector.broadcast %81 : vector<36x1xf32> to vector<36x36xf32>
    %83 = arith.subf %79, %82 : vector<36x36xf32>
    %84 = math.exp %83 : vector<36x36xf32>
    %cst_41 = arith.constant dense<0.000000e+00> : vector<36xf32>
    %85 = vector.multi_reduction <add>, %84, %cst_41 [1] : vector<36x36xf32> to vector<36xf32>
    %86 = vector.shape_cast %85 : vector<36xf32> to vector<36x1xf32>
    %87 = vector.broadcast %86 : vector<36x1xf32> to vector<36x36xf32>
    %88 = arith.divf %84, %87 : vector<36x36xf32>
    %cst_42 = arith.constant dense<0.000000e+00> : vector<36x8xf32>
    %89 = tpu.matmul %88, %76, %cst_42 {dimension_numbers = #tpu.dot_dimension_numbers<[1], [0], [0], [1], [0, 0, 1, 1], [], []>} : vector<36x36xf32>, vector<36x8xf32>, vector<36x8xf32> -> vector<36x8xf32>
    %c24 = arith.constant 24 : index
    %c0_43 = arith.constant 0 : index
    %90 = vector.load %arg9[%c24, %c0_43] : memref<32x32xf32, #tpu.memory_space<vmem>>, vector<8x32xf32>
    %cst_44 = arith.constant dense<0.000000e+00> : vector<36x32xf32>
    %91 = tpu.matmul %89, %90, %cst_44 {dimension_numbers = #tpu.dot_dimension_numbers<[1], [0], [0], [1], [0, 0, 1, 1], [], []>} : vector<36x8xf32>, vector<8x32xf32>, vector<36x32xf32> -> vector<36x32xf32>
    %92 = arith.addf %73, %91 : vector<36x32xf32>
    %c0_45 = arith.constant 0 : index
    %c0_46 = arith.constant 0 : index
    %93 = vector.load %arg10[%c0_45, %c0_46] : memref<1x32xf32, #tpu.memory_space<vmem>>, vector<1x32xf32>
    %94 = vector.broadcast %93 : vector<1x32xf32> to vector<36x32xf32>
    %95 = arith.addf %92, %94 : vector<36x32xf32>
    %cst_47 = arith.constant 0.000000e+00 : f32
    %96 = vector.broadcast %cst_47 : f32 to vector<36x32xf32>
    %97 = arith.maximumf %95, %96 : vector<36x32xf32>
    %c0_48 = arith.constant 0 : index
    %c0_49 = arith.constant 0 : index
    %98 = vector.load %arg11[%c0_48, %c0_49] : memref<32x32xf32, #tpu.memory_space<vmem>>, vector<32x32xf32>
    %cst_50 = arith.constant dense<0.000000e+00> : vector<36x32xf32>
    %99 = tpu.matmul %97, %98, %cst_50 {dimension_numbers = #tpu.dot_dimension_numbers<[1], [0], [0], [1], [0, 0, 1, 1], [], []>} : vector<36x32xf32>, vector<32x32xf32>, vector<36x32xf32> -> vector<36x32xf32>
    %c0_51 = arith.constant 0 : index
    %c0_52 = arith.constant 0 : index
    %100 = vector.load %arg12[%c0_51, %c0_52] : memref<1x32xf32, #tpu.memory_space<vmem>>, vector<1x32xf32>
    %101 = vector.broadcast %100 : vector<1x32xf32> to vector<36x32xf32>
    %102 = arith.addf %99, %101 : vector<36x32xf32>
    %cst_53 = arith.constant dense<0xFF800000> : vector<32xf32>
    %103 = vector.multi_reduction <maximumf>, %102, %cst_53 [0] : vector<36x32xf32> to vector<32xf32>
    %104 = vector.shape_cast %103 : vector<32xf32> to vector<1x32xf32>
    %105 = arith.truncf %104 : vector<1x32xf32> to vector<1x32xbf16>
    %c0_54 = arith.constant 0 : index
    %c0_55 = arith.constant 0 : index
    %106 = vector.load %arg13[%c0_54, %c0_55] : memref<32x400xbf16, #tpu.memory_space<vmem>>, vector<32x400xbf16>
    %cst_56 = arith.constant dense<0.000000e+00> : vector<1x400xf32>
    %107 = tpu.matmul %105, %106, %cst_56 {dimension_numbers = #tpu.dot_dimension_numbers<[1], [0], [0], [1], [0, 0, 1, 1], [], []>} : vector<1x32xbf16>, vector<32x400xbf16>, vector<1x400xf32> -> vector<1x400xf32>
    %c0_57 = arith.constant 0 : index
    %c0_58 = arith.constant 0 : index
    %108 = vector.load %arg14[%c0_57, %c0_58] : memref<1x400xf32, #tpu.memory_space<vmem>>, vector<1x400xf32>
    %109 = arith.addf %107, %108 : vector<1x400xf32>
    %cst_59 = arith.constant 0.000000e+00 : f32
    %110 = vector.broadcast %cst_59 : f32 to vector<1x400xf32>
    %111 = arith.maximumf %109, %110 : vector<1x400xf32>
    %112 = arith.truncf %111 : vector<1x400xf32> to vector<1x400xbf16>
    %c0_60 = arith.constant 0 : index
    %c0_61 = arith.constant 0 : index
    %113 = vector.load %arg15[%c0_60, %c0_61] : memref<400x1152xbf16, #tpu.memory_space<vmem>>, vector<400x1152xbf16>
    %cst_62 = arith.constant dense<0.000000e+00> : vector<1x1152xf32>
    %114 = tpu.matmul %112, %113, %cst_62 {dimension_numbers = #tpu.dot_dimension_numbers<[1], [0], [0], [1], [0, 0, 1, 1], [], []>} : vector<1x400xbf16>, vector<400x1152xbf16>, vector<1x1152xf32> -> vector<1x1152xf32>
    %c0_63 = arith.constant 0 : index
    %c0_64 = arith.constant 0 : index
    %115 = vector.load %arg16[%c0_63, %c0_64] : memref<1x1152xf32, #tpu.memory_space<vmem>>, vector<1x1152xf32>
    %116 = arith.addf %114, %115 : vector<1x1152xf32>
    %c0_65 = arith.constant 0 : index
    %c0_66 = arith.constant 0 : index
    %117 = vector.load %arg1[%c0_65, %c0_66] : memref<1x256xf32, #tpu.memory_space<vmem>>, vector<1x256xf32>
    %c0_67 = arith.constant 0 : index
    %c0_68 = arith.constant 0 : index
    %118 = vector.load %arg2[%c0_67, %c0_68] : memref<1x256xf32, #tpu.memory_space<vmem>>, vector<1x256xf32>
    %119 = arith.truncf %116 : vector<1x1152xf32> to vector<1x1152xbf16>
    %c0_69 = arith.constant 0 : index
    %c0_70 = arith.constant 0 : index
    %120 = vector.load %arg17[%c0_69, %c0_70] : memref<1152x1024xbf16, #tpu.memory_space<vmem>>, vector<1152x1024xbf16>
    %cst_71 = arith.constant dense<0.000000e+00> : vector<1x1024xf32>
    %121 = tpu.matmul %119, %120, %cst_71 {dimension_numbers = #tpu.dot_dimension_numbers<[1], [0], [0], [1], [0, 0, 1, 1], [], []>} : vector<1x1152xbf16>, vector<1152x1024xbf16>, vector<1x1024xf32> -> vector<1x1024xf32>
    %c0_72 = arith.constant 0 : index
    %c0_73 = arith.constant 0 : index
    %122 = vector.load %arg18[%c0_72, %c0_73] : memref<1x1024xf32, #tpu.memory_space<vmem>>, vector<1x1024xf32>
    %123 = arith.addf %121, %122 : vector<1x1024xf32>
    %124 = arith.truncf %117 : vector<1x256xf32> to vector<1x256xbf16>
    %c0_74 = arith.constant 0 : index
    %c0_75 = arith.constant 0 : index
    %125 = vector.load %arg19[%c0_74, %c0_75] : memref<256x1024xbf16, #tpu.memory_space<vmem>>, vector<256x1024xbf16>
    %cst_76 = arith.constant dense<0.000000e+00> : vector<1x1024xf32>
    %126 = tpu.matmul %124, %125, %cst_76 {dimension_numbers = #tpu.dot_dimension_numbers<[1], [0], [0], [1], [0, 0, 1, 1], [], []>} : vector<1x256xbf16>, vector<256x1024xbf16>, vector<1x1024xf32> -> vector<1x1024xf32>
    %127 = arith.addf %123, %126 : vector<1x1024xf32>
    %c0_77 = arith.constant 0 : index
    %c0_78 = arith.constant 0 : index
    %128 = vector.load %arg20[%c0_77, %c0_78] : memref<1x1024xf32, #tpu.memory_space<vmem>>, vector<1x1024xf32>
    %129 = arith.addf %127, %128 : vector<1x1024xf32>
    %130 = vector.extract_strided_slice %129 {offsets = [0, 0], sizes = [1, 256], strides = [1, 1]} : vector<1x1024xf32> to vector<1x256xf32>
    %cst_79 = arith.constant 0.000000e+00 : f32
    %131 = vector.broadcast %cst_79 : f32 to vector<1x256xf32>
    %132 = arith.subf %131, %130 : vector<1x256xf32>
    %133 = math.exp %132 : vector<1x256xf32>
    %cst_80 = arith.constant 1.000000e+00 : f32
    %134 = vector.broadcast %cst_80 : f32 to vector<1x256xf32>
    %135 = arith.addf %134, %133 : vector<1x256xf32>
    %cst_81 = arith.constant 1.000000e+00 : f32
    %136 = vector.broadcast %cst_81 : f32 to vector<1x256xf32>
    %137 = arith.divf %136, %135 : vector<1x256xf32>
    %138 = vector.extract_strided_slice %129 {offsets = [0, 256], sizes = [1, 256], strides = [1, 1]} : vector<1x1024xf32> to vector<1x256xf32>
    %cst_82 = arith.constant 0.000000e+00 : f32
    %139 = vector.broadcast %cst_82 : f32 to vector<1x256xf32>
    %140 = arith.subf %139, %138 : vector<1x256xf32>
    %141 = math.exp %140 : vector<1x256xf32>
    %cst_83 = arith.constant 1.000000e+00 : f32
    %142 = vector.broadcast %cst_83 : f32 to vector<1x256xf32>
    %143 = arith.addf %142, %141 : vector<1x256xf32>
    %cst_84 = arith.constant 1.000000e+00 : f32
    %144 = vector.broadcast %cst_84 : f32 to vector<1x256xf32>
    %145 = arith.divf %144, %143 : vector<1x256xf32>
    %146 = vector.extract_strided_slice %129 {offsets = [0, 512], sizes = [1, 256], strides = [1, 1]} : vector<1x1024xf32> to vector<1x256xf32>
    %147 = math.tanh %146 : vector<1x256xf32>
    %148 = vector.extract_strided_slice %129 {offsets = [0, 768], sizes = [1, 256], strides = [1, 1]} : vector<1x1024xf32> to vector<1x256xf32>
    %cst_85 = arith.constant 0.000000e+00 : f32
    %149 = vector.broadcast %cst_85 : f32 to vector<1x256xf32>
    %150 = arith.subf %149, %148 : vector<1x256xf32>
    %151 = math.exp %150 : vector<1x256xf32>
    %cst_86 = arith.constant 1.000000e+00 : f32
    %152 = vector.broadcast %cst_86 : f32 to vector<1x256xf32>
    %153 = arith.addf %152, %151 : vector<1x256xf32>
    %cst_87 = arith.constant 1.000000e+00 : f32
    %154 = vector.broadcast %cst_87 : f32 to vector<1x256xf32>
    %155 = arith.divf %154, %153 : vector<1x256xf32>
    %156 = arith.mulf %145, %118 : vector<1x256xf32>
    %157 = arith.mulf %137, %147 : vector<1x256xf32>
    %158 = arith.addf %156, %157 : vector<1x256xf32>
    %159 = math.tanh %158 : vector<1x256xf32>
    %160 = arith.mulf %155, %159 : vector<1x256xf32>
    %c0_88 = arith.constant 0 : index
    %c0_89 = arith.constant 0 : index
    %161 = vector.load %arg21[%c0_88, %c0_89] : memref<256x8xf32, #tpu.memory_space<vmem>>, vector<256x8xf32>
    %cst_90 = arith.constant dense<0.000000e+00> : vector<1x8xf32>
    %162 = tpu.matmul %160, %161, %cst_90 {dimension_numbers = #tpu.dot_dimension_numbers<[1], [0], [0], [1], [0, 0, 1, 1], [], []>} : vector<1x256xf32>, vector<256x8xf32>, vector<1x8xf32> -> vector<1x8xf32>
    %c0_91 = arith.constant 0 : index
    %c0_92 = arith.constant 0 : index
    %163 = vector.load %arg22[%c0_91, %c0_92] : memref<1x8xf32, #tpu.memory_space<vmem>>, vector<1x8xf32>
    %164 = arith.addf %162, %163 : vector<1x8xf32>
    %c0_93 = arith.constant 0 : index
    %c0_94 = arith.constant 0 : index
    %165 = vector.load %arg26[%c0_93, %c0_94] : memref<1x8xf32, #tpu.memory_space<vmem>>, vector<1x8xf32>
    tpu.vector_store %arg26[%c0_93, %c0_94], %164 {strides = array<i32>} : memref<1x8xf32, #tpu.memory_space<vmem>>, vector<1x8xf32>,
    %c0_95 = arith.constant 0 : index
    %c0_96 = arith.constant 0 : index
    %166 = vector.load %arg23[%c0_95, %c0_96] : memref<256x1xf32, #tpu.memory_space<vmem>>, vector<256x1xf32>
    %cst_97 = arith.constant dense<0.000000e+00> : vector<1x1xf32>
    %167 = tpu.matmul %160, %166, %cst_97 {dimension_numbers = #tpu.dot_dimension_numbers<[1], [0], [0], [1], [0, 0, 1, 1], [], []>} : vector<1x256xf32>, vector<256x1xf32>, vector<1x1xf32> -> vector<1x1xf32>
    %c0_98 = arith.constant 0 : index
    %c0_99 = arith.constant 0 : index
    %168 = vector.load %arg24[%c0_98, %c0_99] : memref<1x1xf32, #tpu.memory_space<vmem>>, vector<1x1xf32>
    %169 = arith.addf %167, %168 : vector<1x1xf32>
    %c0_100 = arith.constant 0 : index
    %c0_101 = arith.constant 0 : index
    %170 = vector.load %arg25[%c0_100, %c0_101] : memref<1x1xf32, #tpu.memory_space<vmem>>, vector<1x1xf32>
    tpu.vector_store %arg25[%c0_100, %c0_101], %169 {strides = array<i32>} : memref<1x1xf32, #tpu.memory_space<vmem>>, vector<1x1xf32>,
    %c0_102 = arith.constant 0 : index
    %c0_103 = arith.constant 0 : index
    %171 = vector.load %arg27[%c0_102, %c0_103] : memref<1x256xf32, #tpu.memory_space<vmem>>, vector<1x256xf32>
    tpu.vector_store %arg27[%c0_102, %c0_103], %160 {strides = array<i32>} : memref<1x256xf32, #tpu.memory_space<vmem>>, vector<1x256xf32>,
    %c0_104 = arith.constant 0 : index
    %c0_105 = arith.constant 0 : index
    %172 = vector.load %arg28[%c0_104, %c0_105] : memref<1x256xf32, #tpu.memory_space<vmem>>, vector<1x256xf32>
    tpu.vector_store %arg28[%c0_104, %c0_105], %158 {strides = array<i32>} : memref<1x256xf32, #tpu.memory_space<vmem>>, vector<1x256xf32>,
    return
  }
}

</mosaic_0001>

<llo_original>
// kernel: tpu_custom_call.1
$region0: #{tpu_custom_call.1}
  #allocation0 [shape = 'u32[]', space=smem, size = 0x4, offset = 0x4, fixed_abs, tag = 'smem constant byte address 0x4 - core index']
  #allocation1 [shape = 'u32[72,128]{1,0:T(1,128)}', space=vmem, size = 0x9000, scoped, tag = 'internal scratch']
  #allocation2 [shape = 'f32[1,1]{1,0:T(1,128)S(1)}', space=vmem, size = 0x200, scoped, tag = 'scoped memory for tpu_custom_call.1']
  %s0 = inlined_call_operand.hbm [shape: f32[36,34], index: 0, kind: input, shape index: {}]
  %s1 = inlined_call_operand.hbm [shape: f32[1,256], index: 1, kind: input, shape index: {}]
  %s2 = inlined_call_operand.hbm [shape: f32[1,256], index: 2, kind: input, shape index: {}]
  %s3 = inlined_call_operand.vmem [shape: f32[34,32], index: 3, kind: input, shape index: {}]
  %s4 = inlined_call_operand.hbm [shape: f32[1,32], index: 4, kind: input, shape index: {}]
  %s5 = inlined_call_operand.vmem [shape: f32[34,32], index: 5, kind: input, shape index: {}]
  %s6 = inlined_call_operand.hbm [shape: f32[1,32], index: 6, kind: input, shape index: {}]
  %s7 = inlined_call_operand.vmem [shape: f32[34,32], index: 7, kind: input, shape index: {}]
  %s8 = inlined_call_operand.hbm [shape: f32[1,32], index: 8, kind: input, shape index: {}]
  %s9 = inlined_call_operand.hbm [shape: f32[32,32], index: 9, kind: input, shape index: {}]
  %s10 = inlined_call_operand.hbm [shape: f32[1,32], index: 10, kind: input, shape index: {}]
  %s11 = inlined_call_operand.hbm [shape: f32[32,32], index: 11, kind: input, shape index: {}]
  %s12 = inlined_call_operand.hbm [shape: f32[1,32], index: 12, kind: input, shape index: {}]
  %s13 = inlined_call_operand.hbm [shape: bf16[32,400], index: 13, kind: input, shape index: {}]
  %s14 = inlined_call_operand.hbm [shape: f32[1,400], index: 14, kind: input, shape index: {}]
  %s15 = inlined_call_operand.hbm [shape: bf16[400,1152], index: 15, kind: input, shape index: {}]
  %s16 = inlined_call_operand.hbm [shape: f32[1,1152], index: 16, kind: input, shape index: {}]
  %s17 = inlined_call_operand.hbm [shape: bf16[1152,1024], index: 17, kind: input, shape index: {}]
  %s18 = inlined_call_operand.hbm [shape: f32[1,1024], index: 18, kind: input, shape index: {}]
  %s19 = inlined_call_operand.hbm [shape: bf16[256,1024], index: 19, kind: input, shape index: {}]
  %s20 = inlined_call_operand.hbm [shape: f32[1,1024], index: 20, kind: input, shape index: {}]
  %s21 = inlined_call_operand.vmem [shape: f32[256,8], index: 21, kind: input, shape index: {}]
  %s22 = inlined_call_operand.hbm [shape: f32[1,8], index: 22, kind: input, shape index: {}]
  %s23 = inlined_call_operand.vmem [shape: f32[256,1], index: 23, kind: input, shape index: {}]
  %s24 = inlined_call_operand.<no memory space> [shape: f32[1,1], index: 24, kind: input, shape index: {}]
  %s25 = inlined_call_operand.hbm [shape: f32[1,1], index: 25, kind: output, shape index: {0}]
  %s26 = inlined_call_operand.hbm [shape: f32[1,8], index: 26, kind: output, shape index: {1}]
  %s27 = inlined_call_operand.hbm [shape: f32[1,256], index: 27, kind: output, shape index: {2}]
  %s28 = inlined_call_operand.hbm [shape: f32[1,256], index: 28, kind: output, shape index: {3}]
  %29 = xla_tuple %s25, %s26, %s27, %s28
  %s30 = sld [smem:[#allocation0]]
  $region210: #{tpu_custom_call.1} parent=0
    _
  %s32 = ssub.s32 1, %s30
  %s33 = scalar_select 0, %s32, %s30
  %v34 = vstv %s24
  %35 = vst [vmem:[#allocation2] sm:$0x1] %v34
  $region1: #{tpu_custom_call.1} parent=0
    #allocation3 [shape = 'u8[20480]{0}', space=vmem, size = 0x5000, scoped, tag = 'input window, operand 0, single buffered']
    #allocation4 [shape = 's32[1]{0}', space=sflag, size = 0x4, scoped, tag = 'scoped memory for tpu_custom_call.1']
    #allocation5 [shape = 's32[1]{0}', space=sflag, size = 0x4, scoped, tag = 'scoped memory for tpu_custom_call.1']
    #allocation6 [shape = 'u8[1024]{0}', space=vmem, size = 0x400, scoped, tag = 'input window, operand 1, single buffered']
    #allocation7 [shape = 's32[1]{0}', space=sflag, size = 0x4, scoped, tag = 'scoped memory for tpu_custom_call.1']
    #allocation8 [shape = 'u8[1024]{0}', space=vmem, size = 0x400, scoped, tag = 'input window, operand 2, single buffered']
    #allocation9 [shape = 'u8[512]{0}', space=vmem, size = 0x400, scoped, tag = 'input window, operand 4, single buffered']
    #allocation10 [shape = 's32[1]{0}', space=sflag, size = 0x4, scoped, tag = 'scoped memory for tpu_custom_call.1']
    #allocation11 [shape = 'u8[512]{0}', space=vmem, size = 0x400, scoped, tag = 'input window, operand 6, single buffered']
    #allocation12 [shape = 'u8[512]{0}', space=vmem, size = 0x400, scoped, tag = 'input window, operand 8, single buffered']
    #allocation13 [shape = 's32[1]{0}', space=sflag, size = 0x4, scoped, tag = 'scoped memory for tpu_custom_call.1']
    #allocation14 [shape = 'u8[16384]{0}', space=vmem, size = 0x4000, scoped, tag = 'input window, operand 9, single buffered']
    #allocation15 [shape = 'u8[512]{0}', space=vmem, size = 0x400, scoped, tag = 'input window, operand 10, single buffered']
    #allocation16 [shape = 's32[1]{0}', space=sflag, size = 0x4, scoped, tag = 'scoped memory for tpu_custom_call.1']
    #allocation17 [shape = 'u8[16384]{0}', space=vmem, size = 0x4000, scoped, tag = 'input window, operand 11, single buffered']
    #allocation18 [shape = 'u8[512]{0}', space=vmem, size = 0x400, scoped, tag = 'input window, operand 12, single buffered']
    #allocation19 [shape = 's32[1]{0}', space=sflag, size = 0x4, scoped, tag = 'scoped memory for tpu_custom_call.1']
    #allocation20 [shape = 'u8[32768]{0}', space=vmem, size = 0x8000, scoped, tag = 'input window, operand 13, single buffered']
    #allocation21 [shape = 'u8[2048]{0}', space=vmem, size = 0x800, scoped, tag = 'input window, operand 14, single buffered']
    #allocation22 [shape = 's32[1]{0}', space=sflag, size = 0x4, scoped, tag = 'scoped memory for tpu_custom_call.1']
    #allocation23 [shape = 'u8[921600]{0}', space=vmem, size = 0xe1000, scoped, tag = 'input window, operand 15, single buffered']
    #allocation24 [shape = 'u8[4608]{0}', space=vmem, size = 0x1400, scoped, tag = 'input window, operand 16, single buffered']
    #allocation25 [shape = 's32[1]{0}', space=sflag, size = 0x4, scoped, tag = 'scoped memory for tpu_custom_call.1']
    #allocation26 [shape = 'u8[2359296]{0}', space=vmem, size = 0x240000, scoped, tag = 'input window, operand 17, single buffered']
    #allocation27 [shape = 'u8[4096]{0}', space=vmem, size = 0x1000, scoped, tag = 'input window, operand 18, single buffered']
    #allocation28 [shape = 's32[1]{0}', space=sflag, size = 0x4, scoped, tag = 'scoped memory for tpu_custom_call.1']
    #allocation29 [shape = 'u8[524288]{0}', space=vmem, size = 0x80000, scoped, tag = 'input window, operand 19, single buffered']
    #allocation30 [shape = 'u8[4096]{0}', space=vmem, size = 0x1000, scoped, tag = 'input window, operand 20, single buffered']
    #allocation31 [shape = 's32[1]{0}', space=sflag, size = 0x4, scoped, tag = 'scoped memory for tpu_custom_call.1']
    #allocation32 [shape = 'u8[512]{0}', space=vmem, size = 0x400, scoped, tag = 'input window, operand 22, single buffered']
    #allocation33 [shape = 'u8[512]{0}', space=vmem, size = 0x400, scoped, tag = 'output window, operand 0, single buffered']
    #allocation34 [shape = 'u8[512]{0}', space=vmem, size = 0x400, scoped, tag = 'output window, operand 1, single buffered']
    #allocation35 [shape = 's32[1]{0}', space=sflag, size = 0x4, scoped, tag = 'scoped memory for tpu_custom_call.1']
    #allocation36 [shape = 'u8[1024]{0}', space=vmem, size = 0x400, scoped, tag = 'output window, operand 2, single buffered']
    #allocation37 [shape = 'u8[1024]{0}', space=vmem, size = 0x400, scoped, tag = 'output window, operand 3, single buffered']
    #allocation38 [shape = 's32[1]{0}', space=sflag, size = 0x4, scoped, tag = 'scoped memory for tpu_custom_call.1']
    %36 = vsyncpa [#allocation4], 0
    %37 = vsyncpa [#allocation7], 0
    %38 = vsyncpa [#allocation10], 0
    %39 = vsyncpa [#allocation13], 0
    %40 = vsyncpa [#allocation16], 0
    %41 = vsyncpa [#allocation19], 0
    %42 = vsyncpa [#allocation22], 0
    %43 = vsyncpa [#allocation25], 0
    %44 = vsyncpa [#allocation28], 0
    %45 = vsyncpa [#allocation31], 0
    %46 = vsyncpa [#allocation5], 0
    %47 = vsyncpa [#allocation35], 0
    %48 = vsyncpa [#allocation38], 0
    // Predicated region
    $region2: #{tpu_custom_call.1} parent=1 // pred_check
      _
    $region3: #{tpu_custom_call.1} parent=1 // pred_check_branch
      %50 = sbr.rel (0) target = $region5
    $region4: #{tpu_custom_call.1} parent=1 // pred_region
      %52 = vsyncadd [#allocation4], 0
      %s53 = sshll.u32 %s0, 4
      %s54 = int_to_ptr.hbm [resolvable:$true] %s53
      %s55 = sshll.u32 [#allocation3], 4
      %s56 = int_to_ptr.vmem [resolvable:$true] %s55
      %61 = dma.hbm_to_vmem [thread:$0]  %s54, 640, %s56, [#allocation4], 128, 128, 8
    $region5: #{tpu_custom_call.1} parent=1 // pred_fallthru
      _
    // Predicated region
    $region6: #{tpu_custom_call.1} parent=1 // pred_check
      _
    $region7: #{tpu_custom_call.1} parent=1 // pred_check_branch
      %63 = sbr.rel (0) target = $region9
    $region8: #{tpu_custom_call.1} parent=1 // pred_region
      %65 = vsyncadd [#allocation7], 0
      %s67 = sshll.u32 %s1, 4
      %s68 = int_to_ptr.hbm [resolvable:$true] %s67
      %s69 = sshll.u32 [#allocation6], 4
      %s70 = int_to_ptr.vmem [resolvable:$true] %s69
      %72 = dma.hbm_to_vmem [thread:$0]  %s68, 32, %s70, [#allocation7]
    $region9: #{tpu_custom_call.1} parent=1 // pred_fallthru
      _
    // Predicated region
    $region10: #{tpu_custom_call.1} parent=1 // pred_check
      _
    $region11: #{tpu_custom_call.1} parent=1 // pred_check_branch
      %74 = sbr.rel (0) target = $region13
    $region12: #{tpu_custom_call.1} parent=1 // pred_region
      %76 = vsyncadd [#allocation7], 0
      %s78 = sshll.u32 %s2, 4
      %s79 = int_to_ptr.hbm [resolvable:$true] %s78
      %s80 = sshll.u32 [#allocation8], 4
      %s81 = int_to_ptr.vmem [resolvable:$true] %s80
      %83 = dma.hbm_to_vmem [thread:$0]  %s79, 32, %s81, [#allocation7]
    $region13: #{tpu_custom_call.1} parent=1 // pred_fallthru
      _
    // Predicated region
    $region14: #{tpu_custom_call.1} parent=1 // pred_check
      _
    $region15: #{tpu_custom_call.1} parent=1 // pred_check_branch
      %85 = sbr.rel (0) target = $region17
    $region16: #{tpu_custom_call.1} parent=1 // pred_region
      _
    $region17: #{tpu_custom_call.1} parent=1 // pred_fallthru
      _
    // Predicated region
    $region18: #{tpu_custom_call.1} parent=1 // pred_check
      _
    $region19: #{tpu_custom_call.1} parent=1 // pred_check_branch
      %87 = sbr.rel (0) target = $region21
    $region20: #{tpu_custom_call.1} parent=1 // pred_region
      %89 = vsyncadd [#allocation10], 0
      %s91 = sshll.u32 %s4, 4
      %s92 = int_to_ptr.hbm [resolvable:$true] %s91
      %s93 = sshll.u32 [#allocation9], 4
      %s94 = int_to_ptr.vmem [resolvable:$true] %s93
      %96 = dma.hbm_to_vmem [thread:$0]  %s92, 16, %s94, [#allocation10]
    $region21: #{tpu_custom_call.1} parent=1 // pred_fallthru
      _
    // Predicated region
    $region22: #{tpu_custom_call.1} parent=1 // pred_check
      _
    $region23: #{tpu_custom_call.1} parent=1 // pred_check_branch
      %98 = sbr.rel (0) target = $region25
    $region24: #{tpu_custom_call.1} parent=1 // pred_region
      _
    $region25: #{tpu_custom_call.1} parent=1 // pred_fallthru
      _
    // Predicated region
    $region26: #{tpu_custom_call.1} parent=1 // pred_check
      _
    $region27: #{tpu_custom_call.1} parent=1 // pred_check_branch
      %100 = sbr.rel (0) target = $region29
    $region28: #{tpu_custom_call.1} parent=1 // pred_region
      %102 = vsyncadd [#allocation10], 0
      %s104 = sshll.u32 %s6, 4
      %s105 = int_to_ptr.hbm [resolvable:$true] %s104
      %s106 = sshll.u32 [#allocation11], 4
      %s107 = int_to_ptr.vmem [resolvable:$true] %s106
      %109 = dma.hbm_to_vmem [thread:$0]  %s105, 16, %s107, [#allocation10]
    $region29: #{tpu_custom_call.1} parent=1 // pred_fallthru
      _
    // Predicated region
    $region30: #{tpu_custom_call.1} parent=1 // pred_check
      _
    $region31: #{tpu_custom_call.1} parent=1 // pred_check_branch
      %111 = sbr.rel (0) target = $region33
    $region32: #{tpu_custom_call.1} parent=1 // pred_region
      _
    $region33: #{tpu_custom_call.1} parent=1 // pred_fallthru
      _
    // Predicated region
    $region34: #{tpu_custom_call.1} parent=1 // pred_check
      _
    $region35: #{tpu_custom_call.1} parent=1 // pred_check_branch
      %113 = sbr.rel (0) target = $region37
    $region36: #{tpu_custom_call.1} parent=1 // pred_region
      %115 = vsyncadd [#allocation13], 0
      %s117 = sshll.u32 %s8, 4
      %s118 = int_to_ptr.hbm [resolvable:$true] %s117
      %s119 = sshll.u32 [#allocation12], 4
      %s120 = int_to_ptr.vmem [resolvable:$true] %s119
      %122 = dma.hbm_to_vmem [thread:$0]  %s118, 16, %s120, [#allocation13]
    $region37: #{tpu_custom_call.1} parent=1 // pred_fallthru
      _
    // Predicated region
    $region38: #{tpu_custom_call.1} parent=1 // pred_check
      _
    $region39: #{tpu_custom_call.1} parent=1 // pred_check_branch
      %124 = sbr.rel (0) target = $region41
    $region40: #{tpu_custom_call.1} parent=1 // pred_region
      %126 = vsyncadd [#allocation13], 0
      %s127 = sshll.u32 %s9, 4
      %s128 = int_to_ptr.hbm [resolvable:$true] %s127
      %s129 = sshll.u32 [#allocation14], 4
      %s130 = int_to_ptr.vmem [resolvable:$true] %s129
      %135 = dma.hbm_to_vmem [thread:$0]  %s128, 512, %s130, [#allocation13], 128, 128, 8
    $region41: #{tpu_custom_call.1} parent=1 // pred_fallthru
      _
    // Predicated region
    $region42: #{tpu_custom_call.1} parent=1 // pred_check
      _
    $region43: #{tpu_custom_call.1} parent=1 // pred_check_branch
      %137 = sbr.rel (0) target = $region45
    $region44: #{tpu_custom_call.1} parent=1 // pred_region
      %139 = vsyncadd [#allocation16], 0
      %s141 = sshll.u32 %s10, 4
      %s142 = int_to_ptr.hbm [resolvable:$true] %s141
      %s143 = sshll.u32 [#allocation15], 4
      %s144 = int_to_ptr.vmem [resolvable:$true] %s143
      %146 = dma.hbm_to_vmem [thread:$0]  %s142, 16, %s144, [#allocation16]
    $region45: #{tpu_custom_call.1} parent=1 // pred_fallthru
      _
    // Predicated region
    $region46: #{tpu_custom_call.1} parent=1 // pred_check
      _
    $region47: #{tpu_custom_call.1} parent=1 // pred_check_branch
      %148 = sbr.rel (0) target = $region49
    $region48: #{tpu_custom_call.1} parent=1 // pred_region
      %150 = vsyncadd [#allocation16], 0
      %s151 = sshll.u32 %s11, 4
      %s152 = int_to_ptr.hbm [resolvable:$true] %s151
      %s153 = sshll.u32 [#allocation17], 4
      %s154 = int_to_ptr.vmem [resolvable:$true] %s153
      %159 = dma.hbm_to_vmem [thread:$0]  %s152, 512, %s154, [#allocation16], 128, 128, 8
    $region49: #{tpu_custom_call.1} parent=1 // pred_fallthru
      _
    // Predicated region
    $region50: #{tpu_custom_call.1} parent=1 // pred_check
      _
    $region51: #{tpu_custom_call.1} parent=1 // pred_check_branch
      %161 = sbr.rel (0) target = $region53
    $region52: #{tpu_custom_call.1} parent=1 // pred_region
      %163 = vsyncadd [#allocation19], 0
      %s165 = sshll.u32 %s12, 4
      %s166 = int_to_ptr.hbm [resolvable:$true] %s165
      %s167 = sshll.u32 [#allocation18], 4
      %s168 = int_to_ptr.vmem [resolvable:$true] %s167
      %170 = dma.hbm_to_vmem [thread:$0]  %s166, 16, %s168, [#allocation19]
    $region53: #{tpu_custom_call.1} parent=1 // pred_fallthru
      _
    // Predicated region
    $region54: #{tpu_custom_call.1} parent=1 // pred_check
      _
    $region55: #{tpu_custom_call.1} parent=1 // pred_check_branch
      %172 = sbr.rel (0) target = $region57
    $region56: #{tpu_custom_call.1} parent=1 // pred_region
      %174 = vsyncadd [#allocation19], 0
      %s175 = sshll.u32 %s13, 4
      %s176 = int_to_ptr.hbm [resolvable:$true] %s175
      %s177 = sshll.u32 [#allocation20], 4
      %s178 = int_to_ptr.vmem [resolvable:$true] %s177
      %183 = dma.hbm_to_vmem [thread:$0]  %s176, 1024, %s178, [#allocation19], 256, 256, 16
    $region57: #{tpu_custom_call.1} parent=1 // pred_fallthru
      _
    // Predicated region
    $region58: #{tpu_custom_call.1} parent=1 // pred_check
      _
    $region59: #{tpu_custom_call.1} parent=1 // pred_check_branch
      %185 = sbr.rel (0) target = $region61
    $region60: #{tpu_custom_call.1} parent=1 // pred_region
      %187 = vsyncadd [#allocation22], 0
      %s189 = sshll.u32 %s14, 4
      %s190 = int_to_ptr.hbm [resolvable:$true] %s189
      %s191 = sshll.u32 [#allocation21], 4
      %s192 = int_to_ptr.vmem [resolvable:$true] %s191
      %194 = dma.hbm_to_vmem [thread:$0]  %s190, 64, %s192, [#allocation22]
    $region61: #{tpu_custom_call.1} parent=1 // pred_fallthru
      _
    // Predicated region
    $region62: #{tpu_custom_call.1} parent=1 // pred_check
      _
    $region63: #{tpu_custom_call.1} parent=1 // pred_check_branch
      %196 = sbr.rel (0) target = $region65
    $region64: #{tpu_custom_call.1} parent=1 // pred_region
      %198 = vsyncadd [#allocation22], 0
      %s199 = sshll.u32 %s15, 4
      %s200 = int_to_ptr.hbm [resolvable:$true] %s199
      %s201 = sshll.u32 [#allocation23], 4
      %s202 = int_to_ptr.vmem [resolvable:$true] %s201
      %207 = dma.hbm_to_vmem [thread:$0]  %s200, 28800, %s202, [#allocation22], 576, 576, 36
    $region65: #{tpu_custom_call.1} parent=1 // pred_fallthru
      _
    // Predicated region
    $region66: #{tpu_custom_call.1} parent=1 // pred_check
      _
    $region67: #{tpu_custom_call.1} parent=1 // pred_check_branch
      %209 = sbr.rel (0) target = $region69
    $region68: #{tpu_custom_call.1} parent=1 // pred_region
      %211 = vsyncadd [#allocation25], 0
      %s213 = sshll.u32 %s16, 4
      %s214 = int_to_ptr.hbm [resolvable:$true] %s213
      %s215 = sshll.u32 [#allocation24], 4
      %s216 = int_to_ptr.vmem [resolvable:$true] %s215
      %218 = dma.hbm_to_vmem [thread:$0]  %s214, 144, %s216, [#allocation25]
    $region69: #{tpu_custom_call.1} parent=1 // pred_fallthru
      _
    // Predicated region
    $region70: #{tpu_custom_call.1} parent=1 // pred_check
      _
    $region71: #{tpu_custom_call.1} parent=1 // pred_check_branch
      %220 = sbr.rel (0) target = $region73
    $region72: #{tpu_custom_call.1} parent=1 // pred_region
      %222 = vsyncadd [#allocation25], 0
      %s223 = sshll.u32 %s17, 4
      %s224 = int_to_ptr.hbm [resolvable:$true] %s223
      %s225 = sshll.u32 [#allocation26], 4
      %s226 = int_to_ptr.vmem [resolvable:$true] %s225
      %231 = dma.hbm_to_vmem [thread:$0]  %s224, 73728, %s226, [#allocation25], 512, 512, 32
    $region73: #{tpu_custom_call.1} parent=1 // pred_fallthru
      _
    // Predicated region
    $region74: #{tpu_custom_call.1} parent=1 // pred_check
      _
    $region75: #{tpu_custom_call.1} parent=1 // pred_check_branch
      %233 = sbr.rel (0) target = $region77
    $region76: #{tpu_custom_call.1} parent=1 // pred_region
      %235 = vsyncadd [#allocation28], 0
      %s237 = sshll.u32 %s18, 4
      %s238 = int_to_ptr.hbm [resolvable:$true] %s237
      %s239 = sshll.u32 [#allocation27], 4
      %s240 = int_to_ptr.vmem [resolvable:$true] %s239
      %242 = dma.hbm_to_vmem [thread:$0]  %s238, 128, %s240, [#allocation28]
    $region77: #{tpu_custom_call.1} parent=1 // pred_fallthru
      _
    // Predicated region
    $region78: #{tpu_custom_call.1} parent=1 // pred_check
      _
    $region79: #{tpu_custom_call.1} parent=1 // pred_check_branch
      %244 = sbr.rel (0) target = $region81
    $region80: #{tpu_custom_call.1} parent=1 // pred_region
      %246 = vsyncadd [#allocation28], 0
      %s247 = sshll.u32 %s19, 4
      %s248 = int_to_ptr.hbm [resolvable:$true] %s247
      %s249 = sshll.u32 [#allocation29], 4
      %s250 = int_to_ptr.vmem [resolvable:$true] %s249
      %255 = dma.hbm_to_vmem [thread:$0]  %s248, 16384, %s250, [#allocation28], 512, 512, 32
    $region81: #{tpu_custom_call.1} parent=1 // pred_fallthru
      _
    // Predicated region
    $region82: #{tpu_custom_call.1} parent=1 // pred_check
      _
    $region83: #{tpu_custom_call.1} parent=1 // pred_check_branch
      %257 = sbr.rel (0) target = $region85
    $region84: #{tpu_custom_call.1} parent=1 // pred_region
      %259 = vsyncadd [#allocation31], 0
      %s261 = sshll.u32 %s20, 4
      %s262 = int_to_ptr.hbm [resolvable:$true] %s261
      %s263 = sshll.u32 [#allocation30], 4
      %s264 = int_to_ptr.vmem [resolvable:$true] %s263
      %266 = dma.hbm_to_vmem [thread:$0]  %s262, 128, %s264, [#allocation31]
    $region85: #{tpu_custom_call.1} parent=1 // pred_fallthru
      _
    // Predicated region
    $region86: #{tpu_custom_call.1} parent=1 // pred_check
      _
    $region87: #{tpu_custom_call.1} parent=1 // pred_check_branch
      %268 = sbr.rel (0) target = $region89
    $region88: #{tpu_custom_call.1} parent=1 // pred_region
      _
    $region89: #{tpu_custom_call.1} parent=1 // pred_fallthru
      _
    // Predicated region
    $region90: #{tpu_custom_call.1} parent=1 // pred_check
      _
    $region91: #{tpu_custom_call.1} parent=1 // pred_check_branch
      %270 = sbr.rel (0) target = $region93
    $region92: #{tpu_custom_call.1} parent=1 // pred_region
      %272 = vsyncadd [#allocation31], 0
      %s274 = sshll.u32 %s22, 4
      %s275 = int_to_ptr.hbm [resolvable:$true] %s274
      %s276 = sshll.u32 [#allocation32], 4
      %s277 = int_to_ptr.vmem [resolvable:$true] %s276
      %279 = dma.hbm_to_vmem [thread:$0]  %s275, 16, %s277, [#allocation31]
    $region93: #{tpu_custom_call.1} parent=1 // pred_fallthru
      _
    // Predicated region
    $region94: #{tpu_custom_call.1} parent=1 // pred_check
      _
    $region95: #{tpu_custom_call.1} parent=1 // pred_check_branch
      %281 = sbr.rel (0) target = $region97
    $region96: #{tpu_custom_call.1} parent=1 // pred_region
      _
    $region97: #{tpu_custom_call.1} parent=1 // pred_fallthru
      _
    // Predicated region
    $region98: #{tpu_custom_call.1} parent=1 // pred_check
      _
    $region99: #{tpu_custom_call.1} parent=1 // pred_check_branch
      %283 = sbr.rel (0) target = $region101
    $region100: #{tpu_custom_call.1} parent=1 // pred_region
      _
    $region101: #{tpu_custom_call.1} parent=1 // pred_fallthru
      _
    // Predicated region
    $region102: #{tpu_custom_call.1} parent=1 // pred_check
      _
    $region103: #{tpu_custom_call.1} parent=1 // pred_check_branch
      %285 = sbr.rel (0) target = $region105
    $region104: #{tpu_custom_call.1} parent=1 // pred_region
      %287 = dma.done [#allocation4], 640
    $region105: #{tpu_custom_call.1} parent=1 // pred_fallthru
      _
    // Predicated region
    $region106: #{tpu_custom_call.1} parent=1 // pred_check
      _
    $region107: #{tpu_custom_call.1} parent=1 // pred_check_branch
      %289 = sbr.rel (0) target = $region109
    $region108: #{tpu_custom_call.1} parent=1 // pred_region
      %291 = dma.done [#allocation7], 32
    $region109: #{tpu_custom_call.1} parent=1 // pred_fallthru
      _
    // Predicated region
    $region110: #{tpu_custom_call.1} parent=1 // pred_check
      _
    $region111: #{tpu_custom_call.1} parent=1 // pred_check_branch
      %293 = sbr.rel (0) target = $region113
    $region112: #{tpu_custom_call.1} parent=1 // pred_region
      %295 = dma.done [#allocation7], 32
    $region113: #{tpu_custom_call.1} parent=1 // pred_fallthru
      _
    // Predicated region
    $region114: #{tpu_custom_call.1} parent=1 // pred_check
      _
    $region115: #{tpu_custom_call.1} parent=1 // pred_check_branch
      %297 = sbr.rel (0) target = $region117
    $region116: #{tpu_custom_call.1} parent=1 // pred_region
      %299 = dma.done [#allocation10], 16
    $region117: #{tpu_custom_call.1} parent=1 // pred_fallthru
      _
    // Predicated region
    $region118: #{tpu_custom_call.1} parent=1 // pred_check
      _
    $region119: #{tpu_custom_call.1} parent=1 // pred_check_branch
      %301 = sbr.rel (0) target = $region121
    $region120: #{tpu_custom_call.1} parent=1 // pred_region
      %303 = dma.done [#allocation10], 16
    $region121: #{tpu_custom_call.1} parent=1 // pred_fallthru
      _
    // Predicated region
    $region122: #{tpu_custom_call.1} parent=1 // pred_check
      _
    $region123: #{tpu_custom_call.1} parent=1 // pred_check_branch
      %305 = sbr.rel (0) target = $region125
    $region124: #{tpu_custom_call.1} parent=1 // pred_region
      %307 = dma.done [#allocation13], 16
    $region125: #{tpu_custom_call.1} parent=1 // pred_fallthru
      _
    // Predicated region
    $region126: #{tpu_custom_call.1} parent=1 // pred_check
      _
    $region127: #{tpu_custom_call.1} parent=1 // pred_check_branch
      %309 = sbr.rel (0) target = $region129
    $region128: #{tpu_custom_call.1} parent=1 // pred_region
      %311 = dma.done [#allocation13], 512
    $region129: #{tpu_custom_call.1} parent=1 // pred_fallthru
      _
    // Predicated region
    $region130: #{tpu_custom_call.1} parent=1 // pred_check
      _
    $region131: #{tpu_custom_call.1} parent=1 // pred_check_branch
      %313 = sbr.rel (0) target = $region133
    $region132: #{tpu_custom_call.1} parent=1 // pred_region
      %315 = dma.done [#allocation16], 16
    $region133: #{tpu_custom_call.1} parent=1 // pred_fallthru
      _
    // Predicated region
    $region134: #{tpu_custom_call.1} parent=1 // pred_check
      _
    $region135: #{tpu_custom_call.1} parent=1 // pred_check_branch
      %317 = sbr.rel (0) target = $region137
    $region136: #{tpu_custom_call.1} parent=1 // pred_region
      %319 = dma.done [#allocation16], 512
    $region137: #{tpu_custom_call.1} parent=1 // pred_fallthru
      _
    // Predicated region
    $region138: #{tpu_custom_call.1} parent=1 // pred_check
      _
    $region139: #{tpu_custom_call.1} parent=1 // pred_check_branch
      %321 = sbr.rel (0) target = $region141
    $region140: #{tpu_custom_call.1} parent=1 // pred_region
      %323 = dma.done [#allocation19], 16
    $region141: #{tpu_custom_call.1} parent=1 // pred_fallthru
      _
    // Predicated region
    $region142: #{tpu_custom_call.1} parent=1 // pred_check
      _
    $region143: #{tpu_custom_call.1} parent=1 // pred_check_branch
      %325 = sbr.rel (0) target = $region145
    $region144: #{tpu_custom_call.1} parent=1 // pred_region
      %327 = dma.done [#allocation19], 1024
    $region145: #{tpu_custom_call.1} parent=1 // pred_fallthru
      _
    // Predicated region
    $region146: #{tpu_custom_call.1} parent=1 // pred_check
      _
    $region147: #{tpu_custom_call.1} parent=1 // pred_check_branch
      %329 = sbr.rel (0) target = $region149
    $region148: #{tpu_custom_call.1} parent=1 // pred_region
      %331 = dma.done [#allocation22], 64
    $region149: #{tpu_custom_call.1} parent=1 // pred_fallthru
      _
    // Predicated region
    $region150: #{tpu_custom_call.1} parent=1 // pred_check
      _
    $region151: #{tpu_custom_call.1} parent=1 // pred_check_branch
      %333 = sbr.rel (0) target = $region153
    $region152: #{tpu_custom_call.1} parent=1 // pred_region
      %335 = dma.done [#allocation22], 28800
    $region153: #{tpu_custom_call.1} parent=1 // pred_fallthru
      _
    // Predicated region
    $region154: #{tpu_custom_call.1} parent=1 // pred_check
      _
    $region155: #{tpu_custom_call.1} parent=1 // pred_check_branch
      %337 = sbr.rel (0) target = $region157
    $region156: #{tpu_custom_call.1} parent=1 // pred_region
      %339 = dma.done [#allocation25], 144
    $region157: #{tpu_custom_call.1} parent=1 // pred_fallthru
      _
    // Predicated region
    $region158: #{tpu_custom_call.1} parent=1 // pred_check
      _
    $region159: #{tpu_custom_call.1} parent=1 // pred_check_branch
      %341 = sbr.rel (0) target = $region161
    $region160: #{tpu_custom_call.1} parent=1 // pred_region
      %343 = dma.done [#allocation25], 73728
    $region161: #{tpu_custom_call.1} parent=1 // pred_fallthru
      _
    // Predicated region
    $region162: #{tpu_custom_call.1} parent=1 // pred_check
      _
    $region163: #{tpu_custom_call.1} parent=1 // pred_check_branch
      %345 = sbr.rel (0) target = $region165
    $region164: #{tpu_custom_call.1} parent=1 // pred_region
      %347 = dma.done [#allocation28], 128
    $region165: #{tpu_custom_call.1} parent=1 // pred_fallthru
      _
    // Predicated region
    $region166: #{tpu_custom_call.1} parent=1 // pred_check
      _
    $region167: #{tpu_custom_call.1} parent=1 // pred_check_branch
      %349 = sbr.rel (0) target = $region169
    $region168: #{tpu_custom_call.1} parent=1 // pred_region
      %351 = dma.done [#allocation28], 16384
    $region169: #{tpu_custom_call.1} parent=1 // pred_fallthru
      _
    // Predicated region
    $region170: #{tpu_custom_call.1} parent=1 // pred_check
      _
    $region171: #{tpu_custom_call.1} parent=1 // pred_check_branch
      %353 = sbr.rel (0) target = $region173
    $region172: #{tpu_custom_call.1} parent=1 // pred_region
      %355 = dma.done [#allocation31], 128
    $region173: #{tpu_custom_call.1} parent=1 // pred_fallthru
      _
    // Predicated region
    $region174: #{tpu_custom_call.1} parent=1 // pred_check
      _
    $region175: #{tpu_custom_call.1} parent=1 // pred_check_branch
      %357 = sbr.rel (0) target = $region177
    $region176: #{tpu_custom_call.1} parent=1 // pred_region
      %359 = dma.done [#allocation31], 16
    $region177: #{tpu_custom_call.1} parent=1 // pred_fallthru
      _
    %v361 = vld [vmem:[#allocation3] sm:$0xff]
    %v362 = vld [vmem:[#allocation3 + $0x8] sm:$0xff]
    %v363 = vld [vmem:[#allocation3 + $0x10] sm:$0xff]
    %v364 = vld [vmem:[#allocation3 + $0x18] sm:$0xff]
    %v365 = vld [vmem:[#allocation3 + $0x20] sm:$0xf]
    %v366 = vld [vmem:[%s3] sm:$0xff]
    %v367 = vld [vmem:[%s3 + $0x8] sm:$0xff]
    %v368 = vld [vmem:[%s3 + $0x10] sm:$0xff]
    %v369 = vld [vmem:[%s3 + $0x18] sm:$0xff]
    %v370 = vld [vmem:[%s3 + $0x20] sm:$0x3]
    %v371 = vld [vmem:[#allocation9] sm:$0x1]
    %v373 = vperm.slane %v371, 0
    %vm375 = vcmask 277504
    %v377 = vsel %vm375, %v361, 0
    %v380 = vsel %vm375, %v362, 0
    %v383 = vsel %vm375, %v363, 0
    %v386 = vsel %vm375, %v364, 0
    %v389 = vsel %vm375, %v365, 0
    %vm391 = vcmask 1041408
    %v393 = vsel %vm391, %v370, 0
    %395 = vmatpush.msra.mxu0 0.0
    %396 = vmatpush.msra.mxu0 0.0
    %397 = vmatpush.msra.mxu0 0.0
    %398 = vmatpush.msra.mxu0 0.0
    %399 = vmatpush.msra.mxu0 0.0
    %400 = vmatpush.msra.mxu0 0.0
    %401 = vmatpush.msra.mxu0 0.0
    %402 = vmatpush.msra.mxu0 0.0
    %403 = vmatpush.msra.mxu0 0.0
    %404 = vmatpush.msra.mxu0 0.0
    %405 = vmatpush.msra.mxu0 0.0
    %406 = vmatpush.msra.mxu0 %v393
    %407 = vmatpush.msra.mxu0 %v369
    %408 = vmatpush.msra.mxu0 %v368
    %409 = vmatpush.msra.mxu0 %v367
    %410 = vmatpush.msra.mxu0 %v366
    %411 = vmatmul.f32.gmra.mxu0 %v377
    %v412 = vpop.f32.mrf.mxu0
    %v413 = vadd.f32 %v373, %v412
    %414 = vmatmul.f32.gmra.mxu0 %v380
    %v415 = vpop.f32.mrf.mxu0
    %v416 = vadd.f32 %v373, %v415
    %417 = vmatmul.f32.gmra.mxu0 %v383
    %v418 = vpop.f32.mrf.mxu0
    %v419 = vadd.f32 %v373, %v418
    %420 = vmatmul.f32.gmra.mxu0 %v386
    %v421 = vpop.f32.mrf.mxu0
    %v422 = vadd.f32 %v373, %v421
    %423 = vmatmul.f32.gmra.mxu0 %v389
    %v424 = vpop.f32.mrf.mxu0
    %v425 = vadd.f32 %v373, %v424
    %426 = vdwg.mxu0
    %v427 = vld [vmem:[%s5] sm:$0xff]
    %v428 = vld [vmem:[%s5 + $0x8] sm:$0xff]
    %v429 = vld [vmem:[%s5 + $0x10] sm:$0xff]
    %v430 = vld [vmem:[%s5 + $0x18] sm:$0xff]
    %v431 = vld [vmem:[%s5 + $0x20] sm:$0x3]
    %v432 = vld [vmem:[#allocation11] sm:$0x1]
    %v434 = vperm.slane %v432, 0
    %v437 = vsel %vm391, %v431, 0
    %439 = vmatpush.msra.mxu0 0.0
    %440 = vmatpush.msra.mxu0 0.0
    %441 = vmatpush.msra.mxu0 0.0
    %442 = vmatpush.msra.mxu0 0.0
    %443 = vmatpush.msra.mxu0 0.0
    %444 = vmatpush.msra.mxu0 0.0
    %445 = vmatpush.msra.mxu0 0.0
    %446 = vmatpush.msra.mxu0 0.0
    %447 = vmatpush.msra.mxu0 0.0
    %448 = vmatpush.msra.mxu0 0.0
    %449 = vmatpush.msra.mxu0 0.0
    %450 = vmatpush.msra.mxu0 %v437
    %451 = vmatpush.msra.mxu0 %v430
    %452 = vmatpush.msra.mxu0 %v429
    %453 = vmatpush.msra.mxu0 %v428
    %454 = vmatpush.msra.mxu0 %v427
    %455 = vmatmul.f32.gmra.mxu0 %v377
    %v456 = vpop.f32.mrf.mxu0
    %v457 = vadd.f32 %v434, %v456
    %458 = vmatmul.f32.gmra.mxu0 %v380
    %v459 = vpop.f32.mrf.mxu0
    %v460 = vadd.f32 %v434, %v459
    %461 = vmatmul.f32.gmra.mxu0 %v383
    %v462 = vpop.f32.mrf.mxu0
    %v463 = vadd.f32 %v434, %v462
    %464 = vmatmul.f32.gmra.mxu0 %v386
    %v465 = vpop.f32.mrf.mxu0
    %v466 = vadd.f32 %v434, %v465
    %467 = vmatmul.f32.gmra.mxu0 %v389
    %v468 = vpop.f32.mrf.mxu0
    %v469 = vadd.f32 %v434, %v468
    %470 = vdwg.mxu0
    %v471 = vld [vmem:[%s7] sm:$0xff]
    %v472 = vld [vmem:[%s7 + $0x8] sm:$0xff]
    %v473 = vld [vmem:[%s7 + $0x10] sm:$0xff]
    %v474 = vld [vmem:[%s7 + $0x18] sm:$0xff]
    %v475 = vld [vmem:[%s7 + $0x20] sm:$0x3]
    %v476 = vld [vmem:[#allocation12] sm:$0x1]
    %v478 = vperm.slane %v476, 0
    %v481 = vsel %vm391, %v475, 0
    %483 = vmatpush.msra.mxu0 0.0
    %484 = vmatpush.msra.mxu0 0.0
    %485 = vmatpush.msra.mxu0 0.0
    %486 = vmatpush.msra.mxu0 0.0
    %487 = vmatpush.msra.mxu0 0.0
    %488 = vmatpush.msra.mxu0 0.0
    %489 = vmatpush.msra.mxu0 0.0
    %490 = vmatpush.msra.mxu0 0.0
    %491 = vmatpush.msra.mxu0 0.0
    %492 = vmatpush.msra.mxu0 0.0
    %493 = vmatpush.msra.mxu0 0.0
    %494 = vmatpush.msra.mxu0 %v481
    %495 = vmatpush.msra.mxu0 %v474
    %496 = vmatpush.msra.mxu0 %v473
    %497 = vmatpush.msra.mxu0 %v472
    %498 = vmatpush.msra.mxu0 %v471
    %499 = vmatmul.f32.gmra.mxu0 %v377
    %v500 = vpop.f32.mrf.mxu0
    %v501 = vadd.f32 %v478, %v500
    %502 = vmatmul.f32.gmra.mxu0 %v380
    %v503 = vpop.f32.mrf.mxu0
    %v504 = vadd.f32 %v478, %v503
    %505 = vmatmul.f32.gmra.mxu0 %v383
    %v506 = vpop.f32.mrf.mxu0
    %v507 = vadd.f32 %v478, %v506
    %508 = vmatmul.f32.gmra.mxu0 %v386
    %v509 = vpop.f32.mrf.mxu0
    %v510 = vadd.f32 %v478, %v509
    %511 = vmatmul.f32.gmra.mxu0 %v389
    %v512 = vpop.f32.mrf.mxu0
    %v513 = vadd.f32 %v478, %v512
    %514 = vdwg.mxu0
    %vm515 = vcmask 64512
    %v517 = vsel %vm515, %v413, 0
    %v520 = vsel %vm515, %v416, 0
    %v523 = vsel %vm515, %v419, 0
    %v526 = vsel %vm515, %v422, 0
    %v529 = vsel %vm515, %v425, 0
    %v532 = vsel %vm515, %v457, 0
    %v535 = vsel %vm515, %v460, 0
    %v538 = vsel %vm515, %v463, 0
    %v541 = vsel %vm515, %v466, 0
    %v544 = vsel %vm515, %v469, 0
    %546 = vmatpush.xpose.msra.mxu0 0.0
    %547 = vmatpush.xpose.msra.mxu0 0.0
    %548 = vmatpush.xpose.msra.mxu0 0.0
    %549 = vmatpush.xpose.msra.mxu0 0.0
    %550 = vmatpush.xpose.msra.mxu0 0.0
    %551 = vmatpush.xpose.msra.mxu0 0.0
    %552 = vmatpush.xpose.msra.mxu0 0.0
    %553 = vmatpush.xpose.msra.mxu0 0.0
    %554 = vmatpush.xpose.msra.mxu0 0.0
    %555 = vmatpush.xpose.msra.mxu0 0.0
    %556 = vmatpush.xpose.msra.mxu0 0.0
    %557 = vmatpush.xpose.msra.mxu0 %v544
    %558 = vmatpush.xpose.msra.mxu0 %v541
    %559 = vmatpush.xpose.msra.mxu0 %v538
    %560 = vmatpush.xpose.msra.mxu0 %v535
    %561 = vmatpush.xpose.msra.mxu0 %v532
    %562 = vmatmul.f32.gmra.mxu0 %v517
    %v563 = vpop.f32.mrf.mxu0
    %v564 = vadd.f32 0.0, %v563
    %565 = vmatmul.f32.gmra.mxu0 %v520
    %v566 = vpop.f32.mrf.mxu0
    %v567 = vadd.f32 0.0, %v566
    %568 = vmatmul.f32.gmra.mxu0 %v523
    %v569 = vpop.f32.mrf.mxu0
    %v570 = vadd.f32 0.0, %v569
    %571 = vmatmul.f32.gmra.mxu0 %v526
    %v572 = vpop.f32.mrf.mxu0
    %v573 = vadd.f32 0.0, %v572
    %574 = vmatmul.f32.gmra.mxu0 %v529
    %v575 = vpop.f32.mrf.mxu0
    %v576 = vadd.f32 0.0, %v575
    %577 = vdwg.mxu0
    %v578 = vmul.f32 %v564, 0.17677669
    %v579 = vmul.f32 %v567, 0.17677669
    %v580 = vmul.f32 %v570, 0.17677669
    %v581 = vmul.f32 %v573, 0.17677669
    %v582 = vmul.f32 %v576, 0.17677669
    %vm583 = vcmask 293888
    %v584 = vsel %vm583, %v578, -inf
    %585 = vmax.xlane.f32.xlu0 %v584
    %v586 = vpop.xlane.xlu0 %585
    %v587 = vsel %vm583, %v579, -inf
    %588 = vmax.xlane.f32.xlu0 %v587
    %v589 = vpop.xlane.xlu0 %588
    %v590 = vsel %vm583, %v580, -inf
    %591 = vmax.xlane.f32.xlu0 %v590
    %v592 = vpop.xlane.xlu0 %591
    %v593 = vsel %vm583, %v581, -inf
    %594 = vmax.xlane.f32.xlu0 %v593
    %v595 = vpop.xlane.xlu0 %594
    %vm596 = vcmask 289792
    %v597 = vsel %vm596, %v582, -inf
    %598 = vmax.xlane.f32.xlu0 %v597
    %v599 = vpop.xlane.xlu0 %598
    %v600 = vsub.f32 %v578, %v586
    %v601 = vsub.f32 %v579, %v589
    %v602 = vsub.f32 %v580, %v592
    %v603 = vsub.f32 %v581, %v595
    %v604 = vsub.f32 %v582, %v599
    %v605 = vmul.f32 %v600, 1.442695
    %v606 = vpow.pop %v605
    %v607 = vmul.f32 %v601, 1.442695
    %v608 = vpow.pop %v607
    %v609 = vmul.f32 %v602, 1.442695
    %v610 = vpow.pop %v609
    %v611 = vmul.f32 %v603, 1.442695
    %v612 = vpow.pop %v611
    %v613 = vmul.f32 %v604, 1.442695
    %v614 = vpow.pop %v613
    %v615 = vsel %vm583, %v606, 0.0
    %616 = vadd.xlane.f32.xlu0 %v615
    %v617 = vpop.xlane.xlu0 %616
    %v618 = vsel %vm583, %v608, 0.0
    %619 = vadd.xlane.f32.xlu0 %v618
    %v620 = vpop.xlane.xlu0 %619
    %v621 = vsel %vm583, %v610, 0.0
    %622 = vadd.xlane.f32.xlu0 %v621
    %v623 = vpop.xlane.xlu0 %622
    %v624 = vsel %vm583, %v612, 0.0
    %625 = vadd.xlane.f32.xlu0 %v624
    %v626 = vpop.xlane.xlu0 %625
    %v627 = vsel %vm596, %v614, 0.0
    %628 = vadd.xlane.f32.xlu0 %v627
    %v629 = vpop.xlane.xlu0 %628
    %v630 = vrcp.pop %v617
    %v631 = vmul.f32 %v617, %v630
    %v632 = vsub.f32 1.0, %v631
    %v633 = vmul.f32 %v630, %v632
    %v634 = vadd.f32 %v630, %v633
    %vm635 = vweird.f32 %v617
    %vm636 = vweird.f32 %v630
    %vm637 = vmor %vm635, %vm636
    %v638 = vsel %vm637, %v630, %v634
    %v639 = vand.u32 2147483647, %v617
    %vm640 = vcmp.eq.f32.partialorder %v639, 8.507059e+37
    %v641 = vand.u32 %v617, 2147483648
    %v642 = vor.u32 1.1754944e-38, %v641
    %v643 = vsel %vm640, %v642, %v638
    %v644 = vmul.f32 %v606, %v643
    %v645 = vrcp.pop %v620
    %v646 = vmul.f32 %v620, %v645
    %v647 = vsub.f32 1.0, %v646
    %v648 = vmul.f32 %v645, %v647
    %v649 = vadd.f32 %v645, %v648
    %vm650 = vweird.f32 %v620
    %vm651 = vweird.f32 %v645
    %vm652 = vmor %vm650, %vm651
    %v653 = vsel %vm652, %v645, %v649
    %v654 = vand.u32 2147483647, %v620
    %vm655 = vcmp.eq.f32.partialorder %v654, 8.507059e+37
    %v656 = vand.u32 %v620, 2147483648
    %v657 = vor.u32 1.1754944e-38, %v656
    %v658 = vsel %vm655, %v657, %v653
    %v659 = vmul.f32 %v608, %v658
    %v660 = vrcp.pop %v623
    %v661 = vmul.f32 %v623, %v660
    %v662 = vsub.f32 1.0, %v661
    %v663 = vmul.f32 %v660, %v662
    %v664 = vadd.f32 %v660, %v663
    %vm665 = vweird.f32 %v623
    %vm666 = vweird.f32 %v660
    %vm667 = vmor %vm665, %vm666
    %v668 = vsel %vm667, %v660, %v664
    %v669 = vand.u32 2147483647, %v623
    %vm670 = vcmp.eq.f32.partialorder %v669, 8.507059e+37
    %v671 = vand.u32 %v623, 2147483648
    %v672 = vor.u32 1.1754944e-38, %v671
    %v673 = vsel %vm670, %v672, %v668
    %v674 = vmul.f32 %v610, %v673
    %v675 = vrcp.pop %v626
    %v676 = vmul.f32 %v626, %v675
    %v677 = vsub.f32 1.0, %v676
    %v678 = vmul.f32 %v675, %v677
    %v679 = vadd.f32 %v675, %v678
    %vm680 = vweird.f32 %v626
    %vm681 = vweird.f32 %v675
    %vm682 = vmor %vm680, %vm681
    %v683 = vsel %vm682, %v675, %v679
    %v684 = vand.u32 2147483647, %v626
    %vm685 = vcmp.eq.f32.partialorder %v684, 8.507059e+37
    %v686 = vand.u32 %v626, 2147483648
    %v687 = vor.u32 1.1754944e-38, %v686
    %v688 = vsel %vm685, %v687, %v683
    %v689 = vmul.f32 %v612, %v688
    %v690 = vrcp.pop %v629
    %v691 = vmul.f32 %v629, %v690
    %v692 = vsub.f32 1.0, %v691
    %v693 = vmul.f32 %v690, %v692
    %v694 = vadd.f32 %v690, %v693
    %vm695 = vweird.f32 %v629
    %vm696 = vweird.f32 %v690
    %vm697 = vmor %vm695, %vm696
    %v698 = vsel %vm697, %v690, %v694
    %v699 = vand.u32 2147483647, %v629
    %vm700 = vcmp.eq.f32.partialorder %v699, 8.507059e+37
    %v701 = vand.u32 %v629, 2147483648
    %v702 = vor.u32 1.1754944e-38, %v701
    %v703 = vsel %vm700, %v702, %v698
    %v704 = vmul.f32 %v614, %v703
    %v706 = vsel %vm583, %v644, 0
    %v709 = vsel %vm583, %v659, 0
    %v712 = vsel %vm583, %v674, 0
    %v715 = vsel %vm583, %v689, 0
    %v718 = vsel %vm583, %v704, 0
    %vm720 = vcmask 1043456
    %v722 = vsel %vm720, %v513, 0
    %724 = vmatpush.msra.mxu0 0.0
    %725 = vmatpush.msra.mxu0 0.0
    %726 = vmatpush.msra.mxu0 0.0
    %727 = vmatpush.msra.mxu0 0.0
    %728 = vmatpush.msra.mxu0 0.0
    %729 = vmatpush.msra.mxu0 0.0
    %730 = vmatpush.msra.mxu0 0.0
    %731 = vmatpush.msra.mxu0 0.0
    %732 = vmatpush.msra.mxu0 0.0
    %733 = vmatpush.msra.mxu0 0.0
    %734 = vmatpush.msra.mxu0 0.0
    %735 = vmatpush.msra.mxu0 %v722
    %736 = vmatpush.msra.mxu0 %v510
    %737 = vmatpush.msra.mxu0 %v507
    %738 = vmatpush.msra.mxu0 %v504
    %739 = vmatpush.msra.mxu0 %v501
    %740 = vmatmul.f32.gmra.mxu0 %v706
    %v741 = vpop.f32.mrf.mxu0
    %v742 = vadd.f32 0.0, %v741
    %743 = vmatmul.f32.gmra.mxu0 %v709
    %v744 = vpop.f32.mrf.mxu0
    %v745 = vadd.f32 0.0, %v744
    %746 = vmatmul.f32.gmra.mxu0 %v712
    %v747 = vpop.f32.mrf.mxu0
    %v748 = vadd.f32 0.0, %v747
    %749 = vmatmul.f32.gmra.mxu0 %v715
    %v750 = vpop.f32.mrf.mxu0
    %v751 = vadd.f32 0.0, %v750
    %752 = vmatmul.f32.gmra.mxu0 %v718
    %v753 = vpop.f32.mrf.mxu0
    %v754 = vadd.f32 0.0, %v753
    %755 = vdwg.mxu0
    %v756 = vld [vmem:[#allocation14] sm:$0xff]
    %757 = vrot.lane.b32.xlu0 %v413, 120
    %v758 = vpop.permute.xlu0 %757
    %759 = vrot.lane.b32.xlu0 %v416, 120
    %v760 = vpop.permute.xlu0 %759
    %761 = vrot.lane.b32.xlu0 %v419, 120
    %v762 = vpop.permute.xlu0 %761
    %763 = vrot.lane.b32.xlu0 %v422, 120
    %v764 = vpop.permute.xlu0 %763
    %765 = vrot.lane.b32.xlu0 %v425, 120
    %v766 = vpop.permute.xlu0 %765
    %767 = vrot.lane.b32.xlu0 %v457, 120
    %v768 = vpop.permute.xlu0 %767
    %769 = vrot.lane.b32.xlu0 %v460, 120
    %v770 = vpop.permute.xlu0 %769
    %771 = vrot.lane.b32.xlu0 %v463, 120
    %v772 = vpop.permute.xlu0 %771
    %773 = vrot.lane.b32.xlu0 %v466, 120
    %v774 = vpop.permute.xlu0 %773
    %775 = vrot.lane.b32.xlu0 %v469, 120
    %v776 = vpop.permute.xlu0 %775
    %v777 = vsel %vm515, %v758, 0
    %v779 = vsel %vm515, %v760, 0
    %v781 = vsel %vm515, %v762, 0
    %v783 = vsel %vm515, %v764, 0
    %v785 = vsel %vm515, %v766, 0
    %v787 = vsel %vm515, %v768, 0
    %v789 = vsel %vm515, %v770, 0
    %v791 = vsel %vm515, %v772, 0
    %v793 = vsel %vm515, %v774, 0
    %v795 = vsel %vm515, %v776, 0
    %797 = vmatpush.xpose.msra.mxu0 0.0
    %798 = vmatpush.xpose.msra.mxu0 0.0
    %799 = vmatpush.xpose.msra.mxu0 0.0
    %800 = vmatpush.xpose.msra.mxu0 0.0
    %801 = vmatpush.xpose.msra.mxu0 0.0
    %802 = vmatpush.xpose.msra.mxu0 0.0
    %803 = vmatpush.xpose.msra.mxu0 0.0
    %804 = vmatpush.xpose.msra.mxu0 0.0
    %805 = vmatpush.xpose.msra.mxu0 0.0
    %806 = vmatpush.xpose.msra.mxu0 0.0
    %807 = vmatpush.xpose.msra.mxu0 0.0
    %808 = vmatpush.xpose.msra.mxu0 %v795
    %809 = vmatpush.xpose.msra.mxu0 %v793
    %810 = vmatpush.xpose.msra.mxu0 %v791
    %811 = vmatpush.xpose.msra.mxu0 %v789
    %812 = vmatpush.xpose.msra.mxu0 %v787
    %813 = vmatmul.f32.gmra.mxu0 %v777
    %v814 = vpop.f32.mrf.mxu0
    %v815 = vadd.f32 0.0, %v814
    %816 = vmatmul.f32.gmra.mxu0 %v779
    %v817 = vpop.f32.mrf.mxu0
    %v818 = vadd.f32 0.0, %v817
    %819 = vmatmul.f32.gmra.mxu0 %v781
    %v820 = vpop.f32.mrf.mxu0
    %v821 = vadd.f32 0.0, %v820
    %822 = vmatmul.f32.gmra.mxu0 %v783
    %v823 = vpop.f32.mrf.mxu0
    %v824 = vadd.f32 0.0, %v823
    %825 = vmatmul.f32.gmra.mxu0 %v785
    %v826 = vpop.f32.mrf.mxu0
    %v827 = vadd.f32 0.0, %v826
    %828 = vdwg.mxu0
    %v829 = vmul.f32 %v815, 0.17677669
    %v830 = vmul.f32 %v818, 0.17677669
    %v831 = vmul.f32 %v821, 0.17677669
    %v832 = vmul.f32 %v824, 0.17677669
    %v833 = vmul.f32 %v827, 0.17677669
    %v834 = vsel %vm583, %v829, -inf
    %835 = vmax.xlane.f32.xlu0 %v834
    %v836 = vpop.xlane.xlu0 %835
    %v837 = vsel %vm583, %v830, -inf
    %838 = vmax.xlane.f32.xlu0 %v837
    %v839 = vpop.xlane.xlu0 %838
    %v840 = vsel %vm583, %v831, -inf
    %841 = vmax.xlane.f32.xlu0 %v840
    %v842 = vpop.xlane.xlu0 %841
    %v843 = vsel %vm583, %v832, -inf
    %844 = vmax.xlane.f32.xlu0 %v843
    %v845 = vpop.xlane.xlu0 %844
    %v846 = vsel %vm596, %v833, -inf
    %847 = vmax.xlane.f32.xlu0 %v846
    %v848 = vpop.xlane.xlu0 %847
    %v849 = vsub.f32 %v829, %v836
    %v850 = vsub.f32 %v830, %v839
    %v851 = vsub.f32 %v831, %v842
    %v852 = vsub.f32 %v832, %v845
    %v853 = vsub.f32 %v833, %v848
    %v854 = vmul.f32 %v849, 1.442695
    %v855 = vpow.pop %v854
    %v856 = vmul.f32 %v850, 1.442695
    %v857 = vpow.pop %v856
    %v858 = vmul.f32 %v851, 1.442695
    %v859 = vpow.pop %v858
    %v860 = vmul.f32 %v852, 1.442695
    %v861 = vpow.pop %v860
    %v862 = vmul.f32 %v853, 1.442695
    %v863 = vpow.pop %v862
    %v864 = vsel %vm583, %v855, 0.0
    %865 = vadd.xlane.f32.xlu0 %v864
    %v866 = vpop.xlane.xlu0 %865
    %v867 = vsel %vm583, %v857, 0.0
    %868 = vadd.xlane.f32.xlu0 %v867
    %v869 = vpop.xlane.xlu0 %868
    %v870 = vsel %vm583, %v859, 0.0
    %871 = vadd.xlane.f32.xlu0 %v870
    %v872 = vpop.xlane.xlu0 %871
    %v873 = vsel %vm583, %v861, 0.0
    %874 = vadd.xlane.f32.xlu0 %v873
    %v875 = vpop.xlane.xlu0 %874
    %v876 = vsel %vm596, %v863, 0.0
    %877 = vadd.xlane.f32.xlu0 %v876
    %v878 = vpop.xlane.xlu0 %877
    %v879 = vrcp.pop %v866
    %v880 = vmul.f32 %v866, %v879
    %v881 = vsub.f32 1.0, %v880
    %v882 = vmul.f32 %v879, %v881
    %v883 = vadd.f32 %v879, %v882
    %vm884 = vweird.f32 %v866
    %vm885 = vweird.f32 %v879
    %vm886 = vmor %vm884, %vm885
    %v887 = vsel %vm886, %v879, %v883
    %v888 = vand.u32 2147483647, %v866
    %vm889 = vcmp.eq.f32.partialorder %v888, 8.507059e+37
    %v890 = vand.u32 %v866, 2147483648
    %v891 = vor.u32 1.1754944e-38, %v890
    %v892 = vsel %vm889, %v891, %v887
    %v893 = vmul.f32 %v855, %v892
    %v894 = vrcp.pop %v869
    %v895 = vmul.f32 %v869, %v894
    %v896 = vsub.f32 1.0, %v895
    %v897 = vmul.f32 %v894, %v896
    %v898 = vadd.f32 %v894, %v897
    %vm899 = vweird.f32 %v869
    %vm900 = vweird.f32 %v894
    %vm901 = vmor %vm899, %vm900
    %v902 = vsel %vm901, %v894, %v898
    %v903 = vand.u32 2147483647, %v869
    %vm904 = vcmp.eq.f32.partialorder %v903, 8.507059e+37
    %v905 = vand.u32 %v869, 2147483648
    %v906 = vor.u32 1.1754944e-38, %v905
    %v907 = vsel %vm904, %v906, %v902
    %v908 = vmul.f32 %v857, %v907
    %v909 = vrcp.pop %v872
    %v910 = vmul.f32 %v872, %v909
    %v911 = vsub.f32 1.0, %v910
    %v912 = vmul.f32 %v909, %v911
    %v913 = vadd.f32 %v909, %v912
    %vm914 = vweird.f32 %v872
    %vm915 = vweird.f32 %v909
    %vm916 = vmor %vm914, %vm915
    %v917 = vsel %vm916, %v909, %v913
    %v918 = vand.u32 2147483647, %v872
    %vm919 = vcmp.eq.f32.partialorder %v918, 8.507059e+37
    %v920 = vand.u32 %v872, 2147483648
    %v921 = vor.u32 1.1754944e-38, %v920
    %v922 = vsel %vm919, %v921, %v917
    %v923 = vmul.f32 %v859, %v922
    %v924 = vrcp.pop %v875
    %v925 = vmul.f32 %v875, %v924
    %v926 = vsub.f32 1.0, %v925
    %v927 = vmul.f32 %v924, %v926
    %v928 = vadd.f32 %v924, %v927
    %vm929 = vweird.f32 %v875
    %vm930 = vweird.f32 %v924
    %vm931 = vmor %vm929, %vm930
    %v932 = vsel %vm931, %v924, %v928
    %v933 = vand.u32 2147483647, %v875
    %vm934 = vcmp.eq.f32.partialorder %v933, 8.507059e+37
    %v935 = vand.u32 %v875, 2147483648
    %v936 = vor.u32 1.1754944e-38, %v935
    %v937 = vsel %vm934, %v936, %v932
    %v938 = vmul.f32 %v861, %v937
    %v939 = vrcp.pop %v878
    %v940 = vmul.f32 %v878, %v939
    %v941 = vsub.f32 1.0, %v940
    %v942 = vmul.f32 %v939, %v941
    %v943 = vadd.f32 %v939, %v942
    %vm944 = vweird.f32 %v878
    %vm945 = vweird.f32 %v939
    %vm946 = vmor %vm944, %vm945
    %v947 = vsel %vm946, %v939, %v943
    %v948 = vand.u32 2147483647, %v878
    %vm949 = vcmp.eq.f32.partialorder %v948, 8.507059e+37
    %v950 = vand.u32 %v878, 2147483648
    %v951 = vor.u32 1.1754944e-38, %v950
    %v952 = vsel %vm949, %v951, %v947
    %v953 = vmul.f32 %v863, %v952
    %958 = vrot.lane.b32.xlu0 %v501, 120
    %v959 = vpop.permute.xlu0 %958
    %960 = vrot.lane.b32.xlu0 %v504, 120
    %v961 = vpop.permute.xlu0 %960
    %962 = vrot.lane.b32.xlu0 %v507, 120
    %v963 = vpop.permute.xlu0 %962
    %964 = vrot.lane.b32.xlu0 %v510, 120
    %v965 = vpop.permute.xlu0 %964
    %966 = vrot.lane.b32.xlu0 %v513, 120
    %v967 = vpop.permute.xlu0 %966
    %v973 = vsel %vm583, %v893, 0
    %v976 = vsel %vm583, %v908, 0
    %v979 = vsel %vm583, %v923, 0
    %v982 = vsel %vm583, %v938, 0
    %v985 = vsel %vm583, %v953, 0
    %v987 = vsel %vm720, %v967, 0
    %989 = vmatpush.msra.mxu0 0.0
    %990 = vmatpush.msra.mxu0 0.0
    %991 = vmatpush.msra.mxu0 0.0
    %992 = vmatpush.msra.mxu0 0.0
    %993 = vmatpush.msra.mxu0 0.0
    %994 = vmatpush.msra.mxu0 0.0
    %995 = vmatpush.msra.mxu0 0.0
    %996 = vmatpush.msra.mxu0 0.0
    %997 = vmatpush.msra.mxu0 0.0
    %998 = vmatpush.msra.mxu0 0.0
    %999 = vmatpush.msra.mxu0 0.0
    %1000 = vmatpush.msra.mxu0 %v987
    %1001 = vmatpush.msra.mxu0 %v965
    %1002 = vmatpush.msra.mxu0 %v963
    %1003 = vmatpush.msra.mxu0 %v961
    %1004 = vmatpush.msra.mxu0 %v959
    %1005 = vmatmul.f32.gmra.mxu0 %v973
    %v1006 = vpop.f32.mrf.mxu0
    %v1007 = vadd.f32 0.0, %v1006
    %1008 = vmatmul.f32.gmra.mxu0 %v976
    %v1009 = vpop.f32.mrf.mxu0
    %v1010 = vadd.f32 0.0, %v1009
    %1011 = vmatmul.f32.gmra.mxu0 %v979
    %v1012 = vpop.f32.mrf.mxu0
    %v1013 = vadd.f32 0.0, %v1012
    %1014 = vmatmul.f32.gmra.mxu0 %v982
    %v1015 = vpop.f32.mrf.mxu0
    %v1016 = vadd.f32 0.0, %v1015
    %1017 = vmatmul.f32.gmra.mxu0 %v985
    %v1018 = vpop.f32.mrf.mxu0
    %v1019 = vadd.f32 0.0, %v1018
    %1020 = vdwg.mxu0
    %v1021 = vld [vmem:[#allocation14 + $0x8] sm:$0xff]
    %v1023 = vsel %vm515, %v1007, 0
    %v1026 = vsel %vm515, %v1010, 0
    %v1029 = vsel %vm515, %v1013, 0
    %v1032 = vsel %vm515, %v1016, 0
    %v1035 = vsel %vm515, %v1019, 0
    %1037 = vmatpush.msra.mxu0 0.0
    %1038 = vmatpush.msra.mxu0 0.0
    %1039 = vmatpush.msra.mxu0 0.0
    %1040 = vmatpush.msra.mxu0 0.0
    %1041 = vmatpush.msra.mxu0 0.0
    %1042 = vmatpush.msra.mxu0 0.0
    %1043 = vmatpush.msra.mxu0 0.0
    %1044 = vmatpush.msra.mxu0 0.0
    %1045 = vmatpush.msra.mxu0 0.0
    %1046 = vmatpush.msra.mxu0 0.0
    %1047 = vmatpush.msra.mxu0 0.0
    %1048 = vmatpush.msra.mxu0 0.0
    %1049 = vmatpush.msra.mxu0 0.0
    %1050 = vmatpush.msra.mxu0 0.0
    %1051 = vmatpush.msra.mxu0 0.0
    %1052 = vmatpush.msra.mxu0 %v1021
    %1053 = vmatmul.f32.gmra.mxu0 %v1023
    %v1054 = vpop.f32.mrf.mxu0
    %v1055 = vadd.f32 0.0, %v1054
    %1056 = vmatmul.f32.gmra.mxu0 %v1026
    %v1057 = vpop.f32.mrf.mxu0
    %v1058 = vadd.f32 0.0, %v1057
    %1059 = vmatmul.f32.gmra.mxu0 %v1029
    %v1060 = vpop.f32.mrf.mxu0
    %v1061 = vadd.f32 0.0, %v1060
    %1062 = vmatmul.f32.gmra.mxu0 %v1032
    %v1063 = vpop.f32.mrf.mxu0
    %v1064 = vadd.f32 0.0, %v1063
    %1065 = vmatmul.f32.gmra.mxu0 %v1035
    %v1066 = vpop.f32.mrf.mxu0
    %v1067 = vadd.f32 0.0, %v1066
    %1068 = vdwg.mxu0
    %v1070 = vsel %vm515, %v742, 0
    %v1073 = vsel %vm515, %v745, 0
    %v1076 = vsel %vm515, %v748, 0
    %v1079 = vsel %vm515, %v751, 0
    %v1082 = vsel %vm515, %v754, 0
    %1084 = vmatpush.msra.mxu0 0.0
    %1085 = vmatpush.msra.mxu0 0.0
    %1086 = vmatpush.msra.mxu0 0.0
    %1087 = vmatpush.msra.mxu0 0.0
    %1088 = vmatpush.msra.mxu0 0.0
    %1089 = vmatpush.msra.mxu0 0.0
    %1090 = vmatpush.msra.mxu0 0.0
    %1091 = vmatpush.msra.mxu0 0.0
    %1092 = vmatpush.msra.mxu0 0.0
    %1093 = vmatpush.msra.mxu0 0.0
    %1094 = vmatpush.msra.mxu0 0.0
    %1095 = vmatpush.msra.mxu0 0.0
    %1096 = vmatpush.msra.mxu0 0.0
    %1097 = vmatpush.msra.mxu0 0.0
    %1098 = vmatpush.msra.mxu0 0.0
    %1099 = vmatpush.msra.mxu0 %v756
    %1100 = vmatmul.f32.gmra.mxu0 %v1070
    %v1101 = vpop.f32.mrf.mxu0
    %v1102 = vadd.f32 %v1055, %v1101
    %1103 = vmatmul.f32.gmra.mxu0 %v1073
    %v1104 = vpop.f32.mrf.mxu0
    %v1105 = vadd.f32 %v1058, %v1104
    %1106 = vmatmul.f32.gmra.mxu0 %v1076
    %v1107 = vpop.f32.mrf.mxu0
    %v1108 = vadd.f32 %v1061, %v1107
    %1109 = vmatmul.f32.gmra.mxu0 %v1079
    %v1110 = vpop.f32.mrf.mxu0
    %v1111 = vadd.f32 %v1064, %v1110
    %1112 = vmatmul.f32.gmra.mxu0 %v1082
    %v1113 = vpop.f32.mrf.mxu0
    %v1114 = vadd.f32 %v1067, %v1113
    %1115 = vdwg.mxu0
    %1116 = vrot.lane.b32.xlu0 %v413, 112
    %v1117 = vpop.permute.xlu0 %1116
    %1118 = vrot.lane.b32.xlu0 %v416, 112
    %v1119 = vpop.permute.xlu0 %1118
    %1120 = vrot.lane.b32.xlu0 %v419, 112
    %v1121 = vpop.permute.xlu0 %1120
    %1122 = vrot.lane.b32.xlu0 %v422, 112
    %v1123 = vpop.permute.xlu0 %1122
    %1124 = vrot.lane.b32.xlu0 %v425, 112
    %v1125 = vpop.permute.xlu0 %1124
    %1126 = vrot.lane.b32.xlu0 %v457, 112
    %v1127 = vpop.permute.xlu0 %1126
    %1128 = vrot.lane.b32.xlu0 %v460, 112
    %v1129 = vpop.permute.xlu0 %1128
    %1130 = vrot.lane.b32.xlu0 %v463, 112
    %v1131 = vpop.permute.xlu0 %1130
    %1132 = vrot.lane.b32.xlu0 %v466, 112
    %v1133 = vpop.permute.xlu0 %1132
    %1134 = vrot.lane.b32.xlu0 %v469, 112
    %v1135 = vpop.permute.xlu0 %1134
    %v1136 = vsel %vm515, %v1117, 0
    %v1138 = vsel %vm515, %v1119, 0
    %v1140 = vsel %vm515, %v1121, 0
    %v1142 = vsel %vm515, %v1123, 0
    %v1144 = vsel %vm515, %v1125, 0
    %v1146 = vsel %vm515, %v1127, 0
    %v1148 = vsel %vm515, %v1129, 0
    %v1150 = vsel %vm515, %v1131, 0
    %v1152 = vsel %vm515, %v1133, 0
    %v1154 = vsel %vm515, %v1135, 0
    %1156 = vmatpush.xpose.msra.mxu0 0.0
    %1157 = vmatpush.xpose.msra.mxu0 0.0
    %1158 = vmatpush.xpose.msra.mxu0 0.0
    %1159 = vmatpush.xpose.msra.mxu0 0.0
    %1160 = vmatpush.xpose.msra.mxu0 0.0
    %1161 = vmatpush.xpose.msra.mxu0 0.0
    %1162 = vmatpush.xpose.msra.mxu0 0.0
    %1163 = vmatpush.xpose.msra.mxu0 0.0
    %1164 = vmatpush.xpose.msra.mxu0 0.0
    %1165 = vmatpush.xpose.msra.mxu0 0.0
    %1166 = vmatpush.xpose.msra.mxu0 0.0
    %1167 = vmatpush.xpose.msra.mxu0 %v1154
    %1168 = vmatpush.xpose.msra.mxu0 %v1152
    %1169 = vmatpush.xpose.msra.mxu0 %v1150
    %1170 = vmatpush.xpose.msra.mxu0 %v1148
    %1171 = vmatpush.xpose.msra.mxu0 %v1146
    %1172 = vmatmul.f32.gmra.mxu0 %v1136
    %v1173 = vpop.f32.mrf.mxu0
    %v1174 = vadd.f32 0.0, %v1173
    %1175 = vmatmul.f32.gmra.mxu0 %v1138
    %v1176 = vpop.f32.mrf.mxu0
    %v1177 = vadd.f32 0.0, %v1176
    %1178 = vmatmul.f32.gmra.mxu0 %v1140
    %v1179 = vpop.f32.mrf.mxu0
    %v1180 = vadd.f32 0.0, %v1179
    %1181 = vmatmul.f32.gmra.mxu0 %v1142
    %v1182 = vpop.f32.mrf.mxu0
    %v1183 = vadd.f32 0.0, %v1182
    %1184 = vmatmul.f32.gmra.mxu0 %v1144
    %v1185 = vpop.f32.mrf.mxu0
    %v1186 = vadd.f32 0.0, %v1185
    %1187 = vdwg.mxu0
    %v1188 = vmul.f32 %v1174, 0.17677669
    %v1189 = vmul.f32 %v1177, 0.17677669
    %v1190 = vmul.f32 %v1180, 0.17677669
    %v1191 = vmul.f32 %v1183, 0.17677669
    %v1192 = vmul.f32 %v1186, 0.17677669
    %v1193 = vsel %vm583, %v1188, -inf
    %1194 = vmax.xlane.f32.xlu0 %v1193
    %v1195 = vpop.xlane.xlu0 %1194
    %v1196 = vsel %vm583, %v1189, -inf
    %1197 = vmax.xlane.f32.xlu0 %v1196
    %v1198 = vpop.xlane.xlu0 %1197
    %v1199 = vsel %vm583, %v1190, -inf
    %1200 = vmax.xlane.f32.xlu0 %v1199
    %v1201 = vpop.xlane.xlu0 %1200
    %v1202 = vsel %vm583, %v1191, -inf
    %1203 = vmax.xlane.f32.xlu0 %v1202
    %v1204 = vpop.xlane.xlu0 %1203
    %v1205 = vsel %vm596, %v1192, -inf
    %1206 = vmax.xlane.f32.xlu0 %v1205
    %v1207 = vpop.xlane.xlu0 %1206
    %v1208 = vsub.f32 %v1188, %v1195
    %v1209 = vsub.f32 %v1189, %v1198
    %v1210 = vsub.f32 %v1190, %v1201
    %v1211 = vsub.f32 %v1191, %v1204
    %v1212 = vsub.f32 %v1192, %v1207
    %v1213 = vmul.f32 %v1208, 1.442695
    %v1214 = vpow.pop %v1213
    %v1215 = vmul.f32 %v1209, 1.442695
    %v1216 = vpow.pop %v1215
    %v1217 = vmul.f32 %v1210, 1.442695
    %v1218 = vpow.pop %v1217
    %v1219 = vmul.f32 %v1211, 1.442695
    %v1220 = vpow.pop %v1219
    %v1221 = vmul.f32 %v1212, 1.442695
    %v1222 = vpow.pop %v1221
    %v1223 = vsel %vm583, %v1214, 0.0
    %1224 = vadd.xlane.f32.xlu0 %v1223
    %v1225 = vpop.xlane.xlu0 %1224
    %v1226 = vsel %vm583, %v1216, 0.0
    %1227 = vadd.xlane.f32.xlu0 %v1226
    %v1228 = vpop.xlane.xlu0 %1227
    %v1229 = vsel %vm583, %v1218, 0.0
    %1230 = vadd.xlane.f32.xlu0 %v1229
    %v1231 = vpop.xlane.xlu0 %1230
    %v1232 = vsel %vm583, %v1220, 0.0
    %1233 = vadd.xlane.f32.xlu0 %v1232
    %v1234 = vpop.xlane.xlu0 %1233
    %v1235 = vsel %vm596, %v1222, 0.0
    %1236 = vadd.xlane.f32.xlu0 %v1235
    %v1237 = vpop.xlane.xlu0 %1236
    %v1238 = vrcp.pop %v1225
    %v1239 = vmul.f32 %v1225, %v1238
    %v1240 = vsub.f32 1.0, %v1239
    %v1241 = vmul.f32 %v1238, %v1240
    %v1242 = vadd.f32 %v1238, %v1241
    %vm1243 = vweird.f32 %v1225
    %vm1244 = vweird.f32 %v1238
    %vm1245 = vmor %vm1243, %vm1244
    %v1246 = vsel %vm1245, %v1238, %v1242
    %v1247 = vand.u32 2147483647, %v1225
    %vm1248 = vcmp.eq.f32.partialorder %v1247, 8.507059e+37
    %v1249 = vand.u32 %v1225, 2147483648
    %v1250 = vor.u32 1.1754944e-38, %v1249
    %v1251 = vsel %vm1248, %v1250, %v1246
    %v1252 = vmul.f32 %v1214, %v1251
    %v1253 = vrcp.pop %v1228
    %v1254 = vmul.f32 %v1228, %v1253
    %v1255 = vsub.f32 1.0, %v1254
    %v1256 = vmul.f32 %v1253, %v1255
    %v1257 = vadd.f32 %v1253, %v1256
    %vm1258 = vweird.f32 %v1228
    %vm1259 = vweird.f32 %v1253
    %vm1260 = vmor %vm1258, %vm1259
    %v1261 = vsel %vm1260, %v1253, %v1257
    %v1262 = vand.u32 2147483647, %v1228
    %vm1263 = vcmp.eq.f32.partialorder %v1262, 8.507059e+37
    %v1264 = vand.u32 %v1228, 2147483648
    %v1265 = vor.u32 1.1754944e-38, %v1264
    %v1266 = vsel %vm1263, %v1265, %v1261
    %v1267 = vmul.f32 %v1216, %v1266
    %v1268 = vrcp.pop %v1231
    %v1269 = vmul.f32 %v1231, %v1268
    %v1270 = vsub.f32 1.0, %v1269
    %v1271 = vmul.f32 %v1268, %v1270
    %v1272 = vadd.f32 %v1268, %v1271
    %vm1273 = vweird.f32 %v1231
    %vm1274 = vweird.f32 %v1268
    %vm1275 = vmor %vm1273, %vm1274
    %v1276 = vsel %vm1275, %v1268, %v1272
    %v1277 = vand.u32 2147483647, %v1231
    %vm1278 = vcmp.eq.f32.partialorder %v1277, 8.507059e+37
    %v1279 = vand.u32 %v1231, 2147483648
    %v1280 = vor.u32 1.1754944e-38, %v1279
    %v1281 = vsel %vm1278, %v1280, %v1276
    %v1282 = vmul.f32 %v1218, %v1281
    %v1283 = vrcp.pop %v1234
    %v1284 = vmul.f32 %v1234, %v1283
    %v1285 = vsub.f32 1.0, %v1284
    %v1286 = vmul.f32 %v1283, %v1285
    %v1287 = vadd.f32 %v1283, %v1286
    %vm1288 = vweird.f32 %v1234
    %vm1289 = vweird.f32 %v1283
    %vm1290 = vmor %vm1288, %vm1289
    %v1291 = vsel %vm1290, %v1283, %v1287
    %v1292 = vand.u32 2147483647, %v1234
    %vm1293 = vcmp.eq.f32.partialorder %v1292, 8.507059e+37
    %v1294 = vand.u32 %v1234, 2147483648
    %v1295 = vor.u32 1.1754944e-38, %v1294
    %v1296 = vsel %vm1293, %v1295, %v1291
    %v1297 = vmul.f32 %v1220, %v1296
    %v1298 = vrcp.pop %v1237
    %v1299 = vmul.f32 %v1237, %v1298
    %v1300 = vsub.f32 1.0, %v1299
    %v1301 = vmul.f32 %v1298, %v1300
    %v1302 = vadd.f32 %v1298, %v1301
    %vm1303 = vweird.f32 %v1237
    %vm1304 = vweird.f32 %v1298
    %vm1305 = vmor %vm1303, %vm1304
    %v1306 = vsel %vm1305, %v1298, %v1302
    %v1307 = vand.u32 2147483647, %v1237
    %vm1308 = vcmp.eq.f32.partialorder %v1307, 8.507059e+37
    %v1309 = vand.u32 %v1237, 2147483648
    %v1310 = vor.u32 1.1754944e-38, %v1309
    %v1311 = vsel %vm1308, %v1310, %v1306
    %v1312 = vmul.f32 %v1222, %v1311
    %1313 = vrot.lane.b32.xlu0 %v501, 112
    %v1314 = vpop.permute.xlu0 %1313
    %1315 = vrot.lane.b32.xlu0 %v504, 112
    %v1316 = vpop.permute.xlu0 %1315
    %1317 = vrot.lane.b32.xlu0 %v507, 112
    %v1318 = vpop.permute.xlu0 %1317
    %1319 = vrot.lane.b32.xlu0 %v510, 112
    %v1320 = vpop.permute.xlu0 %1319
    %1321 = vrot.lane.b32.xlu0 %v513, 112
    %v1322 = vpop.permute.xlu0 %1321
    %v1328 = vsel %vm583, %v1252, 0
    %v1331 = vsel %vm583, %v1267, 0
    %v1334 = vsel %vm583, %v1282, 0
    %v1337 = vsel %vm583, %v1297, 0
    %v1340 = vsel %vm583, %v1312, 0
    %v1342 = vsel %vm720, %v1322, 0
    %1344 = vmatpush.msra.mxu0 0.0
    %1345 = vmatpush.msra.mxu0 0.0
    %1346 = vmatpush.msra.mxu0 0.0
    %1347 = vmatpush.msra.mxu0 0.0
    %1348 = vmatpush.msra.mxu0 0.0
    %1349 = vmatpush.msra.mxu0 0.0
    %1350 = vmatpush.msra.mxu0 0.0
    %1351 = vmatpush.msra.mxu0 0.0
    %1352 = vmatpush.msra.mxu0 0.0
    %1353 = vmatpush.msra.mxu0 0.0
    %1354 = vmatpush.msra.mxu0 0.0
    %1355 = vmatpush.msra.mxu0 %v1342
    %1356 = vmatpush.msra.mxu0 %v1320
    %1357 = vmatpush.msra.mxu0 %v1318
    %1358 = vmatpush.msra.mxu0 %v1316
    %1359 = vmatpush.msra.mxu0 %v1314
    %1360 = vmatmul.f32.gmra.mxu0 %v1328
    %v1361 = vpop.f32.mrf.mxu0
    %v1362 = vadd.f32 0.0, %v1361
    %1363 = vmatmul.f32.gmra.mxu0 %v1331
    %v1364 = vpop.f32.mrf.mxu0
    %v1365 = vadd.f32 0.0, %v1364
    %1366 = vmatmul.f32.gmra.mxu0 %v1334
    %v1367 = vpop.f32.mrf.mxu0
    %v1368 = vadd.f32 0.0, %v1367
    %1369 = vmatmul.f32.gmra.mxu0 %v1337
    %v1370 = vpop.f32.mrf.mxu0
    %v1371 = vadd.f32 0.0, %v1370
    %1372 = vmatmul.f32.gmra.mxu0 %v1340
    %v1373 = vpop.f32.mrf.mxu0
    %v1374 = vadd.f32 0.0, %v1373
    %1375 = vdwg.mxu0
    %v1376 = vld [vmem:[#allocation14 + $0x10] sm:$0xff]
    %v1378 = vsel %vm515, %v1362, 0
    %v1381 = vsel %vm515, %v1365, 0
    %v1384 = vsel %vm515, %v1368, 0
    %v1387 = vsel %vm515, %v1371, 0
    %v1390 = vsel %vm515, %v1374, 0
    %1392 = vmatpush.msra.mxu0 0.0
    %1393 = vmatpush.msra.mxu0 0.0
    %1394 = vmatpush.msra.mxu0 0.0
    %1395 = vmatpush.msra.mxu0 0.0
    %1396 = vmatpush.msra.mxu0 0.0
    %1397 = vmatpush.msra.mxu0 0.0
    %1398 = vmatpush.msra.mxu0 0.0
    %1399 = vmatpush.msra.mxu0 0.0
    %1400 = vmatpush.msra.mxu0 0.0
    %1401 = vmatpush.msra.mxu0 0.0
    %1402 = vmatpush.msra.mxu0 0.0
    %1403 = vmatpush.msra.mxu0 0.0
    %1404 = vmatpush.msra.mxu0 0.0
    %1405 = vmatpush.msra.mxu0 0.0
    %1406 = vmatpush.msra.mxu0 0.0
    %1407 = vmatpush.msra.mxu0 %v1376
    %1408 = vmatmul.f32.gmra.mxu0 %v1378
    %v1409 = vpop.f32.mrf.mxu0
    %v1410 = vadd.f32 0.0, %v1409
    %1411 = vmatmul.f32.gmra.mxu0 %v1381
    %v1412 = vpop.f32.mrf.mxu0
    %v1413 = vadd.f32 0.0, %v1412
    %1414 = vmatmul.f32.gmra.mxu0 %v1384
    %v1415 = vpop.f32.mrf.mxu0
    %v1416 = vadd.f32 0.0, %v1415
    %1417 = vmatmul.f32.gmra.mxu0 %v1387
    %v1418 = vpop.f32.mrf.mxu0
    %v1419 = vadd.f32 0.0, %v1418
    %1420 = vmatmul.f32.gmra.mxu0 %v1390
    %v1421 = vpop.f32.mrf.mxu0
    %v1422 = vadd.f32 0.0, %v1421
    %1423 = vdwg.mxu0
    %v1424 = vadd.f32 %v1102, %v1410
    %v1425 = vadd.f32 %v1105, %v1413
    %v1426 = vadd.f32 %v1108, %v1416
    %v1427 = vadd.f32 %v1111, %v1419
    %v1428 = vadd.f32 %v1114, %v1422
    %1429 = vrot.lane.b32.xlu0 %v413, 104
    %v1430 = vpop.permute.xlu0 %1429
    %1431 = vrot.lane.b32.xlu0 %v416, 104
    %v1432 = vpop.permute.xlu0 %1431
    %1433 = vrot.lane.b32.xlu0 %v419, 104
    %v1434 = vpop.permute.xlu0 %1433
    %1435 = vrot.lane.b32.xlu0 %v422, 104
    %v1436 = vpop.permute.xlu0 %1435
    %1437 = vrot.lane.b32.xlu0 %v425, 104
    %v1438 = vpop.permute.xlu0 %1437
    %1439 = vrot.lane.b32.xlu0 %v457, 104
    %v1440 = vpop.permute.xlu0 %1439
    %1441 = vrot.lane.b32.xlu0 %v460, 104
    %v1442 = vpop.permute.xlu0 %1441
    %1443 = vrot.lane.b32.xlu0 %v463, 104
    %v1444 = vpop.permute.xlu0 %1443
    %1445 = vrot.lane.b32.xlu0 %v466, 104
    %v1446 = vpop.permute.xlu0 %1445
    %1447 = vrot.lane.b32.xlu0 %v469, 104
    %v1448 = vpop.permute.xlu0 %1447
    %v1449 = vsel %vm515, %v1430, 0
    %v1451 = vsel %vm515, %v1432, 0
    %v1453 = vsel %vm515, %v1434, 0
    %v1455 = vsel %vm515, %v1436, 0
    %v1457 = vsel %vm515, %v1438, 0
    %v1459 = vsel %vm515, %v1440, 0
    %v1461 = vsel %vm515, %v1442, 0
    %v1463 = vsel %vm515, %v1444, 0
    %v1465 = vsel %vm515, %v1446, 0
    %v1467 = vsel %vm515, %v1448, 0
    %1469 = vmatpush.xpose.msra.mxu0 0.0
    %1470 = vmatpush.xpose.msra.mxu0 0.0
    %1471 = vmatpush.xpose.msra.mxu0 0.0
    %1472 = vmatpush.xpose.msra.mxu0 0.0
    %1473 = vmatpush.xpose.msra.mxu0 0.0
    %1474 = vmatpush.xpose.msra.mxu0 0.0
    %1475 = vmatpush.xpose.msra.mxu0 0.0
    %1476 = vmatpush.xpose.msra.mxu0 0.0
    %1477 = vmatpush.xpose.msra.mxu0 0.0
    %1478 = vmatpush.xpose.msra.mxu0 0.0
    %1479 = vmatpush.xpose.msra.mxu0 0.0
    %1480 = vmatpush.xpose.msra.mxu0 %v1467
    %1481 = vmatpush.xpose.msra.mxu0 %v1465
    %1482 = vmatpush.xpose.msra.mxu0 %v1463
    %1483 = vmatpush.xpose.msra.mxu0 %v1461
    %1484 = vmatpush.xpose.msra.mxu0 %v1459
    %1485 = vmatmul.f32.gmra.mxu0 %v1449
    %v1486 = vpop.f32.mrf.mxu0
    %v1487 = vadd.f32 0.0, %v1486
    %1488 = vmatmul.f32.gmra.mxu0 %v1451
    %v1489 = vpop.f32.mrf.mxu0
    %v1490 = vadd.f32 0.0, %v1489
    %1491 = vmatmul.f32.gmra.mxu0 %v1453
    %v1492 = vpop.f32.mrf.mxu0
    %v1493 = vadd.f32 0.0, %v1492
    %1494 = vmatmul.f32.gmra.mxu0 %v1455
    %v1495 = vpop.f32.mrf.mxu0
    %v1496 = vadd.f32 0.0, %v1495
    %1497 = vmatmul.f32.gmra.mxu0 %v1457
    %v1498 = vpop.f32.mrf.mxu0
    %v1499 = vadd.f32 0.0, %v1498
    %1500 = vdwg.mxu0
    %v1501 = vmul.f32 %v1487, 0.17677669
    %v1502 = vmul.f32 %v1490, 0.17677669
    %v1503 = vmul.f32 %v1493, 0.17677669
    %v1504 = vmul.f32 %v1496, 0.17677669
    %v1505 = vmul.f32 %v1499, 0.17677669
    %v1506 = vsel %vm583, %v1501, -inf
    %1507 = vmax.xlane.f32.xlu0 %v1506
    %v1508 = vpop.xlane.xlu0 %1507
    %v1509 = vsel %vm583, %v1502, -inf
    %1510 = vmax.xlane.f32.xlu0 %v1509
    %v1511 = vpop.xlane.xlu0 %1510
    %v1512 = vsel %vm583, %v1503, -inf
    %1513 = vmax.xlane.f32.xlu0 %v1512
    %v1514 = vpop.xlane.xlu0 %1513
    %v1515 = vsel %vm583, %v1504, -inf
    %1516 = vmax.xlane.f32.xlu0 %v1515
    %v1517 = vpop.xlane.xlu0 %1516
    %v1518 = vsel %vm596, %v1505, -inf
    %1519 = vmax.xlane.f32.xlu0 %v1518
    %v1520 = vpop.xlane.xlu0 %1519
    %v1521 = vsub.f32 %v1501, %v1508
    %v1522 = vsub.f32 %v1502, %v1511
    %v1523 = vsub.f32 %v1503, %v1514
    %v1524 = vsub.f32 %v1504, %v1517
    %v1525 = vsub.f32 %v1505, %v1520
    %v1526 = vmul.f32 %v1521, 1.442695
    %v1527 = vpow.pop %v1526
    %v1528 = vmul.f32 %v1522, 1.442695
    %v1529 = vpow.pop %v1528
    %v1530 = vmul.f32 %v1523, 1.442695
    %v1531 = vpow.pop %v1530
    %v1532 = vmul.f32 %v1524, 1.442695
    %v1533 = vpow.pop %v1532
    %v1534 = vmul.f32 %v1525, 1.442695
    %v1535 = vpow.pop %v1534
    %v1536 = vsel %vm583, %v1527, 0.0
    %1537 = vadd.xlane.f32.xlu0 %v1536
    %v1538 = vpop.xlane.xlu0 %1537
    %v1539 = vsel %vm583, %v1529, 0.0
    %1540 = vadd.xlane.f32.xlu0 %v1539
    %v1541 = vpop.xlane.xlu0 %1540
    %v1542 = vsel %vm583, %v1531, 0.0
    %1543 = vadd.xlane.f32.xlu0 %v1542
    %v1544 = vpop.xlane.xlu0 %1543
    %v1545 = vsel %vm583, %v1533, 0.0
    %1546 = vadd.xlane.f32.xlu0 %v1545
    %v1547 = vpop.xlane.xlu0 %1546
    %v1548 = vsel %vm596, %v1535, 0.0
    %1549 = vadd.xlane.f32.xlu0 %v1548
    %v1550 = vpop.xlane.xlu0 %1549
    %v1551 = vrcp.pop %v1538
    %v1552 = vmul.f32 %v1538, %v1551
    %v1553 = vsub.f32 1.0, %v1552
    %v1554 = vmul.f32 %v1551, %v1553
    %v1555 = vadd.f32 %v1551, %v1554
    %vm1556 = vweird.f32 %v1538
    %vm1557 = vweird.f32 %v1551
    %vm1558 = vmor %vm1556, %vm1557
    %v1559 = vsel %vm1558, %v1551, %v1555
    %v1560 = vand.u32 2147483647, %v1538
    %vm1561 = vcmp.eq.f32.partialorder %v1560, 8.507059e+37
    %v1562 = vand.u32 %v1538, 2147483648
    %v1563 = vor.u32 1.1754944e-38, %v1562
    %v1564 = vsel %vm1561, %v1563, %v1559
    %v1565 = vmul.f32 %v1527, %v1564
    %v1566 = vrcp.pop %v1541
    %v1567 = vmul.f32 %v1541, %v1566
    %v1568 = vsub.f32 1.0, %v1567
    %v1569 = vmul.f32 %v1566, %v1568
    %v1570 = vadd.f32 %v1566, %v1569
    %vm1571 = vweird.f32 %v1541
    %vm1572 = vweird.f32 %v1566
    %vm1573 = vmor %vm1571, %vm1572
    %v1574 = vsel %vm1573, %v1566, %v1570
    %v1575 = vand.u32 2147483647, %v1541
    %vm1576 = vcmp.eq.f32.partialorder %v1575, 8.507059e+37
    %v1577 = vand.u32 %v1541, 2147483648
    %v1578 = vor.u32 1.1754944e-38, %v1577
    %v1579 = vsel %vm1576, %v1578, %v1574
    %v1580 = vmul.f32 %v1529, %v1579
    %v1581 = vrcp.pop %v1544
    %v1582 = vmul.f32 %v1544, %v1581
    %v1583 = vsub.f32 1.0, %v1582
    %v1584 = vmul.f32 %v1581, %v1583
    %v1585 = vadd.f32 %v1581, %v1584
    %vm1586 = vweird.f32 %v1544
    %vm1587 = vweird.f32 %v1581
    %vm1588 = vmor %vm1586, %vm1587
    %v1589 = vsel %vm1588, %v1581, %v1585
    %v1590 = vand.u32 2147483647, %v1544
    %vm1591 = vcmp.eq.f32.partialorder %v1590, 8.507059e+37
    %v1592 = vand.u32 %v1544, 2147483648
    %v1593 = vor.u32 1.1754944e-38, %v1592
    %v1594 = vsel %vm1591, %v1593, %v1589
    %v1595 = vmul.f32 %v1531, %v1594
    %v1596 = vrcp.pop %v1547
    %v1597 = vmul.f32 %v1547, %v1596
    %v1598 = vsub.f32 1.0, %v1597
    %v1599 = vmul.f32 %v1596, %v1598
    %v1600 = vadd.f32 %v1596, %v1599
    %vm1601 = vweird.f32 %v1547
    %vm1602 = vweird.f32 %v1596
    %vm1603 = vmor %vm1601, %vm1602
    %v1604 = vsel %vm1603, %v1596, %v1600
    %v1605 = vand.u32 2147483647, %v1547
    %vm1606 = vcmp.eq.f32.partialorder %v1605, 8.507059e+37
    %v1607 = vand.u32 %v1547, 2147483648
    %v1608 = vor.u32 1.1754944e-38, %v1607
    %v1609 = vsel %vm1606, %v1608, %v1604
    %v1610 = vmul.f32 %v1533, %v1609
    %v1611 = vrcp.pop %v1550
    %v1612 = vmul.f32 %v1550, %v1611
    %v1613 = vsub.f32 1.0, %v1612
    %v1614 = vmul.f32 %v1611, %v1613
    %v1615 = vadd.f32 %v1611, %v1614
    %vm1616 = vweird.f32 %v1550
    %vm1617 = vweird.f32 %v1611
    %vm1618 = vmor %vm1616, %vm1617
    %v1619 = vsel %vm1618, %v1611, %v1615
    %v1620 = vand.u32 2147483647, %v1550
    %vm1621 = vcmp.eq.f32.partialorder %v1620, 8.507059e+37
    %v1622 = vand.u32 %v1550, 2147483648
    %v1623 = vor.u32 1.1754944e-38, %v1622
    %v1624 = vsel %vm1621, %v1623, %v1619
    %v1625 = vmul.f32 %v1535, %v1624
    %1626 = vrot.lane.b32.xlu0 %v501, 104
    %v1627 = vpop.permute.xlu0 %1626
    %1628 = vrot.lane.b32.xlu0 %v504, 104
    %v1629 = vpop.permute.xlu0 %1628
    %1630 = vrot.lane.b32.xlu0 %v507, 104
    %v1631 = vpop.permute.xlu0 %1630
    %1632 = vrot.lane.b32.xlu0 %v510, 104
    %v1633 = vpop.permute.xlu0 %1632
    %1634 = vrot.lane.b32.xlu0 %v513, 104
    %v1635 = vpop.permute.xlu0 %1634
    %v1641 = vsel %vm583, %v1565, 0
    %v1644 = vsel %vm583, %v1580, 0
    %v1647 = vsel %vm583, %v1595, 0
    %v1650 = vsel %vm583, %v1610, 0
    %v1653 = vsel %vm583, %v1625, 0
    %v1655 = vsel %vm720, %v1635, 0
    %1657 = vmatpush.msra.mxu0 0.0
    %1658 = vmatpush.msra.mxu0 0.0
    %1659 = vmatpush.msra.mxu0 0.0
    %1660 = vmatpush.msra.mxu0 0.0
    %1661 = vmatpush.msra.mxu0 0.0
    %1662 = vmatpush.msra.mxu0 0.0
    %1663 = vmatpush.msra.mxu0 0.0
    %1664 = vmatpush.msra.mxu0 0.0
    %1665 = vmatpush.msra.mxu0 0.0
    %1666 = vmatpush.msra.mxu0 0.0
    %1667 = vmatpush.msra.mxu0 0.0
    %1668 = vmatpush.msra.mxu0 %v1655
    %1669 = vmatpush.msra.mxu0 %v1633
    %1670 = vmatpush.msra.mxu0 %v1631
    %1671 = vmatpush.msra.mxu0 %v1629
    %1672 = vmatpush.msra.mxu0 %v1627
    %1673 = vmatmul.f32.gmra.mxu0 %v1641
    %v1674 = vpop.f32.mrf.mxu0
    %v1675 = vadd.f32 0.0, %v1674
    %1676 = vmatmul.f32.gmra.mxu0 %v1644
    %v1677 = vpop.f32.mrf.mxu0
    %v1678 = vadd.f32 0.0, %v1677
    %1679 = vmatmul.f32.gmra.mxu0 %v1647
    %v1680 = vpop.f32.mrf.mxu0
    %v1681 = vadd.f32 0.0, %v1680
    %1682 = vmatmul.f32.gmra.mxu0 %v1650
    %v1683 = vpop.f32.mrf.mxu0
    %v1684 = vadd.f32 0.0, %v1683
    %1685 = vmatmul.f32.gmra.mxu0 %v1653
    %v1686 = vpop.f32.mrf.mxu0
    %v1687 = vadd.f32 0.0, %v1686
    %1688 = vdwg.mxu0
    %v1689 = vld [vmem:[#allocation14 + $0x18] sm:$0xff]
    %v1691 = vsel %vm515, %v1675, 0
    %v1694 = vsel %vm515, %v1678, 0
    %v1697 = vsel %vm515, %v1681, 0
    %v1700 = vsel %vm515, %v1684, 0
    %v1703 = vsel %vm515, %v1687, 0
    %1705 = vmatpush.msra.mxu0 0.0
    %1706 = vmatpush.msra.mxu0 0.0
    %1707 = vmatpush.msra.mxu0 0.0
    %1708 = vmatpush.msra.mxu0 0.0
    %1709 = vmatpush.msra.mxu0 0.0
    %1710 = vmatpush.msra.mxu0 0.0
    %1711 = vmatpush.msra.mxu0 0.0
    %1712 = vmatpush.msra.mxu0 0.0
    %1713 = vmatpush.msra.mxu0 0.0
    %1714 = vmatpush.msra.mxu0 0.0
    %1715 = vmatpush.msra.mxu0 0.0
    %1716 = vmatpush.msra.mxu0 0.0
    %1717 = vmatpush.msra.mxu0 0.0
    %1718 = vmatpush.msra.mxu0 0.0
    %1719 = vmatpush.msra.mxu0 0.0
    %1720 = vmatpush.msra.mxu0 %v1689
    %1721 = vmatmul.f32.gmra.mxu0 %v1691
    %v1722 = vpop.f32.mrf.mxu0
    %v1723 = vadd.f32 0.0, %v1722
    %1724 = vmatmul.f32.gmra.mxu0 %v1694
    %v1725 = vpop.f32.mrf.mxu0
    %v1726 = vadd.f32 0.0, %v1725
    %1727 = vmatmul.f32.gmra.mxu0 %v1697
    %v1728 = vpop.f32.mrf.mxu0
    %v1729 = vadd.f32 0.0, %v1728
    %1730 = vmatmul.f32.gmra.mxu0 %v1700
    %v1731 = vpop.f32.mrf.mxu0
    %v1732 = vadd.f32 0.0, %v1731
    %1733 = vmatmul.f32.gmra.mxu0 %v1703
    %v1734 = vpop.f32.mrf.mxu0
    %v1735 = vadd.f32 0.0, %v1734
    %1736 = vdwg.mxu0
    %v1737 = vadd.f32 %v1424, %v1723
    %v1738 = vadd.f32 %v1425, %v1726
    %v1739 = vadd.f32 %v1426, %v1729
    %v1740 = vadd.f32 %v1427, %v1732
    %v1741 = vadd.f32 %v1428, %v1735
    %v1742 = vld [vmem:[#allocation15] sm:$0x1]
    %v1744 = vperm.slane %v1742, 0
    %v1746 = vadd.f32 %v1737, %v1744
    %v1747 = vadd.f32 %v1738, %v1744
    %v1748 = vadd.f32 %v1739, %v1744
    %v1749 = vadd.f32 %v1740, %v1744
    %v1750 = vadd.f32 %v1741, %v1744
    %v1751 = vmax.f32 %v1746, 0.0
    %v1752 = vmax.f32 %v1747, 0.0
    %v1753 = vmax.f32 %v1748, 0.0
    %v1754 = vmax.f32 %v1749, 0.0
    %v1755 = vmax.f32 %v1750, 0.0
    %v1756 = vld [vmem:[#allocation17] sm:$0xff]
    %v1757 = vld [vmem:[#allocation17 + $0x8] sm:$0xff]
    %v1758 = vld [vmem:[#allocation17 + $0x10] sm:$0xff]
    %v1759 = vld [vmem:[#allocation17 + $0x18] sm:$0xff]
    %v1760 = vld [vmem:[#allocation18] sm:$0x1]
    %v1762 = vperm.slane %v1760, 0
    %vm1764 = vcmask 261120
    %v1766 = vsel %vm1764, %v1751, 0
    %v1769 = vsel %vm1764, %v1752, 0
    %v1772 = vsel %vm1764, %v1753, 0
    %v1775 = vsel %vm1764, %v1754, 0
    %v1778 = vsel %vm1764, %v1755, 0
    %1780 = vmatpush.msra.mxu0 0.0
    %1781 = vmatpush.msra.mxu0 0.0
    %1782 = vmatpush.msra.mxu0 0.0
    %1783 = vmatpush.msra.mxu0 0.0
    %1784 = vmatpush.msra.mxu0 0.0
    %1785 = vmatpush.msra.mxu0 0.0
    %1786 = vmatpush.msra.mxu0 0.0
    %1787 = vmatpush.msra.mxu0 0.0
    %1788 = vmatpush.msra.mxu0 0.0
    %1789 = vmatpush.msra.mxu0 0.0
    %1790 = vmatpush.msra.mxu0 0.0
    %1791 = vmatpush.msra.mxu0 0.0
    %1792 = vmatpush.msra.mxu0 %v1759
    %1793 = vmatpush.msra.mxu0 %v1758
    %1794 = vmatpush.msra.mxu0 %v1757
    %1795 = vmatpush.msra.mxu0 %v1756
    %1796 = vmatmul.f32.gmra.mxu0 %v1766
    %v1797 = vpop.f32.mrf.mxu0
    %v1798 = vadd.f32 %v1762, %v1797
    %1799 = vmatmul.f32.gmra.mxu0 %v1769
    %v1800 = vpop.f32.mrf.mxu0
    %v1801 = vadd.f32 %v1762, %v1800
    %1802 = vmatmul.f32.gmra.mxu0 %v1772
    %v1803 = vpop.f32.mrf.mxu0
    %v1804 = vadd.f32 %v1762, %v1803
    %1805 = vmatmul.f32.gmra.mxu0 %v1775
    %v1806 = vpop.f32.mrf.mxu0
    %v1807 = vadd.f32 %v1762, %v1806
    %1808 = vmatmul.f32.gmra.mxu0 %v1778
    %v1809 = vpop.f32.mrf.mxu0
    %v1810 = vadd.f32 %v1762, %v1809
    %1811 = vdwg.mxu0
    %v1812 = vsel %vm1764, %v1798, -inf
    %v1813 = vsel %vm1764, %v1801, -inf
    %v1814 = vsel %vm1764, %v1804, -inf
    %v1815 = vsel %vm1764, %v1807, -inf
    %vm1816 = vcmask 257024
    %v1817 = vsel %vm1816, %v1810, -inf
    %v1818 = vmax.f32 %v1812, %v1817
    %v1819 = vmax.f32 %v1818, %v1813
    %v1820 = vmax.f32 %v1814, %v1815
    %v1821 = vmax.f32 %v1819, %v1820
    %v1822 = vrot.slane %v1821, 4
    %v1823 = vmax.f32 %v1821, %v1822
    %v1824 = vrot.slane %v1823, 2
    %v1825 = vmax.f32 %v1823, %v1824
    %v1826 = vrot.slane %v1825, 1
    %v1827 = vmax.f32 %v1825, %v1826
    %v1828 = vpack.c.bf16 %v1827, %v1827
    %v1829 = vld [vmem:[#allocation20] sm:$0xff]
    %v1830 = vld [vmem:[#allocation20 + $0x8] sm:$0xff]
    %v1831 = vld [vmem:[#allocation20 + $0x10] sm:$0xff]
    %v1832 = vld [vmem:[#allocation20 + $0x18] sm:$0xff]
    %v1833 = vld [vmem:[#allocation20 + $0x20] sm:$0xff]
    %v1834 = vld [vmem:[#allocation20 + $0x28] sm:$0xff]
    %v1835 = vld [vmem:[#allocation20 + $0x30] sm:$0xff]
    %v1836 = vld [vmem:[#allocation20 + $0x38] sm:$0xff]
    %v1837 = vld [vmem:[#allocation21] sm:$0xf]
    %v1846 = vunpack.c.l.b16 %v1829
    %v1847 = vunpack.c.h.b16 %v1829
    %v1848 = vunpack.c.l.b16 %v1830
    %v1849 = vunpack.c.h.b16 %v1830
    %v1850 = vunpack.c.l.b16 %v1831
    %v1851 = vunpack.c.h.b16 %v1831
    %v1852 = vunpack.c.l.b16 %v1832
    %v1853 = vunpack.c.h.b16 %v1832
    %v1854 = vunpack.c.l.b16 %v1833
    %v1855 = vunpack.c.h.b16 %v1833
    %v1856 = vunpack.c.l.b16 %v1834
    %v1857 = vunpack.c.h.b16 %v1834
    %v1858 = vunpack.c.l.b16 %v1835
    %v1859 = vunpack.c.h.b16 %v1835
    %v1860 = vunpack.c.l.b16 %v1836
    %v1861 = vunpack.c.h.b16 %v1836
    %v1862 = vpack.c.b16 %v1850, %v1846
    %v1863 = vpack.c.b16 %v1851, %v1847
    %v1864 = vpack.c.b16 %v1852, %v1848
    %v1865 = vpack.c.b16 %v1853, %v1849
    %v1866 = vpack.c.b16 %v1858, %v1854
    %v1867 = vpack.c.b16 %v1859, %v1855
    %v1868 = vpack.c.b16 %v1860, %v1856
    %v1869 = vpack.c.b16 %v1861, %v1857
    %v1879 = vperm.slane %v1837, 0
    %v1880 = vperm.slane %v1837, 1
    %v1881 = vperm.slane %v1837, 2
    %v1882 = vperm.slane %v1837, 3
    %v1888 = vsel %vm1764, %v1828, 0
    %1890 = vmatpush.bf16.msra.mxu0 0
    %1891 = vmatpush.bf16.msra.mxu0 0
    %1892 = vmatpush.bf16.msra.mxu0 0
    %1893 = vmatpush.bf16.msra.mxu0 0
    %1894 = vmatpush.bf16.msra.mxu0 0
    %1895 = vmatpush.bf16.msra.mxu0 0
    %1896 = vmatpush.bf16.msra.mxu0 %v1866
    %1897 = vmatpush.bf16.msra.mxu0 %v1862
    %1898 = vmatmul.bf16.gmra.mxu0 %v1888
    %v1899 = vpop.f32.mrf.mxu0
    %v1900 = vadd.f32 %v1879, %v1899
    %v1901 = vpop.f32.mrf.mxu0
    %1902 = vdwg.mxu0
    %1903 = vmatpush.bf16.msra.mxu0 0
    %1904 = vmatpush.bf16.msra.mxu0 0
    %1905 = vmatpush.bf16.msra.mxu0 0
    %1906 = vmatpush.bf16.msra.mxu0 0
    %1907 = vmatpush.bf16.msra.mxu0 0
    %1908 = vmatpush.bf16.msra.mxu0 0
    %1909 = vmatpush.bf16.msra.mxu0 %v1867
    %1910 = vmatpush.bf16.msra.mxu0 %v1863
    %1911 = vmatmul.bf16.gmra.mxu0 %v1888
    %v1912 = vpop.f32.mrf.mxu0
    %v1913 = vadd.f32 %v1880, %v1912
    %v1914 = vpop.f32.mrf.mxu0
    %1915 = vdwg.mxu0
    %1916 = vmatpush.bf16.msra.mxu0 0
    %1917 = vmatpush.bf16.msra.mxu0 0
    %1918 = vmatpush.bf16.msra.mxu0 0
    %1919 = vmatpush.bf16.msra.mxu0 0
    %1920 = vmatpush.bf16.msra.mxu0 0
    %1921 = vmatpush.bf16.msra.mxu0 0
    %1922 = vmatpush.bf16.msra.mxu0 %v1868
    %1923 = vmatpush.bf16.msra.mxu0 %v1864
    %1924 = vmatmul.bf16.gmra.mxu0 %v1888
    %v1925 = vpop.f32.mrf.mxu0
    %v1926 = vadd.f32 %v1881, %v1925
    %v1927 = vpop.f32.mrf.mxu0
    %1928 = vdwg.mxu0
    %1929 = vmatpush.bf16.msra.mxu0 0
    %1930 = vmatpush.bf16.msra.mxu0 0
    %1931 = vmatpush.bf16.msra.mxu0 0
    %1932 = vmatpush.bf16.msra.mxu0 0
    %1933 = vmatpush.bf16.msra.mxu0 0
    %1934 = vmatpush.bf16.msra.mxu0 0
    %1935 = vmatpush.bf16.msra.mxu0 %v1869
    %1936 = vmatpush.bf16.msra.mxu0 %v1865
    %1937 = vmatmul.bf16.gmra.mxu0 %v1888
    %v1938 = vpop.f32.mrf.mxu0
    %v1939 = vadd.f32 %v1882, %v1938
    %v1940 = vpop.f32.mrf.mxu0
    %1941 = vdwg.mxu0
    %v1942 = vmax.f32 %v1900, 0.0
    %v1943 = vmax.f32 %v1913, 0.0
    %v1944 = vmax.f32 %v1926, 0.0
    %v1945 = vmax.f32 %v1939, 0.0
    %v1946 = vpack.c.bf16 %v1942, %v1942
    %v1947 = vpack.c.bf16 %v1943, %v1943
    %v1948 = vpack.c.bf16 %v1944, %v1944
    %v1949 = vpack.c.bf16 %v1945, %v1945
    %v1950 = vld [vmem:[#allocation23] sm:$0xff]
    %v1951 = vld [vmem:[#allocation23 + $0x8] sm:$0xff]
    %v1952 = vld [vmem:[#allocation23 + $0x10] sm:$0xff]
    %v1953 = vld [vmem:[#allocation23 + $0x18] sm:$0xff]
    %v1954 = vld [vmem:[#allocation23 + $0x20] sm:$0xf]
    %v1955 = vld [vmem:[#allocation23 + $0x24] sm:$0xff]
    %v1956 = vld [vmem:[#allocation23 + $0x2c] sm:$0xff]
    %v1957 = vld [vmem:[#allocation23 + $0x34] sm:$0xff]
    %v1958 = vld [vmem:[#allocation23 + $0x3c] sm:$0xff]
    %v1959 = vld [vmem:[#allocation23 + $0x44] sm:$0xf]
    %v1960 = vld [vmem:[#allocation23 + $0x48] sm:$0xff]
    %v1961 = vld [vmem:[#allocation23 + $0x50] sm:$0xff]
    %v1962 = vld [vmem:[#allocation23 + $0x58] sm:$0xff]
    %v1963 = vld [vmem:[#allocation23 + $0x60] sm:$0xff]
    %v1964 = vld [vmem:[#allocation23 + $0x68] sm:$0xf]
    %v1965 = vld [vmem:[#allocation23 + $0x6c] sm:$0xff]
    %v1966 = vld [vmem:[#allocation23 + $0x74] sm:$0xff]
    %v1967 = vld [vmem:[#allocation23 + $0x7c] sm:$0xff]
    %v1968 = vld [vmem:[#allocation23 + $0x84] sm:$0xff]
    %v1969 = vld [vmem:[#allocation23 + $0x8c] sm:$0xf]
    %v1970 = vld [vmem:[#allocation23 + $0x90] sm:$0xff]
    %v1971 = vld [vmem:[#allocation23 + $0x98] sm:$0xff]
    %v1972 = vld [vmem:[#allocation23 + $0xa0] sm:$0xff]
    %v1973 = vld [vmem:[#allocation23 + $0xa8] sm:$0xff]
    %v1974 = vld [vmem:[#allocation23 + $0xb0] sm:$0xf]
    %v1975 = vld [vmem:[#allocation23 + $0xb4] sm:$0xff]
    %v1976 = vld [vmem:[#allocation23 + $0xbc] sm:$0xff]
    %v1977 = vld [vmem:[#allocation23 + $0xc4] sm:$0xff]
    %v1978 = vld [vmem:[#allocation23 + $0xcc] sm:$0xff]
    %v1979 = vld [vmem:[#allocation23 + $0xd4] sm:$0xf]
    %v1980 = vld [vmem:[#allocation23 + $0xd8] sm:$0xff]
    %v1981 = vld [vmem:[#allocation23 + $0xe0] sm:$0xff]
    %v1982 = vld [vmem:[#allocation23 + $0xe8] sm:$0xff]
    %v1983 = vld [vmem:[#allocation23 + $0xf0] sm:$0xff]
    %v1984 = vld [vmem:[#allocation23 + $0xf8] sm:$0xf]
    %v1985 = vld [vmem:[#allocation23 + $0xfc] sm:$0xff]
    %v1986 = vld [vmem:[#allocation23 + $0x104] sm:$0xff]
    %v1987 = vld [vmem:[#allocation23 + $0x10c] sm:$0xff]
    %v1988 = vld [vmem:[#allocation23 + $0x114] sm:$0xff]
    %v1989 = vld [vmem:[#allocation23 + $0x11c] sm:$0xf]
    %v1990 = vld [vmem:[#allocation23 + $0x120] sm:$0xff]
    %v1991 = vld [vmem:[#allocation23 + $0x128] sm:$0xff]
    %v1992 = vld [vmem:[#allocation23 + $0x130] sm:$0xff]
    %v1993 = vld [vmem:[#allocation23 + $0x138] sm:$0xff]
    %v1994 = vld [vmem:[#allocation23 + $0x140] sm:$0xf]
    %v1995 = vld [vmem:[#allocation23 + $0x144] sm:$0xff]
    %v1996 = vld [vmem:[#allocation23 + $0x14c] sm:$0xff]
    %v1997 = vld [vmem:[#allocation23 + $0x154] sm:$0xff]
    %v1998 = vld [vmem:[#allocation23 + $0x15c] sm:$0xff]
    %v1999 = vld [vmem:[#allocation23 + $0x164] sm:$0xf]
    %v2000 = vld [vmem:[#allocation23 + $0x168] sm:$0xff]
    %v2001 = vld [vmem:[#allocation23 + $0x170] sm:$0xff]
    %v2002 = vld [vmem:[#allocation23 + $0x178] sm:$0xff]
    %v2003 = vld [vmem:[#allocation23 + $0x180] sm:$0xff]
    %v2004 = vld [vmem:[#allocation23 + $0x188] sm:$0xf]
    %v2005 = vld [vmem:[#allocation23 + $0x18c] sm:$0xff]
    %v2006 = vld [vmem:[#allocation23 + $0x194] sm:$0xff]
    %v2007 = vld [vmem:[#allocation23 + $0x19c] sm:$0xff]
    %v2008 = vld [vmem:[#allocation23 + $0x1a4] sm:$0xff]
    %v2009 = vld [vmem:[#allocation23 + $0x1ac] sm:$0xf]
    %v2010 = vld [vmem:[#allocation23 + $0x1b0] sm:$0xff]
    %v2011 = vld [vmem:[#allocation23 + $0x1b8] sm:$0xff]
    %v2012 = vld [vmem:[#allocation23 + $0x1c0] sm:$0xff]
    %v2013 = vld [vmem:[#allocation23 + $0x1c8] sm:$0xff]
    %v2014 = vld [vmem:[#allocation23 + $0x1d0] sm:$0xf]
    %v2015 = vld [vmem:[#allocation23 + $0x1d4] sm:$0xff]
    %v2016 = vld [vmem:[#allocation23 + $0x1dc] sm:$0xff]
    %v2017 = vld [vmem:[#allocation23 + $0x1e4] sm:$0xff]
    %v2018 = vld [vmem:[#allocation23 + $0x1ec] sm:$0xff]
    %v2019 = vld [vmem:[#allocation23 + $0x1f4] sm:$0xf]
    %v2020 = vld [vmem:[#allocation23 + $0x1f8] sm:$0xff]
    %v2021 = vld [vmem:[#allocation23 + $0x200] sm:$0xff]
    %v2022 = vld [vmem:[#allocation23 + $0x208] sm:$0xff]
    %v2023 = vld [vmem:[#allocation23 + $0x210] sm:$0xff]
    %v2024 = vld [vmem:[#allocation23 + $0x218] sm:$0xf]
    %v2025 = vld [vmem:[#allocation23 + $0x21c] sm:$0xff]
    %v2026 = vld [vmem:[#allocation23 + $0x224] sm:$0xff]
    %v2027 = vld [vmem:[#allocation23 + $0x22c] sm:$0xff]
    %v2028 = vld [vmem:[#allocation23 + $0x234] sm:$0xff]
    %v2029 = vld [vmem:[#allocation23 + $0x23c] sm:$0xf]
    %v2030 = vld [vmem:[#allocation23 + $0x240] sm:$0xff]
    %v2031 = vld [vmem:[#allocation23 + $0x248] sm:$0xff]
    %v2032 = vld [vmem:[#allocation23 + $0x250] sm:$0xff]
    %v2033 = vld [vmem:[#allocation23 + $0x258] sm:$0xff]
    %v2034 = vld [vmem:[#allocation23 + $0x260] sm:$0xf]
    %v2035 = vld [vmem:[#allocation23 + $0x264] sm:$0xff]
    %v2036 = vld [vmem:[#allocation23 + $0x26c] sm:$0xff]
    %v2037 = vld [vmem:[#allocation23 + $0x274] sm:$0xff]
    %v2038 = vld [vmem:[#allocation23 + $0x27c] sm:$0xff]
    %v2039 = vld [vmem:[#allocation23 + $0x284] sm:$0xf]
    %v2040 = vld [vmem:[#allocation23 + $0x288] sm:$0xff]
    %v2041 = vld [vmem:[#allocation23 + $0x290] sm:$0xff]
    %v2042 = vld [vmem:[#allocation23 + $0x298] sm:$0xff]
    %v2043 = vld [vmem:[#allocation23 + $0x2a0] sm:$0xff]
    %v2044 = vld [vmem:[#allocation23 + $0x2a8] sm:$0xf]
    %v2045 = vld [vmem:[#allocation23 + $0x2ac] sm:$0xff]
    %v2046 = vld [vmem:[#allocation23 + $0x2b4] sm:$0xff]
    %v2047 = vld [vmem:[#allocation23 + $0x2bc] sm:$0xff]
    %v2048 = vld [vmem:[#allocation23 + $0x2c4] sm:$0xff]
    %v2049 = vld [vmem:[#allocation23 + $0x2cc] sm:$0xf]
    %v2050 = vld [vmem:[#allocation23 + $0x2d0] sm:$0xff]
    %v2051 = vld [vmem:[#allocation23 + $0x2d8] sm:$0xff]
    %v2052 = vld [vmem:[#allocation23 + $0x2e0] sm:$0xff]
    %v2053 = vld [vmem:[#allocation23 + $0x2e8] sm:$0xff]
    %v2054 = vld [vmem:[#allocation23 + $0x2f0] sm:$0xf]
    %v2055 = vld [vmem:[#allocation23 + $0x2f4] sm:$0xff]
    %v2056 = vld [vmem:[#allocation23 + $0x2fc] sm:$0xff]
    %v2057 = vld [vmem:[#allocation23 + $0x304] sm:$0xff]
    %v2058 = vld [vmem:[#allocation23 + $0x30c] sm:$0xff]
    %v2059 = vld [vmem:[#allocation23 + $0x314] sm:$0xf]
    %v2060 = vld [vmem:[#allocation23 + $0x318] sm:$0xff]
    %v2061 = vld [vmem:[#allocation23 + $0x320] sm:$0xff]
    %v2062 = vld [vmem:[#allocation23 + $0x328] sm:$0xff]
    %v2063 = vld [vmem:[#allocation23 + $0x330] sm:$0xff]
    %v2064 = vld [vmem:[#allocation23 + $0x338] sm:$0xf]
    %v2065 = vld [vmem:[#allocation23 + $0x33c] sm:$0xff]
    %v2066 = vld [vmem:[#allocation23 + $0x344] sm:$0xff]
    %v2067 = vld [vmem:[#allocation23 + $0x34c] sm:$0xff]
    %v2068 = vld [vmem:[#allocation23 + $0x354] sm:$0xff]
    %v2069 = vld [vmem:[#allocation23 + $0x35c] sm:$0xf]
    %v2070 = vld [vmem:[#allocation23 + $0x360] sm:$0xff]
    %v2071 = vld [vmem:[#allocation23 + $0x368] sm:$0xff]
    %v2072 = vld [vmem:[#allocation23 + $0x370] sm:$0xff]
    %v2073 = vld [vmem:[#allocation23 + $0x378] sm:$0xff]
    %v2074 = vld [vmem:[#allocation23 + $0x380] sm:$0xf]
    %v2075 = vld [vmem:[#allocation23 + $0x384] sm:$0xff]
    %v2076 = vld [vmem:[#allocation23 + $0x38c] sm:$0xff]
    %v2077 = vld [vmem:[#allocation23 + $0x394] sm:$0xff]
    %v2078 = vld [vmem:[#allocation23 + $0x39c] sm:$0xff]
    %v2079 = vld [vmem:[#allocation23 + $0x3a4] sm:$0xf]
    %v2080 = vld [vmem:[#allocation23 + $0x3a8] sm:$0xff]
    %v2081 = vld [vmem:[#allocation23 + $0x3b0] sm:$0xff]
    %v2082 = vld [vmem:[#allocation23 + $0x3b8] sm:$0xff]
    %v2083 = vld [vmem:[#allocation23 + $0x3c0] sm:$0xff]
    %v2084 = vld [vmem:[#allocation23 + $0x3c8] sm:$0xf]
    %v2085 = vld [vmem:[#allocation23 + $0x3cc] sm:$0xff]
    %v2086 = vld [vmem:[#allocation23 + $0x3d4] sm:$0xff]
    %v2087 = vld [vmem:[#allocation23 + $0x3dc] sm:$0xff]
    %v2088 = vld [vmem:[#allocation23 + $0x3e4] sm:$0xff]
    %v2089 = vld [vmem:[#allocation23 + $0x3ec] sm:$0xf]
    %v2090 = vld [vmem:[#allocation23 + $0x3f0] sm:$0xff]
    %v2091 = vld [vmem:[#allocation23 + $0x3f8] sm:$0xff]
    %v2092 = vld [vmem:[#allocation23 + $0x400] sm:$0xff]
    %v2093 = vld [vmem:[#allocation23 + $0x408] sm:$0xff]
    %v2094 = vld [vmem:[#allocation23 + $0x410] sm:$0xf]
    %v2095 = vld [vmem:[#allocation23 + $0x414] sm:$0xff]
    %v2096 = vld [vmem:[#allocation23 + $0x41c] sm:$0xff]
    %v2097 = vld [vmem:[#allocation23 + $0x424] sm:$0xff]
    %v2098 = vld [vmem:[#allocation23 + $0x42c] sm:$0xff]
    %v2099 = vld [vmem:[#allocation23 + $0x434] sm:$0xf]
    %v2100 = vld [vmem:[#allocation23 + $0x438] sm:$0xff]
    %v2101 = vld [vmem:[#allocation23 + $0x440] sm:$0xff]
    %v2102 = vld [vmem:[#allocation23 + $0x448] sm:$0xff]
    %v2103 = vld [vmem:[#allocation23 + $0x450] sm:$0xff]
    %v2104 = vld [vmem:[#allocation23 + $0x458] sm:$0xf]
    %v2105 = vld [vmem:[#allocation23 + $0x45c] sm:$0xff]
    %v2106 = vld [vmem:[#allocation23 + $0x464] sm:$0xff]
    %v2107 = vld [vmem:[#allocation23 + $0x46c] sm:$0xff]
    %v2108 = vld [vmem:[#allocation23 + $0x474] sm:$0xff]
    %v2109 = vld [vmem:[#allocation23 + $0x47c] sm:$0xf]
    %v2110 = vld [vmem:[#allocation23 + $0x480] sm:$0xff]
    %v2111 = vld [vmem:[#allocation23 + $0x488] sm:$0xff]
    %v2112 = vld [vmem:[#allocation23 + $0x490] sm:$0xff]
    %v2113 = vld [vmem:[#allocation23 + $0x498] sm:$0xff]
    %v2114 = vld [vmem:[#allocation23 + $0x4a0] sm:$0xf]
    %v2115 = vld [vmem:[#allocation23 + $0x4a4] sm:$0xff]
    %v2116 = vld [vmem:[#allocation23 + $0x4ac] sm:$0xff]
    %v2117 = vld [vmem:[#allocation23 + $0x4b4] sm:$0xff]
    %v2118 = vld [vmem:[#allocation23 + $0x4bc] sm:$0xff]
    %v2119 = vld [vmem:[#allocation23 + $0x4c4] sm:$0xf]
    %v2120 = vld [vmem:[#allocation23 + $0x4c8] sm:$0xff]
    %v2121 = vld [vmem:[#allocation23 + $0x4d0] sm:$0xff]
    %v2122 = vld [vmem:[#allocation23 + $0x4d8] sm:$0xff]
    %v2123 = vld [vmem:[#allocation23 + $0x4e0] sm:$0xff]
    %v2124 = vld [vmem:[#allocation23 + $0x4e8] sm:$0xf]
    %v2125 = vld [vmem:[#allocation23 + $0x4ec] sm:$0xff]
    %v2126 = vld [vmem:[#allocation23 + $0x4f4] sm:$0xff]
    %v2127 = vld [vmem:[#allocation23 + $0x4fc] sm:$0xff]
    %v2128 = vld [vmem:[#allocation23 + $0x504] sm:$0xff]
    %v2129 = vld [vmem:[#allocation23 + $0x50c] sm:$0xf]
    %v2130 = vld [vmem:[#allocation23 + $0x510] sm:$0xff]
    %v2131 = vld [vmem:[#allocation23 + $0x518] sm:$0xff]
    %v2132 = vld [vmem:[#allocation23 + $0x520] sm:$0xff]
    %v2133 = vld [vmem:[#allocation23 + $0x528] sm:$0xff]
    %v2134 = vld [vmem:[#allocation23 + $0x530] sm:$0xf]
    %v2135 = vld [vmem:[#allocation23 + $0x534] sm:$0xff]
    %v2136 = vld [vmem:[#allocation23 + $0x53c] sm:$0xff]
    %v2137 = vld [vmem:[#allocation23 + $0x544] sm:$0xff]
    %v2138 = vld [vmem:[#allocation23 + $0x54c] sm:$0xff]
    %v2139 = vld [vmem:[#allocation23 + $0x554] sm:$0xf]
    %v2140 = vld [vmem:[#allocation23 + $0x558] sm:$0xff]
    %v2141 = vld [vmem:[#allocation23 + $0x560] sm:$0xff]
    %v2142 = vld [vmem:[#allocation23 + $0x568] sm:$0xff]
    %v2143 = vld [vmem:[#allocation23 + $0x570] sm:$0xff]
    %v2144 = vld [vmem:[#allocation23 + $0x578] sm:$0xf]
    %v2145 = vld [vmem:[#allocation23 + $0x57c] sm:$0xff]
    %v2146 = vld [vmem:[#allocation23 + $0x584] sm:$0xff]
    %v2147 = vld [vmem:[#allocation23 + $0x58c] sm:$0xff]
    %v2148 = vld [vmem:[#allocation23 + $0x594] sm:$0xff]
    %v2149 = vld [vmem:[#allocation23 + $0x59c] sm:$0xf]
    %v2150 = vld [vmem:[#allocation23 + $0x5a0] sm:$0xff]
    %v2151 = vld [vmem:[#allocation23 + $0x5a8] sm:$0xff]
    %v2152 = vld [vmem:[#allocation23 + $0x5b0] sm:$0xff]
    %v2153 = vld [vmem:[#allocation23 + $0x5b8] sm:$0xff]
    %v2154 = vld [vmem:[#allocation23 + $0x5c0] sm:$0xf]
    %v2155 = vld [vmem:[#allocation23 + $0x5c4] sm:$0xff]
    %v2156 = vld [vmem:[#allocation23 + $0x5cc] sm:$0xff]
    %v2157 = vld [vmem:[#allocation23 + $0x5d4] sm:$0xff]
    %v2158 = vld [vmem:[#allocation23 + $0x5dc] sm:$0xff]
    %v2159 = vld [vmem:[#allocation23 + $0x5e4] sm:$0xf]
    %v2160 = vld [vmem:[#allocation23 + $0x5e8] sm:$0xff]
    %v2161 = vld [vmem:[#allocation23 + $0x5f0] sm:$0xff]
    %v2162 = vld [vmem:[#allocation23 + $0x5f8] sm:$0xff]
    %v2163 = vld [vmem:[#allocation23 + $0x600] sm:$0xff]
    %v2164 = vld [vmem:[#allocation23 + $0x608] sm:$0xf]
    %v2165 = vld [vmem:[#allocation23 + $0x60c] sm:$0xff]
    %v2166 = vld [vmem:[#allocation23 + $0x614] sm:$0xff]
    %v2167 = vld [vmem:[#allocation23 + $0x61c] sm:$0xff]
    %v2168 = vld [vmem:[#allocation23 + $0x624] sm:$0xff]
    %v2169 = vld [vmem:[#allocation23 + $0x62c] sm:$0xf]
    %v2170 = vld [vmem:[#allocation23 + $0x630] sm:$0xff]
    %v2171 = vld [vmem:[#allocation23 + $0x638] sm:$0xff]
    %v2172 = vld [vmem:[#allocation23 + $0x640] sm:$0xff]
    %v2173 = vld [vmem:[#allocation23 + $0x648] sm:$0xff]
    %v2174 = vld [vmem:[#allocation23 + $0x650] sm:$0xf]
    %v2175 = vld [vmem:[#allocation23 + $0x654] sm:$0xff]
    %v2176 = vld [vmem:[#allocation23 + $0x65c] sm:$0xff]
    %v2177 = vld [vmem:[#allocation23 + $0x664] sm:$0xff]
    %v2178 = vld [vmem:[#allocation23 + $0x66c] sm:$0xff]
    %v2179 = vld [vmem:[#allocation23 + $0x674] sm:$0xf]
    %v2180 = vld [vmem:[#allocation23 + $0x678] sm:$0xff]
    %v2181 = vld [vmem:[#allocation23 + $0x680] sm:$0xff]
    %v2182 = vld [vmem:[#allocation23 + $0x688] sm:$0xff]
    %v2183 = vld [vmem:[#allocation23 + $0x690] sm:$0xff]
    %v2184 = vld [vmem:[#allocation23 + $0x698] sm:$0xf]
    %v2185 = vld [vmem:[#allocation23 + $0x69c] sm:$0xff]
    %v2186 = vld [vmem:[#allocation23 + $0x6a4] sm:$0xff]
    %v2187 = vld [vmem:[#allocation23 + $0x6ac] sm:$0xff]
    %v2188 = vld [vmem:[#allocation23 + $0x6b4] sm:$0xff]
    %v2189 = vld [vmem:[#allocation23 + $0x6bc] sm:$0xf]
    %v2190 = vld [vmem:[#allocation23 + $0x6c0] sm:$0xff]
    %v2191 = vld [vmem:[#allocation23 + $0x6c8] sm:$0xff]
    %v2192 = vld [vmem:[#allocation23 + $0x6d0] sm:$0xff]
    %v2193 = vld [vmem:[#allocation23 + $0x6d8] sm:$0xff]
    %v2194 = vld [vmem:[#allocation23 + $0x6e0] sm:$0xf]
    %v2195 = vld [vmem:[#allocation23 + $0x6e4] sm:$0xff]
    %v2196 = vld [vmem:[#allocation23 + $0x6ec] sm:$0xff]
    %v2197 = vld [vmem:[#allocation23 + $0x6f4] sm:$0xff]
    %v2198 = vld [vmem:[#allocation23 + $0x6fc] sm:$0xff]
    %v2199 = vld [vmem:[#allocation23 + $0x704] sm:$0xf]
    %v2200 = vld [vmem:[#allocation24] sm:$0xff]
    %v2201 = vld [vmem:[#allocation24 + $0x8] sm:$0x1]
    %v2452 = vunpack.c.l.b16 %v1950
    %v2453 = vunpack.c.h.b16 %v1950
    %v2454 = vunpack.c.l.b16 %v1951
    %v2455 = vunpack.c.h.b16 %v1951
    %v2456 = vunpack.c.l.b16 %v1952
    %v2457 = vunpack.c.h.b16 %v1952
    %v2458 = vunpack.c.l.b16 %v1953
    %v2459 = vunpack.c.h.b16 %v1953
    %v2460 = vunpack.c.l.b16 %v1954
    %v2461 = vunpack.c.l.b16 %v1955
    %v2462 = vunpack.c.h.b16 %v1955
    %v2463 = vunpack.c.l.b16 %v1956
    %v2464 = vunpack.c.h.b16 %v1956
    %v2465 = vunpack.c.l.b16 %v1957
    %v2466 = vunpack.c.h.b16 %v1957
    %v2467 = vunpack.c.l.b16 %v1958
    %v2468 = vunpack.c.h.b16 %v1958
    %v2469 = vunpack.c.l.b16 %v1959
    %v2470 = vunpack.c.l.b16 %v1960
    %v2471 = vunpack.c.h.b16 %v1960
    %v2472 = vunpack.c.l.b16 %v1961
    %v2473 = vunpack.c.h.b16 %v1961
    %v2474 = vunpack.c.l.b16 %v1962
    %v2475 = vunpack.c.h.b16 %v1962
    %v2476 = vunpack.c.l.b16 %v1963
    %v2477 = vunpack.c.h.b16 %v1963
    %v2478 = vunpack.c.l.b16 %v1964
    %v2479 = vunpack.c.l.b16 %v1965
    %v2480 = vunpack.c.h.b16 %v1965
    %v2481 = vunpack.c.l.b16 %v1966
    %v2482 = vunpack.c.h.b16 %v1966
    %v2483 = vunpack.c.l.b16 %v1967
    %v2484 = vunpack.c.h.b16 %v1967
    %v2485 = vunpack.c.l.b16 %v1968
    %v2486 = vunpack.c.h.b16 %v1968
    %v2487 = vunpack.c.l.b16 %v1969
    %v2488 = vunpack.c.l.b16 %v1970
    %v2489 = vunpack.c.h.b16 %v1970
    %v2490 = vunpack.c.l.b16 %v1971
    %v2491 = vunpack.c.h.b16 %v1971
    %v2492 = vunpack.c.l.b16 %v1972
    %v2493 = vunpack.c.h.b16 %v1972
    %v2494 = vunpack.c.l.b16 %v1973
    %v2495 = vunpack.c.h.b16 %v1973
    %v2496 = vunpack.c.l.b16 %v1974
    %v2497 = vunpack.c.l.b16 %v1975
    %v2498 = vunpack.c.h.b16 %v1975
    %v2499 = vunpack.c.l.b16 %v1976
    %v2500 = vunpack.c.h.b16 %v1976
    %v2501 = vunpack.c.l.b16 %v1977
    %v2502 = vunpack.c.h.b16 %v1977
    %v2503 = vunpack.c.l.b16 %v1978
    %v2504 = vunpack.c.h.b16 %v1978
    %v2505 = vunpack.c.l.b16 %v1979
    %v2506 = vunpack.c.l.b16 %v1980
    %v2507 = vunpack.c.h.b16 %v1980
    %v2508 = vunpack.c.l.b16 %v1981
    %v2509 = vunpack.c.h.b16 %v1981
    %v2510 = vunpack.c.l.b16 %v1982
    %v2511 = vunpack.c.h.b16 %v1982
    %v2512 = vunpack.c.l.b16 %v1983
    %v2513 = vunpack.c.h.b16 %v1983
    %v2514 = vunpack.c.l.b16 %v1984
    %v2515 = vunpack.c.l.b16 %v1985
    %v2516 = vunpack.c.h.b16 %v1985
    %v2517 = vunpack.c.l.b16 %v1986
    %v2518 = vunpack.c.h.b16 %v1986
    %v2519 = vunpack.c.l.b16 %v1987
    %v2520 = vunpack.c.h.b16 %v1987
    %v2521 = vunpack.c.l.b16 %v1988
    %v2522 = vunpack.c.h.b16 %v1988
    %v2523 = vunpack.c.l.b16 %v1989
    %v2524 = vunpack.c.l.b16 %v1990
    %v2525 = vunpack.c.h.b16 %v1990
    %v2526 = vunpack.c.l.b16 %v1991
    %v2527 = vunpack.c.h.b16 %v1991
    %v2528 = vunpack.c.l.b16 %v1992
    %v2529 = vunpack.c.h.b16 %v1992
    %v2530 = vunpack.c.l.b16 %v1993
    %v2531 = vunpack.c.h.b16 %v1993
    %v2532 = vunpack.c.l.b16 %v1994
    %v2533 = vunpack.c.l.b16 %v1995
    %v2534 = vunpack.c.h.b16 %v1995
    %v2535 = vunpack.c.l.b16 %v1996
    %v2536 = vunpack.c.h.b16 %v1996
    %v2537 = vunpack.c.l.b16 %v1997
    %v2538 = vunpack.c.h.b16 %v1997
    %v2539 = vunpack.c.l.b16 %v1998
    %v2540 = vunpack.c.h.b16 %v1998
    %v2541 = vunpack.c.l.b16 %v1999
    %v2542 = vunpack.c.l.b16 %v2000
    %v2543 = vunpack.c.h.b16 %v2000
    %v2544 = vunpack.c.l.b16 %v2001
    %v2545 = vunpack.c.h.b16 %v2001
    %v2546 = vunpack.c.l.b16 %v2002
    %v2547 = vunpack.c.h.b16 %v2002
    %v2548 = vunpack.c.l.b16 %v2003
    %v2549 = vunpack.c.h.b16 %v2003
    %v2550 = vunpack.c.l.b16 %v2004
    %v2551 = vunpack.c.l.b16 %v2005
    %v2552 = vunpack.c.h.b16 %v2005
    %v2553 = vunpack.c.l.b16 %v2006
    %v2554 = vunpack.c.h.b16 %v2006
    %v2555 = vunpack.c.l.b16 %v2007
    %v2556 = vunpack.c.h.b16 %v2007
    %v2557 = vunpack.c.l.b16 %v2008
    %v2558 = vunpack.c.h.b16 %v2008
    %v2559 = vunpack.c.l.b16 %v2009
    %v2560 = vunpack.c.l.b16 %v2010
    %v2561 = vunpack.c.h.b16 %v2010
    %v2562 = vunpack.c.l.b16 %v2011
    %v2563 = vunpack.c.h.b16 %v2011
    %v2564 = vunpack.c.l.b16 %v2012
    %v2565 = vunpack.c.h.b16 %v2012
    %v2566 = vunpack.c.l.b16 %v2013
    %v2567 = vunpack.c.h.b16 %v2013
    %v2568 = vunpack.c.l.b16 %v2014
    %v2569 = vunpack.c.l.b16 %v2015
    %v2570 = vunpack.c.h.b16 %v2015
    %v2571 = vunpack.c.l.b16 %v2016
    %v2572 = vunpack.c.h.b16 %v2016
    %v2573 = vunpack.c.l.b16 %v2017
    %v2574 = vunpack.c.h.b16 %v2017
    %v2575 = vunpack.c.l.b16 %v2018
    %v2576 = vunpack.c.h.b16 %v2018
    %v2577 = vunpack.c.l.b16 %v2019
    %v2578 = vunpack.c.l.b16 %v2020
    %v2579 = vunpack.c.h.b16 %v2020
    %v2580 = vunpack.c.l.b16 %v2021
    %v2581 = vunpack.c.h.b16 %v2021
    %v2582 = vunpack.c.l.b16 %v2022
    %v2583 = vunpack.c.h.b16 %v2022
    %v2584 = vunpack.c.l.b16 %v2023
    %v2585 = vunpack.c.h.b16 %v2023
    %v2586 = vunpack.c.l.b16 %v2024
    %v2587 = vunpack.c.l.b16 %v2025
    %v2588 = vunpack.c.h.b16 %v2025
    %v2589 = vunpack.c.l.b16 %v2026
    %v2590 = vunpack.c.h.b16 %v2026
    %v2591 = vunpack.c.l.b16 %v2027
    %v2592 = vunpack.c.h.b16 %v2027
    %v2593 = vunpack.c.l.b16 %v2028
    %v2594 = vunpack.c.h.b16 %v2028
    %v2595 = vunpack.c.l.b16 %v2029
    %v2596 = vunpack.c.l.b16 %v2030
    %v2597 = vunpack.c.h.b16 %v2030
    %v2598 = vunpack.c.l.b16 %v2031
    %v2599 = vunpack.c.h.b16 %v2031
    %v2600 = vunpack.c.l.b16 %v2032
    %v2601 = vunpack.c.h.b16 %v2032
    %v2602 = vunpack.c.l.b16 %v2033
    %v2603 = vunpack.c.h.b16 %v2033
    %v2604 = vunpack.c.l.b16 %v2034
    %v2605 = vunpack.c.l.b16 %v2035
    %v2606 = vunpack.c.h.b16 %v2035
    %v2607 = vunpack.c.l.b16 %v2036
    %v2608 = vunpack.c.h.b16 %v2036
    %v2609 = vunpack.c.l.b16 %v2037
    %v2610 = vunpack.c.h.b16 %v2037
    %v2611 = vunpack.c.l.b16 %v2038
    %v2612 = vunpack.c.h.b16 %v2038
    %v2613 = vunpack.c.l.b16 %v2039
    %v2614 = vunpack.c.l.b16 %v2040
    %v2615 = vunpack.c.h.b16 %v2040
    %v2616 = vunpack.c.l.b16 %v2041
    %v2617 = vunpack.c.h.b16 %v2041
    %v2618 = vunpack.c.l.b16 %v2042
    %v2619 = vunpack.c.h.b16 %v2042
    %v2620 = vunpack.c.l.b16 %v2043
    %v2621 = vunpack.c.h.b16 %v2043
    %v2622 = vunpack.c.l.b16 %v2044
    %v2623 = vunpack.c.l.b16 %v2045
    %v2624 = vunpack.c.h.b16 %v2045
    %v2625 = vunpack.c.l.b16 %v2046
    %v2626 = vunpack.c.h.b16 %v2046
    %v2627 = vunpack.c.l.b16 %v2047
    %v2628 = vunpack.c.h.b16 %v2047
    %v2629 = vunpack.c.l.b16 %v2048
    %v2630 = vunpack.c.h.b16 %v2048
    %v2631 = vunpack.c.l.b16 %v2049
    %v2632 = vunpack.c.l.b16 %v2050
    %v2633 = vunpack.c.h.b16 %v2050
    %v2634 = vunpack.c.l.b16 %v2051
    %v2635 = vunpack.c.h.b16 %v2051
    %v2636 = vunpack.c.l.b16 %v2052
    %v2637 = vunpack.c.h.b16 %v2052
    %v2638 = vunpack.c.l.b16 %v2053
    %v2639 = vunpack.c.h.b16 %v2053
    %v2640 = vunpack.c.l.b16 %v2054
    %v2641 = vunpack.c.l.b16 %v2055
    %v2642 = vunpack.c.h.b16 %v2055
    %v2643 = vunpack.c.l.b16 %v2056
    %v2644 = vunpack.c.h.b16 %v2056
    %v2645 = vunpack.c.l.b16 %v2057
    %v2646 = vunpack.c.h.b16 %v2057
    %v2647 = vunpack.c.l.b16 %v2058
    %v2648 = vunpack.c.h.b16 %v2058
    %v2649 = vunpack.c.l.b16 %v2059
    %v2650 = vunpack.c.l.b16 %v2060
    %v2651 = vunpack.c.h.b16 %v2060
    %v2652 = vunpack.c.l.b16 %v2061
    %v2653 = vunpack.c.h.b16 %v2061
    %v2654 = vunpack.c.l.b16 %v2062
    %v2655 = vunpack.c.h.b16 %v2062
    %v2656 = vunpack.c.l.b16 %v2063
    %v2657 = vunpack.c.h.b16 %v2063
    %v2658 = vunpack.c.l.b16 %v2064
    %v2659 = vunpack.c.l.b16 %v2065
    %v2660 = vunpack.c.h.b16 %v2065
    %v2661 = vunpack.c.l.b16 %v2066
    %v2662 = vunpack.c.h.b16 %v2066
    %v2663 = vunpack.c.l.b16 %v2067
    %v2664 = vunpack.c.h.b16 %v2067
    %v2665 = vunpack.c.l.b16 %v2068
    %v2666 = vunpack.c.h.b16 %v2068
    %v2667 = vunpack.c.l.b16 %v2069
    %v2668 = vunpack.c.l.b16 %v2070
    %v2669 = vunpack.c.h.b16 %v2070
    %v2670 = vunpack.c.l.b16 %v2071
    %v2671 = vunpack.c.h.b16 %v2071
    %v2672 = vunpack.c.l.b16 %v2072
    %v2673 = vunpack.c.h.b16 %v2072
    %v2674 = vunpack.c.l.b16 %v2073
    %v2675 = vunpack.c.h.b16 %v2073
    %v2676 = vunpack.c.l.b16 %v2074
    %v2677 = vunpack.c.l.b16 %v2075
    %v2678 = vunpack.c.h.b16 %v2075
    %v2679 = vunpack.c.l.b16 %v2076
    %v2680 = vunpack.c.h.b16 %v2076
    %v2681 = vunpack.c.l.b16 %v2077
    %v2682 = vunpack.c.h.b16 %v2077
    %v2683 = vunpack.c.l.b16 %v2078
    %v2684 = vunpack.c.h.b16 %v2078
    %v2685 = vunpack.c.l.b16 %v2079
    %v2686 = vunpack.c.l.b16 %v2080
    %v2687 = vunpack.c.h.b16 %v2080
    %v2688 = vunpack.c.l.b16 %v2081
    %v2689 = vunpack.c.h.b16 %v2081
    %v2690 = vunpack.c.l.b16 %v2082
    %v2691 = vunpack.c.h.b16 %v2082
    %v2692 = vunpack.c.l.b16 %v2083
    %v2693 = vunpack.c.h.b16 %v2083
    %v2694 = vunpack.c.l.b16 %v2084
    %v2695 = vunpack.c.l.b16 %v2085
    %v2696 = vunpack.c.h.b16 %v2085
    %v2697 = vunpack.c.l.b16 %v2086
    %v2698 = vunpack.c.h.b16 %v2086
    %v2699 = vunpack.c.l.b16 %v2087
    %v2700 = vunpack.c.h.b16 %v2087
    %v2701 = vunpack.c.l.b16 %v2088
    %v2702 = vunpack.c.h.b16 %v2088
    %v2703 = vunpack.c.l.b16 %v2089
    %v2704 = vunpack.c.l.b16 %v2090
    %v2705 = vunpack.c.h.b16 %v2090
    %v2706 = vunpack.c.l.b16 %v2091
    %v2707 = vunpack.c.h.b16 %v2091
    %v2708 = vunpack.c.l.b16 %v2092
    %v2709 = vunpack.c.h.b16 %v2092
    %v2710 = vunpack.c.l.b16 %v2093
    %v2711 = vunpack.c.h.b16 %v2093
    %v2712 = vunpack.c.l.b16 %v2094
    %v2713 = vunpack.c.l.b16 %v2095
    %v2714 = vunpack.c.h.b16 %v2095
    %v2715 = vunpack.c.l.b16 %v2096
    %v2716 = vunpack.c.h.b16 %v2096
    %v2717 = vunpack.c.l.b16 %v2097
    %v2718 = vunpack.c.h.b16 %v2097
    %v2719 = vunpack.c.l.b16 %v2098
    %v2720 = vunpack.c.h.b16 %v2098
    %v2721 = vunpack.c.l.b16 %v2099
    %v2722 = vunpack.c.l.b16 %v2100
    %v2723 = vunpack.c.h.b16 %v2100
    %v2724 = vunpack.c.l.b16 %v2101
    %v2725 = vunpack.c.h.b16 %v2101
    %v2726 = vunpack.c.l.b16 %v2102
    %v2727 = vunpack.c.h.b16 %v2102
    %v2728 = vunpack.c.l.b16 %v2103
    %v2729 = vunpack.c.h.b16 %v2103
    %v2730 = vunpack.c.l.b16 %v2104
    %v2731 = vunpack.c.l.b16 %v2105
    %v2732 = vunpack.c.h.b16 %v2105
    %v2733 = vunpack.c.l.b16 %v2106
    %v2734 = vunpack.c.h.b16 %v2106
    %v2735 = vunpack.c.l.b16 %v2107
    %v2736 = vunpack.c.h.b16 %v2107
    %v2737 = vunpack.c.l.b16 %v2108
    %v2738 = vunpack.c.h.b16 %v2108
    %v2739 = vunpack.c.l.b16 %v2109
    %v2740 = vunpack.c.l.b16 %v2110
    %v2741 = vunpack.c.h.b16 %v2110
    %v2742 = vunpack.c.l.b16 %v2111
    %v2743 = vunpack.c.h.b16 %v2111
    %v2744 = vunpack.c.l.b16 %v2112
    %v2745 = vunpack.c.h.b16 %v2112
    %v2746 = vunpack.c.l.b16 %v2113
    %v2747 = vunpack.c.h.b16 %v2113
    %v2748 = vunpack.c.l.b16 %v2114
    %v2749 = vunpack.c.l.b16 %v2115
    %v2750 = vunpack.c.h.b16 %v2115
    %v2751 = vunpack.c.l.b16 %v2116
    %v2752 = vunpack.c.h.b16 %v2116
    %v2753 = vunpack.c.l.b16 %v2117
    %v2754 = vunpack.c.h.b16 %v2117
    %v2755 = vunpack.c.l.b16 %v2118
    %v2756 = vunpack.c.h.b16 %v2118
    %v2757 = vunpack.c.l.b16 %v2119
    %v2758 = vunpack.c.l.b16 %v2120
    %v2759 = vunpack.c.h.b16 %v2120
    %v2760 = vunpack.c.l.b16 %v2121
    %v2761 = vunpack.c.h.b16 %v2121
    %v2762 = vunpack.c.l.b16 %v2122
    %v2763 = vunpack.c.h.b16 %v2122
    %v2764 = vunpack.c.l.b16 %v2123
    %v2765 = vunpack.c.h.b16 %v2123
    %v2766 = vunpack.c.l.b16 %v2124
    %v2767 = vunpack.c.l.b16 %v2125
    %v2768 = vunpack.c.h.b16 %v2125
    %v2769 = vunpack.c.l.b16 %v2126
    %v2770 = vunpack.c.h.b16 %v2126
    %v2771 = vunpack.c.l.b16 %v2127
    %v2772 = vunpack.c.h.b16 %v2127
    %v2773 = vunpack.c.l.b16 %v2128
    %v2774 = vunpack.c.h.b16 %v2128
    %v2775 = vunpack.c.l.b16 %v2129
    %v2776 = vunpack.c.l.b16 %v2130
    %v2777 = vunpack.c.h.b16 %v2130
    %v2778 = vunpack.c.l.b16 %v2131
    %v2779 = vunpack.c.h.b16 %v2131
    %v2780 = vunpack.c.l.b16 %v2132
    %v2781 = vunpack.c.h.b16 %v2132
    %v2782 = vunpack.c.l.b16 %v2133
    %v2783 = vunpack.c.h.b16 %v2133
    %v2784 = vunpack.c.l.b16 %v2134
    %v2785 = vunpack.c.l.b16 %v2135
    %v2786 = vunpack.c.h.b16 %v2135
    %v2787 = vunpack.c.l.b16 %v2136
    %v2788 = vunpack.c.h.b16 %v2136
    %v2789 = vunpack.c.l.b16 %v2137
    %v2790 = vunpack.c.h.b16 %v2137
    %v2791 = vunpack.c.l.b16 %v2138
    %v2792 = vunpack.c.h.b16 %v2138
    %v2793 = vunpack.c.l.b16 %v2139
    %v2794 = vunpack.c.l.b16 %v2140
    %v2795 = vunpack.c.h.b16 %v2140
    %v2796 = vunpack.c.l.b16 %v2141
    %v2797 = vunpack.c.h.b16 %v2141
    %v2798 = vunpack.c.l.b16 %v2142
    %v2799 = vunpack.c.h.b16 %v2142
    %v2800 = vunpack.c.l.b16 %v2143
    %v2801 = vunpack.c.h.b16 %v2143
    %v2802 = vunpack.c.l.b16 %v2144
    %v2803 = vunpack.c.l.b16 %v2145
    %v2804 = vunpack.c.h.b16 %v2145
    %v2805 = vunpack.c.l.b16 %v2146
    %v2806 = vunpack.c.h.b16 %v2146
    %v2807 = vunpack.c.l.b16 %v2147
    %v2808 = vunpack.c.h.b16 %v2147
    %v2809 = vunpack.c.l.b16 %v2148
    %v2810 = vunpack.c.h.b16 %v2148
    %v2811 = vunpack.c.l.b16 %v2149
    %v2812 = vunpack.c.l.b16 %v2150
    %v2813 = vunpack.c.h.b16 %v2150
    %v2814 = vunpack.c.l.b16 %v2151
    %v2815 = vunpack.c.h.b16 %v2151
    %v2816 = vunpack.c.l.b16 %v2152
    %v2817 = vunpack.c.h.b16 %v2152
    %v2818 = vunpack.c.l.b16 %v2153
    %v2819 = vunpack.c.h.b16 %v2153
    %v2820 = vunpack.c.l.b16 %v2154
    %v2821 = vunpack.c.l.b16 %v2155
    %v2822 = vunpack.c.h.b16 %v2155
    %v2823 = vunpack.c.l.b16 %v2156
    %v2824 = vunpack.c.h.b16 %v2156
    %v2825 = vunpack.c.l.b16 %v2157
    %v2826 = vunpack.c.h.b16 %v2157
    %v2827 = vunpack.c.l.b16 %v2158
    %v2828 = vunpack.c.h.b16 %v2158
    %v2829 = vunpack.c.l.b16 %v2159
    %v2830 = vunpack.c.l.b16 %v2160
    %v2831 = vunpack.c.h.b16 %v2160
    %v2832 = vunpack.c.l.b16 %v2161
    %v2833 = vunpack.c.h.b16 %v2161
    %v2834 = vunpack.c.l.b16 %v2162
    %v2835 = vunpack.c.h.b16 %v2162
    %v2836 = vunpack.c.l.b16 %v2163
    %v2837 = vunpack.c.h.b16 %v2163
    %v2838 = vunpack.c.l.b16 %v2164
    %v2839 = vunpack.c.l.b16 %v2165
    %v2840 = vunpack.c.h.b16 %v2165
    %v2841 = vunpack.c.l.b16 %v2166
    %v2842 = vunpack.c.h.b16 %v2166
    %v2843 = vunpack.c.l.b16 %v2167
    %v2844 = vunpack.c.h.b16 %v2167
    %v2845 = vunpack.c.l.b16 %v2168
    %v2846 = vunpack.c.h.b16 %v2168
    %v2847 = vunpack.c.l.b16 %v2169
    %v2848 = vunpack.c.l.b16 %v2170
    %v2849 = vunpack.c.h.b16 %v2170
    %v2850 = vunpack.c.l.b16 %v2171
    %v2851 = vunpack.c.h.b16 %v2171
    %v2852 = vunpack.c.l.b16 %v2172
    %v2853 = vunpack.c.h.b16 %v2172
    %v2854 = vunpack.c.l.b16 %v2173
    %v2855 = vunpack.c.h.b16 %v2173
    %v2856 = vunpack.c.l.b16 %v2174
    %v2857 = vunpack.c.l.b16 %v2175
    %v2858 = vunpack.c.h.b16 %v2175
    %v2859 = vunpack.c.l.b16 %v2176
    %v2860 = vunpack.c.h.b16 %v2176
    %v2861 = vunpack.c.l.b16 %v2177
    %v2862 = vunpack.c.h.b16 %v2177
    %v2863 = vunpack.c.l.b16 %v2178
    %v2864 = vunpack.c.h.b16 %v2178
    %v2865 = vunpack.c.l.b16 %v2179
    %v2866 = vunpack.c.l.b16 %v2180
    %v2867 = vunpack.c.h.b16 %v2180
    %v2868 = vunpack.c.l.b16 %v2181
    %v2869 = vunpack.c.h.b16 %v2181
    %v2870 = vunpack.c.l.b16 %v2182
    %v2871 = vunpack.c.h.b16 %v2182
    %v2872 = vunpack.c.l.b16 %v2183
    %v2873 = vunpack.c.h.b16 %v2183
    %v2874 = vunpack.c.l.b16 %v2184
    %v2875 = vunpack.c.l.b16 %v2185
    %v2876 = vunpack.c.h.b16 %v2185
    %v2877 = vunpack.c.l.b16 %v2186
    %v2878 = vunpack.c.h.b16 %v2186
    %v2879 = vunpack.c.l.b16 %v2187
    %v2880 = vunpack.c.h.b16 %v2187
    %v2881 = vunpack.c.l.b16 %v2188
    %v2882 = vunpack.c.h.b16 %v2188
    %v2883 = vunpack.c.l.b16 %v2189
    %v2884 = vunpack.c.l.b16 %v2190
    %v2885 = vunpack.c.h.b16 %v2190
    %v2886 = vunpack.c.l.b16 %v2191
    %v2887 = vunpack.c.h.b16 %v2191
    %v2888 = vunpack.c.l.b16 %v2192
    %v2889 = vunpack.c.h.b16 %v2192
    %v2890 = vunpack.c.l.b16 %v2193
    %v2891 = vunpack.c.h.b16 %v2193
    %v2892 = vunpack.c.l.b16 %v2194
    %v2893 = vunpack.c.l.b16 %v2195
    %v2894 = vunpack.c.h.b16 %v2195
    %v2895 = vunpack.c.l.b16 %v2196
    %v2896 = vunpack.c.h.b16 %v2196
    %v2897 = vunpack.c.l.b16 %v2197
    %v2898 = vunpack.c.h.b16 %v2197
    %v2899 = vunpack.c.l.b16 %v2198
    %v2900 = vunpack.c.h.b16 %v2198
    %v2901 = vunpack.c.l.b16 %v2199
    %v2902 = vpack.c.b16 %v2461, %v2452
    %v2903 = vpack.c.b16 %v2462, %v2453
    %v2904 = vpack.c.b16 %v2463, %v2454
    %v2905 = vpack.c.b16 %v2464, %v2455
    %v2906 = vpack.c.b16 %v2465, %v2456
    %v2907 = vpack.c.b16 %v2466, %v2457
    %v2908 = vpack.c.b16 %v2467, %v2458
    %v2909 = vpack.c.b16 %v2468, %v2459
    %v2910 = vpack.c.b16 %v2469, %v2460
    %v2911 = vpack.c.b16 %v2479, %v2470
    %v2912 = vpack.c.b16 %v2480, %v2471
    %v2913 = vpack.c.b16 %v2481, %v2472
    %v2914 = vpack.c.b16 %v2482, %v2473
    %v2915 = vpack.c.b16 %v2483, %v2474
    %v2916 = vpack.c.b16 %v2484, %v2475
    %v2917 = vpack.c.b16 %v2485, %v2476
    %v2918 = vpack.c.b16 %v2486, %v2477
    %v2919 = vpack.c.b16 %v2487, %v2478
    %v2920 = vpack.c.b16 %v2497, %v2488
    %v2921 = vpack.c.b16 %v2498, %v2489
    %v2922 = vpack.c.b16 %v2499, %v2490
    %v2923 = vpack.c.b16 %v2500, %v2491
    %v2924 = vpack.c.b16 %v2501, %v2492
    %v2925 = vpack.c.b16 %v2502, %v2493
    %v2926 = vpack.c.b16 %v2503, %v2494
    %v2927 = vpack.c.b16 %v2504, %v2495
    %v2928 = vpack.c.b16 %v2505, %v2496
    %v2929 = vpack.c.b16 %v2515, %v2506
    %v2930 = vpack.c.b16 %v2516, %v2507
    %v2931 = vpack.c.b16 %v2517, %v2508
    %v2932 = vpack.c.b16 %v2518, %v2509
    %v2933 = vpack.c.b16 %v2519, %v2510
    %v2934 = vpack.c.b16 %v2520, %v2511
    %v2935 = vpack.c.b16 %v2521, %v2512
    %v2936 = vpack.c.b16 %v2522, %v2513
    %v2937 = vpack.c.b16 %v2523, %v2514
    %v2938 = vpack.c.b16 %v2533, %v2524
    %v2939 = vpack.c.b16 %v2534, %v2525
    %v2940 = vpack.c.b16 %v2535, %v2526
    %v2941 = vpack.c.b16 %v2536, %v2527
    %v2942 = vpack.c.b16 %v2537, %v2528
    %v2943 = vpack.c.b16 %v2538, %v2529
    %v2944 = vpack.c.b16 %v2539, %v2530
    %v2945 = vpack.c.b16 %v2540, %v2531
    %v2946 = vpack.c.b16 %v2541, %v2532
    %v2947 = vpack.c.b16 %v2551, %v2542
    %v2948 = vpack.c.b16 %v2552, %v2543
    %v2949 = vpack.c.b16 %v2553, %v2544
    %v2950 = vpack.c.b16 %v2554, %v2545
    %v2951 = vpack.c.b16 %v2555, %v2546
    %v2952 = vpack.c.b16 %v2556, %v2547
    %v2953 = vpack.c.b16 %v2557, %v2548
    %v2954 = vpack.c.b16 %v2558, %v2549
    %v2955 = vpack.c.b16 %v2559, %v2550
    %v2956 = vpack.c.b16 %v2569, %v2560
    %v2957 = vpack.c.b16 %v2570, %v2561
    %v2958 = vpack.c.b16 %v2571, %v2562
    %v2959 = vpack.c.b16 %v2572, %v2563
    %v2960 = vpack.c.b16 %v2573, %v2564
    %v2961 = vpack.c.b16 %v2574, %v2565
    %v2962 = vpack.c.b16 %v2575, %v2566
    %v2963 = vpack.c.b16 %v2576, %v2567
    %v2964 = vpack.c.b16 %v2577, %v2568
    %v2965 = vpack.c.b16 %v2587, %v2578
    %v2966 = vpack.c.b16 %v2588, %v2579
    %v2967 = vpack.c.b16 %v2589, %v2580
    %v2968 = vpack.c.b16 %v2590, %v2581
    %v2969 = vpack.c.b16 %v2591, %v2582
    %v2970 = vpack.c.b16 %v2592, %v2583
    %v2971 = vpack.c.b16 %v2593, %v2584
    %v2972 = vpack.c.b16 %v2594, %v2585
    %v2973 = vpack.c.b16 %v2595, %v2586
    %v2974 = vpack.c.b16 %v2605, %v2596
    %v2975 = vpack.c.b16 %v2606, %v2597
    %v2976 = vpack.c.b16 %v2607, %v2598
    %v2977 = vpack.c.b16 %v2608, %v2599
    %v2978 = vpack.c.b16 %v2609, %v2600
    %v2979 = vpack.c.b16 %v2610, %v2601
    %v2980 = vpack.c.b16 %v2611, %v2602
    %v2981 = vpack.c.b16 %v2612, %v2603
    %v2982 = vpack.c.b16 %v2613, %v2604
    %v2983 = vpack.c.b16 %v2623, %v2614
    %v2984 = vpack.c.b16 %v2624, %v2615
    %v2985 = vpack.c.b16 %v2625, %v2616
    %v2986 = vpack.c.b16 %v2626, %v2617
    %v2987 = vpack.c.b16 %v2627, %v2618
    %v2988 = vpack.c.b16 %v2628, %v2619
    %v2989 = vpack.c.b16 %v2629, %v2620
    %v2990 = vpack.c.b16 %v2630, %v2621
    %v2991 = vpack.c.b16 %v2631, %v2622
    %v2992 = vpack.c.b16 %v2641, %v2632
    %v2993 = vpack.c.b16 %v2642, %v2633
    %v2994 = vpack.c.b16 %v2643, %v2634
    %v2995 = vpack.c.b16 %v2644, %v2635
    %v2996 = vpack.c.b16 %v2645, %v2636
    %v2997 = vpack.c.b16 %v2646, %v2637
    %v2998 = vpack.c.b16 %v2647, %v2638
    %v2999 = vpack.c.b16 %v2648, %v2639
    %v3000 = vpack.c.b16 %v2649, %v2640
    %v3001 = vpack.c.b16 %v2659, %v2650
    %v3002 = vpack.c.b16 %v2660, %v2651
    %v3003 = vpack.c.b16 %v2661, %v2652
    %v3004 = vpack.c.b16 %v2662, %v2653
    %v3005 = vpack.c.b16 %v2663, %v2654
    %v3006 = vpack.c.b16 %v2664, %v2655
    %v3007 = vpack.c.b16 %v2665, %v2656
    %v3008 = vpack.c.b16 %v2666, %v2657
    %v3009 = vpack.c.b16 %v2667, %v2658
    %v3010 = vpack.c.b16 %v2677, %v2668
    %v3011 = vpack.c.b16 %v2678, %v2669
    %v3012 = vpack.c.b16 %v2679, %v2670
    %v3013 = vpack.c.b16 %v2680, %v2671
    %v3014 = vpack.c.b16 %v2681, %v2672
    %v3015 = vpack.c.b16 %v2682, %v2673
    %v3016 = vpack.c.b16 %v2683, %v2674
    %v3017 = vpack.c.b16 %v2684, %v2675
    %v3018 = vpack.c.b16 %v2685, %v2676
    %v3019 = vpack.c.b16 %v2695, %v2686
    %v3020 = vpack.c.b16 %v2696, %v2687
    %v3021 = vpack.c.b16 %v2697, %v2688
    %v3022 = vpack.c.b16 %v2698, %v2689
    %v3023 = vpack.c.b16 %v2699, %v2690
    %v3024 = vpack.c.b16 %v2700, %v2691
    %v3025 = vpack.c.b16 %v2701, %v2692
    %v3026 = vpack.c.b16 %v2702, %v2693
    %v3027 = vpack.c.b16 %v2703, %v2694
    %v3028 = vpack.c.b16 %v2713, %v2704
    %v3029 = vpack.c.b16 %v2714, %v2705
    %v3030 = vpack.c.b16 %v2715, %v2706
    %v3031 = vpack.c.b16 %v2716, %v2707
    %v3032 = vpack.c.b16 %v2717, %v2708
    %v3033 = vpack.c.b16 %v2718, %v2709
    %v3034 = vpack.c.b16 %v2719, %v2710
    %v3035 = vpack.c.b16 %v2720, %v2711
    %v3036 = vpack.c.b16 %v2721, %v2712
    %v3037 = vpack.c.b16 %v2731, %v2722
    %v3038 = vpack.c.b16 %v2732, %v2723
    %v3039 = vpack.c.b16 %v2733, %v2724
    %v3040 = vpack.c.b16 %v2734, %v2725
    %v3041 = vpack.c.b16 %v2735, %v2726
    %v3042 = vpack.c.b16 %v2736, %v2727
    %v3043 = vpack.c.b16 %v2737, %v2728
    %v3044 = vpack.c.b16 %v2738, %v2729
    %v3045 = vpack.c.b16 %v2739, %v2730
    %v3046 = vpack.c.b16 %v2749, %v2740
    %v3047 = vpack.c.b16 %v2750, %v2741
    %v3048 = vpack.c.b16 %v2751, %v2742
    %v3049 = vpack.c.b16 %v2752, %v2743
    %v3050 = vpack.c.b16 %v2753, %v2744
    %v3051 = vpack.c.b16 %v2754, %v2745
    %v3052 = vpack.c.b16 %v2755, %v2746
    %v3053 = vpack.c.b16 %v2756, %v2747
    %v3054 = vpack.c.b16 %v2757, %v2748
    %v3055 = vpack.c.b16 %v2767, %v2758
    %v3056 = vpack.c.b16 %v2768, %v2759
    %v3057 = vpack.c.b16 %v2769, %v2760
    %v3058 = vpack.c.b16 %v2770, %v2761
    %v3059 = vpack.c.b16 %v2771, %v2762
    %v3060 = vpack.c.b16 %v2772, %v2763
    %v3061 = vpack.c.b16 %v2773, %v2764
    %v3062 = vpack.c.b16 %v2774, %v2765
    %v3063 = vpack.c.b16 %v2775, %v2766
    %v3064 = vpack.c.b16 %v2785, %v2776
    %v3065 = vpack.c.b16 %v2786, %v2777
    %v3066 = vpack.c.b16 %v2787, %v2778
    %v3067 = vpack.c.b16 %v2788, %v2779
    %v3068 = vpack.c.b16 %v2789, %v2780
    %v3069 = vpack.c.b16 %v2790, %v2781
    %v3070 = vpack.c.b16 %v2791, %v2782
    %v3071 = vpack.c.b16 %v2792, %v2783
    %v3072 = vpack.c.b16 %v2793, %v2784
    %v3073 = vpack.c.b16 %v2803, %v2794
    %v3074 = vpack.c.b16 %v2804, %v2795
    %v3075 = vpack.c.b16 %v2805, %v2796
    %v3076 = vpack.c.b16 %v2806, %v2797
    %v3077 = vpack.c.b16 %v2807, %v2798
    %v3078 = vpack.c.b16 %v2808, %v2799
    %v3079 = vpack.c.b16 %v2809, %v2800
    %v3080 = vpack.c.b16 %v2810, %v2801
    %v3081 = vpack.c.b16 %v2811, %v2802
    %v3082 = vpack.c.b16 %v2821, %v2812
    %v3083 = vpack.c.b16 %v2822, %v2813
    %v3084 = vpack.c.b16 %v2823, %v2814
    %v3085 = vpack.c.b16 %v2824, %v2815
    %v3086 = vpack.c.b16 %v2825, %v2816
    %v3087 = vpack.c.b16 %v2826, %v2817
    %v3088 = vpack.c.b16 %v2827, %v2818
    %v3089 = vpack.c.b16 %v2828, %v2819
    %v3090 = vpack.c.b16 %v2829, %v2820
    %v3091 = vpack.c.b16 %v2839, %v2830
    %v3092 = vpack.c.b16 %v2840, %v2831
    %v3093 = vpack.c.b16 %v2841, %v2832
    %v3094 = vpack.c.b16 %v2842, %v2833
    %v3095 = vpack.c.b16 %v2843, %v2834
    %v3096 = vpack.c.b16 %v2844, %v2835
    %v3097 = vpack.c.b16 %v2845, %v2836
    %v3098 = vpack.c.b16 %v2846, %v2837
    %v3099 = vpack.c.b16 %v2847, %v2838
    %v3100 = vpack.c.b16 %v2857, %v2848
    %v3101 = vpack.c.b16 %v2858, %v2849
    %v3102 = vpack.c.b16 %v2859, %v2850
    %v3103 = vpack.c.b16 %v2860, %v2851
    %v3104 = vpack.c.b16 %v2861, %v2852
    %v3105 = vpack.c.b16 %v2862, %v2853
    %v3106 = vpack.c.b16 %v2863, %v2854
    %v3107 = vpack.c.b16 %v2864, %v2855
    %v3108 = vpack.c.b16 %v2865, %v2856
    %v3109 = vpack.c.b16 %v2875, %v2866
    %v3110 = vpack.c.b16 %v2876, %v2867
    %v3111 = vpack.c.b16 %v2877, %v2868
    %v3112 = vpack.c.b16 %v2878, %v2869
    %v3113 = vpack.c.b16 %v2879, %v2870
    %v3114 = vpack.c.b16 %v2880, %v2871
    %v3115 = vpack.c.b16 %v2881, %v2872
    %v3116 = vpack.c.b16 %v2882, %v2873
    %v3117 = vpack.c.b16 %v2883, %v2874
    %v3118 = vpack.c.b16 %v2893, %v2884
    %v3119 = vpack.c.b16 %v2894, %v2885
    %v3120 = vpack.c.b16 %v2895, %v2886
    %v3121 = vpack.c.b16 %v2896, %v2887
    %v3122 = vpack.c.b16 %v2897, %v2888
    %v3123 = vpack.c.b16 %v2898, %v2889
    %v3124 = vpack.c.b16 %v2899, %v2890
    %v3125 = vpack.c.b16 %v2900, %v2891
    %v3126 = vpack.c.b16 %v2901, %v2892
    %v3354 = vperm.slane %v2200, 0
    %v3355 = vperm.slane %v2200, 1
    %v3356 = vperm.slane %v2200, 2
    %v3357 = vperm.slane %v2200, 3
    %v3358 = vperm.slane %v2200, 4
    %v3359 = vperm.slane %v2200, 5
    %v3360 = vperm.slane %v2200, 6
    %v3361 = vperm.slane %v2200, 7
    %v3362 = vperm.slane %v2201, 0
    %vm3372 = vcmask 130048
    %v3374 = vsel %vm3372, %v1949, 0
    %3376 = vmatpush.bf16.msra.mxu0 %v2965
    %3377 = vmatpush.bf16.msra.mxu0 %v2956
    %3378 = vmatpush.bf16.msra.mxu0 %v2947
    %3379 = vmatpush.bf16.msra.mxu0 %v2938
    %3380 = vmatpush.bf16.msra.mxu0 %v2929
    %3381 = vmatpush.bf16.msra.mxu0 %v2920
    %3382 = vmatpush.bf16.msra.mxu0 %v2911
    %3383 = vmatpush.bf16.msra.mxu0 %v2902
    %3384 = vmatmul.bf16.gmra.mxu0 %v1946
    %v3385 = vpop.f32.mrf.mxu0
    %v3386 = vadd.f32 %v3354, %v3385
    %v3387 = vpop.f32.mrf.mxu0
    %3388 = vdwg.mxu0
    %3389 = vmatpush.bf16.msra.mxu0 %v3037
    %3390 = vmatpush.bf16.msra.mxu0 %v3028
    %3391 = vmatpush.bf16.msra.mxu0 %v3019
    %3392 = vmatpush.bf16.msra.mxu0 %v3010
    %3393 = vmatpush.bf16.msra.mxu0 %v3001
    %3394 = vmatpush.bf16.msra.mxu0 %v2992
    %3395 = vmatpush.bf16.msra.mxu0 %v2983
    %3396 = vmatpush.bf16.msra.mxu0 %v2974
    %3397 = vmatmul.bf16.gmra.mxu0 %v1947
    %v3398 = vpop.f32.mrf.mxu0
    %v3399 = vadd.f32 %v3386, %v3398
    %v3400 = vpop.f32.mrf.mxu0
    %3401 = vdwg.mxu0
    %3402 = vmatpush.bf16.msra.mxu0 %v3109
    %3403 = vmatpush.bf16.msra.mxu0 %v3100
    %3404 = vmatpush.bf16.msra.mxu0 %v3091
    %3405 = vmatpush.bf16.msra.mxu0 %v3082
    %3406 = vmatpush.bf16.msra.mxu0 %v3073
    %3407 = vmatpush.bf16.msra.mxu0 %v3064
    %3408 = vmatpush.bf16.msra.mxu0 %v3055
    %3409 = vmatpush.bf16.msra.mxu0 %v3046
    %3410 = vmatmul.bf16.gmra.mxu0 %v1948
    %v3411 = vpop.f32.mrf.mxu0
    %v3412 = vadd.f32 %v3399, %v3411
    %v3413 = vpop.f32.mrf.mxu0
    %3414 = vdwg.mxu0
    %3415 = vmatpush.bf16.msra.mxu0 0
    %3416 = vmatpush.bf16.msra.mxu0 0
    %3417 = vmatpush.bf16.msra.mxu0 0
    %3418 = vmatpush.bf16.msra.mxu0 0
    %3419 = vmatpush.bf16.msra.mxu0 0
    %3420 = vmatpush.bf16.msra.mxu0 0
    %3421 = vmatpush.bf16.msra.mxu0 0
    %3422 = vmatpush.bf16.msra.mxu0 %v3118
    %3423 = vmatmul.bf16.gmra.mxu0 %v3374
    %v3424 = vpop.f32.mrf.mxu0
    %v3425 = vadd.f32 %v3412, %v3424
    %v3426 = vpop.f32.mrf.mxu0
    %3427 = vdwg.mxu0
    %3428 = vmatpush.bf16.msra.mxu0 %v2966
    %3429 = vmatpush.bf16.msra.mxu0 %v2957
    %3430 = vmatpush.bf16.msra.mxu0 %v2948
    %3431 = vmatpush.bf16.msra.mxu0 %v2939
    %3432 = vmatpush.bf16.msra.mxu0 %v2930
    %3433 = vmatpush.bf16.msra.mxu0 %v2921
    %3434 = vmatpush.bf16.msra.mxu0 %v2912
    %3435 = vmatpush.bf16.msra.mxu0 %v2903
    %3436 = vmatmul.bf16.gmra.mxu0 %v1946
    %v3437 = vpop.f32.mrf.mxu0
    %v3438 = vadd.f32 %v3355, %v3437
    %v3439 = vpop.f32.mrf.mxu0
    %3440 = vdwg.mxu0
    %3441 = vmatpush.bf16.msra.mxu0 %v3038
    %3442 = vmatpush.bf16.msra.mxu0 %v3029
    %3443 = vmatpush.bf16.msra.mxu0 %v3020
    %3444 = vmatpush.bf16.msra.mxu0 %v3011
    %3445 = vmatpush.bf16.msra.mxu0 %v3002
    %3446 = vmatpush.bf16.msra.mxu0 %v2993
    %3447 = vmatpush.bf16.msra.mxu0 %v2984
    %3448 = vmatpush.bf16.msra.mxu0 %v2975
    %3449 = vmatmul.bf16.gmra.mxu0 %v1947
    %v3450 = vpop.f32.mrf.mxu0
    %v3451 = vadd.f32 %v3438, %v3450
    %v3452 = vpop.f32.mrf.mxu0
    %3453 = vdwg.mxu0
    %3454 = vmatpush.bf16.msra.mxu0 %v3110
    %3455 = vmatpush.bf16.msra.mxu0 %v3101
    %3456 = vmatpush.bf16.msra.mxu0 %v3092
    %3457 = vmatpush.bf16.msra.mxu0 %v3083
    %3458 = vmatpush.bf16.msra.mxu0 %v3074
    %3459 = vmatpush.bf16.msra.mxu0 %v3065
    %3460 = vmatpush.bf16.msra.mxu0 %v3056
    %3461 = vmatpush.bf16.msra.mxu0 %v3047
    %3462 = vmatmul.bf16.gmra.mxu0 %v1948
    %v3463 = vpop.f32.mrf.mxu0
    %v3464 = vadd.f32 %v3451, %v3463
    %v3465 = vpop.f32.mrf.mxu0
    %3466 = vdwg.mxu0
    %3467 = vmatpush.bf16.msra.mxu0 0
    %3468 = vmatpush.bf16.msra.mxu0 0
    %3469 = vmatpush.bf16.msra.mxu0 0
    %3470 = vmatpush.bf16.msra.mxu0 0
    %3471 = vmatpush.bf16.msra.mxu0 0
    %3472 = vmatpush.bf16.msra.mxu0 0
    %3473 = vmatpush.bf16.msra.mxu0 0
    %3474 = vmatpush.bf16.msra.mxu0 %v3119
    %3475 = vmatmul.bf16.gmra.mxu0 %v3374
    %v3476 = vpop.f32.mrf.mxu0
    %v3477 = vadd.f32 %v3464, %v3476
    %v3478 = vpop.f32.mrf.mxu0
    %3479 = vdwg.mxu0
    %3480 = vmatpush.bf16.msra.mxu0 %v2967
    %3481 = vmatpush.bf16.msra.mxu0 %v2958
    %3482 = vmatpush.bf16.msra.mxu0 %v2949
    %3483 = vmatpush.bf16.msra.mxu0 %v2940
    %3484 = vmatpush.bf16.msra.mxu0 %v2931
    %3485 = vmatpush.bf16.msra.mxu0 %v2922
    %3486 = vmatpush.bf16.msra.mxu0 %v2913
    %3487 = vmatpush.bf16.msra.mxu0 %v2904
    %3488 = vmatmul.bf16.gmra.mxu0 %v1946
    %v3489 = vpop.f32.mrf.mxu0
    %v3490 = vadd.f32 %v3356, %v3489
    %v3491 = vpop.f32.mrf.mxu0
    %3492 = vdwg.mxu0
    %3493 = vmatpush.bf16.msra.mxu0 %v3039
    %3494 = vmatpush.bf16.msra.mxu0 %v3030
    %3495 = vmatpush.bf16.msra.mxu0 %v3021
    %3496 = vmatpush.bf16.msra.mxu0 %v3012
    %3497 = vmatpush.bf16.msra.mxu0 %v3003
    %3498 = vmatpush.bf16.msra.mxu0 %v2994
    %3499 = vmatpush.bf16.msra.mxu0 %v2985
    %3500 = vmatpush.bf16.msra.mxu0 %v2976
    %3501 = vmatmul.bf16.gmra.mxu0 %v1947
    %v3502 = vpop.f32.mrf.mxu0
    %v3503 = vadd.f32 %v3490, %v3502
    %v3504 = vpop.f32.mrf.mxu0
    %3505 = vdwg.mxu0
    %3506 = vmatpush.bf16.msra.mxu0 %v3111
    %3507 = vmatpush.bf16.msra.mxu0 %v3102
    %3508 = vmatpush.bf16.msra.mxu0 %v3093
    %3509 = vmatpush.bf16.msra.mxu0 %v3084
    %3510 = vmatpush.bf16.msra.mxu0 %v3075
    %3511 = vmatpush.bf16.msra.mxu0 %v3066
    %3512 = vmatpush.bf16.msra.mxu0 %v3057
    %3513 = vmatpush.bf16.msra.mxu0 %v3048
    %3514 = vmatmul.bf16.gmra.mxu0 %v1948
    %v3515 = vpop.f32.mrf.mxu0
    %v3516 = vadd.f32 %v3503, %v3515
    %v3517 = vpop.f32.mrf.mxu0
    %3518 = vdwg.mxu0
    %3519 = vmatpush.bf16.msra.mxu0 0
    %3520 = vmatpush.bf16.msra.mxu0 0
    %3521 = vmatpush.bf16.msra.mxu0 0
    %3522 = vmatpush.bf16.msra.mxu0 0
    %3523 = vmatpush.bf16.msra.mxu0 0
    %3524 = vmatpush.bf16.msra.mxu0 0
    %3525 = vmatpush.bf16.msra.mxu0 0
    %3526 = vmatpush.bf16.msra.mxu0 %v3120
    %3527 = vmatmul.bf16.gmra.mxu0 %v3374
    %v3528 = vpop.f32.mrf.mxu0
    %v3529 = vadd.f32 %v3516, %v3528
    %v3530 = vpop.f32.mrf.mxu0
    %3531 = vdwg.mxu0
    %3532 = vmatpush.bf16.msra.mxu0 %v2968
    %3533 = vmatpush.bf16.msra.mxu0 %v2959
    %3534 = vmatpush.bf16.msra.mxu0 %v2950
    %3535 = vmatpush.bf16.msra.mxu0 %v2941
    %3536 = vmatpush.bf16.msra.mxu0 %v2932
    %3537 = vmatpush.bf16.msra.mxu0 %v2923
    %3538 = vmatpush.bf16.msra.mxu0 %v2914
    %3539 = vmatpush.bf16.msra.mxu0 %v2905
    %3540 = vmatmul.bf16.gmra.mxu0 %v1946
    %v3541 = vpop.f32.mrf.mxu0
    %v3542 = vadd.f32 %v3357, %v3541
    %v3543 = vpop.f32.mrf.mxu0
    %3544 = vdwg.mxu0
    %3545 = vmatpush.bf16.msra.mxu0 %v3040
    %3546 = vmatpush.bf16.msra.mxu0 %v3031
    %3547 = vmatpush.bf16.msra.mxu0 %v3022
    %3548 = vmatpush.bf16.msra.mxu0 %v3013
    %3549 = vmatpush.bf16.msra.mxu0 %v3004
    %3550 = vmatpush.bf16.msra.mxu0 %v2995
    %3551 = vmatpush.bf16.msra.mxu0 %v2986
    %3552 = vmatpush.bf16.msra.mxu0 %v2977
    %3553 = vmatmul.bf16.gmra.mxu0 %v1947
    %v3554 = vpop.f32.mrf.mxu0
    %v3555 = vadd.f32 %v3542, %v3554
    %v3556 = vpop.f32.mrf.mxu0
    %3557 = vdwg.mxu0
    %3558 = vmatpush.bf16.msra.mxu0 %v3112
    %3559 = vmatpush.bf16.msra.mxu0 %v3103
    %3560 = vmatpush.bf16.msra.mxu0 %v3094
    %3561 = vmatpush.bf16.msra.mxu0 %v3085
    %3562 = vmatpush.bf16.msra.mxu0 %v3076
    %3563 = vmatpush.bf16.msra.mxu0 %v3067
    %3564 = vmatpush.bf16.msra.mxu0 %v3058
    %3565 = vmatpush.bf16.msra.mxu0 %v3049
    %3566 = vmatmul.bf16.gmra.mxu0 %v1948
    %v3567 = vpop.f32.mrf.mxu0
    %v3568 = vadd.f32 %v3555, %v3567
    %v3569 = vpop.f32.mrf.mxu0
    %3570 = vdwg.mxu0
    %3571 = vmatpush.bf16.msra.mxu0 0
    %3572 = vmatpush.bf16.msra.mxu0 0
    %3573 = vmatpush.bf16.msra.mxu0 0
    %3574 = vmatpush.bf16.msra.mxu0 0
    %3575 = vmatpush.bf16.msra.mxu0 0
    %3576 = vmatpush.bf16.msra.mxu0 0
    %3577 = vmatpush.bf16.msra.mxu0 0
    %3578 = vmatpush.bf16.msra.mxu0 %v3121
    %3579 = vmatmul.bf16.gmra.mxu0 %v3374
    %v3580 = vpop.f32.mrf.mxu0
    %v3581 = vadd.f32 %v3568, %v3580
    %v3582 = vpop.f32.mrf.mxu0
    %3583 = vdwg.mxu0
    %3584 = vmatpush.bf16.msra.mxu0 %v2969
    %3585 = vmatpush.bf16.msra.mxu0 %v2960
    %3586 = vmatpush.bf16.msra.mxu0 %v2951
    %3587 = vmatpush.bf16.msra.mxu0 %v2942
    %3588 = vmatpush.bf16.msra.mxu0 %v2933
    %3589 = vmatpush.bf16.msra.mxu0 %v2924
    %3590 = vmatpush.bf16.msra.mxu0 %v2915
    %3591 = vmatpush.bf16.msra.mxu0 %v2906
    %3592 = vmatmul.bf16.gmra.mxu0 %v1946
    %v3593 = vpop.f32.mrf.mxu0
    %v3594 = vadd.f32 %v3358, %v3593
    %v3595 = vpop.f32.mrf.mxu0
    %3596 = vdwg.mxu0
    %3597 = vmatpush.bf16.msra.mxu0 %v3041
    %3598 = vmatpush.bf16.msra.mxu0 %v3032
    %3599 = vmatpush.bf16.msra.mxu0 %v3023
    %3600 = vmatpush.bf16.msra.mxu0 %v3014
    %3601 = vmatpush.bf16.msra.mxu0 %v3005
    %3602 = vmatpush.bf16.msra.mxu0 %v2996
    %3603 = vmatpush.bf16.msra.mxu0 %v2987
    %3604 = vmatpush.bf16.msra.mxu0 %v2978
    %3605 = vmatmul.bf16.gmra.mxu0 %v1947
    %v3606 = vpop.f32.mrf.mxu0
    %v3607 = vadd.f32 %v3594, %v3606
    %v3608 = vpop.f32.mrf.mxu0
    %3609 = vdwg.mxu0
    %3610 = vmatpush.bf16.msra.mxu0 %v3113
    %3611 = vmatpush.bf16.msra.mxu0 %v3104
    %3612 = vmatpush.bf16.msra.mxu0 %v3095
    %3613 = vmatpush.bf16.msra.mxu0 %v3086
    %3614 = vmatpush.bf16.msra.mxu0 %v3077
    %3615 = vmatpush.bf16.msra.mxu0 %v3068
    %3616 = vmatpush.bf16.msra.mxu0 %v3059
    %3617 = vmatpush.bf16.msra.mxu0 %v3050
    %3618 = vmatmul.bf16.gmra.mxu0 %v1948
    %v3619 = vpop.f32.mrf.mxu0
    %v3620 = vadd.f32 %v3607, %v3619
    %v3621 = vpop.f32.mrf.mxu0
    %3622 = vdwg.mxu0
    %3623 = vmatpush.bf16.msra.mxu0 0
    %3624 = vmatpush.bf16.msra.mxu0 0
    %3625 = vmatpush.bf16.msra.mxu0 0
    %3626 = vmatpush.bf16.msra.mxu0 0
    %3627 = vmatpush.bf16.msra.mxu0 0
    %3628 = vmatpush.bf16.msra.mxu0 0
    %3629 = vmatpush.bf16.msra.mxu0 0
    %3630 = vmatpush.bf16.msra.mxu0 %v3122
    %3631 = vmatmul.bf16.gmra.mxu0 %v3374
    %v3632 = vpop.f32.mrf.mxu0
    %v3633 = vadd.f32 %v3620, %v3632
    %v3634 = vpop.f32.mrf.mxu0
    %3635 = vdwg.mxu0
    %3636 = vmatpush.bf16.msra.mxu0 %v2970
    %3637 = vmatpush.bf16.msra.mxu0 %v2961
    %3638 = vmatpush.bf16.msra.mxu0 %v2952
    %3639 = vmatpush.bf16.msra.mxu0 %v2943
    %3640 = vmatpush.bf16.msra.mxu0 %v2934
    %3641 = vmatpush.bf16.msra.mxu0 %v2925
    %3642 = vmatpush.bf16.msra.mxu0 %v2916
    %3643 = vmatpush.bf16.msra.mxu0 %v2907
    %3644 = vmatmul.bf16.gmra.mxu0 %v1946
    %v3645 = vpop.f32.mrf.mxu0
    %v3646 = vadd.f32 %v3359, %v3645
    %v3647 = vpop.f32.mrf.mxu0
    %3648 = vdwg.mxu0
    %3649 = vmatpush.bf16.msra.mxu0 %v3042
    %3650 = vmatpush.bf16.msra.mxu0 %v3033
    %3651 = vmatpush.bf16.msra.mxu0 %v3024
    %3652 = vmatpush.bf16.msra.mxu0 %v3015
    %3653 = vmatpush.bf16.msra.mxu0 %v3006
    %3654 = vmatpush.bf16.msra.mxu0 %v2997
    %3655 = vmatpush.bf16.msra.mxu0 %v2988
    %3656 = vmatpush.bf16.msra.mxu0 %v2979
    %3657 = vmatmul.bf16.gmra.mxu0 %v1947
    %v3658 = vpop.f32.mrf.mxu0
    %v3659 = vadd.f32 %v3646, %v3658
    %v3660 = vpop.f32.mrf.mxu0
    %3661 = vdwg.mxu0
    %3662 = vmatpush.bf16.msra.mxu0 %v3114
    %3663 = vmatpush.bf16.msra.mxu0 %v3105
    %3664 = vmatpush.bf16.msra.mxu0 %v3096
    %3665 = vmatpush.bf16.msra.mxu0 %v3087
    %3666 = vmatpush.bf16.msra.mxu0 %v3078
    %3667 = vmatpush.bf16.msra.mxu0 %v3069
    %3668 = vmatpush.bf16.msra.mxu0 %v3060
    %3669 = vmatpush.bf16.msra.mxu0 %v3051
    %3670 = vmatmul.bf16.gmra.mxu0 %v1948
    %v3671 = vpop.f32.mrf.mxu0
    %v3672 = vadd.f32 %v3659, %v3671
    %v3673 = vpop.f32.mrf.mxu0
    %3674 = vdwg.mxu0
    %3675 = vmatpush.bf16.msra.mxu0 0
    %3676 = vmatpush.bf16.msra.mxu0 0
    %3677 = vmatpush.bf16.msra.mxu0 0
    %3678 = vmatpush.bf16.msra.mxu0 0
    %3679 = vmatpush.bf16.msra.mxu0 0
    %3680 = vmatpush.bf16.msra.mxu0 0
    %3681 = vmatpush.bf16.msra.mxu0 0
    %3682 = vmatpush.bf16.msra.mxu0 %v3123
    %3683 = vmatmul.bf16.gmra.mxu0 %v3374
    %v3684 = vpop.f32.mrf.mxu0
    %v3685 = vadd.f32 %v3672, %v3684
    %v3686 = vpop.f32.mrf.mxu0
    %3687 = vdwg.mxu0
    %3688 = vmatpush.bf16.msra.mxu0 %v2971
    %3689 = vmatpush.bf16.msra.mxu0 %v2962
    %3690 = vmatpush.bf16.msra.mxu0 %v2953
    %3691 = vmatpush.bf16.msra.mxu0 %v2944
    %3692 = vmatpush.bf16.msra.mxu0 %v2935
    %3693 = vmatpush.bf16.msra.mxu0 %v2926
    %3694 = vmatpush.bf16.msra.mxu0 %v2917
    %3695 = vmatpush.bf16.msra.mxu0 %v2908
    %3696 = vmatmul.bf16.gmra.mxu0 %v1946
    %v3697 = vpop.f32.mrf.mxu0
    %v3698 = vadd.f32 %v3360, %v3697
    %v3699 = vpop.f32.mrf.mxu0
    %3700 = vdwg.mxu0
    %3701 = vmatpush.bf16.msra.mxu0 %v3043
    %3702 = vmatpush.bf16.msra.mxu0 %v3034
    %3703 = vmatpush.bf16.msra.mxu0 %v3025
    %3704 = vmatpush.bf16.msra.mxu0 %v3016
    %3705 = vmatpush.bf16.msra.mxu0 %v3007
    %3706 = vmatpush.bf16.msra.mxu0 %v2998
    %3707 = vmatpush.bf16.msra.mxu0 %v2989
    %3708 = vmatpush.bf16.msra.mxu0 %v2980
    %3709 = vmatmul.bf16.gmra.mxu0 %v1947
    %v3710 = vpop.f32.mrf.mxu0
    %v3711 = vadd.f32 %v3698, %v3710
    %v3712 = vpop.f32.mrf.mxu0
    %3713 = vdwg.mxu0
    %3714 = vmatpush.bf16.msra.mxu0 %v3115
    %3715 = vmatpush.bf16.msra.mxu0 %v3106
    %3716 = vmatpush.bf16.msra.mxu0 %v3097
    %3717 = vmatpush.bf16.msra.mxu0 %v3088
    %3718 = vmatpush.bf16.msra.mxu0 %v3079
    %3719 = vmatpush.bf16.msra.mxu0 %v3070
    %3720 = vmatpush.bf16.msra.mxu0 %v3061
    %3721 = vmatpush.bf16.msra.mxu0 %v3052
    %3722 = vmatmul.bf16.gmra.mxu0 %v1948
    %v3723 = vpop.f32.mrf.mxu0
    %v3724 = vadd.f32 %v3711, %v3723
    %v3725 = vpop.f32.mrf.mxu0
    %3726 = vdwg.mxu0
    %3727 = vmatpush.bf16.msra.mxu0 0
    %3728 = vmatpush.bf16.msra.mxu0 0
    %3729 = vmatpush.bf16.msra.mxu0 0
    %3730 = vmatpush.bf16.msra.mxu0 0
    %3731 = vmatpush.bf16.msra.mxu0 0
    %3732 = vmatpush.bf16.msra.mxu0 0
    %3733 = vmatpush.bf16.msra.mxu0 0
    %3734 = vmatpush.bf16.msra.mxu0 %v3124
    %3735 = vmatmul.bf16.gmra.mxu0 %v3374
    %v3736 = vpop.f32.mrf.mxu0
    %v3737 = vadd.f32 %v3724, %v3736
    %v3738 = vpop.f32.mrf.mxu0
    %3739 = vdwg.mxu0
    %3740 = vmatpush.bf16.msra.mxu0 %v2972
    %3741 = vmatpush.bf16.msra.mxu0 %v2963
    %3742 = vmatpush.bf16.msra.mxu0 %v2954
    %3743 = vmatpush.bf16.msra.mxu0 %v2945
    %3744 = vmatpush.bf16.msra.mxu0 %v2936
    %3745 = vmatpush.bf16.msra.mxu0 %v2927
    %3746 = vmatpush.bf16.msra.mxu0 %v2918
    %3747 = vmatpush.bf16.msra.mxu0 %v2909
    %3748 = vmatmul.bf16.gmra.mxu0 %v1946
    %v3749 = vpop.f32.mrf.mxu0
    %v3750 = vadd.f32 %v3361, %v3749
    %v3751 = vpop.f32.mrf.mxu0
    %3752 = vdwg.mxu0
    %3753 = vmatpush.bf16.msra.mxu0 %v3044
    %3754 = vmatpush.bf16.msra.mxu0 %v3035
    %3755 = vmatpush.bf16.msra.mxu0 %v3026
    %3756 = vmatpush.bf16.msra.mxu0 %v3017
    %3757 = vmatpush.bf16.msra.mxu0 %v3008
    %3758 = vmatpush.bf16.msra.mxu0 %v2999
    %3759 = vmatpush.bf16.msra.mxu0 %v2990
    %3760 = vmatpush.bf16.msra.mxu0 %v2981
    %3761 = vmatmul.bf16.gmra.mxu0 %v1947
    %v3762 = vpop.f32.mrf.mxu0
    %v3763 = vadd.f32 %v3750, %v3762
    %v3764 = vpop.f32.mrf.mxu0
    %3765 = vdwg.mxu0
    %3766 = vmatpush.bf16.msra.mxu0 %v3116
    %3767 = vmatpush.bf16.msra.mxu0 %v3107
    %3768 = vmatpush.bf16.msra.mxu0 %v3098
    %3769 = vmatpush.bf16.msra.mxu0 %v3089
    %3770 = vmatpush.bf16.msra.mxu0 %v3080
    %3771 = vmatpush.bf16.msra.mxu0 %v3071
    %3772 = vmatpush.bf16.msra.mxu0 %v3062
    %3773 = vmatpush.bf16.msra.mxu0 %v3053
    %3774 = vmatmul.bf16.gmra.mxu0 %v1948
    %v3775 = vpop.f32.mrf.mxu0
    %v3776 = vadd.f32 %v3763, %v3775
    %v3777 = vpop.f32.mrf.mxu0
    %3778 = vdwg.mxu0
    %3779 = vmatpush.bf16.msra.mxu0 0
    %3780 = vmatpush.bf16.msra.mxu0 0
    %3781 = vmatpush.bf16.msra.mxu0 0
    %3782 = vmatpush.bf16.msra.mxu0 0
    %3783 = vmatpush.bf16.msra.mxu0 0
    %3784 = vmatpush.bf16.msra.mxu0 0
    %3785 = vmatpush.bf16.msra.mxu0 0
    %3786 = vmatpush.bf16.msra.mxu0 %v3125
    %3787 = vmatmul.bf16.gmra.mxu0 %v3374
    %v3788 = vpop.f32.mrf.mxu0
    %v3789 = vadd.f32 %v3776, %v3788
    %v3790 = vpop.f32.mrf.mxu0
    %3791 = vdwg.mxu0
    %3792 = vmatpush.bf16.msra.mxu0 %v2973
    %3793 = vmatpush.bf16.msra.mxu0 %v2964
    %3794 = vmatpush.bf16.msra.mxu0 %v2955
    %3795 = vmatpush.bf16.msra.mxu0 %v2946
    %3796 = vmatpush.bf16.msra.mxu0 %v2937
    %3797 = vmatpush.bf16.msra.mxu0 %v2928
    %3798 = vmatpush.bf16.msra.mxu0 %v2919
    %3799 = vmatpush.bf16.msra.mxu0 %v2910
    %3800 = vmatmul.bf16.gmra.mxu0 %v1946
    %v3801 = vpop.f32.mrf.mxu0
    %v3802 = vadd.f32 %v3362, %v3801
    %v3803 = vpop.f32.mrf.mxu0
    %3804 = vdwg.mxu0
    %3805 = vmatpush.bf16.msra.mxu0 %v3045
    %3806 = vmatpush.bf16.msra.mxu0 %v3036
    %3807 = vmatpush.bf16.msra.mxu0 %v3027
    %3808 = vmatpush.bf16.msra.mxu0 %v3018
    %3809 = vmatpush.bf16.msra.mxu0 %v3009
    %3810 = vmatpush.bf16.msra.mxu0 %v3000
    %3811 = vmatpush.bf16.msra.mxu0 %v2991
    %3812 = vmatpush.bf16.msra.mxu0 %v2982
    %3813 = vmatmul.bf16.gmra.mxu0 %v1947
    %v3814 = vpop.f32.mrf.mxu0
    %v3815 = vadd.f32 %v3802, %v3814
    %v3816 = vpop.f32.mrf.mxu0
    %3817 = vdwg.mxu0
    %3818 = vmatpush.bf16.msra.mxu0 %v3117
    %3819 = vmatpush.bf16.msra.mxu0 %v3108
    %3820 = vmatpush.bf16.msra.mxu0 %v3099
    %3821 = vmatpush.bf16.msra.mxu0 %v3090
    %3822 = vmatpush.bf16.msra.mxu0 %v3081
    %3823 = vmatpush.bf16.msra.mxu0 %v3072
    %3824 = vmatpush.bf16.msra.mxu0 %v3063
    %3825 = vmatpush.bf16.msra.mxu0 %v3054
    %3826 = vmatmul.bf16.gmra.mxu0 %v1948
    %v3827 = vpop.f32.mrf.mxu0
    %v3828 = vadd.f32 %v3815, %v3827
    %v3829 = vpop.f32.mrf.mxu0
    %3830 = vdwg.mxu0
    %3831 = vmatpush.bf16.msra.mxu0 0
    %3832 = vmatpush.bf16.msra.mxu0 0
    %3833 = vmatpush.bf16.msra.mxu0 0
    %3834 = vmatpush.bf16.msra.mxu0 0
    %3835 = vmatpush.bf16.msra.mxu0 0
    %3836 = vmatpush.bf16.msra.mxu0 0
    %3837 = vmatpush.bf16.msra.mxu0 0
    %3838 = vmatpush.bf16.msra.mxu0 %v3126
    %3839 = vmatmul.bf16.gmra.mxu0 %v3374
    %v3840 = vpop.f32.mrf.mxu0
    %v3841 = vadd.f32 %v3828, %v3840
    %v3842 = vpop.f32.mrf.mxu0
    %3843 = vdwg.mxu0
    %v3844 = vld [vmem:[#allocation6] sm:$0x3]
    %v3845 = vld [vmem:[#allocation8] sm:$0x3]
    %v3846 = vpack.c.bf16 %v3425, %v3425
    %v3847 = vpack.c.bf16 %v3477, %v3477
    %v3848 = vpack.c.bf16 %v3529, %v3529
    %v3849 = vpack.c.bf16 %v3581, %v3581
    %v3850 = vpack.c.bf16 %v3633, %v3633
    %v3851 = vpack.c.bf16 %v3685, %v3685
    %v3852 = vpack.c.bf16 %v3737, %v3737
    %v3853 = vpack.c.bf16 %v3789, %v3789
    %v3854 = vpack.c.bf16 %v3841, %v3841
    %v3855 = vld [vmem:[#allocation26] sm:$0xff]
    %v3856 = vld [vmem:[#allocation26 + $0x8] sm:$0xff]
    %v3857 = vld [vmem:[#allocation26 + $0x10] sm:$0xff]
    %v3858 = vld [vmem:[#allocation26 + $0x18] sm:$0xff]
    %v3859 = vld [vmem:[#allocation26 + $0x20] sm:$0xff]
    %v3860 = vld [vmem:[#allocation26 + $0x28] sm:$0xff]
    %v3861 = vld [vmem:[#allocation26 + $0x30] sm:$0xff]
    %v3862 = vld [vmem:[#allocation26 + $0x38] sm:$0xff]
    %v3863 = vld [vmem:[#allocation26 + $0x40] sm:$0xff]
    %v3864 = vld [vmem:[#allocation26 + $0x48] sm:$0xff]
    %v3865 = vld [vmem:[#allocation26 + $0x50] sm:$0xff]
    %v3866 = vld [vmem:[#allocation26 + $0x58] sm:$0xff]
    %v3867 = vld [vmem:[#allocation26 + $0x60] sm:$0xff]
    %v3868 = vld [vmem:[#allocation26 + $0x68] sm:$0xff]
    %v3869 = vld [vmem:[#allocation26 + $0x70] sm:$0xff]
    %v3870 = vld [vmem:[#allocation26 + $0x78] sm:$0xff]
    %v3871 = vld [vmem:[#allocation26 + $0x80] sm:$0xff]
    %v3872 = vld [vmem:[#allocation26 + $0x88] sm:$0xff]
    %v3873 = vld [vmem:[#allocation26 + $0x90] sm:$0xff]
    %v3874 = vld [vmem:[#allocation26 + $0x98] sm:$0xff]
    %v3875 = vld [vmem:[#allocation26 + $0xa0] sm:$0xff]
    %v3876 = vld [vmem:[#allocation26 + $0xa8] sm:$0xff]
    %v3877 = vld [vmem:[#allocation26 + $0xb0] sm:$0xff]
    %v3878 = vld [vmem:[#allocation26 + $0xb8] sm:$0xff]
    %v3879 = vld [vmem:[#allocation26 + $0xc0] sm:$0xff]
    %v3880 = vld [vmem:[#allocation26 + $0xc8] sm:$0xff]
    %v3881 = vld [vmem:[#allocation26 + $0xd0] sm:$0xff]
    %v3882 = vld [vmem:[#allocation26 + $0xd8] sm:$0xff]
    %v3883 = vld [vmem:[#allocation26 + $0xe0] sm:$0xff]
    %v3884 = vld [vmem:[#allocation26 + $0xe8] sm:$0xff]
    %v3885 = vld [vmem:[#allocation26 + $0xf0] sm:$0xff]
    %v3886 = vld [vmem:[#allocation26 + $0xf8] sm:$0xff]
    %v3887 = vld [vmem:[#allocation26 + $0x100] sm:$0xff]
    %v3888 = vld [vmem:[#allocation26 + $0x108] sm:$0xff]
    %v3889 = vld [vmem:[#allocation26 + $0x110] sm:$0xff]
    %v3890 = vld [vmem:[#allocation26 + $0x118] sm:$0xff]
    %v3891 = vld [vmem:[#allocation26 + $0x120] sm:$0xff]
    %v3892 = vld [vmem:[#allocation26 + $0x128] sm:$0xff]
    %v3893 = vld [vmem:[#allocation26 + $0x130] sm:$0xff]
    %v3894 = vld [vmem:[#allocation26 + $0x138] sm:$0xff]
    %v3895 = vld [vmem:[#allocation26 + $0x140] sm:$0xff]
    %v3896 = vld [vmem:[#allocation26 + $0x148] sm:$0xff]
    %v3897 = vld [vmem:[#allocation26 + $0x150] sm:$0xff]
    %v3898 = vld [vmem:[#allocation26 + $0x158] sm:$0xff]
    %v3899 = vld [vmem:[#allocation26 + $0x160] sm:$0xff]
    %v3900 = vld [vmem:[#allocation26 + $0x168] sm:$0xff]
    %v3901 = vld [vmem:[#allocation26 + $0x170] sm:$0xff]
    %v3902 = vld [vmem:[#allocation26 + $0x178] sm:$0xff]
    %v3903 = vld [vmem:[#allocation26 + $0x180] sm:$0xff]
    %v3904 = vld [vmem:[#allocation26 + $0x188] sm:$0xff]
    %v3905 = vld [vmem:[#allocation26 + $0x190] sm:$0xff]
    %v3906 = vld [vmem:[#allocation26 + $0x198] sm:$0xff]
    %v3907 = vld [vmem:[#allocation26 + $0x1a0] sm:$0xff]
    %v3908 = vld [vmem:[#allocation26 + $0x1a8] sm:$0xff]
    %v3909 = vld [vmem:[#allocation26 + $0x1b0] sm:$0xff]
    %v3910 = vld [vmem:[#allocation26 + $0x1b8] sm:$0xff]
    %v3911 = vld [vmem:[#allocation26 + $0x1c0] sm:$0xff]
    %v3912 = vld [vmem:[#allocation26 + $0x1c8] sm:$0xff]
    %v3913 = vld [vmem:[#allocation26 + $0x1d0] sm:$0xff]
    %v3914 = vld [vmem:[#allocation26 + $0x1d8] sm:$0xff]
    %v3915 = vld [vmem:[#allocation26 + $0x1e0] sm:$0xff]
    %v3916 = vld [vmem:[#allocation26 + $0x1e8] sm:$0xff]
    %v3917 = vld [vmem:[#allocation26 + $0x1f0] sm:$0xff]
    %v3918 = vld [vmem:[#allocation26 + $0x1f8] sm:$0xff]
    %v3919 = vld [vmem:[#allocation26 + $0x200] sm:$0xff]
    %v3920 = vld [vmem:[#allocation26 + $0x208] sm:$0xff]
    %v3921 = vld [vmem:[#allocation26 + $0x210] sm:$0xff]
    %v3922 = vld [vmem:[#allocation26 + $0x218] sm:$0xff]
    %v3923 = vld [vmem:[#allocation26 + $0x220] sm:$0xff]
    %v3924 = vld [vmem:[#allocation26 + $0x228] sm:$0xff]
    %v3925 = vld [vmem:[#allocation26 + $0x230] sm:$0xff]
    %v3926 = vld [vmem:[#allocation26 + $0x238] sm:$0xff]
    %v3927 = vld [vmem:[#allocation26 + $0x240] sm:$0xff]
    %v3928 = vld [vmem:[#allocation26 + $0x248] sm:$0xff]
    %v3929 = vld [vmem:[#allocation26 + $0x250] sm:$0xff]
    %v3930 = vld [vmem:[#allocation26 + $0x258] sm:$0xff]
    %v3931 = vld [vmem:[#allocation26 + $0x260] sm:$0xff]
    %v3932 = vld [vmem:[#allocation26 + $0x268] sm:$0xff]
    %v3933 = vld [vmem:[#allocation26 + $0x270] sm:$0xff]
    %v3934 = vld [vmem:[#allocation26 + $0x278] sm:$0xff]
    %v3935 = vld [vmem:[#allocation26 + $0x280] sm:$0xff]
    %v3936 = vld [vmem:[#allocation26 + $0x288] sm:$0xff]
    %v3937 = vld [vmem:[#allocation26 + $0x290] sm:$0xff]
    %v3938 = vld [vmem:[#allocation26 + $0x298] sm:$0xff]
    %v3939 = vld [vmem:[#allocation26 + $0x2a0] sm:$0xff]
    %v3940 = vld [vmem:[#allocation26 + $0x2a8] sm:$0xff]
    %v3941 = vld [vmem:[#allocation26 + $0x2b0] sm:$0xff]
    %v3942 = vld [vmem:[#allocation26 + $0x2b8] sm:$0xff]
    %v3943 = vld [vmem:[#allocation26 + $0x2c0] sm:$0xff]
    %v3944 = vld [vmem:[#allocation26 + $0x2c8] sm:$0xff]
    %v3945 = vld [vmem:[#allocation26 + $0x2d0] sm:$0xff]
    %v3946 = vld [vmem:[#allocation26 + $0x2d8] sm:$0xff]
    %v3947 = vld [vmem:[#allocation26 + $0x2e0] sm:$0xff]
    %v3948 = vld [vmem:[#allocation26 + $0x2e8] sm:$0xff]
    %v3949 = vld [vmem:[#allocation26 + $0x2f0] sm:$0xff]
    %v3950 = vld [vmem:[#allocation26 + $0x2f8] sm:$0xff]
    %v3951 = vld [vmem:[#allocation26 + $0x300] sm:$0xff]
    %v3952 = vld [vmem:[#allocation26 + $0x308] sm:$0xff]
    %v3953 = vld [vmem:[#allocation26 + $0x310] sm:$0xff]
    %v3954 = vld [vmem:[#allocation26 + $0x318] sm:$0xff]
    %v3955 = vld [vmem:[#allocation26 + $0x320] sm:$0xff]
    %v3956 = vld [vmem:[#allocation26 + $0x328] sm:$0xff]
    %v3957 = vld [vmem:[#allocation26 + $0x330] sm:$0xff]
    %v3958 = vld [vmem:[#allocation26 + $0x338] sm:$0xff]
    %v3959 = vld [vmem:[#allocation26 + $0x340] sm:$0xff]
    %v3960 = vld [vmem:[#allocation26 + $0x348] sm:$0xff]
    %v3961 = vld [vmem:[#allocation26 + $0x350] sm:$0xff]
    %v3962 = vld [vmem:[#allocation26 + $0x358] sm:$0xff]
    %v3963 = vld [vmem:[#allocation26 + $0x360] sm:$0xff]
    %v3964 = vld [vmem:[#allocation26 + $0x368] sm:$0xff]
    %v3965 = vld [vmem:[#allocation26 + $0x370] sm:$0xff]
    %v3966 = vld [vmem:[#allocation26 + $0x378] sm:$0xff]
    %v3967 = vld [vmem:[#allocation26 + $0x380] sm:$0xff]
    %v3968 = vld [vmem:[#allocation26 + $0x388] sm:$0xff]
    %v3969 = vld [vmem:[#allocation26 + $0x390] sm:$0xff]
    %v3970 = vld [vmem:[#allocation26 + $0x398] sm:$0xff]
    %v3971 = vld [vmem:[#allocation26 + $0x3a0] sm:$0xff]
    %v3972 = vld [vmem:[#allocation26 + $0x3a8] sm:$0xff]
    %v3973 = vld [vmem:[#allocation26 + $0x3b0] sm:$0xff]
    %v3974 = vld [vmem:[#allocation26 + $0x3b8] sm:$0xff]
    %v3975 = vld [vmem:[#allocation26 + $0x3c0] sm:$0xff]
    %v3976 = vld [vmem:[#allocation26 + $0x3c8] sm:$0xff]
    %v3977 = vld [vmem:[#allocation26 + $0x3d0] sm:$0xff]
    %v3978 = vld [vmem:[#allocation26 + $0x3d8] sm:$0xff]
    %v3979 = vld [vmem:[#allocation26 + $0x3e0] sm:$0xff]
    %v3980 = vld [vmem:[#allocation26 + $0x3e8] sm:$0xff]
    %v3981 = vld [vmem:[#allocation26 + $0x3f0] sm:$0xff]
    %v3982 = vld [vmem:[#allocation26 + $0x3f8] sm:$0xff]
    %v3983 = vld [vmem:[#allocation26 + $0x400] sm:$0xff]
    %v3984 = vld [vmem:[#allocation26 + $0x408] sm:$0xff]
    %v3985 = vld [vmem:[#allocation26 + $0x410] sm:$0xff]
    %v3986 = vld [vmem:[#allocation26 + $0x418] sm:$0xff]
    %v3987 = vld [vmem:[#allocation26 + $0x420] sm:$0xff]
    %v3988 = vld [vmem:[#allocation26 + $0x428] sm:$0xff]
    %v3989 = vld [vmem:[#allocation26 + $0x430] sm:$0xff]
    %v3990 = vld [vmem:[#allocation26 + $0x438] sm:$0xff]
    %v3991 = vld [vmem:[#allocation26 + $0x440] sm:$0xff]
    %v3992 = vld [vmem:[#allocation26 + $0x448] sm:$0xff]
    %v3993 = vld [vmem:[#allocation26 + $0x450] sm:$0xff]
    %v3994 = vld [vmem:[#allocation26 + $0x458] sm:$0xff]
    %v3995 = vld [vmem:[#allocation26 + $0x460] sm:$0xff]
    %v3996 = vld [vmem:[#allocation26 + $0x468] sm:$0xff]
    %v3997 = vld [vmem:[#allocation26 + $0x470] sm:$0xff]
    %v3998 = vld [vmem:[#allocation26 + $0x478] sm:$0xff]
    %v3999 = vld [vmem:[#allocation26 + $0x480] sm:$0xff]
    %v4000 = vld [vmem:[#allocation26 + $0x488] sm:$0xff]
    %v4001 = vld [vmem:[#allocation26 + $0x490] sm:$0xff]
    %v4002 = vld [vmem:[#allocation26 + $0x498] sm:$0xff]
    %v4003 = vld [vmem:[#allocation26 + $0x4a0] sm:$0xff]
    %v4004 = vld [vmem:[#allocation26 + $0x4a8] sm:$0xff]
    %v4005 = vld [vmem:[#allocation26 + $0x4b0] sm:$0xff]
    %v4006 = vld [vmem:[#allocation26 + $0x4b8] sm:$0xff]
    %v4007 = vld [vmem:[#allocation26 + $0x4c0] sm:$0xff]
    %v4008 = vld [vmem:[#allocation26 + $0x4c8] sm:$0xff]
    %v4009 = vld [vmem:[#allocation26 + $0x4d0] sm:$0xff]
    %v4010 = vld [vmem:[#allocation26 + $0x4d8] sm:$0xff]
    %v4011 = vld [vmem:[#allocation26 + $0x4e0] sm:$0xff]
    %v4012 = vld [vmem:[#allocation26 + $0x4e8] sm:$0xff]
    %v4013 = vld [vmem:[#allocation26 + $0x4f0] sm:$0xff]
    %v4014 = vld [vmem:[#allocation26 + $0x4f8] sm:$0xff]
    %v4015 = vld [vmem:[#allocation26 + $0x500] sm:$0xff]
    %v4016 = vld [vmem:[#allocation26 + $0x508] sm:$0xff]
    %v4017 = vld [vmem:[#allocation26 + $0x510] sm:$0xff]
    %v4018 = vld [vmem:[#allocation26 + $0x518] sm:$0xff]
    %v4019 = vld [vmem:[#allocation26 + $0x520] sm:$0xff]
    %v4020 = vld [vmem:[#allocation26 + $0x528] sm:$0xff]
    %v4021 = vld [vmem:[#allocation26 + $0x530] sm:$0xff]
    %v4022 = vld [vmem:[#allocation26 + $0x538] sm:$0xff]
    %v4023 = vld [vmem:[#allocation26 + $0x540] sm:$0xff]
    %v4024 = vld [vmem:[#allocation26 + $0x548] sm:$0xff]
    %v4025 = vld [vmem:[#allocation26 + $0x550] sm:$0xff]
    %v4026 = vld [vmem:[#allocation26 + $0x558] sm:$0xff]
    %v4027 = vld [vmem:[#allocation26 + $0x560] sm:$0xff]
    %v4028 = vld [vmem:[#allocation26 + $0x568] sm:$0xff]
    %v4029 = vld [vmem:[#allocation26 + $0x570] sm:$0xff]
    %v4030 = vld [vmem:[#allocation26 + $0x578] sm:$0xff]
    %v4031 = vld [vmem:[#allocation26 + $0x580] sm:$0xff]
    %v4032 = vld [vmem:[#allocation26 + $0x588] sm:$0xff]
    %v4033 = vld [vmem:[#allocation26 + $0x590] sm:$0xff]
    %v4034 = vld [vmem:[#allocation26 + $0x598] sm:$0xff]
    %v4035 = vld [vmem:[#allocation26 + $0x5a0] sm:$0xff]
    %v4036 = vld [vmem:[#allocation26 + $0x5a8] sm:$0xff]
    %v4037 = vld [vmem:[#allocation26 + $0x5b0] sm:$0xff]
    %v4038 = vld [vmem:[#allocation26 + $0x5b8] sm:$0xff]
    %v4039 = vld [vmem:[#allocation26 + $0x5c0] sm:$0xff]
    %v4040 = vld [vmem:[#allocation26 + $0x5c8] sm:$0xff]
    %v4041 = vld [vmem:[#allocation26 + $0x5d0] sm:$0xff]
    %v4042 = vld [vmem:[#allocation26 + $0x5d8] sm:$0xff]
    %v4043 = vld [vmem:[#allocation26 + $0x5e0] sm:$0xff]
    %v4044 = vld [vmem:[#allocation26 + $0x5e8] sm:$0xff]
    %v4045 = vld [vmem:[#allocation26 + $0x5f0] sm:$0xff]
    %v4046 = vld [vmem:[#allocation26 + $0x5f8] sm:$0xff]
    %v4047 = vld [vmem:[#allocation26 + $0x600] sm:$0xff]
    %v4048 = vld [vmem:[#allocation26 + $0x608] sm:$0xff]
    %v4049 = vld [vmem:[#allocation26 + $0x610] sm:$0xff]
    %v4050 = vld [vmem:[#allocation26 + $0x618] sm:$0xff]
    %v4051 = vld [vmem:[#allocation26 + $0x620] sm:$0xff]
    %v4052 = vld [vmem:[#allocation26 + $0x628] sm:$0xff]
    %v4053 = vld [vmem:[#allocation26 + $0x630] sm:$0xff]
    %v4054 = vld [vmem:[#allocation26 + $0x638] sm:$0xff]
    %v4055 = vld [vmem:[#allocation26 + $0x640] sm:$0xff]
    %v4056 = vld [vmem:[#allocation26 + $0x648] sm:$0xff]
    %v4057 = vld [vmem:[#allocation26 + $0x650] sm:$0xff]
    %v4058 = vld [vmem:[#allocation26 + $0x658] sm:$0xff]
    %v4059 = vld [vmem:[#allocation26 + $0x660] sm:$0xff]
    %v4060 = vld [vmem:[#allocation26 + $0x668] sm:$0xff]
    %v4061 = vld [vmem:[#allocation26 + $0x670] sm:$0xff]
    %v4062 = vld [vmem:[#allocation26 + $0x678] sm:$0xff]
    %v4063 = vld [vmem:[#allocation26 + $0x680] sm:$0xff]
    %v4064 = vld [vmem:[#allocation26 + $0x688] sm:$0xff]
    %v4065 = vld [vmem:[#allocation26 + $0x690] sm:$0xff]
    %v4066 = vld [vmem:[#allocation26 + $0x698] sm:$0xff]
    %v4067 = vld [vmem:[#allocation26 + $0x6a0] sm:$0xff]
    %v4068 = vld [vmem:[#allocation26 + $0x6a8] sm:$0xff]
    %v4069 = vld [vmem:[#allocation26 + $0x6b0] sm:$0xff]
    %v4070 = vld [vmem:[#allocation26 + $0x6b8] sm:$0xff]
    %v4071 = vld [vmem:[#allocation26 + $0x6c0] sm:$0xff]
    %v4072 = vld [vmem:[#allocation26 + $0x6c8] sm:$0xff]
    %v4073 = vld [vmem:[#allocation26 + $0x6d0] sm:$0xff]
    %v4074 = vld [vmem:[#allocation26 + $0x6d8] sm:$0xff]
    %v4075 = vld [vmem:[#allocation26 + $0x6e0] sm:$0xff]
    %v4076 = vld [vmem:[#allocation26 + $0x6e8] sm:$0xff]
    %v4077 = vld [vmem:[#allocation26 + $0x6f0] sm:$0xff]
    %v4078 = vld [vmem:[#allocation26 + $0x6f8] sm:$0xff]
    %v4079 = vld [vmem:[#allocation26 + $0x700] sm:$0xff]
    %v4080 = vld [vmem:[#allocation26 + $0x708] sm:$0xff]
    %v4081 = vld [vmem:[#allocation26 + $0x710] sm:$0xff]
    %v4082 = vld [vmem:[#allocation26 + $0x718] sm:$0xff]
    %v4083 = vld [vmem:[#allocation26 + $0x720] sm:$0xff]
    %v4084 = vld [vmem:[#allocation26 + $0x728] sm:$0xff]
    %v4085 = vld [vmem:[#allocation26 + $0x730] sm:$0xff]
    %v4086 = vld [vmem:[#allocation26 + $0x738] sm:$0xff]
    %v4087 = vld [vmem:[#allocation26 + $0x740] sm:$0xff]
    %v4088 = vld [vmem:[#allocation26 + $0x748] sm:$0xff]
    %v4089 = vld [vmem:[#allocation26 + $0x750] sm:$0xff]
    %v4090 = vld [vmem:[#allocation26 + $0x758] sm:$0xff]
    %v4091 = vld [vmem:[#allocation26 + $0x760] sm:$0xff]
    %v4092 = vld [vmem:[#allocation26 + $0x768] sm:$0xff]
    %v4093 = vld [vmem:[#allocation26 + $0x770] sm:$0xff]
    %v4094 = vld [vmem:[#allocation26 + $0x778] sm:$0xff]
    %v4095 = vld [vmem:[#allocation26 + $0x780] sm:$0xff]
    %v4096 = vld [vmem:[#allocation26 + $0x788] sm:$0xff]
    %v4097 = vld [vmem:[#allocation26 + $0x790] sm:$0xff]
    %v4098 = vld [vmem:[#allocation26 + $0x798] sm:$0xff]
    %v4099 = vld [vmem:[#allocation26 + $0x7a0] sm:$0xff]
    %v4100 = vld [vmem:[#allocation26 + $0x7a8] sm:$0xff]
    %v4101 = vld [vmem:[#allocation26 + $0x7b0] sm:$0xff]
    %v4102 = vld [vmem:[#allocation26 + $0x7b8] sm:$0xff]
    %v4103 = vld [vmem:[#allocation26 + $0x7c0] sm:$0xff]
    %v4104 = vld [vmem:[#allocation26 + $0x7c8] sm:$0xff]
    %v4105 = vld [vmem:[#allocation26 + $0x7d0] sm:$0xff]
    %v4106 = vld [vmem:[#allocation26 + $0x7d8] sm:$0xff]
    %v4107 = vld [vmem:[#allocation26 + $0x7e0] sm:$0xff]
    %v4108 = vld [vmem:[#allocation26 + $0x7e8] sm:$0xff]
    %v4109 = vld [vmem:[#allocation26 + $0x7f0] sm:$0xff]
    %v4110 = vld [vmem:[#allocation26 + $0x7f8] sm:$0xff]
    %v4111 = vld [vmem:[#allocation26 + $0x800] sm:$0xff]
    %v4112 = vld [vmem:[#allocation26 + $0x808] sm:$0xff]
    %v4113 = vld [vmem:[#allocation26 + $0x810] sm:$0xff]
    %v4114 = vld [vmem:[#allocation26 + $0x818] sm:$0xff]
    %v4115 = vld [vmem:[#allocation26 + $0x820] sm:$0xff]
    %v4116 = vld [vmem:[#allocation26 + $0x828] sm:$0xff]
    %v4117 = vld [vmem:[#allocation26 + $0x830] sm:$0xff]
    %v4118 = vld [vmem:[#allocation26 + $0x838] sm:$0xff]
    %v4119 = vld [vmem:[#allocation26 + $0x840] sm:$0xff]
    %v4120 = vld [vmem:[#allocation26 + $0x848] sm:$0xff]
    %v4121 = vld [vmem:[#allocation26 + $0x850] sm:$0xff]
    %v4122 = vld [vmem:[#allocation26 + $0x858] sm:$0xff]
    %v4123 = vld [vmem:[#allocation26 + $0x860] sm:$0xff]
    %v4124 = vld [vmem:[#allocation26 + $0x868] sm:$0xff]
    %v4125 = vld [vmem:[#allocation26 + $0x870] sm:$0xff]
    %v4126 = vld [vmem:[#allocation26 + $0x878] sm:$0xff]
    %v4127 = vld [vmem:[#allocation26 + $0x880] sm:$0xff]
    %v4128 = vld [vmem:[#allocation26 + $0x888] sm:$0xff]
    %v4129 = vld [vmem:[#allocation26 + $0x890] sm:$0xff]
    %v4130 = vld [vmem:[#allocation26 + $0x898] sm:$0xff]
    %v4131 = vld [vmem:[#allocation26 + $0x8a0] sm:$0xff]
    %v4132 = vld [vmem:[#allocation26 + $0x8a8] sm:$0xff]
    %v4133 = vld [vmem:[#allocation26 + $0x8b0] sm:$0xff]
    %v4134 = vld [vmem:[#allocation26 + $0x8b8] sm:$0xff]
    %v4135 = vld [vmem:[#allocation26 + $0x8c0] sm:$0xff]
    %v4136 = vld [vmem:[#allocation26 + $0x8c8] sm:$0xff]
    %v4137 = vld [vmem:[#allocation26 + $0x8d0] sm:$0xff]
    %v4138 = vld [vmem:[#allocation26 + $0x8d8] sm:$0xff]
    %v4139 = vld [vmem:[#allocation26 + $0x8e0] sm:$0xff]
    %v4140 = vld [vmem:[#allocation26 + $0x8e8] sm:$0xff]
    %v4141 = vld [vmem:[#allocation26 + $0x8f0] sm:$0xff]
    %v4142 = vld [vmem:[#allocation26 + $0x8f8] sm:$0xff]
    %v4143 = vld [vmem:[#allocation26 + $0x900] sm:$0xff]
    %v4144 = vld [vmem:[#allocation26 + $0x908] sm:$0xff]
    %v4145 = vld [vmem:[#allocation26 + $0x910] sm:$0xff]
    %v4146 = vld [vmem:[#allocation26 + $0x918] sm:$0xff]
    %v4147 = vld [vmem:[#allocation26 + $0x920] sm:$0xff]
    %v4148 = vld [vmem:[#allocation26 + $0x928] sm:$0xff]
    %v4149 = vld [vmem:[#allocation26 + $0x930] sm:$0xff]
    %v4150 = vld [vmem:[#allocation26 + $0x938] sm:$0xff]
    %v4151 = vld [vmem:[#allocation26 + $0x940] sm:$0xff]
    %v4152 = vld [vmem:[#allocation26 + $0x948] sm:$0xff]
    %v4153 = vld [vmem:[#allocation26 + $0x950] sm:$0xff]
    %v4154 = vld [vmem:[#allocation26 + $0x958] sm:$0xff]
    %v4155 = vld [vmem:[#allocation26 + $0x960] sm:$0xff]
    %v4156 = vld [vmem:[#allocation26 + $0x968] sm:$0xff]
    %v4157 = vld [vmem:[#allocation26 + $0x970] sm:$0xff]
    %v4158 = vld [vmem:[#allocation26 + $0x978] sm:$0xff]
    %v4159 = vld [vmem:[#allocation26 + $0x980] sm:$0xff]
    %v4160 = vld [vmem:[#allocation26 + $0x988] sm:$0xff]
    %v4161 = vld [vmem:[#allocation26 + $0x990] sm:$0xff]
    %v4162 = vld [vmem:[#allocation26 + $0x998] sm:$0xff]
    %v4163 = vld [vmem:[#allocation26 + $0x9a0] sm:$0xff]
    %v4164 = vld [vmem:[#allocation26 + $0x9a8] sm:$0xff]
    %v4165 = vld [vmem:[#allocation26 + $0x9b0] sm:$0xff]
    %v4166 = vld [vmem:[#allocation26 + $0x9b8] sm:$0xff]
    %v4167 = vld [vmem:[#allocation26 + $0x9c0] sm:$0xff]
    %v4168 = vld [vmem:[#allocation26 + $0x9c8] sm:$0xff]
    %v4169 = vld [vmem:[#allocation26 + $0x9d0] sm:$0xff]
    %v4170 = vld [vmem:[#allocation26 + $0x9d8] sm:$0xff]
    %v4171 = vld [vmem:[#allocation26 + $0x9e0] sm:$0xff]
    %v4172 = vld [vmem:[#allocation26 + $0x9e8] sm:$0xff]
    %v4173 = vld [vmem:[#allocation26 + $0x9f0] sm:$0xff]
    %v4174 = vld [vmem:[#allocation26 + $0x9f8] sm:$0xff]
    %v4175 = vld [vmem:[#allocation26 + $0xa00] sm:$0xff]
    %v4176 = vld [vmem:[#allocation26 + $0xa08] sm:$0xff]
    %v4177 = vld [vmem:[#allocation26 + $0xa10] sm:$0xff]
    %v4178 = vld [vmem:[#allocation26 + $0xa18] sm:$0xff]
    %v4179 = vld [vmem:[#allocation26 + $0xa20] sm:$0xff]
    %v4180 = vld [vmem:[#allocation26 + $0xa28] sm:$0xff]
    %v4181 = vld [vmem:[#allocation26 + $0xa30] sm:$0xff]
    %v4182 = vld [vmem:[#allocation26 + $0xa38] sm:$0xff]
    %v4183 = vld [vmem:[#allocation26 + $0xa40] sm:$0xff]
    %v4184 = vld [vmem:[#allocation26 + $0xa48] sm:$0xff]
    %v4185 = vld [vmem:[#allocation26 + $0xa50] sm:$0xff]
    %v4186 = vld [vmem:[#allocation26 + $0xa58] sm:$0xff]
    %v4187 = vld [vmem:[#allocation26 + $0xa60] sm:$0xff]
    %v4188 = vld [vmem:[#allocation26 + $0xa68] sm:$0xff]
    %v4189 = vld [vmem:[#allocation26 + $0xa70] sm:$0xff]
    %v4190 = vld [vmem:[#allocation26 + $0xa78] sm:$0xff]
    %v4191 = vld [vmem:[#allocation26 + $0xa80] sm:$0xff]
    %v4192 = vld [vmem:[#allocation26 + $0xa88] sm:$0xff]
    %v4193 = vld [vmem:[#allocation26 + $0xa90] sm:$0xff]
    %v4194 = vld [vmem:[#allocation26 + $0xa98] sm:$0xff]
    %v4195 = vld [vmem:[#allocation26 + $0xaa0] sm:$0xff]
    %v4196 = vld [vmem:[#allocation26 + $0xaa8] sm:$0xff]
    %v4197 = vld [vmem:[#allocation26 + $0xab0] sm:$0xff]
    %v4198 = vld [vmem:[#allocation26 + $0xab8] sm:$0xff]
    %v4199 = vld [vmem:[#allocation26 + $0xac0] sm:$0xff]
    %v4200 = vld [vmem:[#allocation26 + $0xac8] sm:$0xff]
    %v4201 = vld [vmem:[#allocation26 + $0xad0] sm:$0xff]
    %v4202 = vld [vmem:[#allocation26 + $0xad8] sm:$0xff]
    %v4203 = vld [vmem:[#allocation26 + $0xae0] sm:$0xff]
    %v4204 = vld [vmem:[#allocation26 + $0xae8] sm:$0xff]
    %v4205 = vld [vmem:[#allocation26 + $0xaf0] sm:$0xff]
    %v4206 = vld [vmem:[#allocation26 + $0xaf8] sm:$0xff]
    %v4207 = vld [vmem:[#allocation26 + $0xb00] sm:$0xff]
    %v4208 = vld [vmem:[#allocation26 + $0xb08] sm:$0xff]
    %v4209 = vld [vmem:[#allocation26 + $0xb10] sm:$0xff]
    %v4210 = vld [vmem:[#allocation26 + $0xb18] sm:$0xff]
    %v4211 = vld [vmem:[#allocation26 + $0xb20] sm:$0xff]
    %v4212 = vld [vmem:[#allocation26 + $0xb28] sm:$0xff]
    %v4213 = vld [vmem:[#allocation26 + $0xb30] sm:$0xff]
    %v4214 = vld [vmem:[#allocation26 + $0xb38] sm:$0xff]
    %v4215 = vld [vmem:[#allocation26 + $0xb40] sm:$0xff]
    %v4216 = vld [vmem:[#allocation26 + $0xb48] sm:$0xff]
    %v4217 = vld [vmem:[#allocation26 + $0xb50] sm:$0xff]
    %v4218 = vld [vmem:[#allocation26 + $0xb58] sm:$0xff]
    %v4219 = vld [vmem:[#allocation26 + $0xb60] sm:$0xff]
    %v4220 = vld [vmem:[#allocation26 + $0xb68] sm:$0xff]
    %v4221 = vld [vmem:[#allocation26 + $0xb70] sm:$0xff]
    %v4222 = vld [vmem:[#allocation26 + $0xb78] sm:$0xff]
    %v4223 = vld [vmem:[#allocation26 + $0xb80] sm:$0xff]
    %v4224 = vld [vmem:[#allocation26 + $0xb88] sm:$0xff]
    %v4225 = vld [vmem:[#allocation26 + $0xb90] sm:$0xff]
    %v4226 = vld [vmem:[#allocation26 + $0xb98] sm:$0xff]
    %v4227 = vld [vmem:[#allocation26 + $0xba0] sm:$0xff]
    %v4228 = vld [vmem:[#allocation26 + $0xba8] sm:$0xff]
    %v4229 = vld [vmem:[#allocation26 + $0xbb0] sm:$0xff]
    %v4230 = vld [vmem:[#allocation26 + $0xbb8] sm:$0xff]
    %v4231 = vld [vmem:[#allocation26 + $0xbc0] sm:$0xff]
    %v4232 = vld [vmem:[#allocation26 + $0xbc8] sm:$0xff]
    %v4233 = vld [vmem:[#allocation26 + $0xbd0] sm:$0xff]
    %v4234 = vld [vmem:[#allocation26 + $0xbd8] sm:$0xff]
    %v4235 = vld [vmem:[#allocation26 + $0xbe0] sm:$0xff]
    %v4236 = vld [vmem:[#allocation26 + $0xbe8] sm:$0xff]
    %v4237 = vld [vmem:[#allocation26 + $0xbf0] sm:$0xff]
    %v4238 = vld [vmem:[#allocation26 + $0xbf8] sm:$0xff]
    %v4239 = vld [vmem:[#allocation26 + $0xc00] sm:$0xff]
    %v4240 = vld [vmem:[#allocation26 + $0xc08] sm:$0xff]
    %v4241 = vld [vmem:[#allocation26 + $0xc10] sm:$0xff]
    %v4242 = vld [vmem:[#allocation26 + $0xc18] sm:$0xff]
    %v4243 = vld [vmem:[#allocation26 + $0xc20] sm:$0xff]
    %v4244 = vld [vmem:[#allocation26 + $0xc28] sm:$0xff]
    %v4245 = vld [vmem:[#allocation26 + $0xc30] sm:$0xff]
    %v4246 = vld [vmem:[#allocation26 + $0xc38] sm:$0xff]
    %v4247 = vld [vmem:[#allocation26 + $0xc40] sm:$0xff]
    %v4248 = vld [vmem:[#allocation26 + $0xc48] sm:$0xff]
    %v4249 = vld [vmem:[#allocation26 + $0xc50] sm:$0xff]
    %v4250 = vld [vmem:[#allocation26 + $0xc58] sm:$0xff]
    %v4251 = vld [vmem:[#allocation26 + $0xc60] sm:$0xff]
    %v4252 = vld [vmem:[#allocation26 + $0xc68] sm:$0xff]
    %v4253 = vld [vmem:[#allocation26 + $0xc70] sm:$0xff]
    %v4254 = vld [vmem:[#allocation26 + $0xc78] sm:$0xff]
    %v4255 = vld [vmem:[#allocation26 + $0xc80] sm:$0xff]
    %v4256 = vld [vmem:[#allocation26 + $0xc88] sm:$0xff]
    %v4257 = vld [vmem:[#allocation26 + $0xc90] sm:$0xff]
    %v4258 = vld [vmem:[#allocation26 + $0xc98] sm:$0xff]
    %v4259 = vld [vmem:[#allocation26 + $0xca0] sm:$0xff]
    %v4260 = vld [vmem:[#allocation26 + $0xca8] sm:$0xff]
    %v4261 = vld [vmem:[#allocation26 + $0xcb0] sm:$0xff]
    %v4262 = vld [vmem:[#allocation26 + $0xcb8] sm:$0xff]
    %v4263 = vld [vmem:[#allocation26 + $0xcc0] sm:$0xff]
    %v4264 = vld [vmem:[#allocation26 + $0xcc8] sm:$0xff]
    %v4265 = vld [vmem:[#allocation26 + $0xcd0] sm:$0xff]
    %v4266 = vld [vmem:[#allocation26 + $0xcd8] sm:$0xff]
    %v4267 = vld [vmem:[#allocation26 + $0xce0] sm:$0xff]
    %v4268 = vld [vmem:[#allocation26 + $0xce8] sm:$0xff]
    %v4269 = vld [vmem:[#allocation26 + $0xcf0] sm:$0xff]
    %v4270 = vld [vmem:[#allocation26 + $0xcf8] sm:$0xff]
    %v4271 = vld [vmem:[#allocation26 + $0xd00] sm:$0xff]
    %v4272 = vld [vmem:[#allocation26 + $0xd08] sm:$0xff]
    %v4273 = vld [vmem:[#allocation26 + $0xd10] sm:$0xff]
    %v4274 = vld [vmem:[#allocation26 + $0xd18] sm:$0xff]
    %v4275 = vld [vmem:[#allocation26 + $0xd20] sm:$0xff]
    %v4276 = vld [vmem:[#allocation26 + $0xd28] sm:$0xff]
    %v4277 = vld [vmem:[#allocation26 + $0xd30] sm:$0xff]
    %v4278 = vld [vmem:[#allocation26 + $0xd38] sm:$0xff]
    %v4279 = vld [vmem:[#allocation26 + $0xd40] sm:$0xff]
    %v4280 = vld [vmem:[#allocation26 + $0xd48] sm:$0xff]
    %v4281 = vld [vmem:[#allocation26 + $0xd50] sm:$0xff]
    %v4282 = vld [vmem:[#allocation26 + $0xd58] sm:$0xff]
    %v4283 = vld [vmem:[#allocation26 + $0xd60] sm:$0xff]
    %v4284 = vld [vmem:[#allocation26 + $0xd68] sm:$0xff]
    %v4285 = vld [vmem:[#allocation26 + $0xd70] sm:$0xff]
    %v4286 = vld [vmem:[#allocation26 + $0xd78] sm:$0xff]
    %v4287 = vld [vmem:[#allocation26 + $0xd80] sm:$0xff]
    %v4288 = vld [vmem:[#allocation26 + $0xd88] sm:$0xff]
    %v4289 = vld [vmem:[#allocation26 + $0xd90] sm:$0xff]
    %v4290 = vld [vmem:[#allocation26 + $0xd98] sm:$0xff]
    %v4291 = vld [vmem:[#allocation26 + $0xda0] sm:$0xff]
    %v4292 = vld [vmem:[#allocation26 + $0xda8] sm:$0xff]
    %v4293 = vld [vmem:[#allocation26 + $0xdb0] sm:$0xff]
    %v4294 = vld [vmem:[#allocation26 + $0xdb8] sm:$0xff]
    %v4295 = vld [vmem:[#allocation26 + $0xdc0] sm:$0xff]
    %v4296 = vld [vmem:[#allocation26 + $0xdc8] sm:$0xff]
    %v4297 = vld [vmem:[#allocation26 + $0xdd0] sm:$0xff]
    %v4298 = vld [vmem:[#allocation26 + $0xdd8] sm:$0xff]
    %v4299 = vld [vmem:[#allocation26 + $0xde0] sm:$0xff]
    %v4300 = vld [vmem:[#allocation26 + $0xde8] sm:$0xff]
    %v4301 = vld [vmem:[#allocation26 + $0xdf0] sm:$0xff]
    %v4302 = vld [vmem:[#allocation26 + $0xdf8] sm:$0xff]
    %v4303 = vld [vmem:[#allocation26 + $0xe00] sm:$0xff]
    %v4304 = vld [vmem:[#allocation26 + $0xe08] sm:$0xff]
    %v4305 = vld [vmem:[#allocation26 + $0xe10] sm:$0xff]
    %v4306 = vld [vmem:[#allocation26 + $0xe18] sm:$0xff]
    %v4307 = vld [vmem:[#allocation26 + $0xe20] sm:$0xff]
    %v4308 = vld [vmem:[#allocation26 + $0xe28] sm:$0xff]
    %v4309 = vld [vmem:[#allocation26 + $0xe30] sm:$0xff]
    %v4310 = vld [vmem:[#allocation26 + $0xe38] sm:$0xff]
    %v4311 = vld [vmem:[#allocation26 + $0xe40] sm:$0xff]
    %v4312 = vld [vmem:[#allocation26 + $0xe48] sm:$0xff]
    %v4313 = vld [vmem:[#allocation26 + $0xe50] sm:$0xff]
    %v4314 = vld [vmem:[#allocation26 + $0xe58] sm:$0xff]
    %v4315 = vld [vmem:[#allocation26 + $0xe60] sm:$0xff]
    %v4316 = vld [vmem:[#allocation26 + $0xe68] sm:$0xff]
    %v4317 = vld [vmem:[#allocation26 + $0xe70] sm:$0xff]
    %v4318 = vld [vmem:[#allocation26 + $0xe78] sm:$0xff]
    %v4319 = vld [vmem:[#allocation26 + $0xe80] sm:$0xff]
    %v4320 = vld [vmem:[#allocation26 + $0xe88] sm:$0xff]
    %v4321 = vld [vmem:[#allocation26 + $0xe90] sm:$0xff]
    %v4322 = vld [vmem:[#allocation26 + $0xe98] sm:$0xff]
    %v4323 = vld [vmem:[#allocation26 + $0xea0] sm:$0xff]
    %v4324 = vld [vmem:[#allocation26 + $0xea8] sm:$0xff]
    %v4325 = vld [vmem:[#allocation26 + $0xeb0] sm:$0xff]
    %v4326 = vld [vmem:[#allocation26 + $0xeb8] sm:$0xff]
    %v4327 = vld [vmem:[#allocation26 + $0xec0] sm:$0xff]
    %v4328 = vld [vmem:[#allocation26 + $0xec8] sm:$0xff]
    %v4329 = vld [vmem:[#allocation26 + $0xed0] sm:$0xff]
    %v4330 = vld [vmem:[#allocation26 + $0xed8] sm:$0xff]
    %v4331 = vld [vmem:[#allocation26 + $0xee0] sm:$0xff]
    %v4332 = vld [vmem:[#allocation26 + $0xee8] sm:$0xff]
    %v4333 = vld [vmem:[#allocation26 + $0xef0] sm:$0xff]
    %v4334 = vld [vmem:[#allocation26 + $0xef8] sm:$0xff]
    %v4335 = vld [vmem:[#allocation26 + $0xf00] sm:$0xff]
    %v4336 = vld [vmem:[#allocation26 + $0xf08] sm:$0xff]
    %v4337 = vld [vmem:[#allocation26 + $0xf10] sm:$0xff]
    %v4338 = vld [vmem:[#allocation26 + $0xf18] sm:$0xff]
    %v4339 = vld [vmem:[#allocation26 + $0xf20] sm:$0xff]
    %v4340 = vld [vmem:[#allocation26 + $0xf28] sm:$0xff]
    %v4341 = vld [vmem:[#allocation26 + $0xf30] sm:$0xff]
    %v4342 = vld [vmem:[#allocation26 + $0xf38] sm:$0xff]
    %v4343 = vld [vmem:[#allocation26 + $0xf40] sm:$0xff]
    %v4344 = vld [vmem:[#allocation26 + $0xf48] sm:$0xff]
    %v4345 = vld [vmem:[#allocation26 + $0xf50] sm:$0xff]
    %v4346 = vld [vmem:[#allocation26 + $0xf58] sm:$0xff]
    %v4347 = vld [vmem:[#allocation26 + $0xf60] sm:$0xff]
    %v4348 = vld [vmem:[#allocation26 + $0xf68] sm:$0xff]
    %v4349 = vld [vmem:[#allocation26 + $0xf70] sm:$0xff]
    %v4350 = vld [vmem:[#allocation26 + $0xf78] sm:$0xff]
    %v4351 = vld [vmem:[#allocation26 + $0xf80] sm:$0xff]
    %v4352 = vld [vmem:[#allocation26 + $0xf88] sm:$0xff]
    %v4353 = vld [vmem:[#allocation26 + $0xf90] sm:$0xff]
    %v4354 = vld [vmem:[#allocation26 + $0xf98] sm:$0xff]
    %v4355 = vld [vmem:[#allocation26 + $0xfa0] sm:$0xff]
    %v4356 = vld [vmem:[#allocation26 + $0xfa8] sm:$0xff]
    %v4357 = vld [vmem:[#allocation26 + $0xfb0] sm:$0xff]
    %v4358 = vld [vmem:[#allocation26 + $0xfb8] sm:$0xff]
    %v4359 = vld [vmem:[#allocation26 + $0xfc0] sm:$0xff]
    %v4360 = vld [vmem:[#allocation26 + $0xfc8] sm:$0xff]
    %v4361 = vld [vmem:[#allocation26 + $0xfd0] sm:$0xff]
    %v4362 = vld [vmem:[#allocation26 + $0xfd8] sm:$0xff]
    %v4363 = vld [vmem:[#allocation26 + $0xfe0] sm:$0xff]
    %v4364 = vld [vmem:[#allocation26 + $0xfe8] sm:$0xff]
    %v4365 = vld [vmem:[#allocation26 + $0xff0] sm:$0xff]
    %v4366 = vld [vmem:[#allocation26 + $0xff8] sm:$0xff]
    %v4367 = vld [vmem:[#allocation26 + $0x1000] sm:$0xff]
    %v4368 = vld [vmem:[#allocation26 + $0x1008] sm:$0xff]
    %v4369 = vld [vmem:[#allocation26 + $0x1010] sm:$0xff]
    %v4370 = vld [vmem:[#allocation26 + $0x1018] sm:$0xff]
    %v4371 = vld [vmem:[#allocation26 + $0x1020] sm:$0xff]
    %v4372 = vld [vmem:[#allocation26 + $0x1028] sm:$0xff]
    %v4373 = vld [vmem:[#allocation26 + $0x1030] sm:$0xff]
    %v4374 = vld [vmem:[#allocation26 + $0x1038] sm:$0xff]
    %v4375 = vld [vmem:[#allocation26 + $0x1040] sm:$0xff]
    %v4376 = vld [vmem:[#allocation26 + $0x1048] sm:$0xff]
    %v4377 = vld [vmem:[#allocation26 + $0x1050] sm:$0xff]
    %v4378 = vld [vmem:[#allocation26 + $0x1058] sm:$0xff]
    %v4379 = vld [vmem:[#allocation26 + $0x1060] sm:$0xff]
    %v4380 = vld [vmem:[#allocation26 + $0x1068] sm:$0xff]
    %v4381 = vld [vmem:[#allocation26 + $0x1070] sm:$0xff]
    %v4382 = vld [vmem:[#allocation26 + $0x1078] sm:$0xff]
    %v4383 = vld [vmem:[#allocation26 + $0x1080] sm:$0xff]
    %v4384 = vld [vmem:[#allocation26 + $0x1088] sm:$0xff]
    %v4385 = vld [vmem:[#allocation26 + $0x1090] sm:$0xff]
    %v4386 = vld [vmem:[#allocation26 + $0x1098] sm:$0xff]
    %v4387 = vld [vmem:[#allocation26 + $0x10a0] sm:$0xff]
    %v4388 = vld [vmem:[#allocation26 + $0x10a8] sm:$0xff]
    %v4389 = vld [vmem:[#allocation26 + $0x10b0] sm:$0xff]
    %v4390 = vld [vmem:[#allocation26 + $0x10b8] sm:$0xff]
    %v4391 = vld [vmem:[#allocation26 + $0x10c0] sm:$0xff]
    %v4392 = vld [vmem:[#allocation26 + $0x10c8] sm:$0xff]
    %v4393 = vld [vmem:[#allocation26 + $0x10d0] sm:$0xff]
    %v4394 = vld [vmem:[#allocation26 + $0x10d8] sm:$0xff]
    %v4395 = vld [vmem:[#allocation26 + $0x10e0] sm:$0xff]
    %v4396 = vld [vmem:[#allocation26 + $0x10e8] sm:$0xff]
    %v4397 = vld [vmem:[#allocation26 + $0x10f0] sm:$0xff]
    %v4398 = vld [vmem:[#allocation26 + $0x10f8] sm:$0xff]
    %v4399 = vld [vmem:[#allocation26 + $0x1100] sm:$0xff]
    %v4400 = vld [vmem:[#allocation26 + $0x1108] sm:$0xff]
    %v4401 = vld [vmem:[#allocation26 + $0x1110] sm:$0xff]
    %v4402 = vld [vmem:[#allocation26 + $0x1118] sm:$0xff]
    %v4403 = vld [vmem:[#allocation26 + $0x1120] sm:$0xff]
    %v4404 = vld [vmem:[#allocation26 + $0x1128] sm:$0xff]
    %v4405 = vld [vmem:[#allocation26 + $0x1130] sm:$0xff]
    %v4406 = vld [vmem:[#allocation26 + $0x1138] sm:$0xff]
    %v4407 = vld [vmem:[#allocation26 + $0x1140] sm:$0xff]
    %v4408 = vld [vmem:[#allocation26 + $0x1148] sm:$0xff]
    %v4409 = vld [vmem:[#allocation26 + $0x1150] sm:$0xff]
    %v4410 = vld [vmem:[#allocation26 + $0x1158] sm:$0xff]
    %v4411 = vld [vmem:[#allocation26 + $0x1160] sm:$0xff]
    %v4412 = vld [vmem:[#allocation26 + $0x1168] sm:$0xff]
    %v4413 = vld [vmem:[#allocation26 + $0x1170] sm:$0xff]
    %v4414 = vld [vmem:[#allocation26 + $0x1178] sm:$0xff]
    %v4415 = vld [vmem:[#allocation26 + $0x1180] sm:$0xff]
    %v4416 = vld [vmem:[#allocation26 + $0x1188] sm:$0xff]
    %v4417 = vld [vmem:[#allocation26 + $0x1190] sm:$0xff]
    %v4418 = vld [vmem:[#allocation26 + $0x1198] sm:$0xff]
    %v4419 = vld [vmem:[#allocation26 + $0x11a0] sm:$0xff]
    %v4420 = vld [vmem:[#allocation26 + $0x11a8] sm:$0xff]
    %v4421 = vld [vmem:[#allocation26 + $0x11b0] sm:$0xff]
    %v4422 = vld [vmem:[#allocation26 + $0x11b8] sm:$0xff]
    %v4423 = vld [vmem:[#allocation26 + $0x11c0] sm:$0xff]
    %v4424 = vld [vmem:[#allocation26 + $0x11c8] sm:$0xff]
    %v4425 = vld [vmem:[#allocation26 + $0x11d0] sm:$0xff]
    %v4426 = vld [vmem:[#allocation26 + $0x11d8] sm:$0xff]
    %v4427 = vld [vmem:[#allocation26 + $0x11e0] sm:$0xff]
    %v4428 = vld [vmem:[#allocation26 + $0x11e8] sm:$0xff]
    %v4429 = vld [vmem:[#allocation26 + $0x11f0] sm:$0xff]
    %v4430 = vld [vmem:[#allocation26 + $0x11f8] sm:$0xff]
    %v4431 = vld [vmem:[#allocation27] sm:$0xff]
    %v5008 = vunpack.c.l.b16 %v3855
    %v5009 = vunpack.c.h.b16 %v3855
    %v5010 = vunpack.c.l.b16 %v3856
    %v5011 = vunpack.c.h.b16 %v3856
    %v5012 = vunpack.c.l.b16 %v3857
    %v5013 = vunpack.c.h.b16 %v3857
    %v5014 = vunpack.c.l.b16 %v3858
    %v5015 = vunpack.c.h.b16 %v3858
    %v5016 = vunpack.c.l.b16 %v3859
    %v5017 = vunpack.c.h.b16 %v3859
    %v5018 = vunpack.c.l.b16 %v3860
    %v5019 = vunpack.c.h.b16 %v3860
    %v5020 = vunpack.c.l.b16 %v3861
    %v5021 = vunpack.c.h.b16 %v3861
    %v5022 = vunpack.c.l.b16 %v3862
    %v5023 = vunpack.c.h.b16 %v3862
    %v5024 = vunpack.c.l.b16 %v3863
    %v5025 = vunpack.c.h.b16 %v3863
    %v5026 = vunpack.c.l.b16 %v3864
    %v5027 = vunpack.c.h.b16 %v3864
    %v5028 = vunpack.c.l.b16 %v3865
    %v5029 = vunpack.c.h.b16 %v3865
    %v5030 = vunpack.c.l.b16 %v3866
    %v5031 = vunpack.c.h.b16 %v3866
    %v5032 = vunpack.c.l.b16 %v3867
    %v5033 = vunpack.c.h.b16 %v3867
    %v5034 = vunpack.c.l.b16 %v3868
    %v5035 = vunpack.c.h.b16 %v3868
    %v5036 = vunpack.c.l.b16 %v3869
    %v5037 = vunpack.c.h.b16 %v3869
    %v5038 = vunpack.c.l.b16 %v3870
    %v5039 = vunpack.c.h.b16 %v3870
    %v5040 = vunpack.c.l.b16 %v3871
    %v5041 = vunpack.c.h.b16 %v3871
    %v5042 = vunpack.c.l.b16 %v3872
    %v5043 = vunpack.c.h.b16 %v3872
    %v5044 = vunpack.c.l.b16 %v3873
    %v5045 = vunpack.c.h.b16 %v3873
    %v5046 = vunpack.c.l.b16 %v3874
    %v5047 = vunpack.c.h.b16 %v3874
    %v5048 = vunpack.c.l.b16 %v3875
    %v5049 = vunpack.c.h.b16 %v3875
    %v5050 = vunpack.c.l.b16 %v3876
    %v5051 = vunpack.c.h.b16 %v3876
    %v5052 = vunpack.c.l.b16 %v3877
    %v5053 = vunpack.c.h.b16 %v3877
    %v5054 = vunpack.c.l.b16 %v3878
    %v5055 = vunpack.c.h.b16 %v3878
    %v5056 = vunpack.c.l.b16 %v3879
    %v5057 = vunpack.c.h.b16 %v3879
    %v5058 = vunpack.c.l.b16 %v3880
    %v5059 = vunpack.c.h.b16 %v3880
    %v5060 = vunpack.c.l.b16 %v3881
    %v5061 = vunpack.c.h.b16 %v3881
    %v5062 = vunpack.c.l.b16 %v3882
    %v5063 = vunpack.c.h.b16 %v3882
    %v5064 = vunpack.c.l.b16 %v3883
    %v5065 = vunpack.c.h.b16 %v3883
    %v5066 = vunpack.c.l.b16 %v3884
    %v5067 = vunpack.c.h.b16 %v3884
    %v5068 = vunpack.c.l.b16 %v3885
    %v5069 = vunpack.c.h.b16 %v3885
    %v5070 = vunpack.c.l.b16 %v3886
    %v5071 = vunpack.c.h.b16 %v3886
    %v5072 = vunpack.c.l.b16 %v3887
    %v5073 = vunpack.c.h.b16 %v3887
    %v5074 = vunpack.c.l.b16 %v3888
    %v5075 = vunpack.c.h.b16 %v3888
    %v5076 = vunpack.c.l.b16 %v3889
    %v5077 = vunpack.c.h.b16 %v3889
    %v5078 = vunpack.c.l.b16 %v3890
    %v5079 = vunpack.c.h.b16 %v3890
    %v5080 = vunpack.c.l.b16 %v3891
    %v5081 = vunpack.c.h.b16 %v3891
    %v5082 = vunpack.c.l.b16 %v3892
    %v5083 = vunpack.c.h.b16 %v3892
    %v5084 = vunpack.c.l.b16 %v3893
    %v5085 = vunpack.c.h.b16 %v3893
    %v5086 = vunpack.c.l.b16 %v3894
    %v5087 = vunpack.c.h.b16 %v3894
    %v5088 = vunpack.c.l.b16 %v3895
    %v5089 = vunpack.c.h.b16 %v3895
    %v5090 = vunpack.c.l.b16 %v3896
    %v5091 = vunpack.c.h.b16 %v3896
    %v5092 = vunpack.c.l.b16 %v3897
    %v5093 = vunpack.c.h.b16 %v3897
    %v5094 = vunpack.c.l.b16 %v3898
    %v5095 = vunpack.c.h.b16 %v3898
    %v5096 = vunpack.c.l.b16 %v3899
    %v5097 = vunpack.c.h.b16 %v3899
    %v5098 = vunpack.c.l.b16 %v3900
    %v5099 = vunpack.c.h.b16 %v3900
    %v5100 = vunpack.c.l.b16 %v3901
    %v5101 = vunpack.c.h.b16 %v3901
    %v5102 = vunpack.c.l.b16 %v3902
    %v5103 = vunpack.c.h.b16 %v3902
    %v5104 = vunpack.c.l.b16 %v3903
    %v5105 = vunpack.c.h.b16 %v3903
    %v5106 = vunpack.c.l.b16 %v3904
    %v5107 = vunpack.c.h.b16 %v3904
    %v5108 = vunpack.c.l.b16 %v3905
    %v5109 = vunpack.c.h.b16 %v3905
    %v5110 = vunpack.c.l.b16 %v3906
    %v5111 = vunpack.c.h.b16 %v3906
    %v5112 = vunpack.c.l.b16 %v3907
    %v5113 = vunpack.c.h.b16 %v3907
    %v5114 = vunpack.c.l.b16 %v3908
    %v5115 = vunpack.c.h.b16 %v3908
    %v5116 = vunpack.c.l.b16 %v3909
    %v5117 = vunpack.c.h.b16 %v3909
    %v5118 = vunpack.c.l.b16 %v3910
    %v5119 = vunpack.c.h.b16 %v3910
    %v5120 = vunpack.c.l.b16 %v3911
    %v5121 = vunpack.c.h.b16 %v3911
    %v5122 = vunpack.c.l.b16 %v3912
    %v5123 = vunpack.c.h.b16 %v3912
    %v5124 = vunpack.c.l.b16 %v3913
    %v5125 = vunpack.c.h.b16 %v3913
    %v5126 = vunpack.c.l.b16 %v3914
    %v5127 = vunpack.c.h.b16 %v3914
    %v5128 = vunpack.c.l.b16 %v3915
    %v5129 = vunpack.c.h.b16 %v3915
    %v5130 = vunpack.c.l.b16 %v3916
    %v5131 = vunpack.c.h.b16 %v3916
    %v5132 = vunpack.c.l.b16 %v3917
    %v5133 = vunpack.c.h.b16 %v3917
    %v5134 = vunpack.c.l.b16 %v3918
    %v5135 = vunpack.c.h.b16 %v3918
    %v5136 = vunpack.c.l.b16 %v3919
    %v5137 = vunpack.c.h.b16 %v3919
    %v5138 = vunpack.c.l.b16 %v3920
    %v5139 = vunpack.c.h.b16 %v3920
    %v5140 = vunpack.c.l.b16 %v3921
    %v5141 = vunpack.c.h.b16 %v3921
    %v5142 = vunpack.c.l.b16 %v3922
    %v5143 = vunpack.c.h.b16 %v3922
    %v5144 = vunpack.c.l.b16 %v3923
    %v5145 = vunpack.c.h.b16 %v3923
    %v5146 = vunpack.c.l.b16 %v3924
    %v5147 = vunpack.c.h.b16 %v3924
    %v5148 = vunpack.c.l.b16 %v3925
    %v5149 = vunpack.c.h.b16 %v3925
    %v5150 = vunpack.c.l.b16 %v3926
    %v5151 = vunpack.c.h.b16 %v3926
    %v5152 = vunpack.c.l.b16 %v3927
    %v5153 = vunpack.c.h.b16 %v3927
    %v5154 = vunpack.c.l.b16 %v3928
    %v5155 = vunpack.c.h.b16 %v3928
    %v5156 = vunpack.c.l.b16 %v3929
    %v5157 = vunpack.c.h.b16 %v3929
    %v5158 = vunpack.c.l.b16 %v3930
    %v5159 = vunpack.c.h.b16 %v3930
    %v5160 = vunpack.c.l.b16 %v3931
    %v5161 = vunpack.c.h.b16 %v3931
    %v5162 = vunpack.c.l.b16 %v3932
    %v5163 = vunpack.c.h.b16 %v3932
    %v5164 = vunpack.c.l.b16 %v3933
    %v5165 = vunpack.c.h.b16 %v3933
    %v5166 = vunpack.c.l.b16 %v3934
    %v5167 = vunpack.c.h.b16 %v3934
    %v5168 = vunpack.c.l.b16 %v3935
    %v5169 = vunpack.c.h.b16 %v3935
    %v5170 = vunpack.c.l.b16 %v3936
    %v5171 = vunpack.c.h.b16 %v3936
    %v5172 = vunpack.c.l.b16 %v3937
    %v5173 = vunpack.c.h.b16 %v3937
    %v5174 = vunpack.c.l.b16 %v3938
    %v5175 = vunpack.c.h.b16 %v3938
    %v5176 = vunpack.c.l.b16 %v3939
    %v5177 = vunpack.c.h.b16 %v3939
    %v5178 = vunpack.c.l.b16 %v3940
    %v5179 = vunpack.c.h.b16 %v3940
    %v5180 = vunpack.c.l.b16 %v3941
    %v5181 = vunpack.c.h.b16 %v3941
    %v5182 = vunpack.c.l.b16 %v3942
    %v5183 = vunpack.c.h.b16 %v3942
    %v5184 = vunpack.c.l.b16 %v3943
    %v5185 = vunpack.c.h.b16 %v3943
    %v5186 = vunpack.c.l.b16 %v3944
    %v5187 = vunpack.c.h.b16 %v3944
    %v5188 = vunpack.c.l.b16 %v3945
    %v5189 = vunpack.c.h.b16 %v3945
    %v5190 = vunpack.c.l.b16 %v3946
    %v5191 = vunpack.c.h.b16 %v3946
    %v5192 = vunpack.c.l.b16 %v3947
    %v5193 = vunpack.c.h.b16 %v3947
    %v5194 = vunpack.c.l.b16 %v3948
    %v5195 = vunpack.c.h.b16 %v3948
    %v5196 = vunpack.c.l.b16 %v3949
    %v5197 = vunpack.c.h.b16 %v3949
    %v5198 = vunpack.c.l.b16 %v3950
    %v5199 = vunpack.c.h.b16 %v3950
    %v5200 = vunpack.c.l.b16 %v3951
    %v5201 = vunpack.c.h.b16 %v3951
    %v5202 = vunpack.c.l.b16 %v3952
    %v5203 = vunpack.c.h.b16 %v3952
    %v5204 = vunpack.c.l.b16 %v3953
    %v5205 = vunpack.c.h.b16 %v3953
    %v5206 = vunpack.c.l.b16 %v3954
    %v5207 = vunpack.c.h.b16 %v3954
    %v5208 = vunpack.c.l.b16 %v3955
    %v5209 = vunpack.c.h.b16 %v3955
    %v5210 = vunpack.c.l.b16 %v3956
    %v5211 = vunpack.c.h.b16 %v3956
    %v5212 = vunpack.c.l.b16 %v3957
    %v5213 = vunpack.c.h.b16 %v3957
    %v5214 = vunpack.c.l.b16 %v3958
    %v5215 = vunpack.c.h.b16 %v3958
    %v5216 = vunpack.c.l.b16 %v3959
    %v5217 = vunpack.c.h.b16 %v3959
    %v5218 = vunpack.c.l.b16 %v3960
    %v5219 = vunpack.c.h.b16 %v3960
    %v5220 = vunpack.c.l.b16 %v3961
    %v5221 = vunpack.c.h.b16 %v3961
    %v5222 = vunpack.c.l.b16 %v3962
    %v5223 = vunpack.c.h.b16 %v3962
    %v5224 = vunpack.c.l.b16 %v3963
    %v5225 = vunpack.c.h.b16 %v3963
    %v5226 = vunpack.c.l.b16 %v3964
    %v5227 = vunpack.c.h.b16 %v3964
    %v5228 = vunpack.c.l.b16 %v3965
    %v5229 = vunpack.c.h.b16 %v3965
    %v5230 = vunpack.c.l.b16 %v3966
    %v5231 = vunpack.c.h.b16 %v3966
    %v5232 = vunpack.c.l.b16 %v3967
    %v5233 = vunpack.c.h.b16 %v3967
    %v5234 = vunpack.c.l.b16 %v3968
    %v5235 = vunpack.c.h.b16 %v3968
    %v5236 = vunpack.c.l.b16 %v3969
    %v5237 = vunpack.c.h.b16 %v3969
    %v5238 = vunpack.c.l.b16 %v3970
    %v5239 = vunpack.c.h.b16 %v3970
    %v5240 = vunpack.c.l.b16 %v3971
    %v5241 = vunpack.c.h.b16 %v3971
    %v5242 = vunpack.c.l.b16 %v3972
    %v5243 = vunpack.c.h.b16 %v3972
    %v5244 = vunpack.c.l.b16 %v3973
    %v5245 = vunpack.c.h.b16 %v3973
    %v5246 = vunpack.c.l.b16 %v3974
    %v5247 = vunpack.c.h.b16 %v3974
    %v5248 = vunpack.c.l.b16 %v3975
    %v5249 = vunpack.c.h.b16 %v3975
    %v5250 = vunpack.c.l.b16 %v3976
    %v5251 = vunpack.c.h.b16 %v3976
    %v5252 = vunpack.c.l.b16 %v3977
    %v5253 = vunpack.c.h.b16 %v3977
    %v5254 = vunpack.c.l.b16 %v3978
    %v5255 = vunpack.c.h.b16 %v3978
    %v5256 = vunpack.c.l.b16 %v3979
    %v5257 = vunpack.c.h.b16 %v3979
    %v5258 = vunpack.c.l.b16 %v3980
    %v5259 = vunpack.c.h.b16 %v3980
    %v5260 = vunpack.c.l.b16 %v3981
    %v5261 = vunpack.c.h.b16 %v3981
    %v5262 = vunpack.c.l.b16 %v3982
    %v5263 = vunpack.c.h.b16 %v3982
    %v5264 = vunpack.c.l.b16 %v3983
    %v5265 = vunpack.c.h.b16 %v3983
    %v5266 = vunpack.c.l.b16 %v3984
    %v5267 = vunpack.c.h.b16 %v3984
    %v5268 = vunpack.c.l.b16 %v3985
    %v5269 = vunpack.c.h.b16 %v3985
    %v5270 = vunpack.c.l.b16 %v3986
    %v5271 = vunpack.c.h.b16 %v3986
    %v5272 = vunpack.c.l.b16 %v3987
    %v5273 = vunpack.c.h.b16 %v3987
    %v5274 = vunpack.c.l.b16 %v3988
    %v5275 = vunpack.c.h.b16 %v3988
    %v5276 = vunpack.c.l.b16 %v3989
    %v5277 = vunpack.c.h.b16 %v3989
    %v5278 = vunpack.c.l.b16 %v3990
    %v5279 = vunpack.c.h.b16 %v3990
    %v5280 = vunpack.c.l.b16 %v3991
    %v5281 = vunpack.c.h.b16 %v3991
    %v5282 = vunpack.c.l.b16 %v3992
    %v5283 = vunpack.c.h.b16 %v3992
    %v5284 = vunpack.c.l.b16 %v3993
    %v5285 = vunpack.c.h.b16 %v3993
    %v5286 = vunpack.c.l.b16 %v3994
    %v5287 = vunpack.c.h.b16 %v3994
    %v5288 = vunpack.c.l.b16 %v3995
    %v5289 = vunpack.c.h.b16 %v3995
    %v5290 = vunpack.c.l.b16 %v3996
    %v5291 = vunpack.c.h.b16 %v3996
    %v5292 = vunpack.c.l.b16 %v3997
    %v5293 = vunpack.c.h.b16 %v3997
    %v5294 = vunpack.c.l.b16 %v3998
    %v5295 = vunpack.c.h.b16 %v3998
    %v5296 = vunpack.c.l.b16 %v3999
    %v5297 = vunpack.c.h.b16 %v3999
    %v5298 = vunpack.c.l.b16 %v4000
    %v5299 = vunpack.c.h.b16 %v4000
    %v5300 = vunpack.c.l.b16 %v4001
    %v5301 = vunpack.c.h.b16 %v4001
    %v5302 = vunpack.c.l.b16 %v4002
    %v5303 = vunpack.c.h.b16 %v4002
    %v5304 = vunpack.c.l.b16 %v4003
    %v5305 = vunpack.c.h.b16 %v4003
    %v5306 = vunpack.c.l.b16 %v4004
    %v5307 = vunpack.c.h.b16 %v4004
    %v5308 = vunpack.c.l.b16 %v4005
    %v5309 = vunpack.c.h.b16 %v4005
    %v5310 = vunpack.c.l.b16 %v4006
    %v5311 = vunpack.c.h.b16 %v4006
    %v5312 = vunpack.c.l.b16 %v4007
    %v5313 = vunpack.c.h.b16 %v4007
    %v5314 = vunpack.c.l.b16 %v4008
    %v5315 = vunpack.c.h.b16 %v4008
    %v5316 = vunpack.c.l.b16 %v4009
    %v5317 = vunpack.c.h.b16 %v4009
    %v5318 = vunpack.c.l.b16 %v4010
    %v5319 = vunpack.c.h.b16 %v4010
    %v5320 = vunpack.c.l.b16 %v4011
    %v5321 = vunpack.c.h.b16 %v4011
    %v5322 = vunpack.c.l.b16 %v4012
    %v5323 = vunpack.c.h.b16 %v4012
    %v5324 = vunpack.c.l.b16 %v4013
    %v5325 = vunpack.c.h.b16 %v4013
    %v5326 = vunpack.c.l.b16 %v4014
    %v5327 = vunpack.c.h.b16 %v4014
    %v5328 = vunpack.c.l.b16 %v4015
    %v5329 = vunpack.c.h.b16 %v4015
    %v5330 = vunpack.c.l.b16 %v4016
    %v5331 = vunpack.c.h.b16 %v4016
    %v5332 = vunpack.c.l.b16 %v4017
    %v5333 = vunpack.c.h.b16 %v4017
    %v5334 = vunpack.c.l.b16 %v4018
    %v5335 = vunpack.c.h.b16 %v4018
    %v5336 = vunpack.c.l.b16 %v4019
    %v5337 = vunpack.c.h.b16 %v4019
    %v5338 = vunpack.c.l.b16 %v4020
    %v5339 = vunpack.c.h.b16 %v4020
    %v5340 = vunpack.c.l.b16 %v4021
    %v5341 = vunpack.c.h.b16 %v4021
    %v5342 = vunpack.c.l.b16 %v4022
    %v5343 = vunpack.c.h.b16 %v4022
    %v5344 = vunpack.c.l.b16 %v4023
    %v5345 = vunpack.c.h.b16 %v4023
    %v5346 = vunpack.c.l.b16 %v4024
    %v5347 = vunpack.c.h.b16 %v4024
    %v5348 = vunpack.c.l.b16 %v4025
    %v5349 = vunpack.c.h.b16 %v4025
    %v5350 = vunpack.c.l.b16 %v4026
    %v5351 = vunpack.c.h.b16 %v4026
    %v5352 = vunpack.c.l.b16 %v4027
    %v5353 = vunpack.c.h.b16 %v4027
    %v5354 = vunpack.c.l.b16 %v4028
    %v5355 = vunpack.c.h.b16 %v4028
    %v5356 = vunpack.c.l.b16 %v4029
    %v5357 = vunpack.c.h.b16 %v4029
    %v5358 = vunpack.c.l.b16 %v4030
    %v5359 = vunpack.c.h.b16 %v4030
    %v5360 = vunpack.c.l.b16 %v4031
    %v5361 = vunpack.c.h.b16 %v4031
    %v5362 = vunpack.c.l.b16 %v4032
    %v5363 = vunpack.c.h.b16 %v4032
    %v5364 = vunpack.c.l.b16 %v4033
    %v5365 = vunpack.c.h.b16 %v4033
    %v5366 = vunpack.c.l.b16 %v4034
    %v5367 = vunpack.c.h.b16 %v4034
    %v5368 = vunpack.c.l.b16 %v4035
    %v5369 = vunpack.c.h.b16 %v4035
    %v5370 = vunpack.c.l.b16 %v4036
    %v5371 = vunpack.c.h.b16 %v4036
    %v5372 = vunpack.c.l.b16 %v4037
    %v5373 = vunpack.c.h.b16 %v4037
    %v5374 = vunpack.c.l.b16 %v4038
    %v5375 = vunpack.c.h.b16 %v4038
    %v5376 = vunpack.c.l.b16 %v4039
    %v5377 = vunpack.c.h.b16 %v4039
    %v5378 = vunpack.c.l.b16 %v4040
    %v5379 = vunpack.c.h.b16 %v4040
    %v5380 = vunpack.c.l.b16 %v4041
    %v5381 = vunpack.c.h.b16 %v4041
    %v5382 = vunpack.c.l.b16 %v4042
    %v5383 = vunpack.c.h.b16 %v4042
    %v5384 = vunpack.c.l.b16 %v4043
    %v5385 = vunpack.c.h.b16 %v4043
    %v5386 = vunpack.c.l.b16 %v4044
    %v5387 = vunpack.c.h.b16 %v4044
    %v5388 = vunpack.c.l.b16 %v4045
    %v5389 = vunpack.c.h.b16 %v4045
    %v5390 = vunpack.c.l.b16 %v4046
    %v5391 = vunpack.c.h.b16 %v4046
    %v5392 = vunpack.c.l.b16 %v4047
    %v5393 = vunpack.c.h.b16 %v4047
    %v5394 = vunpack.c.l.b16 %v4048
    %v5395 = vunpack.c.h.b16 %v4048
    %v5396 = vunpack.c.l.b16 %v4049
    %v5397 = vunpack.c.h.b16 %v4049
    %v5398 = vunpack.c.l.b16 %v4050
    %v5399 = vunpack.c.h.b16 %v4050
    %v5400 = vunpack.c.l.b16 %v4051
    %v5401 = vunpack.c.h.b16 %v4051
    %v5402 = vunpack.c.l.b16 %v4052
    %v5403 = vunpack.c.h.b16 %v4052
    %v5404 = vunpack.c.l.b16 %v4053
    %v5405 = vunpack.c.h.b16 %v4053
    %v5406 = vunpack.c.l.b16 %v4054
    %v5407 = vunpack.c.h.b16 %v4054
    %v5408 = vunpack.c.l.b16 %v4055
    %v5409 = vunpack.c.h.b16 %v4055
    %v5410 = vunpack.c.l.b16 %v4056
    %v5411 = vunpack.c.h.b16 %v4056
    %v5412 = vunpack.c.l.b16 %v4057
    %v5413 = vunpack.c.h.b16 %v4057
    %v5414 = vunpack.c.l.b16 %v4058
    %v5415 = vunpack.c.h.b16 %v4058
    %v5416 = vunpack.c.l.b16 %v4059
    %v5417 = vunpack.c.h.b16 %v4059
    %v5418 = vunpack.c.l.b16 %v4060
    %v5419 = vunpack.c.h.b16 %v4060
    %v5420 = vunpack.c.l.b16 %v4061
    %v5421 = vunpack.c.h.b16 %v4061
    %v5422 = vunpack.c.l.b16 %v4062
    %v5423 = vunpack.c.h.b16 %v4062
    %v5424 = vunpack.c.l.b16 %v4063
    %v5425 = vunpack.c.h.b16 %v4063
    %v5426 = vunpack.c.l.b16 %v4064
    %v5427 = vunpack.c.h.b16 %v4064
    %v5428 = vunpack.c.l.b16 %v4065
    %v5429 = vunpack.c.h.b16 %v4065
    %v5430 = vunpack.c.l.b16 %v4066
    %v5431 = vunpack.c.h.b16 %v4066
    %v5432 = vunpack.c.l.b16 %v4067
    %v5433 = vunpack.c.h.b16 %v4067
    %v5434 = vunpack.c.l.b16 %v4068
    %v5435 = vunpack.c.h.b16 %v4068
    %v5436 = vunpack.c.l.b16 %v4069
    %v5437 = vunpack.c.h.b16 %v4069
    %v5438 = vunpack.c.l.b16 %v4070
    %v5439 = vunpack.c.h.b16 %v4070
    %v5440 = vunpack.c.l.b16 %v4071
    %v5441 = vunpack.c.h.b16 %v4071
    %v5442 = vunpack.c.l.b16 %v4072
    %v5443 = vunpack.c.h.b16 %v4072
    %v5444 = vunpack.c.l.b16 %v4073
    %v5445 = vunpack.c.h.b16 %v4073
    %v5446 = vunpack.c.l.b16 %v4074
    %v5447 = vunpack.c.h.b16 %v4074
    %v5448 = vunpack.c.l.b16 %v4075
    %v5449 = vunpack.c.h.b16 %v4075
    %v5450 = vunpack.c.l.b16 %v4076
    %v5451 = vunpack.c.h.b16 %v4076
    %v5452 = vunpack.c.l.b16 %v4077
    %v5453 = vunpack.c.h.b16 %v4077
    %v5454 = vunpack.c.l.b16 %v4078
    %v5455 = vunpack.c.h.b16 %v4078
    %v5456 = vunpack.c.l.b16 %v4079
    %v5457 = vunpack.c.h.b16 %v4079
    %v5458 = vunpack.c.l.b16 %v4080
    %v5459 = vunpack.c.h.b16 %v4080
    %v5460 = vunpack.c.l.b16 %v4081
    %v5461 = vunpack.c.h.b16 %v4081
    %v5462 = vunpack.c.l.b16 %v4082
    %v5463 = vunpack.c.h.b16 %v4082
    %v5464 = vunpack.c.l.b16 %v4083
    %v5465 = vunpack.c.h.b16 %v4083
    %v5466 = vunpack.c.l.b16 %v4084
    %v5467 = vunpack.c.h.b16 %v4084
    %v5468 = vunpack.c.l.b16 %v4085
    %v5469 = vunpack.c.h.b16 %v4085
    %v5470 = vunpack.c.l.b16 %v4086
    %v5471 = vunpack.c.h.b16 %v4086
    %v5472 = vunpack.c.l.b16 %v4087
    %v5473 = vunpack.c.h.b16 %v4087
    %v5474 = vunpack.c.l.b16 %v4088
    %v5475 = vunpack.c.h.b16 %v4088
    %v5476 = vunpack.c.l.b16 %v4089
    %v5477 = vunpack.c.h.b16 %v4089
    %v5478 = vunpack.c.l.b16 %v4090
    %v5479 = vunpack.c.h.b16 %v4090
    %v5480 = vunpack.c.l.b16 %v4091
    %v5481 = vunpack.c.h.b16 %v4091
    %v5482 = vunpack.c.l.b16 %v4092
    %v5483 = vunpack.c.h.b16 %v4092
    %v5484 = vunpack.c.l.b16 %v4093
    %v5485 = vunpack.c.h.b16 %v4093
    %v5486 = vunpack.c.l.b16 %v4094
    %v5487 = vunpack.c.h.b16 %v4094
    %v5488 = vunpack.c.l.b16 %v4095
    %v5489 = vunpack.c.h.b16 %v4095
    %v5490 = vunpack.c.l.b16 %v4096
    %v5491 = vunpack.c.h.b16 %v4096
    %v5492 = vunpack.c.l.b16 %v4097
    %v5493 = vunpack.c.h.b16 %v4097
    %v5494 = vunpack.c.l.b16 %v4098
    %v5495 = vunpack.c.h.b16 %v4098
    %v5496 = vunpack.c.l.b16 %v4099
    %v5497 = vunpack.c.h.b16 %v4099
    %v5498 = vunpack.c.l.b16 %v4100
    %v5499 = vunpack.c.h.b16 %v4100
    %v5500 = vunpack.c.l.b16 %v4101
    %v5501 = vunpack.c.h.b16 %v4101
    %v5502 = vunpack.c.l.b16 %v4102
    %v5503 = vunpack.c.h.b16 %v4102
    %v5504 = vunpack.c.l.b16 %v4103
    %v5505 = vunpack.c.h.b16 %v4103
    %v5506 = vunpack.c.l.b16 %v4104
    %v5507 = vunpack.c.h.b16 %v4104
    %v5508 = vunpack.c.l.b16 %v4105
    %v5509 = vunpack.c.h.b16 %v4105
    %v5510 = vunpack.c.l.b16 %v4106
    %v5511 = vunpack.c.h.b16 %v4106
    %v5512 = vunpack.c.l.b16 %v4107
    %v5513 = vunpack.c.h.b16 %v4107
    %v5514 = vunpack.c.l.b16 %v4108
    %v5515 = vunpack.c.h.b16 %v4108
    %v5516 = vunpack.c.l.b16 %v4109
    %v5517 = vunpack.c.h.b16 %v4109
    %v5518 = vunpack.c.l.b16 %v4110
    %v5519 = vunpack.c.h.b16 %v4110
    %v5520 = vunpack.c.l.b16 %v4111
    %v5521 = vunpack.c.h.b16 %v4111
    %v5522 = vunpack.c.l.b16 %v4112
    %v5523 = vunpack.c.h.b16 %v4112
    %v5524 = vunpack.c.l.b16 %v4113
    %v5525 = vunpack.c.h.b16 %v4113
    %v5526 = vunpack.c.l.b16 %v4114
    %v5527 = vunpack.c.h.b16 %v4114
    %v5528 = vunpack.c.l.b16 %v4115
    %v5529 = vunpack.c.h.b16 %v4115
    %v5530 = vunpack.c.l.b16 %v4116
    %v5531 = vunpack.c.h.b16 %v4116
    %v5532 = vunpack.c.l.b16 %v4117
    %v5533 = vunpack.c.h.b16 %v4117
    %v5534 = vunpack.c.l.b16 %v4118
    %v5535 = vunpack.c.h.b16 %v4118
    %v5536 = vunpack.c.l.b16 %v4119
    %v5537 = vunpack.c.h.b16 %v4119
    %v5538 = vunpack.c.l.b16 %v4120
    %v5539 = vunpack.c.h.b16 %v4120
    %v5540 = vunpack.c.l.b16 %v4121
    %v5541 = vunpack.c.h.b16 %v4121
    %v5542 = vunpack.c.l.b16 %v4122
    %v5543 = vunpack.c.h.b16 %v4122
    %v5544 = vunpack.c.l.b16 %v4123
    %v5545 = vunpack.c.h.b16 %v4123
    %v5546 = vunpack.c.l.b16 %v4124
    %v5547 = vunpack.c.h.b16 %v4124
    %v5548 = vunpack.c.l.b16 %v4125
    %v5549 = vunpack.c.h.b16 %v4125
    %v5550 = vunpack.c.l.b16 %v4126
    %v5551 = vunpack.c.h.b16 %v4126
    %v5552 = vunpack.c.l.b16 %v4127
    %v5553 = vunpack.c.h.b16 %v4127
    %v5554 = vunpack.c.l.b16 %v4128
    %v5555 = vunpack.c.h.b16 %v4128
    %v5556 = vunpack.c.l.b16 %v4129
    %v5557 = vunpack.c.h.b16 %v4129
    %v5558 = vunpack.c.l.b16 %v4130
    %v5559 = vunpack.c.h.b16 %v4130
    %v5560 = vunpack.c.l.b16 %v4131
    %v5561 = vunpack.c.h.b16 %v4131
    %v5562 = vunpack.c.l.b16 %v4132
    %v5563 = vunpack.c.h.b16 %v4132
    %v5564 = vunpack.c.l.b16 %v4133
    %v5565 = vunpack.c.h.b16 %v4133
    %v5566 = vunpack.c.l.b16 %v4134
    %v5567 = vunpack.c.h.b16 %v4134
    %v5568 = vunpack.c.l.b16 %v4135
    %v5569 = vunpack.c.h.b16 %v4135
    %v5570 = vunpack.c.l.b16 %v4136
    %v5571 = vunpack.c.h.b16 %v4136
    %v5572 = vunpack.c.l.b16 %v4137
    %v5573 = vunpack.c.h.b16 %v4137
    %v5574 = vunpack.c.l.b16 %v4138
    %v5575 = vunpack.c.h.b16 %v4138
    %v5576 = vunpack.c.l.b16 %v4139
    %v5577 = vunpack.c.h.b16 %v4139
    %v5578 = vunpack.c.l.b16 %v4140
    %v5579 = vunpack.c.h.b16 %v4140
    %v5580 = vunpack.c.l.b16 %v4141
    %v5581 = vunpack.c.h.b16 %v4141
    %v5582 = vunpack.c.l.b16 %v4142
    %v5583 = vunpack.c.h.b16 %v4142
    %v5584 = vunpack.c.l.b16 %v4143
    %v5585 = vunpack.c.h.b16 %v4143
    %v5586 = vunpack.c.l.b16 %v4144
    %v5587 = vunpack.c.h.b16 %v4144
    %v5588 = vunpack.c.l.b16 %v4145
    %v5589 = vunpack.c.h.b16 %v4145
    %v5590 = vunpack.c.l.b16 %v4146
    %v5591 = vunpack.c.h.b16 %v4146
    %v5592 = vunpack.c.l.b16 %v4147
    %v5593 = vunpack.c.h.b16 %v4147
    %v5594 = vunpack.c.l.b16 %v4148
    %v5595 = vunpack.c.h.b16 %v4148
    %v5596 = vunpack.c.l.b16 %v4149
    %v5597 = vunpack.c.h.b16 %v4149
    %v5598 = vunpack.c.l.b16 %v4150
    %v5599 = vunpack.c.h.b16 %v4150
    %v5600 = vunpack.c.l.b16 %v4151
    %v5601 = vunpack.c.h.b16 %v4151
    %v5602 = vunpack.c.l.b16 %v4152
    %v5603 = vunpack.c.h.b16 %v4152
    %v5604 = vunpack.c.l.b16 %v4153
    %v5605 = vunpack.c.h.b16 %v4153
    %v5606 = vunpack.c.l.b16 %v4154
    %v5607 = vunpack.c.h.b16 %v4154
    %v5608 = vunpack.c.l.b16 %v4155
    %v5609 = vunpack.c.h.b16 %v4155
    %v5610 = vunpack.c.l.b16 %v4156
    %v5611 = vunpack.c.h.b16 %v4156
    %v5612 = vunpack.c.l.b16 %v4157
    %v5613 = vunpack.c.h.b16 %v4157
    %v5614 = vunpack.c.l.b16 %v4158
    %v5615 = vunpack.c.h.b16 %v4158
    %v5616 = vunpack.c.l.b16 %v4159
    %v5617 = vunpack.c.h.b16 %v4159
    %v5618 = vunpack.c.l.b16 %v4160
    %v5619 = vunpack.c.h.b16 %v4160
    %v5620 = vunpack.c.l.b16 %v4161
    %v5621 = vunpack.c.h.b16 %v4161
    %v5622 = vunpack.c.l.b16 %v4162
    %v5623 = vunpack.c.h.b16 %v4162
    %v5624 = vunpack.c.l.b16 %v4163
    %v5625 = vunpack.c.h.b16 %v4163
    %v5626 = vunpack.c.l.b16 %v4164
    %v5627 = vunpack.c.h.b16 %v4164
    %v5628 = vunpack.c.l.b16 %v4165
    %v5629 = vunpack.c.h.b16 %v4165
    %v5630 = vunpack.c.l.b16 %v4166
    %v5631 = vunpack.c.h.b16 %v4166
    %v5632 = vunpack.c.l.b16 %v4167
    %v5633 = vunpack.c.h.b16 %v4167
    %v5634 = vunpack.c.l.b16 %v4168
    %v5635 = vunpack.c.h.b16 %v4168
    %v5636 = vunpack.c.l.b16 %v4169
    %v5637 = vunpack.c.h.b16 %v4169
    %v5638 = vunpack.c.l.b16 %v4170
    %v5639 = vunpack.c.h.b16 %v4170
    %v5640 = vunpack.c.l.b16 %v4171
    %v5641 = vunpack.c.h.b16 %v4171
    %v5642 = vunpack.c.l.b16 %v4172
    %v5643 = vunpack.c.h.b16 %v4172
    %v5644 = vunpack.c.l.b16 %v4173
    %v5645 = vunpack.c.h.b16 %v4173
    %v5646 = vunpack.c.l.b16 %v4174
    %v5647 = vunpack.c.h.b16 %v4174
    %v5648 = vunpack.c.l.b16 %v4175
    %v5649 = vunpack.c.h.b16 %v4175
    %v5650 = vunpack.c.l.b16 %v4176
    %v5651 = vunpack.c.h.b16 %v4176
    %v5652 = vunpack.c.l.b16 %v4177
    %v5653 = vunpack.c.h.b16 %v4177
    %v5654 = vunpack.c.l.b16 %v4178
    %v5655 = vunpack.c.h.b16 %v4178
    %v5656 = vunpack.c.l.b16 %v4179
    %v5657 = vunpack.c.h.b16 %v4179
    %v5658 = vunpack.c.l.b16 %v4180
    %v5659 = vunpack.c.h.b16 %v4180
    %v5660 = vunpack.c.l.b16 %v4181
    %v5661 = vunpack.c.h.b16 %v4181
    %v5662 = vunpack.c.l.b16 %v4182
    %v5663 = vunpack.c.h.b16 %v4182
    %v5664 = vunpack.c.l.b16 %v4183
    %v5665 = vunpack.c.h.b16 %v4183
    %v5666 = vunpack.c.l.b16 %v4184
    %v5667 = vunpack.c.h.b16 %v4184
    %v5668 = vunpack.c.l.b16 %v4185
    %v5669 = vunpack.c.h.b16 %v4185
    %v5670 = vunpack.c.l.b16 %v4186
    %v5671 = vunpack.c.h.b16 %v4186
    %v5672 = vunpack.c.l.b16 %v4187
    %v5673 = vunpack.c.h.b16 %v4187
    %v5674 = vunpack.c.l.b16 %v4188
    %v5675 = vunpack.c.h.b16 %v4188
    %v5676 = vunpack.c.l.b16 %v4189
    %v5677 = vunpack.c.h.b16 %v4189
    %v5678 = vunpack.c.l.b16 %v4190
    %v5679 = vunpack.c.h.b16 %v4190
    %v5680 = vunpack.c.l.b16 %v4191
    %v5681 = vunpack.c.h.b16 %v4191
    %v5682 = vunpack.c.l.b16 %v4192
    %v5683 = vunpack.c.h.b16 %v4192
    %v5684 = vunpack.c.l.b16 %v4193
    %v5685 = vunpack.c.h.b16 %v4193
    %v5686 = vunpack.c.l.b16 %v4194
    %v5687 = vunpack.c.h.b16 %v4194
    %v5688 = vunpack.c.l.b16 %v4195
    %v5689 = vunpack.c.h.b16 %v4195
    %v5690 = vunpack.c.l.b16 %v4196
    %v5691 = vunpack.c.h.b16 %v4196
    %v5692 = vunpack.c.l.b16 %v4197
    %v5693 = vunpack.c.h.b16 %v4197
    %v5694 = vunpack.c.l.b16 %v4198
    %v5695 = vunpack.c.h.b16 %v4198
    %v5696 = vunpack.c.l.b16 %v4199
    %v5697 = vunpack.c.h.b16 %v4199
    %v5698 = vunpack.c.l.b16 %v4200
    %v5699 = vunpack.c.h.b16 %v4200
    %v5700 = vunpack.c.l.b16 %v4201
    %v5701 = vunpack.c.h.b16 %v4201
    %v5702 = vunpack.c.l.b16 %v4202
    %v5703 = vunpack.c.h.b16 %v4202
    %v5704 = vunpack.c.l.b16 %v4203
    %v5705 = vunpack.c.h.b16 %v4203
    %v5706 = vunpack.c.l.b16 %v4204
    %v5707 = vunpack.c.h.b16 %v4204
    %v5708 = vunpack.c.l.b16 %v4205
    %v5709 = vunpack.c.h.b16 %v4205
    %v5710 = vunpack.c.l.b16 %v4206
    %v5711 = vunpack.c.h.b16 %v4206
    %v5712 = vunpack.c.l.b16 %v4207
    %v5713 = vunpack.c.h.b16 %v4207
    %v5714 = vunpack.c.l.b16 %v4208
    %v5715 = vunpack.c.h.b16 %v4208
    %v5716 = vunpack.c.l.b16 %v4209
    %v5717 = vunpack.c.h.b16 %v4209
    %v5718 = vunpack.c.l.b16 %v4210
    %v5719 = vunpack.c.h.b16 %v4210
    %v5720 = vunpack.c.l.b16 %v4211
    %v5721 = vunpack.c.h.b16 %v4211
    %v5722 = vunpack.c.l.b16 %v4212
    %v5723 = vunpack.c.h.b16 %v4212
    %v5724 = vunpack.c.l.b16 %v4213
    %v5725 = vunpack.c.h.b16 %v4213
    %v5726 = vunpack.c.l.b16 %v4214
    %v5727 = vunpack.c.h.b16 %v4214
    %v5728 = vunpack.c.l.b16 %v4215
    %v5729 = vunpack.c.h.b16 %v4215
    %v5730 = vunpack.c.l.b16 %v4216
    %v5731 = vunpack.c.h.b16 %v4216
    %v5732 = vunpack.c.l.b16 %v4217
    %v5733 = vunpack.c.h.b16 %v4217
    %v5734 = vunpack.c.l.b16 %v4218
    %v5735 = vunpack.c.h.b16 %v4218
    %v5736 = vunpack.c.l.b16 %v4219
    %v5737 = vunpack.c.h.b16 %v4219
    %v5738 = vunpack.c.l.b16 %v4220
    %v5739 = vunpack.c.h.b16 %v4220
    %v5740 = vunpack.c.l.b16 %v4221
    %v5741 = vunpack.c.h.b16 %v4221
    %v5742 = vunpack.c.l.b16 %v4222
    %v5743 = vunpack.c.h.b16 %v4222
    %v5744 = vunpack.c.l.b16 %v4223
    %v5745 = vunpack.c.h.b16 %v4223
    %v5746 = vunpack.c.l.b16 %v4224
    %v5747 = vunpack.c.h.b16 %v4224
    %v5748 = vunpack.c.l.b16 %v4225
    %v5749 = vunpack.c.h.b16 %v4225
    %v5750 = vunpack.c.l.b16 %v4226
    %v5751 = vunpack.c.h.b16 %v4226
    %v5752 = vunpack.c.l.b16 %v4227
    %v5753 = vunpack.c.h.b16 %v4227
    %v5754 = vunpack.c.l.b16 %v4228
    %v5755 = vunpack.c.h.b16 %v4228
    %v5756 = vunpack.c.l.b16 %v4229
    %v5757 = vunpack.c.h.b16 %v4229
    %v5758 = vunpack.c.l.b16 %v4230
    %v5759 = vunpack.c.h.b16 %v4230
    %v5760 = vunpack.c.l.b16 %v4231
    %v5761 = vunpack.c.h.b16 %v4231
    %v5762 = vunpack.c.l.b16 %v4232
    %v5763 = vunpack.c.h.b16 %v4232
    %v5764 = vunpack.c.l.b16 %v4233
    %v5765 = vunpack.c.h.b16 %v4233
    %v5766 = vunpack.c.l.b16 %v4234
    %v5767 = vunpack.c.h.b16 %v4234
    %v5768 = vunpack.c.l.b16 %v4235
    %v5769 = vunpack.c.h.b16 %v4235
    %v5770 = vunpack.c.l.b16 %v4236
    %v5771 = vunpack.c.h.b16 %v4236
    %v5772 = vunpack.c.l.b16 %v4237
    %v5773 = vunpack.c.h.b16 %v4237
    %v5774 = vunpack.c.l.b16 %v4238
    %v5775 = vunpack.c.h.b16 %v4238
    %v5776 = vunpack.c.l.b16 %v4239
    %v5777 = vunpack.c.h.b16 %v4239
    %v5778 = vunpack.c.l.b16 %v4240
    %v5779 = vunpack.c.h.b16 %v4240
    %v5780 = vunpack.c.l.b16 %v4241
    %v5781 = vunpack.c.h.b16 %v4241
    %v5782 = vunpack.c.l.b16 %v4242
    %v5783 = vunpack.c.h.b16 %v4242
    %v5784 = vunpack.c.l.b16 %v4243
    %v5785 = vunpack.c.h.b16 %v4243
    %v5786 = vunpack.c.l.b16 %v4244
    %v5787 = vunpack.c.h.b16 %v4244
    %v5788 = vunpack.c.l.b16 %v4245
    %v5789 = vunpack.c.h.b16 %v4245
    %v5790 = vunpack.c.l.b16 %v4246
    %v5791 = vunpack.c.h.b16 %v4246
    %v5792 = vunpack.c.l.b16 %v4247
    %v5793 = vunpack.c.h.b16 %v4247
    %v5794 = vunpack.c.l.b16 %v4248
    %v5795 = vunpack.c.h.b16 %v4248
    %v5796 = vunpack.c.l.b16 %v4249
    %v5797 = vunpack.c.h.b16 %v4249
    %v5798 = vunpack.c.l.b16 %v4250
    %v5799 = vunpack.c.h.b16 %v4250
    %v5800 = vunpack.c.l.b16 %v4251
    %v5801 = vunpack.c.h.b16 %v4251
    %v5802 = vunpack.c.l.b16 %v4252
    %v5803 = vunpack.c.h.b16 %v4252
    %v5804 = vunpack.c.l.b16 %v4253
    %v5805 = vunpack.c.h.b16 %v4253
    %v5806 = vunpack.c.l.b16 %v4254
    %v5807 = vunpack.c.h.b16 %v4254
    %v5808 = vunpack.c.l.b16 %v4255
    %v5809 = vunpack.c.h.b16 %v4255
    %v5810 = vunpack.c.l.b16 %v4256
    %v5811 = vunpack.c.h.b16 %v4256
    %v5812 = vunpack.c.l.b16 %v4257
    %v5813 = vunpack.c.h.b16 %v4257
    %v5814 = vunpack.c.l.b16 %v4258
    %v5815 = vunpack.c.h.b16 %v4258
    %v5816 = vunpack.c.l.b16 %v4259
    %v5817 = vunpack.c.h.b16 %v4259
    %v5818 = vunpack.c.l.b16 %v4260
    %v5819 = vunpack.c.h.b16 %v4260
    %v5820 = vunpack.c.l.b16 %v4261
    %v5821 = vunpack.c.h.b16 %v4261
    %v5822 = vunpack.c.l.b16 %v4262
    %v5823 = vunpack.c.h.b16 %v4262
    %v5824 = vunpack.c.l.b16 %v4263
    %v5825 = vunpack.c.h.b16 %v4263
    %v5826 = vunpack.c.l.b16 %v4264
    %v5827 = vunpack.c.h.b16 %v4264
    %v5828 = vunpack.c.l.b16 %v4265
    %v5829 = vunpack.c.h.b16 %v4265
    %v5830 = vunpack.c.l.b16 %v4266
    %v5831 = vunpack.c.h.b16 %v4266
    %v5832 = vunpack.c.l.b16 %v4267
    %v5833 = vunpack.c.h.b16 %v4267
    %v5834 = vunpack.c.l.b16 %v4268
    %v5835 = vunpack.c.h.b16 %v4268
    %v5836 = vunpack.c.l.b16 %v4269
    %v5837 = vunpack.c.h.b16 %v4269
    %v5838 = vunpack.c.l.b16 %v4270
    %v5839 = vunpack.c.h.b16 %v4270
    %v5840 = vunpack.c.l.b16 %v4271
    %v5841 = vunpack.c.h.b16 %v4271
    %v5842 = vunpack.c.l.b16 %v4272
    %v5843 = vunpack.c.h.b16 %v4272
    %v5844 = vunpack.c.l.b16 %v4273
    %v5845 = vunpack.c.h.b16 %v4273
    %v5846 = vunpack.c.l.b16 %v4274
    %v5847 = vunpack.c.h.b16 %v4274
    %v5848 = vunpack.c.l.b16 %v4275
    %v5849 = vunpack.c.h.b16 %v4275
    %v5850 = vunpack.c.l.b16 %v4276
    %v5851 = vunpack.c.h.b16 %v4276
    %v5852 = vunpack.c.l.b16 %v4277
    %v5853 = vunpack.c.h.b16 %v4277
    %v5854 = vunpack.c.l.b16 %v4278
    %v5855 = vunpack.c.h.b16 %v4278
    %v5856 = vunpack.c.l.b16 %v4279
    %v5857 = vunpack.c.h.b16 %v4279
    %v5858 = vunpack.c.l.b16 %v4280
    %v5859 = vunpack.c.h.b16 %v4280
    %v5860 = vunpack.c.l.b16 %v4281
    %v5861 = vunpack.c.h.b16 %v4281
    %v5862 = vunpack.c.l.b16 %v4282
    %v5863 = vunpack.c.h.b16 %v4282
    %v5864 = vunpack.c.l.b16 %v4283
    %v5865 = vunpack.c.h.b16 %v4283
    %v5866 = vunpack.c.l.b16 %v4284
    %v5867 = vunpack.c.h.b16 %v4284
    %v5868 = vunpack.c.l.b16 %v4285
    %v5869 = vunpack.c.h.b16 %v4285
    %v5870 = vunpack.c.l.b16 %v4286
    %v5871 = vunpack.c.h.b16 %v4286
    %v5872 = vunpack.c.l.b16 %v4287
    %v5873 = vunpack.c.h.b16 %v4287
    %v5874 = vunpack.c.l.b16 %v4288
    %v5875 = vunpack.c.h.b16 %v4288
    %v5876 = vunpack.c.l.b16 %v4289
    %v5877 = vunpack.c.h.b16 %v4289
    %v5878 = vunpack.c.l.b16 %v4290
    %v5879 = vunpack.c.h.b16 %v4290
    %v5880 = vunpack.c.l.b16 %v4291
    %v5881 = vunpack.c.h.b16 %v4291
    %v5882 = vunpack.c.l.b16 %v4292
    %v5883 = vunpack.c.h.b16 %v4292
    %v5884 = vunpack.c.l.b16 %v4293
    %v5885 = vunpack.c.h.b16 %v4293
    %v5886 = vunpack.c.l.b16 %v4294
    %v5887 = vunpack.c.h.b16 %v4294
    %v5888 = vunpack.c.l.b16 %v4295
    %v5889 = vunpack.c.h.b16 %v4295
    %v5890 = vunpack.c.l.b16 %v4296
    %v5891 = vunpack.c.h.b16 %v4296
    %v5892 = vunpack.c.l.b16 %v4297
    %v5893 = vunpack.c.h.b16 %v4297
    %v5894 = vunpack.c.l.b16 %v4298
    %v5895 = vunpack.c.h.b16 %v4298
    %v5896 = vunpack.c.l.b16 %v4299
    %v5897 = vunpack.c.h.b16 %v4299
    %v5898 = vunpack.c.l.b16 %v4300
    %v5899 = vunpack.c.h.b16 %v4300
    %v5900 = vunpack.c.l.b16 %v4301
    %v5901 = vunpack.c.h.b16 %v4301
    %v5902 = vunpack.c.l.b16 %v4302
    %v5903 = vunpack.c.h.b16 %v4302
    %v5904 = vunpack.c.l.b16 %v4303
    %v5905 = vunpack.c.h.b16 %v4303
    %v5906 = vunpack.c.l.b16 %v4304
    %v5907 = vunpack.c.h.b16 %v4304
    %v5908 = vunpack.c.l.b16 %v4305
    %v5909 = vunpack.c.h.b16 %v4305
    %v5910 = vunpack.c.l.b16 %v4306
    %v5911 = vunpack.c.h.b16 %v4306
    %v5912 = vunpack.c.l.b16 %v4307
    %v5913 = vunpack.c.h.b16 %v4307
    %v5914 = vunpack.c.l.b16 %v4308
    %v5915 = vunpack.c.h.b16 %v4308
    %v5916 = vunpack.c.l.b16 %v4309
    %v5917 = vunpack.c.h.b16 %v4309
    %v5918 = vunpack.c.l.b16 %v4310
    %v5919 = vunpack.c.h.b16 %v4310
    %v5920 = vunpack.c.l.b16 %v4311
    %v5921 = vunpack.c.h.b16 %v4311
    %v5922 = vunpack.c.l.b16 %v4312
    %v5923 = vunpack.c.h.b16 %v4312
    %v5924 = vunpack.c.l.b16 %v4313
    %v5925 = vunpack.c.h.b16 %v4313
    %v5926 = vunpack.c.l.b16 %v4314
    %v5927 = vunpack.c.h.b16 %v4314
    %v5928 = vunpack.c.l.b16 %v4315
    %v5929 = vunpack.c.h.b16 %v4315
    %v5930 = vunpack.c.l.b16 %v4316
    %v5931 = vunpack.c.h.b16 %v4316
    %v5932 = vunpack.c.l.b16 %v4317
    %v5933 = vunpack.c.h.b16 %v4317
    %v5934 = vunpack.c.l.b16 %v4318
    %v5935 = vunpack.c.h.b16 %v4318
    %v5936 = vunpack.c.l.b16 %v4319
    %v5937 = vunpack.c.h.b16 %v4319
    %v5938 = vunpack.c.l.b16 %v4320
    %v5939 = vunpack.c.h.b16 %v4320
    %v5940 = vunpack.c.l.b16 %v4321
    %v5941 = vunpack.c.h.b16 %v4321
    %v5942 = vunpack.c.l.b16 %v4322
    %v5943 = vunpack.c.h.b16 %v4322
    %v5944 = vunpack.c.l.b16 %v4323
    %v5945 = vunpack.c.h.b16 %v4323
    %v5946 = vunpack.c.l.b16 %v4324
    %v5947 = vunpack.c.h.b16 %v4324
    %v5948 = vunpack.c.l.b16 %v4325
    %v5949 = vunpack.c.h.b16 %v4325
    %v5950 = vunpack.c.l.b16 %v4326
    %v5951 = vunpack.c.h.b16 %v4326
    %v5952 = vunpack.c.l.b16 %v4327
    %v5953 = vunpack.c.h.b16 %v4327
    %v5954 = vunpack.c.l.b16 %v4328
    %v5955 = vunpack.c.h.b16 %v4328
    %v5956 = vunpack.c.l.b16 %v4329
    %v5957 = vunpack.c.h.b16 %v4329
    %v5958 = vunpack.c.l.b16 %v4330
    %v5959 = vunpack.c.h.b16 %v4330
    %v5960 = vunpack.c.l.b16 %v4331
    %v5961 = vunpack.c.h.b16 %v4331
    %v5962 = vunpack.c.l.b16 %v4332
    %v5963 = vunpack.c.h.b16 %v4332
    %v5964 = vunpack.c.l.b16 %v4333
    %v5965 = vunpack.c.h.b16 %v4333
    %v5966 = vunpack.c.l.b16 %v4334
    %v5967 = vunpack.c.h.b16 %v4334
    %v5968 = vunpack.c.l.b16 %v4335
    %v5969 = vunpack.c.h.b16 %v4335
    %v5970 = vunpack.c.l.b16 %v4336
    %v5971 = vunpack.c.h.b16 %v4336
    %v5972 = vunpack.c.l.b16 %v4337
    %v5973 = vunpack.c.h.b16 %v4337
    %v5974 = vunpack.c.l.b16 %v4338
    %v5975 = vunpack.c.h.b16 %v4338
    %v5976 = vunpack.c.l.b16 %v4339
    %v5977 = vunpack.c.h.b16 %v4339
    %v5978 = vunpack.c.l.b16 %v4340
    %v5979 = vunpack.c.h.b16 %v4340
    %v5980 = vunpack.c.l.b16 %v4341
    %v5981 = vunpack.c.h.b16 %v4341
    %v5982 = vunpack.c.l.b16 %v4342
    %v5983 = vunpack.c.h.b16 %v4342
    %v5984 = vunpack.c.l.b16 %v4343
    %v5985 = vunpack.c.h.b16 %v4343
    %v5986 = vunpack.c.l.b16 %v4344
    %v5987 = vunpack.c.h.b16 %v4344
    %v5988 = vunpack.c.l.b16 %v4345
    %v5989 = vunpack.c.h.b16 %v4345
    %v5990 = vunpack.c.l.b16 %v4346
    %v5991 = vunpack.c.h.b16 %v4346
    %v5992 = vunpack.c.l.b16 %v4347
    %v5993 = vunpack.c.h.b16 %v4347
    %v5994 = vunpack.c.l.b16 %v4348
    %v5995 = vunpack.c.h.b16 %v4348
    %v5996 = vunpack.c.l.b16 %v4349
    %v5997 = vunpack.c.h.b16 %v4349
    %v5998 = vunpack.c.l.b16 %v4350
    %v5999 = vunpack.c.h.b16 %v4350
    %v6000 = vunpack.c.l.b16 %v4351
    %v6001 = vunpack.c.h.b16 %v4351
    %v6002 = vunpack.c.l.b16 %v4352
    %v6003 = vunpack.c.h.b16 %v4352
    %v6004 = vunpack.c.l.b16 %v4353
    %v6005 = vunpack.c.h.b16 %v4353
    %v6006 = vunpack.c.l.b16 %v4354
    %v6007 = vunpack.c.h.b16 %v4354
    %v6008 = vunpack.c.l.b16 %v4355
    %v6009 = vunpack.c.h.b16 %v4355
    %v6010 = vunpack.c.l.b16 %v4356
    %v6011 = vunpack.c.h.b16 %v4356
    %v6012 = vunpack.c.l.b16 %v4357
    %v6013 = vunpack.c.h.b16 %v4357
    %v6014 = vunpack.c.l.b16 %v4358
    %v6015 = vunpack.c.h.b16 %v4358
    %v6016 = vunpack.c.l.b16 %v4359
    %v6017 = vunpack.c.h.b16 %v4359
    %v6018 = vunpack.c.l.b16 %v4360
    %v6019 = vunpack.c.h.b16 %v4360
    %v6020 = vunpack.c.l.b16 %v4361
    %v6021 = vunpack.c.h.b16 %v4361
    %v6022 = vunpack.c.l.b16 %v4362
    %v6023 = vunpack.c.h.b16 %v4362
    %v6024 = vunpack.c.l.b16 %v4363
    %v6025 = vunpack.c.h.b16 %v4363
    %v6026 = vunpack.c.l.b16 %v4364
    %v6027 = vunpack.c.h.b16 %v4364
    %v6028 = vunpack.c.l.b16 %v4365
    %v6029 = vunpack.c.h.b16 %v4365
    %v6030 = vunpack.c.l.b16 %v4366
    %v6031 = vunpack.c.h.b16 %v4366
    %v6032 = vunpack.c.l.b16 %v4367
    %v6033 = vunpack.c.h.b16 %v4367
    %v6034 = vunpack.c.l.b16 %v4368
    %v6035 = vunpack.c.h.b16 %v4368
    %v6036 = vunpack.c.l.b16 %v4369
    %v6037 = vunpack.c.h.b16 %v4369
    %v6038 = vunpack.c.l.b16 %v4370
    %v6039 = vunpack.c.h.b16 %v4370
    %v6040 = vunpack.c.l.b16 %v4371
    %v6041 = vunpack.c.h.b16 %v4371
    %v6042 = vunpack.c.l.b16 %v4372
    %v6043 = vunpack.c.h.b16 %v4372
    %v6044 = vunpack.c.l.b16 %v4373
    %v6045 = vunpack.c.h.b16 %v4373
    %v6046 = vunpack.c.l.b16 %v4374
    %v6047 = vunpack.c.h.b16 %v4374
    %v6048 = vunpack.c.l.b16 %v4375
    %v6049 = vunpack.c.h.b16 %v4375
    %v6050 = vunpack.c.l.b16 %v4376
    %v6051 = vunpack.c.h.b16 %v4376
    %v6052 = vunpack.c.l.b16 %v4377
    %v6053 = vunpack.c.h.b16 %v4377
    %v6054 = vunpack.c.l.b16 %v4378
    %v6055 = vunpack.c.h.b16 %v4378
    %v6056 = vunpack.c.l.b16 %v4379
    %v6057 = vunpack.c.h.b16 %v4379
    %v6058 = vunpack.c.l.b16 %v4380
    %v6059 = vunpack.c.h.b16 %v4380
    %v6060 = vunpack.c.l.b16 %v4381
    %v6061 = vunpack.c.h.b16 %v4381
    %v6062 = vunpack.c.l.b16 %v4382
    %v6063 = vunpack.c.h.b16 %v4382
    %v6064 = vunpack.c.l.b16 %v4383
    %v6065 = vunpack.c.h.b16 %v4383
    %v6066 = vunpack.c.l.b16 %v4384
    %v6067 = vunpack.c.h.b16 %v4384
    %v6068 = vunpack.c.l.b16 %v4385
    %v6069 = vunpack.c.h.b16 %v4385
    %v6070 = vunpack.c.l.b16 %v4386
    %v6071 = vunpack.c.h.b16 %v4386
    %v6072 = vunpack.c.l.b16 %v4387
    %v6073 = vunpack.c.h.b16 %v4387
    %v6074 = vunpack.c.l.b16 %v4388
    %v6075 = vunpack.c.h.b16 %v4388
    %v6076 = vunpack.c.l.b16 %v4389
    %v6077 = vunpack.c.h.b16 %v4389
    %v6078 = vunpack.c.l.b16 %v4390
    %v6079 = vunpack.c.h.b16 %v4390
    %v6080 = vunpack.c.l.b16 %v4391
    %v6081 = vunpack.c.h.b16 %v4391
    %v6082 = vunpack.c.l.b16 %v4392
    %v6083 = vunpack.c.h.b16 %v4392
    %v6084 = vunpack.c.l.b16 %v4393
    %v6085 = vunpack.c.h.b16 %v4393
    %v6086 = vunpack.c.l.b16 %v4394
    %v6087 = vunpack.c.h.b16 %v4394
    %v6088 = vunpack.c.l.b16 %v4395
    %v6089 = vunpack.c.h.b16 %v4395
    %v6090 = vunpack.c.l.b16 %v4396
    %v6091 = vunpack.c.h.b16 %v4396
    %v6092 = vunpack.c.l.b16 %v4397
    %v6093 = vunpack.c.h.b16 %v4397
    %v6094 = vunpack.c.l.b16 %v4398
    %v6095 = vunpack.c.h.b16 %v4398
    %v6096 = vunpack.c.l.b16 %v4399
    %v6097 = vunpack.c.h.b16 %v4399
    %v6098 = vunpack.c.l.b16 %v4400
    %v6099 = vunpack.c.h.b16 %v4400
    %v6100 = vunpack.c.l.b16 %v4401
    %v6101 = vunpack.c.h.b16 %v4401
    %v6102 = vunpack.c.l.b16 %v4402
    %v6103 = vunpack.c.h.b16 %v4402
    %v6104 = vunpack.c.l.b16 %v4403
    %v6105 = vunpack.c.h.b16 %v4403
    %v6106 = vunpack.c.l.b16 %v4404
    %v6107 = vunpack.c.h.b16 %v4404
    %v6108 = vunpack.c.l.b16 %v4405
    %v6109 = vunpack.c.h.b16 %v4405
    %v6110 = vunpack.c.l.b16 %v4406
    %v6111 = vunpack.c.h.b16 %v4406
    %v6112 = vunpack.c.l.b16 %v4407
    %v6113 = vunpack.c.h.b16 %v4407
    %v6114 = vunpack.c.l.b16 %v4408
    %v6115 = vunpack.c.h.b16 %v4408
    %v6116 = vunpack.c.l.b16 %v4409
    %v6117 = vunpack.c.h.b16 %v4409
    %v6118 = vunpack.c.l.b16 %v4410
    %v6119 = vunpack.c.h.b16 %v4410
    %v6120 = vunpack.c.l.b16 %v4411
    %v6121 = vunpack.c.h.b16 %v4411
    %v6122 = vunpack.c.l.b16 %v4412
    %v6123 = vunpack.c.h.b16 %v4412
    %v6124 = vunpack.c.l.b16 %v4413
    %v6125 = vunpack.c.h.b16 %v4413
    %v6126 = vunpack.c.l.b16 %v4414
    %v6127 = vunpack.c.h.b16 %v4414
    %v6128 = vunpack.c.l.b16 %v4415
    %v6129 = vunpack.c.h.b16 %v4415
    %v6130 = vunpack.c.l.b16 %v4416
    %v6131 = vunpack.c.h.b16 %v4416
    %v6132 = vunpack.c.l.b16 %v4417
    %v6133 = vunpack.c.h.b16 %v4417
    %v6134 = vunpack.c.l.b16 %v4418
    %v6135 = vunpack.c.h.b16 %v4418
    %v6136 = vunpack.c.l.b16 %v4419
    %v6137 = vunpack.c.h.b16 %v4419
    %v6138 = vunpack.c.l.b16 %v4420
    %v6139 = vunpack.c.h.b16 %v4420
    %v6140 = vunpack.c.l.b16 %v4421
    %v6141 = vunpack.c.h.b16 %v4421
    %v6142 = vunpack.c.l.b16 %v4422
    %v6143 = vunpack.c.h.b16 %v4422
    %v6144 = vunpack.c.l.b16 %v4423
    %v6145 = vunpack.c.h.b16 %v4423
    %v6146 = vunpack.c.l.b16 %v4424
    %v6147 = vunpack.c.h.b16 %v4424
    %v6148 = vunpack.c.l.b16 %v4425
    %v6149 = vunpack.c.h.b16 %v4425
    %v6150 = vunpack.c.l.b16 %v4426
    %v6151 = vunpack.c.h.b16 %v4426
    %v6152 = vunpack.c.l.b16 %v4427
    %v6153 = vunpack.c.h.b16 %v4427
    %v6154 = vunpack.c.l.b16 %v4428
    %v6155 = vunpack.c.h.b16 %v4428
    %v6156 = vunpack.c.l.b16 %v4429
    %v6157 = vunpack.c.h.b16 %v4429
    %v6158 = vunpack.c.l.b16 %v4430
    %v6159 = vunpack.c.h.b16 %v4430
    %v6160 = vpack.c.b16 %v5016, %v5008
    %v6161 = vpack.c.b16 %v5017, %v5009
    %v6162 = vpack.c.b16 %v5018, %v5010
    %v6163 = vpack.c.b16 %v5019, %v5011
    %v6164 = vpack.c.b16 %v5020, %v5012
    %v6165 = vpack.c.b16 %v5021, %v5013
    %v6166 = vpack.c.b16 %v5022, %v5014
    %v6167 = vpack.c.b16 %v5023, %v5015
    %v6168 = vpack.c.b16 %v5032, %v5024
    %v6169 = vpack.c.b16 %v5033, %v5025
    %v6170 = vpack.c.b16 %v5034, %v5026
    %v6171 = vpack.c.b16 %v5035, %v5027
    %v6172 = vpack.c.b16 %v5036, %v5028
    %v6173 = vpack.c.b16 %v5037, %v5029
    %v6174 = vpack.c.b16 %v5038, %v5030
    %v6175 = vpack.c.b16 %v5039, %v5031
    %v6176 = vpack.c.b16 %v5048, %v5040
    %v6177 = vpack.c.b16 %v5049, %v5041
    %v6178 = vpack.c.b16 %v5050, %v5042
    %v6179 = vpack.c.b16 %v5051, %v5043
    %v6180 = vpack.c.b16 %v5052, %v5044
    %v6181 = vpack.c.b16 %v5053, %v5045
    %v6182 = vpack.c.b16 %v5054, %v5046
    %v6183 = vpack.c.b16 %v5055, %v5047
    %v6184 = vpack.c.b16 %v5064, %v5056
    %v6185 = vpack.c.b16 %v5065, %v5057
    %v6186 = vpack.c.b16 %v5066, %v5058
    %v6187 = vpack.c.b16 %v5067, %v5059
    %v6188 = vpack.c.b16 %v5068, %v5060
    %v6189 = vpack.c.b16 %v5069, %v5061
    %v6190 = vpack.c.b16 %v5070, %v5062
    %v6191 = vpack.c.b16 %v5071, %v5063
    %v6192 = vpack.c.b16 %v5080, %v5072
    %v6193 = vpack.c.b16 %v5081, %v5073
    %v6194 = vpack.c.b16 %v5082, %v5074
    %v6195 = vpack.c.b16 %v5083, %v5075
    %v6196 = vpack.c.b16 %v5084, %v5076
    %v6197 = vpack.c.b16 %v5085, %v5077
    %v6198 = vpack.c.b16 %v5086, %v5078
    %v6199 = vpack.c.b16 %v5087, %v5079
    %v6200 = vpack.c.b16 %v5096, %v5088
    %v6201 = vpack.c.b16 %v5097, %v5089
    %v6202 = vpack.c.b16 %v5098, %v5090
    %v6203 = vpack.c.b16 %v5099, %v5091
    %v6204 = vpack.c.b16 %v5100, %v5092
    %v6205 = vpack.c.b16 %v5101, %v5093
    %v6206 = vpack.c.b16 %v5102, %v5094
    %v6207 = vpack.c.b16 %v5103, %v5095
    %v6208 = vpack.c.b16 %v5112, %v5104
    %v6209 = vpack.c.b16 %v5113, %v5105
    %v6210 = vpack.c.b16 %v5114, %v5106
    %v6211 = vpack.c.b16 %v5115, %v5107
    %v6212 = vpack.c.b16 %v5116, %v5108
    %v6213 = vpack.c.b16 %v5117, %v5109
    %v6214 = vpack.c.b16 %v5118, %v5110
    %v6215 = vpack.c.b16 %v5119, %v5111
    %v6216 = vpack.c.b16 %v5128, %v5120
    %v6217 = vpack.c.b16 %v5129, %v5121
    %v6218 = vpack.c.b16 %v5130, %v5122
    %v6219 = vpack.c.b16 %v5131, %v5123
    %v6220 = vpack.c.b16 %v5132, %v5124
    %v6221 = vpack.c.b16 %v5133, %v5125
    %v6222 = vpack.c.b16 %v5134, %v5126
    %v6223 = vpack.c.b16 %v5135, %v5127
    %v6224 = vpack.c.b16 %v5144, %v5136
    %v6225 = vpack.c.b16 %v5145, %v5137
    %v6226 = vpack.c.b16 %v5146, %v5138
    %v6227 = vpack.c.b16 %v5147, %v5139
    %v6228 = vpack.c.b16 %v5148, %v5140
    %v6229 = vpack.c.b16 %v5149, %v5141
    %v6230 = vpack.c.b16 %v5150, %v5142
    %v6231 = vpack.c.b16 %v5151, %v5143
    %v6232 = vpack.c.b16 %v5160, %v5152
    %v6233 = vpack.c.b16 %v5161, %v5153
    %v6234 = vpack.c.b16 %v5162, %v5154
    %v6235 = vpack.c.b16 %v5163, %v5155
    %v6236 = vpack.c.b16 %v5164, %v5156
    %v6237 = vpack.c.b16 %v5165, %v5157
    %v6238 = vpack.c.b16 %v5166, %v5158
    %v6239 = vpack.c.b16 %v5167, %v5159
    %v6240 = vpack.c.b16 %v5176, %v5168
    %v6241 = vpack.c.b16 %v5177, %v5169
    %v6242 = vpack.c.b16 %v5178, %v5170
    %v6243 = vpack.c.b16 %v5179, %v5171
    %v6244 = vpack.c.b16 %v5180, %v5172
    %v6245 = vpack.c.b16 %v5181, %v5173
    %v6246 = vpack.c.b16 %v5182, %v5174
    %v6247 = vpack.c.b16 %v5183, %v5175
    %v6248 = vpack.c.b16 %v5192, %v5184
    %v6249 = vpack.c.b16 %v5193, %v5185
    %v6250 = vpack.c.b16 %v5194, %v5186
    %v6251 = vpack.c.b16 %v5195, %v5187
    %v6252 = vpack.c.b16 %v5196, %v5188
    %v6253 = vpack.c.b16 %v5197, %v5189
    %v6254 = vpack.c.b16 %v5198, %v5190
    %v6255 = vpack.c.b16 %v5199, %v5191
    %v6256 = vpack.c.b16 %v5208, %v5200
    %v6257 = vpack.c.b16 %v5209, %v5201
    %v6258 = vpack.c.b16 %v5210, %v5202
    %v6259 = vpack.c.b16 %v5211, %v5203
    %v6260 = vpack.c.b16 %v5212, %v5204
    %v6261 = vpack.c.b16 %v5213, %v5205
    %v6262 = vpack.c.b16 %v5214, %v5206
    %v6263 = vpack.c.b16 %v5215, %v5207
    %v6264 = vpack.c.b16 %v5224, %v5216
    %v6265 = vpack.c.b16 %v5225, %v5217
    %v6266 = vpack.c.b16 %v5226, %v5218
    %v6267 = vpack.c.b16 %v5227, %v5219
    %v6268 = vpack.c.b16 %v5228, %v5220
    %v6269 = vpack.c.b16 %v5229, %v5221
    %v6270 = vpack.c.b16 %v5230, %v5222
    %v6271 = vpack.c.b16 %v5231, %v5223
    %v6272 = vpack.c.b16 %v5240, %v5232
    %v6273 = vpack.c.b16 %v5241, %v5233
    %v6274 = vpack.c.b16 %v5242, %v5234
    %v6275 = vpack.c.b16 %v5243, %v5235
    %v6276 = vpack.c.b16 %v5244, %v5236
    %v6277 = vpack.c.b16 %v5245, %v5237
    %v6278 = vpack.c.b16 %v5246, %v5238
    %v6279 = vpack.c.b16 %v5247, %v5239
    %v6280 = vpack.c.b16 %v5256, %v5248
    %v6281 = vpack.c.b16 %v5257, %v5249
    %v6282 = vpack.c.b16 %v5258, %v5250
    %v6283 = vpack.c.b16 %v5259, %v5251
    %v6284 = vpack.c.b16 %v5260, %v5252
    %v6285 = vpack.c.b16 %v5261, %v5253
    %v6286 = vpack.c.b16 %v5262, %v5254
    %v6287 = vpack.c.b16 %v5263, %v5255
    %v6288 = vpack.c.b16 %v5272, %v5264
    %v6289 = vpack.c.b16 %v5273, %v5265
    %v6290 = vpack.c.b16 %v5274, %v5266
    %v6291 = vpack.c.b16 %v5275, %v5267
    %v6292 = vpack.c.b16 %v5276, %v5268
    %v6293 = vpack.c.b16 %v5277, %v5269
    %v6294 = vpack.c.b16 %v5278, %v5270
    %v6295 = vpack.c.b16 %v5279, %v5271
    %v6296 = vpack.c.b16 %v5288, %v5280
    %v6297 = vpack.c.b16 %v5289, %v5281
    %v6298 = vpack.c.b16 %v5290, %v5282
    %v6299 = vpack.c.b16 %v5291, %v5283
    %v6300 = vpack.c.b16 %v5292, %v5284
    %v6301 = vpack.c.b16 %v5293, %v5285
    %v6302 = vpack.c.b16 %v5294, %v5286
    %v6303 = vpack.c.b16 %v5295, %v5287
    %v6304 = vpack.c.b16 %v5304, %v5296
    %v6305 = vpack.c.b16 %v5305, %v5297
    %v6306 = vpack.c.b16 %v5306, %v5298
    %v6307 = vpack.c.b16 %v5307, %v5299
    %v6308 = vpack.c.b16 %v5308, %v5300
    %v6309 = vpack.c.b16 %v5309, %v5301
    %v6310 = vpack.c.b16 %v5310, %v5302
    %v6311 = vpack.c.b16 %v5311, %v5303
    %v6312 = vpack.c.b16 %v5320, %v5312
    %v6313 = vpack.c.b16 %v5321, %v5313
    %v6314 = vpack.c.b16 %v5322, %v5314
    %v6315 = vpack.c.b16 %v5323, %v5315
    %v6316 = vpack.c.b16 %v5324, %v5316
    %v6317 = vpack.c.b16 %v5325, %v5317
    %v6318 = vpack.c.b16 %v5326, %v5318
    %v6319 = vpack.c.b16 %v5327, %v5319
    %v6320 = vpack.c.b16 %v5336, %v5328
    %v6321 = vpack.c.b16 %v5337, %v5329
    %v6322 = vpack.c.b16 %v5338, %v5330
    %v6323 = vpack.c.b16 %v5339, %v5331
    %v6324 = vpack.c.b16 %v5340, %v5332
    %v6325 = vpack.c.b16 %v5341, %v5333
    %v6326 = vpack.c.b16 %v5342, %v5334
    %v6327 = vpack.c.b16 %v5343, %v5335
    %v6328 = vpack.c.b16 %v5352, %v5344
    %v6329 = vpack.c.b16 %v5353, %v5345
    %v6330 = vpack.c.b16 %v5354, %v5346
    %v6331 = vpack.c.b16 %v5355, %v5347
    %v6332 = vpack.c.b16 %v5356, %v5348
    %v6333 = vpack.c.b16 %v5357, %v5349
    %v6334 = vpack.c.b16 %v5358, %v5350
    %v6335 = vpack.c.b16 %v5359, %v5351
    %v6336 = vpack.c.b16 %v5368, %v5360
    %v6337 = vpack.c.b16 %v5369, %v5361
    %v6338 = vpack.c.b16 %v5370, %v5362
    %v6339 = vpack.c.b16 %v5371, %v5363
    %v6340 = vpack.c.b16 %v5372, %v5364
    %v6341 = vpack.c.b16 %v5373, %v5365
    %v6342 = vpack.c.b16 %v5374, %v5366
    %v6343 = vpack.c.b16 %v5375, %v5367
    %v6344 = vpack.c.b16 %v5384, %v5376
    %v6345 = vpack.c.b16 %v5385, %v5377
    %v6346 = vpack.c.b16 %v5386, %v5378
    %v6347 = vpack.c.b16 %v5387, %v5379
    %v6348 = vpack.c.b16 %v5388, %v5380
    %v6349 = vpack.c.b16 %v5389, %v5381
    %v6350 = vpack.c.b16 %v5390, %v5382
    %v6351 = vpack.c.b16 %v5391, %v5383
    %v6352 = vpack.c.b16 %v5400, %v5392
    %v6353 = vpack.c.b16 %v5401, %v5393
    %v6354 = vpack.c.b16 %v5402, %v5394
    %v6355 = vpack.c.b16 %v5403, %v5395
    %v6356 = vpack.c.b16 %v5404, %v5396
    %v6357 = vpack.c.b16 %v5405, %v5397
    %v6358 = vpack.c.b16 %v5406, %v5398
    %v6359 = vpack.c.b16 %v5407, %v5399
    %v6360 = vpack.c.b16 %v5416, %v5408
    %v6361 = vpack.c.b16 %v5417, %v5409
    %v6362 = vpack.c.b16 %v5418, %v5410
    %v6363 = vpack.c.b16 %v5419, %v5411
    %v6364 = vpack.c.b16 %v5420, %v5412
    %v6365 = vpack.c.b16 %v5421, %v5413
    %v6366 = vpack.c.b16 %v5422, %v5414
    %v6367 = vpack.c.b16 %v5423, %v5415
    %v6368 = vpack.c.b16 %v5432, %v5424
    %v6369 = vpack.c.b16 %v5433, %v5425
    %v6370 = vpack.c.b16 %v5434, %v5426
    %v6371 = vpack.c.b16 %v5435, %v5427
    %v6372 = vpack.c.b16 %v5436, %v5428
    %v6373 = vpack.c.b16 %v5437, %v5429
    %v6374 = vpack.c.b16 %v5438, %v5430
    %v6375 = vpack.c.b16 %v5439, %v5431
    %v6376 = vpack.c.b16 %v5448, %v5440
    %v6377 = vpack.c.b16 %v5449, %v5441
    %v6378 = vpack.c.b16 %v5450, %v5442
    %v6379 = vpack.c.b16 %v5451, %v5443
    %v6380 = vpack.c.b16 %v5452, %v5444
    %v6381 = vpack.c.b16 %v5453, %v5445
    %v6382 = vpack.c.b16 %v5454, %v5446
    %v6383 = vpack.c.b16 %v5455, %v5447
    %v6384 = vpack.c.b16 %v5464, %v5456
    %v6385 = vpack.c.b16 %v5465, %v5457
    %v6386 = vpack.c.b16 %v5466, %v5458
    %v6387 = vpack.c.b16 %v5467, %v5459
    %v6388 = vpack.c.b16 %v5468, %v5460
    %v6389 = vpack.c.b16 %v5469, %v5461
    %v6390 = vpack.c.b16 %v5470, %v5462
    %v6391 = vpack.c.b16 %v5471, %v5463
    %v6392 = vpack.c.b16 %v5480, %v5472
    %v6393 = vpack.c.b16 %v5481, %v5473
    %v6394 = vpack.c.b16 %v5482, %v5474
    %v6395 = vpack.c.b16 %v5483, %v5475
    %v6396 = vpack.c.b16 %v5484, %v5476
    %v6397 = vpack.c.b16 %v5485, %v5477
    %v6398 = vpack.c.b16 %v5486, %v5478
    %v6399 = vpack.c.b16 %v5487, %v5479
    %v6400 = vpack.c.b16 %v5496, %v5488
    %v6401 = vpack.c.b16 %v5497, %v5489
    %v6402 = vpack.c.b16 %v5498, %v5490
    %v6403 = vpack.c.b16 %v5499, %v5491
    %v6404 = vpack.c.b16 %v5500, %v5492
    %v6405 = vpack.c.b16 %v5501, %v5493
    %v6406 = vpack.c.b16 %v5502, %v5494
    %v6407 = vpack.c.b16 %v5503, %v5495
    %v6408 = vpack.c.b16 %v5512, %v5504
    %v6409 = vpack.c.b16 %v5513, %v5505
    %v6410 = vpack.c.b16 %v5514, %v5506
    %v6411 = vpack.c.b16 %v5515, %v5507
    %v6412 = vpack.c.b16 %v5516, %v5508
    %v6413 = vpack.c.b16 %v5517, %v5509
    %v6414 = vpack.c.b16 %v5518, %v5510
    %v6415 = vpack.c.b16 %v5519, %v5511
    %v6416 = vpack.c.b16 %v5528, %v5520
    %v6417 = vpack.c.b16 %v5529, %v5521
    %v6418 = vpack.c.b16 %v5530, %v5522
    %v6419 = vpack.c.b16 %v5531, %v5523
    %v6420 = vpack.c.b16 %v5532, %v5524
    %v6421 = vpack.c.b16 %v5533, %v5525
    %v6422 = vpack.c.b16 %v5534, %v5526
    %v6423 = vpack.c.b16 %v5535, %v5527
    %v6424 = vpack.c.b16 %v5544, %v5536
    %v6425 = vpack.c.b16 %v5545, %v5537
    %v6426 = vpack.c.b16 %v5546, %v5538
    %v6427 = vpack.c.b16 %v5547, %v5539
    %v6428 = vpack.c.b16 %v5548, %v5540
    %v6429 = vpack.c.b16 %v5549, %v5541
    %v6430 = vpack.c.b16 %v5550, %v5542
    %v6431 = vpack.c.b16 %v5551, %v5543
    %v6432 = vpack.c.b16 %v5560, %v5552
    %v6433 = vpack.c.b16 %v5561, %v5553
    %v6434 = vpack.c.b16 %v5562, %v5554
    %v6435 = vpack.c.b16 %v5563, %v5555
    %v6436 = vpack.c.b16 %v5564, %v5556
    %v6437 = vpack.c.b16 %v5565, %v5557
    %v6438 = vpack.c.b16 %v5566, %v5558
    %v6439 = vpack.c.b16 %v5567, %v5559
    %v6440 = vpack.c.b16 %v5576, %v5568
    %v6441 = vpack.c.b16 %v5577, %v5569
    %v6442 = vpack.c.b16 %v5578, %v5570
    %v6443 = vpack.c.b16 %v5579, %v5571
    %v6444 = vpack.c.b16 %v5580, %v5572
    %v6445 = vpack.c.b16 %v5581, %v5573
    %v6446 = vpack.c.b16 %v5582, %v5574
    %v6447 = vpack.c.b16 %v5583, %v5575
    %v6448 = vpack.c.b16 %v5592, %v5584
    %v6449 = vpack.c.b16 %v5593, %v5585
    %v6450 = vpack.c.b16 %v5594, %v5586
    %v6451 = vpack.c.b16 %v5595, %v5587
    %v6452 = vpack.c.b16 %v5596, %v5588
    %v6453 = vpack.c.b16 %v5597, %v5589
    %v6454 = vpack.c.b16 %v5598, %v5590
    %v6455 = vpack.c.b16 %v5599, %v5591
    %v6456 = vpack.c.b16 %v5608, %v5600
    %v6457 = vpack.c.b16 %v5609, %v5601
    %v6458 = vpack.c.b16 %v5610, %v5602
    %v6459 = vpack.c.b16 %v5611, %v5603
    %v6460 = vpack.c.b16 %v5612, %v5604
    %v6461 = vpack.c.b16 %v5613, %v5605
    %v6462 = vpack.c.b16 %v5614, %v5606
    %v6463 = vpack.c.b16 %v5615, %v5607
    %v6464 = vpack.c.b16 %v5624, %v5616
    %v6465 = vpack.c.b16 %v5625, %v5617
    %v6466 = vpack.c.b16 %v5626, %v5618
    %v6467 = vpack.c.b16 %v5627, %v5619
    %v6468 = vpack.c.b16 %v5628, %v5620
    %v6469 = vpack.c.b16 %v5629, %v5621
    %v6470 = vpack.c.b16 %v5630, %v5622
    %v6471 = vpack.c.b16 %v5631, %v5623
    %v6472 = vpack.c.b16 %v5640, %v5632
    %v6473 = vpack.c.b16 %v5641, %v5633
    %v6474 = vpack.c.b16 %v5642, %v5634
    %v6475 = vpack.c.b16 %v5643, %v5635
    %v6476 = vpack.c.b16 %v5644, %v5636
    %v6477 = vpack.c.b16 %v5645, %v5637
    %v6478 = vpack.c.b16 %v5646, %v5638
    %v6479 = vpack.c.b16 %v5647, %v5639
    %v6480 = vpack.c.b16 %v5656, %v5648
    %v6481 = vpack.c.b16 %v5657, %v5649
    %v6482 = vpack.c.b16 %v5658, %v5650
    %v6483 = vpack.c.b16 %v5659, %v5651
    %v6484 = vpack.c.b16 %v5660, %v5652
    %v6485 = vpack.c.b16 %v5661, %v5653
    %v6486 = vpack.c.b16 %v5662, %v5654
    %v6487 = vpack.c.b16 %v5663, %v5655
    %v6488 = vpack.c.b16 %v5672, %v5664
    %v6489 = vpack.c.b16 %v5673, %v5665
    %v6490 = vpack.c.b16 %v5674, %v5666
    %v6491 = vpack.c.b16 %v5675, %v5667
    %v6492 = vpack.c.b16 %v5676, %v5668
    %v6493 = vpack.c.b16 %v5677, %v5669
    %v6494 = vpack.c.b16 %v5678, %v5670
    %v6495 = vpack.c.b16 %v5679, %v5671
    %v6496 = vpack.c.b16 %v5688, %v5680
    %v6497 = vpack.c.b16 %v5689, %v5681
    %v6498 = vpack.c.b16 %v5690, %v5682
    %v6499 = vpack.c.b16 %v5691, %v5683
    %v6500 = vpack.c.b16 %v5692, %v5684
    %v6501 = vpack.c.b16 %v5693, %v5685
    %v6502 = vpack.c.b16 %v5694, %v5686
    %v6503 = vpack.c.b16 %v5695, %v5687
    %v6504 = vpack.c.b16 %v5704, %v5696
    %v6505 = vpack.c.b16 %v5705, %v5697
    %v6506 = vpack.c.b16 %v5706, %v5698
    %v6507 = vpack.c.b16 %v5707, %v5699
    %v6508 = vpack.c.b16 %v5708, %v5700
    %v6509 = vpack.c.b16 %v5709, %v5701
    %v6510 = vpack.c.b16 %v5710, %v5702
    %v6511 = vpack.c.b16 %v5711, %v5703
    %v6512 = vpack.c.b16 %v5720, %v5712
    %v6513 = vpack.c.b16 %v5721, %v5713
    %v6514 = vpack.c.b16 %v5722, %v5714
    %v6515 = vpack.c.b16 %v5723, %v5715
    %v6516 = vpack.c.b16 %v5724, %v5716
    %v6517 = vpack.c.b16 %v5725, %v5717
    %v6518 = vpack.c.b16 %v5726, %v5718
    %v6519 = vpack.c.b16 %v5727, %v5719
    %v6520 = vpack.c.b16 %v5736, %v5728
    %v6521 = vpack.c.b16 %v5737, %v5729
    %v6522 = vpack.c.b16 %v5738, %v5730
    %v6523 = vpack.c.b16 %v5739, %v5731
    %v6524 = vpack.c.b16 %v5740, %v5732
    %v6525 = vpack.c.b16 %v5741, %v5733
    %v6526 = vpack.c.b16 %v5742, %v5734
    %v6527 = vpack.c.b16 %v5743, %v5735
    %v6528 = vpack.c.b16 %v5752, %v5744
    %v6529 = vpack.c.b16 %v5753, %v5745
    %v6530 = vpack.c.b16 %v5754, %v5746
    %v6531 = vpack.c.b16 %v5755, %v5747
    %v6532 = vpack.c.b16 %v5756, %v5748
    %v6533 = vpack.c.b16 %v5757, %v5749
    %v6534 = vpack.c.b16 %v5758, %v5750
    %v6535 = vpack.c.b16 %v5759, %v5751
    %v6536 = vpack.c.b16 %v5768, %v5760
    %v6537 = vpack.c.b16 %v5769, %v5761
    %v6538 = vpack.c.b16 %v5770, %v5762
    %v6539 = vpack.c.b16 %v5771, %v5763
    %v6540 = vpack.c.b16 %v5772, %v5764
    %v6541 = vpack.c.b16 %v5773, %v5765
    %v6542 = vpack.c.b16 %v5774, %v5766
    %v6543 = vpack.c.b16 %v5775, %v5767
    %v6544 = vpack.c.b16 %v5784, %v5776
    %v6545 = vpack.c.b16 %v5785, %v5777
    %v6546 = vpack.c.b16 %v5786, %v5778
    %v6547 = vpack.c.b16 %v5787, %v5779
    %v6548 = vpack.c.b16 %v5788, %v5780
    %v6549 = vpack.c.b16 %v5789, %v5781
    %v6550 = vpack.c.b16 %v5790, %v5782
    %v6551 = vpack.c.b16 %v5791, %v5783
    %v6552 = vpack.c.b16 %v5800, %v5792
    %v6553 = vpack.c.b16 %v5801, %v5793
    %v6554 = vpack.c.b16 %v5802, %v5794
    %v6555 = vpack.c.b16 %v5803, %v5795
    %v6556 = vpack.c.b16 %v5804, %v5796
    %v6557 = vpack.c.b16 %v5805, %v5797
    %v6558 = vpack.c.b16 %v5806, %v5798
    %v6559 = vpack.c.b16 %v5807, %v5799
    %v6560 = vpack.c.b16 %v5816, %v5808
    %v6561 = vpack.c.b16 %v5817, %v5809
    %v6562 = vpack.c.b16 %v5818, %v5810
    %v6563 = vpack.c.b16 %v5819, %v5811
    %v6564 = vpack.c.b16 %v5820, %v5812
    %v6565 = vpack.c.b16 %v5821, %v5813
    %v6566 = vpack.c.b16 %v5822, %v5814
    %v6567 = vpack.c.b16 %v5823, %v5815
    %v6568 = vpack.c.b16 %v5832, %v5824
    %v6569 = vpack.c.b16 %v5833, %v5825
    %v6570 = vpack.c.b16 %v5834, %v5826
    %v6571 = vpack.c.b16 %v5835, %v5827
    %v6572 = vpack.c.b16 %v5836, %v5828
    %v6573 = vpack.c.b16 %v5837, %v5829
    %v6574 = vpack.c.b16 %v5838, %v5830
    %v6575 = vpack.c.b16 %v5839, %v5831
    %v6576 = vpack.c.b16 %v5848, %v5840
    %v6577 = vpack.c.b16 %v5849, %v5841
    %v6578 = vpack.c.b16 %v5850, %v5842
    %v6579 = vpack.c.b16 %v5851, %v5843
    %v6580 = vpack.c.b16 %v5852, %v5844
    %v6581 = vpack.c.b16 %v5853, %v5845
    %v6582 = vpack.c.b16 %v5854, %v5846
    %v6583 = vpack.c.b16 %v5855, %v5847
    %v6584 = vpack.c.b16 %v5864, %v5856
    %v6585 = vpack.c.b16 %v5865, %v5857
    %v6586 = vpack.c.b16 %v5866, %v5858
    %v6587 = vpack.c.b16 %v5867, %v5859
    %v6588 = vpack.c.b16 %v5868, %v5860
    %v6589 = vpack.c.b16 %v5869, %v5861
    %v6590 = vpack.c.b16 %v5870, %v5862
    %v6591 = vpack.c.b16 %v5871, %v5863
    %v6592 = vpack.c.b16 %v5880, %v5872
    %v6593 = vpack.c.b16 %v5881, %v5873
    %v6594 = vpack.c.b16 %v5882, %v5874
    %v6595 = vpack.c.b16 %v5883, %v5875
    %v6596 = vpack.c.b16 %v5884, %v5876
    %v6597 = vpack.c.b16 %v5885, %v5877
    %v6598 = vpack.c.b16 %v5886, %v5878
    %v6599 = vpack.c.b16 %v5887, %v5879
    %v6600 = vpack.c.b16 %v5896, %v5888
    %v6601 = vpack.c.b16 %v5897, %v5889
    %v6602 = vpack.c.b16 %v5898, %v5890
    %v6603 = vpack.c.b16 %v5899, %v5891
    %v6604 = vpack.c.b16 %v5900, %v5892
    %v6605 = vpack.c.b16 %v5901, %v5893
    %v6606 = vpack.c.b16 %v5902, %v5894
    %v6607 = vpack.c.b16 %v5903, %v5895
    %v6608 = vpack.c.b16 %v5912, %v5904
    %v6609 = vpack.c.b16 %v5913, %v5905
    %v6610 = vpack.c.b16 %v5914, %v5906
    %v6611 = vpack.c.b16 %v5915, %v5907
    %v6612 = vpack.c.b16 %v5916, %v5908
    %v6613 = vpack.c.b16 %v5917, %v5909
    %v6614 = vpack.c.b16 %v5918, %v5910
    %v6615 = vpack.c.b16 %v5919, %v5911
    %v6616 = vpack.c.b16 %v5928, %v5920
    %v6617 = vpack.c.b16 %v5929, %v5921
    %v6618 = vpack.c.b16 %v5930, %v5922
    %v6619 = vpack.c.b16 %v5931, %v5923
    %v6620 = vpack.c.b16 %v5932, %v5924
    %v6621 = vpack.c.b16 %v5933, %v5925
    %v6622 = vpack.c.b16 %v5934, %v5926
    %v6623 = vpack.c.b16 %v5935, %v5927
    %v6624 = vpack.c.b16 %v5944, %v5936
    %v6625 = vpack.c.b16 %v5945, %v5937
    %v6626 = vpack.c.b16 %v5946, %v5938
    %v6627 = vpack.c.b16 %v5947, %v5939
    %v6628 = vpack.c.b16 %v5948, %v5940
    %v6629 = vpack.c.b16 %v5949, %v5941
    %v6630 = vpack.c.b16 %v5950, %v5942
    %v6631 = vpack.c.b16 %v5951, %v5943
    %v6632 = vpack.c.b16 %v5960, %v5952
    %v6633 = vpack.c.b16 %v5961, %v5953
    %v6634 = vpack.c.b16 %v5962, %v5954
    %v6635 = vpack.c.b16 %v5963, %v5955
    %v6636 = vpack.c.b16 %v5964, %v5956
    %v6637 = vpack.c.b16 %v5965, %v5957
    %v6638 = vpack.c.b16 %v5966, %v5958
    %v6639 = vpack.c.b16 %v5967, %v5959
    %v6640 = vpack.c.b16 %v5976, %v5968
    %v6641 = vpack.c.b16 %v5977, %v5969
    %v6642 = vpack.c.b16 %v5978, %v5970
    %v6643 = vpack.c.b16 %v5979, %v5971
    %v6644 = vpack.c.b16 %v5980, %v5972
    %v6645 = vpack.c.b16 %v5981, %v5973
    %v6646 = vpack.c.b16 %v5982, %v5974
    %v6647 = vpack.c.b16 %v5983, %v5975
    %v6648 = vpack.c.b16 %v5992, %v5984
    %v6649 = vpack.c.b16 %v5993, %v5985
    %v6650 = vpack.c.b16 %v5994, %v5986
    %v6651 = vpack.c.b16 %v5995, %v5987
    %v6652 = vpack.c.b16 %v5996, %v5988
    %v6653 = vpack.c.b16 %v5997, %v5989
    %v6654 = vpack.c.b16 %v5998, %v5990
    %v6655 = vpack.c.b16 %v5999, %v5991
    %v6656 = vpack.c.b16 %v6008, %v6000
    %v6657 = vpack.c.b16 %v6009, %v6001
    %v6658 = vpack.c.b16 %v6010, %v6002
    %v6659 = vpack.c.b16 %v6011, %v6003
    %v6660 = vpack.c.b16 %v6012, %v6004
    %v6661 = vpack.c.b16 %v6013, %v6005
    %v6662 = vpack.c.b16 %v6014, %v6006
    %v6663 = vpack.c.b16 %v6015, %v6007
    %v6664 = vpack.c.b16 %v6024, %v6016
    %v6665 = vpack.c.b16 %v6025, %v6017
    %v6666 = vpack.c.b16 %v6026, %v6018
    %v6667 = vpack.c.b16 %v6027, %v6019
    %v6668 = vpack.c.b16 %v6028, %v6020
    %v6669 = vpack.c.b16 %v6029, %v6021
    %v6670 = vpack.c.b16 %v6030, %v6022
    %v6671 = vpack.c.b16 %v6031, %v6023
    %v6672 = vpack.c.b16 %v6040, %v6032
    %v6673 = vpack.c.b16 %v6041, %v6033
    %v6674 = vpack.c.b16 %v6042, %v6034
    %v6675 = vpack.c.b16 %v6043, %v6035
    %v6676 = vpack.c.b16 %v6044, %v6036
    %v6677 = vpack.c.b16 %v6045, %v6037
    %v6678 = vpack.c.b16 %v6046, %v6038
    %v6679 = vpack.c.b16 %v6047, %v6039
    %v6680 = vpack.c.b16 %v6056, %v6048
    %v6681 = vpack.c.b16 %v6057, %v6049
    %v6682 = vpack.c.b16 %v6058, %v6050
    %v6683 = vpack.c.b16 %v6059, %v6051
    %v6684 = vpack.c.b16 %v6060, %v6052
    %v6685 = vpack.c.b16 %v6061, %v6053
    %v6686 = vpack.c.b16 %v6062, %v6054
    %v6687 = vpack.c.b16 %v6063, %v6055
    %v6688 = vpack.c.b16 %v6072, %v6064
    %v6689 = vpack.c.b16 %v6073, %v6065
    %v6690 = vpack.c.b16 %v6074, %v6066
    %v6691 = vpack.c.b16 %v6075, %v6067
    %v6692 = vpack.c.b16 %v6076, %v6068
    %v6693 = vpack.c.b16 %v6077, %v6069
    %v6694 = vpack.c.b16 %v6078, %v6070
    %v6695 = vpack.c.b16 %v6079, %v6071
    %v6696 = vpack.c.b16 %v6088, %v6080
    %v6697 = vpack.c.b16 %v6089, %v6081
    %v6698 = vpack.c.b16 %v6090, %v6082
    %v6699 = vpack.c.b16 %v6091, %v6083
    %v6700 = vpack.c.b16 %v6092, %v6084
    %v6701 = vpack.c.b16 %v6093, %v6085
    %v6702 = vpack.c.b16 %v6094, %v6086
    %v6703 = vpack.c.b16 %v6095, %v6087
    %v6704 = vpack.c.b16 %v6104, %v6096
    %v6705 = vpack.c.b16 %v6105, %v6097
    %v6706 = vpack.c.b16 %v6106, %v6098
    %v6707 = vpack.c.b16 %v6107, %v6099
    %v6708 = vpack.c.b16 %v6108, %v6100
    %v6709 = vpack.c.b16 %v6109, %v6101
    %v6710 = vpack.c.b16 %v6110, %v6102
    %v6711 = vpack.c.b16 %v6111, %v6103
    %v6712 = vpack.c.b16 %v6120, %v6112
    %v6713 = vpack.c.b16 %v6121, %v6113
    %v6714 = vpack.c.b16 %v6122, %v6114
    %v6715 = vpack.c.b16 %v6123, %v6115
    %v6716 = vpack.c.b16 %v6124, %v6116
    %v6717 = vpack.c.b16 %v6125, %v6117
    %v6718 = vpack.c.b16 %v6126, %v6118
    %v6719 = vpack.c.b16 %v6127, %v6119
    %v6720 = vpack.c.b16 %v6136, %v6128
    %v6721 = vpack.c.b16 %v6137, %v6129
    %v6722 = vpack.c.b16 %v6138, %v6130
    %v6723 = vpack.c.b16 %v6139, %v6131
    %v6724 = vpack.c.b16 %v6140, %v6132
    %v6725 = vpack.c.b16 %v6141, %v6133
    %v6726 = vpack.c.b16 %v6142, %v6134
    %v6727 = vpack.c.b16 %v6143, %v6135
    %v6728 = vpack.c.b16 %v6152, %v6144
    %v6729 = vpack.c.b16 %v6153, %v6145
    %v6730 = vpack.c.b16 %v6154, %v6146
    %v6731 = vpack.c.b16 %v6155, %v6147
    %v6732 = vpack.c.b16 %v6156, %v6148
    %v6733 = vpack.c.b16 %v6157, %v6149
    %v6734 = vpack.c.b16 %v6158, %v6150
    %v6735 = vpack.c.b16 %v6159, %v6151
    %v7313 = vperm.slane %v4431, 0
    %v7314 = vperm.slane %v4431, 1
    %v7315 = vperm.slane %v4431, 2
    %v7316 = vperm.slane %v4431, 3
    %v7317 = vperm.slane %v4431, 4
    %v7318 = vperm.slane %v4431, 5
    %v7319 = vperm.slane %v4431, 6
    %v7320 = vperm.slane %v4431, 7
    %7329 = vmatpush.bf16.msra.mxu0 %v6216
    %7330 = vmatpush.bf16.msra.mxu0 %v6208
    %7331 = vmatpush.bf16.msra.mxu0 %v6200
    %7332 = vmatpush.bf16.msra.mxu0 %v6192
    %7333 = vmatpush.bf16.msra.mxu0 %v6184
    %7334 = vmatpush.bf16.msra.mxu0 %v6176
    %7335 = vmatpush.bf16.msra.mxu0 %v6168
    %7336 = vmatpush.bf16.msra.mxu0 %v6160
    %7337 = vmatmul.bf16.gmra.mxu0 %v3846
    %v7338 = vpop.f32.mrf.mxu0
    %v7339 = vadd.f32 %v7313, %v7338
    %v7340 = vpop.f32.mrf.mxu0
    %7341 = vdwg.mxu0
    %7342 = vmatpush.bf16.msra.mxu0 %v6280
    %7343 = vmatpush.bf16.msra.mxu0 %v6272
    %7344 = vmatpush.bf16.msra.mxu0 %v6264
    %7345 = vmatpush.bf16.msra.mxu0 %v6256
    %7346 = vmatpush.bf16.msra.mxu0 %v6248
    %7347 = vmatpush.bf16.msra.mxu0 %v6240
    %7348 = vmatpush.bf16.msra.mxu0 %v6232
    %7349 = vmatpush.bf16.msra.mxu0 %v6224
    %7350 = vmatmul.bf16.gmra.mxu0 %v3847
    %v7351 = vpop.f32.mrf.mxu0
    %v7352 = vadd.f32 %v7339, %v7351
    %v7353 = vpop.f32.mrf.mxu0
    %7354 = vdwg.mxu0
    %7355 = vmatpush.bf16.msra.mxu0 %v6344
    %7356 = vmatpush.bf16.msra.mxu0 %v6336
    %7357 = vmatpush.bf16.msra.mxu0 %v6328
    %7358 = vmatpush.bf16.msra.mxu0 %v6320
    %7359 = vmatpush.bf16.msra.mxu0 %v6312
    %7360 = vmatpush.bf16.msra.mxu0 %v6304
    %7361 = vmatpush.bf16.msra.mxu0 %v6296
    %7362 = vmatpush.bf16.msra.mxu0 %v6288
    %7363 = vmatmul.bf16.gmra.mxu0 %v3848
    %v7364 = vpop.f32.mrf.mxu0
    %v7365 = vadd.f32 %v7352, %v7364
    %v7366 = vpop.f32.mrf.mxu0
    %7367 = vdwg.mxu0
    %7368 = vmatpush.bf16.msra.mxu0 %v6408
    %7369 = vmatpush.bf16.msra.mxu0 %v6400
    %7370 = vmatpush.bf16.msra.mxu0 %v6392
    %7371 = vmatpush.bf16.msra.mxu0 %v6384
    %7372 = vmatpush.bf16.msra.mxu0 %v6376
    %7373 = vmatpush.bf16.msra.mxu0 %v6368
    %7374 = vmatpush.bf16.msra.mxu0 %v6360
    %7375 = vmatpush.bf16.msra.mxu0 %v6352
    %7376 = vmatmul.bf16.gmra.mxu0 %v3849
    %v7377 = vpop.f32.mrf.mxu0
    %v7378 = vadd.f32 %v7365, %v7377
    %v7379 = vpop.f32.mrf.mxu0
    %7380 = vdwg.mxu0
    %7381 = vmatpush.bf16.msra.mxu0 %v6472
    %7382 = vmatpush.bf16.msra.mxu0 %v6464
    %7383 = vmatpush.bf16.msra.mxu0 %v6456
    %7384 = vmatpush.bf16.msra.mxu0 %v6448
    %7385 = vmatpush.bf16.msra.mxu0 %v6440
    %7386 = vmatpush.bf16.msra.mxu0 %v6432
    %7387 = vmatpush.bf16.msra.mxu0 %v6424
    %7388 = vmatpush.bf16.msra.mxu0 %v6416
    %7389 = vmatmul.bf16.gmra.mxu0 %v3850
    %v7390 = vpop.f32.mrf.mxu0
    %v7391 = vadd.f32 %v7378, %v7390
    %v7392 = vpop.f32.mrf.mxu0
    %7393 = vdwg.mxu0
    %7394 = vmatpush.bf16.msra.mxu0 %v6536
    %7395 = vmatpush.bf16.msra.mxu0 %v6528
    %7396 = vmatpush.bf16.msra.mxu0 %v6520
    %7397 = vmatpush.bf16.msra.mxu0 %v6512
    %7398 = vmatpush.bf16.msra.mxu0 %v6504
    %7399 = vmatpush.bf16.msra.mxu0 %v6496
    %7400 = vmatpush.bf16.msra.mxu0 %v6488
    %7401 = vmatpush.bf16.msra.mxu0 %v6480
    %7402 = vmatmul.bf16.gmra.mxu0 %v3851
    %v7403 = vpop.f32.mrf.mxu0
    %v7404 = vadd.f32 %v7391, %v7403
    %v7405 = vpop.f32.mrf.mxu0
    %7406 = vdwg.mxu0
    %7407 = vmatpush.bf16.msra.mxu0 %v6600
    %7408 = vmatpush.bf16.msra.mxu0 %v6592
    %7409 = vmatpush.bf16.msra.mxu0 %v6584
    %7410 = vmatpush.bf16.msra.mxu0 %v6576
    %7411 = vmatpush.bf16.msra.mxu0 %v6568
    %7412 = vmatpush.bf16.msra.mxu0 %v6560
    %7413 = vmatpush.bf16.msra.mxu0 %v6552
    %7414 = vmatpush.bf16.msra.mxu0 %v6544
    %7415 = vmatmul.bf16.gmra.mxu0 %v3852
    %v7416 = vpop.f32.mrf.mxu0
    %v7417 = vadd.f32 %v7404, %v7416
    %v7418 = vpop.f32.mrf.mxu0
    %7419 = vdwg.mxu0
    %7420 = vmatpush.bf16.msra.mxu0 %v6664
    %7421 = vmatpush.bf16.msra.mxu0 %v6656
    %7422 = vmatpush.bf16.msra.mxu0 %v6648
    %7423 = vmatpush.bf16.msra.mxu0 %v6640
    %7424 = vmatpush.bf16.msra.mxu0 %v6632
    %7425 = vmatpush.bf16.msra.mxu0 %v6624
    %7426 = vmatpush.bf16.msra.mxu0 %v6616
    %7427 = vmatpush.bf16.msra.mxu0 %v6608
    %7428 = vmatmul.bf16.gmra.mxu0 %v3853
    %v7429 = vpop.f32.mrf.mxu0
    %v7430 = vadd.f32 %v7417, %v7429
    %v7431 = vpop.f32.mrf.mxu0
    %7432 = vdwg.mxu0
    %7433 = vmatpush.bf16.msra.mxu0 %v6728
    %7434 = vmatpush.bf16.msra.mxu0 %v6720
    %7435 = vmatpush.bf16.msra.mxu0 %v6712
    %7436 = vmatpush.bf16.msra.mxu0 %v6704
    %7437 = vmatpush.bf16.msra.mxu0 %v6696
    %7438 = vmatpush.bf16.msra.mxu0 %v6688
    %7439 = vmatpush.bf16.msra.mxu0 %v6680
    %7440 = vmatpush.bf16.msra.mxu0 %v6672
    %7441 = vmatmul.bf16.gmra.mxu0 %v3854
    %v7442 = vpop.f32.mrf.mxu0
    %v7443 = vadd.f32 %v7430, %v7442
    %v7444 = vpop.f32.mrf.mxu0
    %7445 = vdwg.mxu0
    %7446 = vmatpush.bf16.msra.mxu0 %v6217
    %7447 = vmatpush.bf16.msra.mxu0 %v6209
    %7448 = vmatpush.bf16.msra.mxu0 %v6201
    %7449 = vmatpush.bf16.msra.mxu0 %v6193
    %7450 = vmatpush.bf16.msra.mxu0 %v6185
    %7451 = vmatpush.bf16.msra.mxu0 %v6177
    %7452 = vmatpush.bf16.msra.mxu0 %v6169
    %7453 = vmatpush.bf16.msra.mxu0 %v6161
    %7454 = vmatmul.bf16.gmra.mxu0 %v3846
    %v7455 = vpop.f32.mrf.mxu0
    %v7456 = vadd.f32 %v7314, %v7455
    %v7457 = vpop.f32.mrf.mxu0
    %7458 = vdwg.mxu0
    %7459 = vmatpush.bf16.msra.mxu0 %v6281
    %7460 = vmatpush.bf16.msra.mxu0 %v6273
    %7461 = vmatpush.bf16.msra.mxu0 %v6265
    %7462 = vmatpush.bf16.msra.mxu0 %v6257
    %7463 = vmatpush.bf16.msra.mxu0 %v6249
    %7464 = vmatpush.bf16.msra.mxu0 %v6241
    %7465 = vmatpush.bf16.msra.mxu0 %v6233
    %7466 = vmatpush.bf16.msra.mxu0 %v6225
    %7467 = vmatmul.bf16.gmra.mxu0 %v3847
    %v7468 = vpop.f32.mrf.mxu0
    %v7469 = vadd.f32 %v7456, %v7468
    %v7470 = vpop.f32.mrf.mxu0
    %7471 = vdwg.mxu0
    %7472 = vmatpush.bf16.msra.mxu0 %v6345
    %7473 = vmatpush.bf16.msra.mxu0 %v6337
    %7474 = vmatpush.bf16.msra.mxu0 %v6329
    %7475 = vmatpush.bf16.msra.mxu0 %v6321
    %7476 = vmatpush.bf16.msra.mxu0 %v6313
    %7477 = vmatpush.bf16.msra.mxu0 %v6305
    %7478 = vmatpush.bf16.msra.mxu0 %v6297
    %7479 = vmatpush.bf16.msra.mxu0 %v6289
    %7480 = vmatmul.bf16.gmra.mxu0 %v3848
    %v7481 = vpop.f32.mrf.mxu0
    %v7482 = vadd.f32 %v7469, %v7481
    %v7483 = vpop.f32.mrf.mxu0
    %7484 = vdwg.mxu0
    %7485 = vmatpush.bf16.msra.mxu0 %v6409
    %7486 = vmatpush.bf16.msra.mxu0 %v6401
    %7487 = vmatpush.bf16.msra.mxu0 %v6393
    %7488 = vmatpush.bf16.msra.mxu0 %v6385
    %7489 = vmatpush.bf16.msra.mxu0 %v6377
    %7490 = vmatpush.bf16.msra.mxu0 %v6369
    %7491 = vmatpush.bf16.msra.mxu0 %v6361
    %7492 = vmatpush.bf16.msra.mxu0 %v6353
    %7493 = vmatmul.bf16.gmra.mxu0 %v3849
    %v7494 = vpop.f32.mrf.mxu0
    %v7495 = vadd.f32 %v7482, %v7494
    %v7496 = vpop.f32.mrf.mxu0
    %7497 = vdwg.mxu0
    %7498 = vmatpush.bf16.msra.mxu0 %v6473
    %7499 = vmatpush.bf16.msra.mxu0 %v6465
    %7500 = vmatpush.bf16.msra.mxu0 %v6457
    %7501 = vmatpush.bf16.msra.mxu0 %v6449
    %7502 = vmatpush.bf16.msra.mxu0 %v6441
    %7503 = vmatpush.bf16.msra.mxu0 %v6433
    %7504 = vmatpush.bf16.msra.mxu0 %v6425
    %7505 = vmatpush.bf16.msra.mxu0 %v6417
    %7506 = vmatmul.bf16.gmra.mxu0 %v3850
    %v7507 = vpop.f32.mrf.mxu0
    %v7508 = vadd.f32 %v7495, %v7507
    %v7509 = vpop.f32.mrf.mxu0
    %7510 = vdwg.mxu0
    %7511 = vmatpush.bf16.msra.mxu0 %v6537
    %7512 = vmatpush.bf16.msra.mxu0 %v6529
    %7513 = vmatpush.bf16.msra.mxu0 %v6521
    %7514 = vmatpush.bf16.msra.mxu0 %v6513
    %7515 = vmatpush.bf16.msra.mxu0 %v6505
    %7516 = vmatpush.bf16.msra.mxu0 %v6497
    %7517 = vmatpush.bf16.msra.mxu0 %v6489
    %7518 = vmatpush.bf16.msra.mxu0 %v6481
    %7519 = vmatmul.bf16.gmra.mxu0 %v3851
    %v7520 = vpop.f32.mrf.mxu0
    %v7521 = vadd.f32 %v7508, %v7520
    %v7522 = vpop.f32.mrf.mxu0
    %7523 = vdwg.mxu0
    %7524 = vmatpush.bf16.msra.mxu0 %v6601
    %7525 = vmatpush.bf16.msra.mxu0 %v6593
    %7526 = vmatpush.bf16.msra.mxu0 %v6585
    %7527 = vmatpush.bf16.msra.mxu0 %v6577
    %7528 = vmatpush.bf16.msra.mxu0 %v6569
    %7529 = vmatpush.bf16.msra.mxu0 %v6561
    %7530 = vmatpush.bf16.msra.mxu0 %v6553
    %7531 = vmatpush.bf16.msra.mxu0 %v6545
    %7532 = vmatmul.bf16.gmra.mxu0 %v3852
    %v7533 = vpop.f32.mrf.mxu0
    %v7534 = vadd.f32 %v7521, %v7533
    %v7535 = vpop.f32.mrf.mxu0
    %7536 = vdwg.mxu0
    %7537 = vmatpush.bf16.msra.mxu0 %v6665
    %7538 = vmatpush.bf16.msra.mxu0 %v6657
    %7539 = vmatpush.bf16.msra.mxu0 %v6649
    %7540 = vmatpush.bf16.msra.mxu0 %v6641
    %7541 = vmatpush.bf16.msra.mxu0 %v6633
    %7542 = vmatpush.bf16.msra.mxu0 %v6625
    %7543 = vmatpush.bf16.msra.mxu0 %v6617
    %7544 = vmatpush.bf16.msra.mxu0 %v6609
    %7545 = vmatmul.bf16.gmra.mxu0 %v3853
    %v7546 = vpop.f32.mrf.mxu0
    %v7547 = vadd.f32 %v7534, %v7546
    %v7548 = vpop.f32.mrf.mxu0
    %7549 = vdwg.mxu0
    %7550 = vmatpush.bf16.msra.mxu0 %v6729
    %7551 = vmatpush.bf16.msra.mxu0 %v6721
    %7552 = vmatpush.bf16.msra.mxu0 %v6713
    %7553 = vmatpush.bf16.msra.mxu0 %v6705
    %7554 = vmatpush.bf16.msra.mxu0 %v6697
    %7555 = vmatpush.bf16.msra.mxu0 %v6689
    %7556 = vmatpush.bf16.msra.mxu0 %v6681
    %7557 = vmatpush.bf16.msra.mxu0 %v6673
    %7558 = vmatmul.bf16.gmra.mxu0 %v3854
    %v7559 = vpop.f32.mrf.mxu0
    %v7560 = vadd.f32 %v7547, %v7559
    %v7561 = vpop.f32.mrf.mxu0
    %7562 = vdwg.mxu0
    %7563 = vmatpush.bf16.msra.mxu0 %v6218
    %7564 = vmatpush.bf16.msra.mxu0 %v6210
    %7565 = vmatpush.bf16.msra.mxu0 %v6202
    %7566 = vmatpush.bf16.msra.mxu0 %v6194
    %7567 = vmatpush.bf16.msra.mxu0 %v6186
    %7568 = vmatpush.bf16.msra.mxu0 %v6178
    %7569 = vmatpush.bf16.msra.mxu0 %v6170
    %7570 = vmatpush.bf16.msra.mxu0 %v6162
    %7571 = vmatmul.bf16.gmra.mxu0 %v3846
    %v7572 = vpop.f32.mrf.mxu0
    %v7573 = vadd.f32 %v7315, %v7572
    %v7574 = vpop.f32.mrf.mxu0
    %7575 = vdwg.mxu0
    %7576 = vmatpush.bf16.msra.mxu0 %v6282
    %7577 = vmatpush.bf16.msra.mxu0 %v6274
    %7578 = vmatpush.bf16.msra.mxu0 %v6266
    %7579 = vmatpush.bf16.msra.mxu0 %v6258
    %7580 = vmatpush.bf16.msra.mxu0 %v6250
    %7581 = vmatpush.bf16.msra.mxu0 %v6242
    %7582 = vmatpush.bf16.msra.mxu0 %v6234
    %7583 = vmatpush.bf16.msra.mxu0 %v6226
    %7584 = vmatmul.bf16.gmra.mxu0 %v3847
    %v7585 = vpop.f32.mrf.mxu0
    %v7586 = vadd.f32 %v7573, %v7585
    %v7587 = vpop.f32.mrf.mxu0
    %7588 = vdwg.mxu0
    %7589 = vmatpush.bf16.msra.mxu0 %v6346
    %7590 = vmatpush.bf16.msra.mxu0 %v6338
    %7591 = vmatpush.bf16.msra.mxu0 %v6330
    %7592 = vmatpush.bf16.msra.mxu0 %v6322
    %7593 = vmatpush.bf16.msra.mxu0 %v6314
    %7594 = vmatpush.bf16.msra.mxu0 %v6306
    %7595 = vmatpush.bf16.msra.mxu0 %v6298
    %7596 = vmatpush.bf16.msra.mxu0 %v6290
    %7597 = vmatmul.bf16.gmra.mxu0 %v3848
    %v7598 = vpop.f32.mrf.mxu0
    %v7599 = vadd.f32 %v7586, %v7598
    %v7600 = vpop.f32.mrf.mxu0
    %7601 = vdwg.mxu0
    %7602 = vmatpush.bf16.msra.mxu0 %v6410
    %7603 = vmatpush.bf16.msra.mxu0 %v6402
    %7604 = vmatpush.bf16.msra.mxu0 %v6394
    %7605 = vmatpush.bf16.msra.mxu0 %v6386
    %7606 = vmatpush.bf16.msra.mxu0 %v6378
    %7607 = vmatpush.bf16.msra.mxu0 %v6370
    %7608 = vmatpush.bf16.msra.mxu0 %v6362
    %7609 = vmatpush.bf16.msra.mxu0 %v6354
    %7610 = vmatmul.bf16.gmra.mxu0 %v3849
    %v7611 = vpop.f32.mrf.mxu0
    %v7612 = vadd.f32 %v7599, %v7611
    %v7613 = vpop.f32.mrf.mxu0
    %7614 = vdwg.mxu0
    %7615 = vmatpush.bf16.msra.mxu0 %v6474
    %7616 = vmatpush.bf16.msra.mxu0 %v6466
    %7617 = vmatpush.bf16.msra.mxu0 %v6458
    %7618 = vmatpush.bf16.msra.mxu0 %v6450
    %7619 = vmatpush.bf16.msra.mxu0 %v6442
    %7620 = vmatpush.bf16.msra.mxu0 %v6434
    %7621 = vmatpush.bf16.msra.mxu0 %v6426
    %7622 = vmatpush.bf16.msra.mxu0 %v6418
    %7623 = vmatmul.bf16.gmra.mxu0 %v3850
    %v7624 = vpop.f32.mrf.mxu0
    %v7625 = vadd.f32 %v7612, %v7624
    %v7626 = vpop.f32.mrf.mxu0
    %7627 = vdwg.mxu0
    %7628 = vmatpush.bf16.msra.mxu0 %v6538
    %7629 = vmatpush.bf16.msra.mxu0 %v6530
    %7630 = vmatpush.bf16.msra.mxu0 %v6522
    %7631 = vmatpush.bf16.msra.mxu0 %v6514
    %7632 = vmatpush.bf16.msra.mxu0 %v6506
    %7633 = vmatpush.bf16.msra.mxu0 %v6498
    %7634 = vmatpush.bf16.msra.mxu0 %v6490
    %7635 = vmatpush.bf16.msra.mxu0 %v6482
    %7636 = vmatmul.bf16.gmra.mxu0 %v3851
    %v7637 = vpop.f32.mrf.mxu0
    %v7638 = vadd.f32 %v7625, %v7637
    %v7639 = vpop.f32.mrf.mxu0
    %7640 = vdwg.mxu0
    %7641 = vmatpush.bf16.msra.mxu0 %v6602
    %7642 = vmatpush.bf16.msra.mxu0 %v6594
    %7643 = vmatpush.bf16.msra.mxu0 %v6586
    %7644 = vmatpush.bf16.msra.mxu0 %v6578
    %7645 = vmatpush.bf16.msra.mxu0 %v6570
    %7646 = vmatpush.bf16.msra.mxu0 %v6562
    %7647 = vmatpush.bf16.msra.mxu0 %v6554
    %7648 = vmatpush.bf16.msra.mxu0 %v6546
    %7649 = vmatmul.bf16.gmra.mxu0 %v3852
    %v7650 = vpop.f32.mrf.mxu0
    %v7651 = vadd.f32 %v7638, %v7650
    %v7652 = vpop.f32.mrf.mxu0
    %7653 = vdwg.mxu0
    %7654 = vmatpush.bf16.msra.mxu0 %v6666
    %7655 = vmatpush.bf16.msra.mxu0 %v6658
    %7656 = vmatpush.bf16.msra.mxu0 %v6650
    %7657 = vmatpush.bf16.msra.mxu0 %v6642
    %7658 = vmatpush.bf16.msra.mxu0 %v6634
    %7659 = vmatpush.bf16.msra.mxu0 %v6626
    %7660 = vmatpush.bf16.msra.mxu0 %v6618
    %7661 = vmatpush.bf16.msra.mxu0 %v6610
    %7662 = vmatmul.bf16.gmra.mxu0 %v3853
    %v7663 = vpop.f32.mrf.mxu0
    %v7664 = vadd.f32 %v7651, %v7663
    %v7665 = vpop.f32.mrf.mxu0
    %7666 = vdwg.mxu0
    %7667 = vmatpush.bf16.msra.mxu0 %v6730
    %7668 = vmatpush.bf16.msra.mxu0 %v6722
    %7669 = vmatpush.bf16.msra.mxu0 %v6714
    %7670 = vmatpush.bf16.msra.mxu0 %v6706
    %7671 = vmatpush.bf16.msra.mxu0 %v6698
    %7672 = vmatpush.bf16.msra.mxu0 %v6690
    %7673 = vmatpush.bf16.msra.mxu0 %v6682
    %7674 = vmatpush.bf16.msra.mxu0 %v6674
    %7675 = vmatmul.bf16.gmra.mxu0 %v3854
    %v7676 = vpop.f32.mrf.mxu0
    %v7677 = vadd.f32 %v7664, %v7676
    %v7678 = vpop.f32.mrf.mxu0
    %7679 = vdwg.mxu0
    %7680 = vmatpush.bf16.msra.mxu0 %v6219
    %7681 = vmatpush.bf16.msra.mxu0 %v6211
    %7682 = vmatpush.bf16.msra.mxu0 %v6203
    %7683 = vmatpush.bf16.msra.mxu0 %v6195
    %7684 = vmatpush.bf16.msra.mxu0 %v6187
    %7685 = vmatpush.bf16.msra.mxu0 %v6179
    %7686 = vmatpush.bf16.msra.mxu0 %v6171
    %7687 = vmatpush.bf16.msra.mxu0 %v6163
    %7688 = vmatmul.bf16.gmra.mxu0 %v3846
    %v7689 = vpop.f32.mrf.mxu0
    %v7690 = vadd.f32 %v7316, %v7689
    %v7691 = vpop.f32.mrf.mxu0
    %7692 = vdwg.mxu0
    %7693 = vmatpush.bf16.msra.mxu0 %v6283
    %7694 = vmatpush.bf16.msra.mxu0 %v6275
    %7695 = vmatpush.bf16.msra.mxu0 %v6267
    %7696 = vmatpush.bf16.msra.mxu0 %v6259
    %7697 = vmatpush.bf16.msra.mxu0 %v6251
    %7698 = vmatpush.bf16.msra.mxu0 %v6243
    %7699 = vmatpush.bf16.msra.mxu0 %v6235
    %7700 = vmatpush.bf16.msra.mxu0 %v6227
    %7701 = vmatmul.bf16.gmra.mxu0 %v3847
    %v7702 = vpop.f32.mrf.mxu0
    %v7703 = vadd.f32 %v7690, %v7702
    %v7704 = vpop.f32.mrf.mxu0
    %7705 = vdwg.mxu0
    %7706 = vmatpush.bf16.msra.mxu0 %v6347
    %7707 = vmatpush.bf16.msra.mxu0 %v6339
    %7708 = vmatpush.bf16.msra.mxu0 %v6331
    %7709 = vmatpush.bf16.msra.mxu0 %v6323
    %7710 = vmatpush.bf16.msra.mxu0 %v6315
    %7711 = vmatpush.bf16.msra.mxu0 %v6307
    %7712 = vmatpush.bf16.msra.mxu0 %v6299
    %7713 = vmatpush.bf16.msra.mxu0 %v6291
    %7714 = vmatmul.bf16.gmra.mxu0 %v3848
    %v7715 = vpop.f32.mrf.mxu0
    %v7716 = vadd.f32 %v7703, %v7715
    %v7717 = vpop.f32.mrf.mxu0
    %7718 = vdwg.mxu0
    %7719 = vmatpush.bf16.msra.mxu0 %v6411
    %7720 = vmatpush.bf16.msra.mxu0 %v6403
    %7721 = vmatpush.bf16.msra.mxu0 %v6395
    %7722 = vmatpush.bf16.msra.mxu0 %v6387
    %7723 = vmatpush.bf16.msra.mxu0 %v6379
    %7724 = vmatpush.bf16.msra.mxu0 %v6371
    %7725 = vmatpush.bf16.msra.mxu0 %v6363
    %7726 = vmatpush.bf16.msra.mxu0 %v6355
    %7727 = vmatmul.bf16.gmra.mxu0 %v3849
    %v7728 = vpop.f32.mrf.mxu0
    %v7729 = vadd.f32 %v7716, %v7728
    %v7730 = vpop.f32.mrf.mxu0
    %7731 = vdwg.mxu0
    %7732 = vmatpush.bf16.msra.mxu0 %v6475
    %7733 = vmatpush.bf16.msra.mxu0 %v6467
    %7734 = vmatpush.bf16.msra.mxu0 %v6459
    %7735 = vmatpush.bf16.msra.mxu0 %v6451
    %7736 = vmatpush.bf16.msra.mxu0 %v6443
    %7737 = vmatpush.bf16.msra.mxu0 %v6435
    %7738 = vmatpush.bf16.msra.mxu0 %v6427
    %7739 = vmatpush.bf16.msra.mxu0 %v6419
    %7740 = vmatmul.bf16.gmra.mxu0 %v3850
    %v7741 = vpop.f32.mrf.mxu0
    %v7742 = vadd.f32 %v7729, %v7741
    %v7743 = vpop.f32.mrf.mxu0
    %7744 = vdwg.mxu0
    %7745 = vmatpush.bf16.msra.mxu0 %v6539
    %7746 = vmatpush.bf16.msra.mxu0 %v6531
    %7747 = vmatpush.bf16.msra.mxu0 %v6523
    %7748 = vmatpush.bf16.msra.mxu0 %v6515
    %7749 = vmatpush.bf16.msra.mxu0 %v6507
    %7750 = vmatpush.bf16.msra.mxu0 %v6499
    %7751 = vmatpush.bf16.msra.mxu0 %v6491
    %7752 = vmatpush.bf16.msra.mxu0 %v6483
    %7753 = vmatmul.bf16.gmra.mxu0 %v3851
    %v7754 = vpop.f32.mrf.mxu0
    %v7755 = vadd.f32 %v7742, %v7754
    %v7756 = vpop.f32.mrf.mxu0
    %7757 = vdwg.mxu0
    %7758 = vmatpush.bf16.msra.mxu0 %v6603
    %7759 = vmatpush.bf16.msra.mxu0 %v6595
    %7760 = vmatpush.bf16.msra.mxu0 %v6587
    %7761 = vmatpush.bf16.msra.mxu0 %v6579
    %7762 = vmatpush.bf16.msra.mxu0 %v6571
    %7763 = vmatpush.bf16.msra.mxu0 %v6563
    %7764 = vmatpush.bf16.msra.mxu0 %v6555
    %7765 = vmatpush.bf16.msra.mxu0 %v6547
    %7766 = vmatmul.bf16.gmra.mxu0 %v3852
    %v7767 = vpop.f32.mrf.mxu0
    %v7768 = vadd.f32 %v7755, %v7767
    %v7769 = vpop.f32.mrf.mxu0
    %7770 = vdwg.mxu0
    %7771 = vmatpush.bf16.msra.mxu0 %v6667
    %7772 = vmatpush.bf16.msra.mxu0 %v6659
    %7773 = vmatpush.bf16.msra.mxu0 %v6651
    %7774 = vmatpush.bf16.msra.mxu0 %v6643
    %7775 = vmatpush.bf16.msra.mxu0 %v6635
    %7776 = vmatpush.bf16.msra.mxu0 %v6627
    %7777 = vmatpush.bf16.msra.mxu0 %v6619
    %7778 = vmatpush.bf16.msra.mxu0 %v6611
    %7779 = vmatmul.bf16.gmra.mxu0 %v3853
    %v7780 = vpop.f32.mrf.mxu0
    %v7781 = vadd.f32 %v7768, %v7780
    %v7782 = vpop.f32.mrf.mxu0
    %7783 = vdwg.mxu0
    %7784 = vmatpush.bf16.msra.mxu0 %v6731
    %7785 = vmatpush.bf16.msra.mxu0 %v6723
    %7786 = vmatpush.bf16.msra.mxu0 %v6715
    %7787 = vmatpush.bf16.msra.mxu0 %v6707
    %7788 = vmatpush.bf16.msra.mxu0 %v6699
    %7789 = vmatpush.bf16.msra.mxu0 %v6691
    %7790 = vmatpush.bf16.msra.mxu0 %v6683
    %7791 = vmatpush.bf16.msra.mxu0 %v6675
    %7792 = vmatmul.bf16.gmra.mxu0 %v3854
    %v7793 = vpop.f32.mrf.mxu0
    %v7794 = vadd.f32 %v7781, %v7793
    %v7795 = vpop.f32.mrf.mxu0
    %7796 = vdwg.mxu0
    %7797 = vmatpush.bf16.msra.mxu0 %v6220
    %7798 = vmatpush.bf16.msra.mxu0 %v6212
    %7799 = vmatpush.bf16.msra.mxu0 %v6204
    %7800 = vmatpush.bf16.msra.mxu0 %v6196
    %7801 = vmatpush.bf16.msra.mxu0 %v6188
    %7802 = vmatpush.bf16.msra.mxu0 %v6180
    %7803 = vmatpush.bf16.msra.mxu0 %v6172
    %7804 = vmatpush.bf16.msra.mxu0 %v6164
    %7805 = vmatmul.bf16.gmra.mxu0 %v3846
    %v7806 = vpop.f32.mrf.mxu0
    %v7807 = vadd.f32 %v7317, %v7806
    %v7808 = vpop.f32.mrf.mxu0
    %7809 = vdwg.mxu0
    %7810 = vmatpush.bf16.msra.mxu0 %v6284
    %7811 = vmatpush.bf16.msra.mxu0 %v6276
    %7812 = vmatpush.bf16.msra.mxu0 %v6268
    %7813 = vmatpush.bf16.msra.mxu0 %v6260
    %7814 = vmatpush.bf16.msra.mxu0 %v6252
    %7815 = vmatpush.bf16.msra.mxu0 %v6244
    %7816 = vmatpush.bf16.msra.mxu0 %v6236
    %7817 = vmatpush.bf16.msra.mxu0 %v6228
    %7818 = vmatmul.bf16.gmra.mxu0 %v3847
    %v7819 = vpop.f32.mrf.mxu0
    %v7820 = vadd.f32 %v7807, %v7819
    %v7821 = vpop.f32.mrf.mxu0
    %7822 = vdwg.mxu0
    %7823 = vmatpush.bf16.msra.mxu0 %v6348
    %7824 = vmatpush.bf16.msra.mxu0 %v6340
    %7825 = vmatpush.bf16.msra.mxu0 %v6332
    %7826 = vmatpush.bf16.msra.mxu0 %v6324
    %7827 = vmatpush.bf16.msra.mxu0 %v6316
    %7828 = vmatpush.bf16.msra.mxu0 %v6308
    %7829 = vmatpush.bf16.msra.mxu0 %v6300
    %7830 = vmatpush.bf16.msra.mxu0 %v6292
    %7831 = vmatmul.bf16.gmra.mxu0 %v3848
    %v7832 = vpop.f32.mrf.mxu0
    %v7833 = vadd.f32 %v7820, %v7832
    %v7834 = vpop.f32.mrf.mxu0
    %7835 = vdwg.mxu0
    %7836 = vmatpush.bf16.msra.mxu0 %v6412
    %7837 = vmatpush.bf16.msra.mxu0 %v6404
    %7838 = vmatpush.bf16.msra.mxu0 %v6396
    %7839 = vmatpush.bf16.msra.mxu0 %v6388
    %7840 = vmatpush.bf16.msra.mxu0 %v6380
    %7841 = vmatpush.bf16.msra.mxu0 %v6372
    %7842 = vmatpush.bf16.msra.mxu0 %v6364
    %7843 = vmatpush.bf16.msra.mxu0 %v6356
    %7844 = vmatmul.bf16.gmra.mxu0 %v3849
    %v7845 = vpop.f32.mrf.mxu0
    %v7846 = vadd.f32 %v7833, %v7845
    %v7847 = vpop.f32.mrf.mxu0
    %7848 = vdwg.mxu0
    %7849 = vmatpush.bf16.msra.mxu0 %v6476
    %7850 = vmatpush.bf16.msra.mxu0 %v6468
    %7851 = vmatpush.bf16.msra.mxu0 %v6460
    %7852 = vmatpush.bf16.msra.mxu0 %v6452
    %7853 = vmatpush.bf16.msra.mxu0 %v6444
    %7854 = vmatpush.bf16.msra.mxu0 %v6436
    %7855 = vmatpush.bf16.msra.mxu0 %v6428
    %7856 = vmatpush.bf16.msra.mxu0 %v6420
    %7857 = vmatmul.bf16.gmra.mxu0 %v3850
    %v7858 = vpop.f32.mrf.mxu0
    %v7859 = vadd.f32 %v7846, %v7858
    %v7860 = vpop.f32.mrf.mxu0
    %7861 = vdwg.mxu0
    %7862 = vmatpush.bf16.msra.mxu0 %v6540
    %7863 = vmatpush.bf16.msra.mxu0 %v6532
    %7864 = vmatpush.bf16.msra.mxu0 %v6524
    %7865 = vmatpush.bf16.msra.mxu0 %v6516
    %7866 = vmatpush.bf16.msra.mxu0 %v6508
    %7867 = vmatpush.bf16.msra.mxu0 %v6500
    %7868 = vmatpush.bf16.msra.mxu0 %v6492
    %7869 = vmatpush.bf16.msra.mxu0 %v6484
    %7870 = vmatmul.bf16.gmra.mxu0 %v3851
    %v7871 = vpop.f32.mrf.mxu0
    %v7872 = vadd.f32 %v7859, %v7871
    %v7873 = vpop.f32.mrf.mxu0
    %7874 = vdwg.mxu0
    %7875 = vmatpush.bf16.msra.mxu0 %v6604
    %7876 = vmatpush.bf16.msra.mxu0 %v6596
    %7877 = vmatpush.bf16.msra.mxu0 %v6588
    %7878 = vmatpush.bf16.msra.mxu0 %v6580
    %7879 = vmatpush.bf16.msra.mxu0 %v6572
    %7880 = vmatpush.bf16.msra.mxu0 %v6564
    %7881 = vmatpush.bf16.msra.mxu0 %v6556
    %7882 = vmatpush.bf16.msra.mxu0 %v6548
    %7883 = vmatmul.bf16.gmra.mxu0 %v3852
    %v7884 = vpop.f32.mrf.mxu0
    %v7885 = vadd.f32 %v7872, %v7884
    %v7886 = vpop.f32.mrf.mxu0
    %7887 = vdwg.mxu0
    %7888 = vmatpush.bf16.msra.mxu0 %v6668
    %7889 = vmatpush.bf16.msra.mxu0 %v6660
    %7890 = vmatpush.bf16.msra.mxu0 %v6652
    %7891 = vmatpush.bf16.msra.mxu0 %v6644
    %7892 = vmatpush.bf16.msra.mxu0 %v6636
    %7893 = vmatpush.bf16.msra.mxu0 %v6628
    %7894 = vmatpush.bf16.msra.mxu0 %v6620
    %7895 = vmatpush.bf16.msra.mxu0 %v6612
    %7896 = vmatmul.bf16.gmra.mxu0 %v3853
    %v7897 = vpop.f32.mrf.mxu0
    %v7898 = vadd.f32 %v7885, %v7897
    %v7899 = vpop.f32.mrf.mxu0
    %7900 = vdwg.mxu0
    %7901 = vmatpush.bf16.msra.mxu0 %v6732
    %7902 = vmatpush.bf16.msra.mxu0 %v6724
    %7903 = vmatpush.bf16.msra.mxu0 %v6716
    %7904 = vmatpush.bf16.msra.mxu0 %v6708
    %7905 = vmatpush.bf16.msra.mxu0 %v6700
    %7906 = vmatpush.bf16.msra.mxu0 %v6692
    %7907 = vmatpush.bf16.msra.mxu0 %v6684
    %7908 = vmatpush.bf16.msra.mxu0 %v6676
    %7909 = vmatmul.bf16.gmra.mxu0 %v3854
    %v7910 = vpop.f32.mrf.mxu0
    %v7911 = vadd.f32 %v7898, %v7910
    %v7912 = vpop.f32.mrf.mxu0
    %7913 = vdwg.mxu0
    %7914 = vmatpush.bf16.msra.mxu0 %v6221
    %7915 = vmatpush.bf16.msra.mxu0 %v6213
    %7916 = vmatpush.bf16.msra.mxu0 %v6205
    %7917 = vmatpush.bf16.msra.mxu0 %v6197
    %7918 = vmatpush.bf16.msra.mxu0 %v6189
    %7919 = vmatpush.bf16.msra.mxu0 %v6181
    %7920 = vmatpush.bf16.msra.mxu0 %v6173
    %7921 = vmatpush.bf16.msra.mxu0 %v6165
    %7922 = vmatmul.bf16.gmra.mxu0 %v3846
    %v7923 = vpop.f32.mrf.mxu0
    %v7924 = vadd.f32 %v7318, %v7923
    %v7925 = vpop.f32.mrf.mxu0
    %7926 = vdwg.mxu0
    %7927 = vmatpush.bf16.msra.mxu0 %v6285
    %7928 = vmatpush.bf16.msra.mxu0 %v6277
    %7929 = vmatpush.bf16.msra.mxu0 %v6269
    %7930 = vmatpush.bf16.msra.mxu0 %v6261
    %7931 = vmatpush.bf16.msra.mxu0 %v6253
    %7932 = vmatpush.bf16.msra.mxu0 %v6245
    %7933 = vmatpush.bf16.msra.mxu0 %v6237
    %7934 = vmatpush.bf16.msra.mxu0 %v6229
    %7935 = vmatmul.bf16.gmra.mxu0 %v3847
    %v7936 = vpop.f32.mrf.mxu0
    %v7937 = vadd.f32 %v7924, %v7936
    %v7938 = vpop.f32.mrf.mxu0
    %7939 = vdwg.mxu0
    %7940 = vmatpush.bf16.msra.mxu0 %v6349
    %7941 = vmatpush.bf16.msra.mxu0 %v6341
    %7942 = vmatpush.bf16.msra.mxu0 %v6333
    %7943 = vmatpush.bf16.msra.mxu0 %v6325
    %7944 = vmatpush.bf16.msra.mxu0 %v6317
    %7945 = vmatpush.bf16.msra.mxu0 %v6309
    %7946 = vmatpush.bf16.msra.mxu0 %v6301
    %7947 = vmatpush.bf16.msra.mxu0 %v6293
    %7948 = vmatmul.bf16.gmra.mxu0 %v3848
    %v7949 = vpop.f32.mrf.mxu0
    %v7950 = vadd.f32 %v7937, %v7949
    %v7951 = vpop.f32.mrf.mxu0
    %7952 = vdwg.mxu0
    %7953 = vmatpush.bf16.msra.mxu0 %v6413
    %7954 = vmatpush.bf16.msra.mxu0 %v6405
    %7955 = vmatpush.bf16.msra.mxu0 %v6397
    %7956 = vmatpush.bf16.msra.mxu0 %v6389
    %7957 = vmatpush.bf16.msra.mxu0 %v6381
    %7958 = vmatpush.bf16.msra.mxu0 %v6373
    %7959 = vmatpush.bf16.msra.mxu0 %v6365
    %7960 = vmatpush.bf16.msra.mxu0 %v6357
    %7961 = vmatmul.bf16.gmra.mxu0 %v3849
    %v7962 = vpop.f32.mrf.mxu0
    %v7963 = vadd.f32 %v7950, %v7962
    %v7964 = vpop.f32.mrf.mxu0
    %7965 = vdwg.mxu0
    %7966 = vmatpush.bf16.msra.mxu0 %v6477
    %7967 = vmatpush.bf16.msra.mxu0 %v6469
    %7968 = vmatpush.bf16.msra.mxu0 %v6461
    %7969 = vmatpush.bf16.msra.mxu0 %v6453
    %7970 = vmatpush.bf16.msra.mxu0 %v6445
    %7971 = vmatpush.bf16.msra.mxu0 %v6437
    %7972 = vmatpush.bf16.msra.mxu0 %v6429
    %7973 = vmatpush.bf16.msra.mxu0 %v6421
    %7974 = vmatmul.bf16.gmra.mxu0 %v3850
    %v7975 = vpop.f32.mrf.mxu0
    %v7976 = vadd.f32 %v7963, %v7975
    %v7977 = vpop.f32.mrf.mxu0
    %7978 = vdwg.mxu0
    %7979 = vmatpush.bf16.msra.mxu0 %v6541
    %7980 = vmatpush.bf16.msra.mxu0 %v6533
    %7981 = vmatpush.bf16.msra.mxu0 %v6525
    %7982 = vmatpush.bf16.msra.mxu0 %v6517
    %7983 = vmatpush.bf16.msra.mxu0 %v6509
    %7984 = vmatpush.bf16.msra.mxu0 %v6501
    %7985 = vmatpush.bf16.msra.mxu0 %v6493
    %7986 = vmatpush.bf16.msra.mxu0 %v6485
    %7987 = vmatmul.bf16.gmra.mxu0 %v3851
    %v7988 = vpop.f32.mrf.mxu0
    %v7989 = vadd.f32 %v7976, %v7988
    %v7990 = vpop.f32.mrf.mxu0
    %7991 = vdwg.mxu0
    %7992 = vmatpush.bf16.msra.mxu0 %v6605
    %7993 = vmatpush.bf16.msra.mxu0 %v6597
    %7994 = vmatpush.bf16.msra.mxu0 %v6589
    %7995 = vmatpush.bf16.msra.mxu0 %v6581
    %7996 = vmatpush.bf16.msra.mxu0 %v6573
    %7997 = vmatpush.bf16.msra.mxu0 %v6565
    %7998 = vmatpush.bf16.msra.mxu0 %v6557
    %7999 = vmatpush.bf16.msra.mxu0 %v6549
    %8000 = vmatmul.bf16.gmra.mxu0 %v3852
    %v8001 = vpop.f32.mrf.mxu0
    %v8002 = vadd.f32 %v7989, %v8001
    %v8003 = vpop.f32.mrf.mxu0
    %8004 = vdwg.mxu0
    %8005 = vmatpush.bf16.msra.mxu0 %v6669
    %8006 = vmatpush.bf16.msra.mxu0 %v6661
    %8007 = vmatpush.bf16.msra.mxu0 %v6653
    %8008 = vmatpush.bf16.msra.mxu0 %v6645
    %8009 = vmatpush.bf16.msra.mxu0 %v6637
    %8010 = vmatpush.bf16.msra.mxu0 %v6629
    %8011 = vmatpush.bf16.msra.mxu0 %v6621
    %8012 = vmatpush.bf16.msra.mxu0 %v6613
    %8013 = vmatmul.bf16.gmra.mxu0 %v3853
    %v8014 = vpop.f32.mrf.mxu0
    %v8015 = vadd.f32 %v8002, %v8014
    %v8016 = vpop.f32.mrf.mxu0
    %8017 = vdwg.mxu0
    %8018 = vmatpush.bf16.msra.mxu0 %v6733
    %8019 = vmatpush.bf16.msra.mxu0 %v6725
    %8020 = vmatpush.bf16.msra.mxu0 %v6717
    %8021 = vmatpush.bf16.msra.mxu0 %v6709
    %8022 = vmatpush.bf16.msra.mxu0 %v6701
    %8023 = vmatpush.bf16.msra.mxu0 %v6693
    %8024 = vmatpush.bf16.msra.mxu0 %v6685
    %8025 = vmatpush.bf16.msra.mxu0 %v6677
    %8026 = vmatmul.bf16.gmra.mxu0 %v3854
    %v8027 = vpop.f32.mrf.mxu0
    %v8028 = vadd.f32 %v8015, %v8027
    %v8029 = vpop.f32.mrf.mxu0
    %8030 = vdwg.mxu0
    %8031 = vmatpush.bf16.msra.mxu0 %v6222
    %8032 = vmatpush.bf16.msra.mxu0 %v6214
    %8033 = vmatpush.bf16.msra.mxu0 %v6206
    %8034 = vmatpush.bf16.msra.mxu0 %v6198
    %8035 = vmatpush.bf16.msra.mxu0 %v6190
    %8036 = vmatpush.bf16.msra.mxu0 %v6182
    %8037 = vmatpush.bf16.msra.mxu0 %v6174
    %8038 = vmatpush.bf16.msra.mxu0 %v6166
    %8039 = vmatmul.bf16.gmra.mxu0 %v3846
    %v8040 = vpop.f32.mrf.mxu0
    %v8041 = vadd.f32 %v7319, %v8040
    %v8042 = vpop.f32.mrf.mxu0
    %8043 = vdwg.mxu0
    %8044 = vmatpush.bf16.msra.mxu0 %v6286
    %8045 = vmatpush.bf16.msra.mxu0 %v6278
    %8046 = vmatpush.bf16.msra.mxu0 %v6270
    %8047 = vmatpush.bf16.msra.mxu0 %v6262
    %8048 = vmatpush.bf16.msra.mxu0 %v6254
    %8049 = vmatpush.bf16.msra.mxu0 %v6246
    %8050 = vmatpush.bf16.msra.mxu0 %v6238
    %8051 = vmatpush.bf16.msra.mxu0 %v6230
    %8052 = vmatmul.bf16.gmra.mxu0 %v3847
    %v8053 = vpop.f32.mrf.mxu0
    %v8054 = vadd.f32 %v8041, %v8053
    %v8055 = vpop.f32.mrf.mxu0
    %8056 = vdwg.mxu0
    %8057 = vmatpush.bf16.msra.mxu0 %v6350
    %8058 = vmatpush.bf16.msra.mxu0 %v6342
    %8059 = vmatpush.bf16.msra.mxu0 %v6334
    %8060 = vmatpush.bf16.msra.mxu0 %v6326
    %8061 = vmatpush.bf16.msra.mxu0 %v6318
    %8062 = vmatpush.bf16.msra.mxu0 %v6310
    %8063 = vmatpush.bf16.msra.mxu0 %v6302
    %8064 = vmatpush.bf16.msra.mxu0 %v6294
    %8065 = vmatmul.bf16.gmra.mxu0 %v3848
    %v8066 = vpop.f32.mrf.mxu0
    %v8067 = vadd.f32 %v8054, %v8066
    %v8068 = vpop.f32.mrf.mxu0
    %8069 = vdwg.mxu0
    %8070 = vmatpush.bf16.msra.mxu0 %v6414
    %8071 = vmatpush.bf16.msra.mxu0 %v6406
    %8072 = vmatpush.bf16.msra.mxu0 %v6398
    %8073 = vmatpush.bf16.msra.mxu0 %v6390
    %8074 = vmatpush.bf16.msra.mxu0 %v6382
    %8075 = vmatpush.bf16.msra.mxu0 %v6374
    %8076 = vmatpush.bf16.msra.mxu0 %v6366
    %8077 = vmatpush.bf16.msra.mxu0 %v6358
    %8078 = vmatmul.bf16.gmra.mxu0 %v3849
    %v8079 = vpop.f32.mrf.mxu0
    %v8080 = vadd.f32 %v8067, %v8079
    %v8081 = vpop.f32.mrf.mxu0
    %8082 = vdwg.mxu0
    %8083 = vmatpush.bf16.msra.mxu0 %v6478
    %8084 = vmatpush.bf16.msra.mxu0 %v6470
    %8085 = vmatpush.bf16.msra.mxu0 %v6462
    %8086 = vmatpush.bf16.msra.mxu0 %v6454
    %8087 = vmatpush.bf16.msra.mxu0 %v6446
    %8088 = vmatpush.bf16.msra.mxu0 %v6438
    %8089 = vmatpush.bf16.msra.mxu0 %v6430
    %8090 = vmatpush.bf16.msra.mxu0 %v6422
    %8091 = vmatmul.bf16.gmra.mxu0 %v3850
    %v8092 = vpop.f32.mrf.mxu0
    %v8093 = vadd.f32 %v8080, %v8092
    %v8094 = vpop.f32.mrf.mxu0
    %8095 = vdwg.mxu0
    %8096 = vmatpush.bf16.msra.mxu0 %v6542
    %8097 = vmatpush.bf16.msra.mxu0 %v6534
    %8098 = vmatpush.bf16.msra.mxu0 %v6526
    %8099 = vmatpush.bf16.msra.mxu0 %v6518
    %8100 = vmatpush.bf16.msra.mxu0 %v6510
    %8101 = vmatpush.bf16.msra.mxu0 %v6502
    %8102 = vmatpush.bf16.msra.mxu0 %v6494
    %8103 = vmatpush.bf16.msra.mxu0 %v6486
    %8104 = vmatmul.bf16.gmra.mxu0 %v3851
    %v8105 = vpop.f32.mrf.mxu0
    %v8106 = vadd.f32 %v8093, %v8105
    %v8107 = vpop.f32.mrf.mxu0
    %8108 = vdwg.mxu0
    %8109 = vmatpush.bf16.msra.mxu0 %v6606
    %8110 = vmatpush.bf16.msra.mxu0 %v6598
    %8111 = vmatpush.bf16.msra.mxu0 %v6590
    %8112 = vmatpush.bf16.msra.mxu0 %v6582
    %8113 = vmatpush.bf16.msra.mxu0 %v6574
    %8114 = vmatpush.bf16.msra.mxu0 %v6566
    %8115 = vmatpush.bf16.msra.mxu0 %v6558
    %8116 = vmatpush.bf16.msra.mxu0 %v6550
    %8117 = vmatmul.bf16.gmra.mxu0 %v3852
    %v8118 = vpop.f32.mrf.mxu0
    %v8119 = vadd.f32 %v8106, %v8118
    %v8120 = vpop.f32.mrf.mxu0
    %8121 = vdwg.mxu0
    %8122 = vmatpush.bf16.msra.mxu0 %v6670
    %8123 = vmatpush.bf16.msra.mxu0 %v6662
    %8124 = vmatpush.bf16.msra.mxu0 %v6654
    %8125 = vmatpush.bf16.msra.mxu0 %v6646
    %8126 = vmatpush.bf16.msra.mxu0 %v6638
    %8127 = vmatpush.bf16.msra.mxu0 %v6630
    %8128 = vmatpush.bf16.msra.mxu0 %v6622
    %8129 = vmatpush.bf16.msra.mxu0 %v6614
    %8130 = vmatmul.bf16.gmra.mxu0 %v3853
    %v8131 = vpop.f32.mrf.mxu0
    %v8132 = vadd.f32 %v8119, %v8131
    %v8133 = vpop.f32.mrf.mxu0
    %8134 = vdwg.mxu0
    %8135 = vmatpush.bf16.msra.mxu0 %v6734
    %8136 = vmatpush.bf16.msra.mxu0 %v6726
    %8137 = vmatpush.bf16.msra.mxu0 %v6718
    %8138 = vmatpush.bf16.msra.mxu0 %v6710
    %8139 = vmatpush.bf16.msra.mxu0 %v6702
    %8140 = vmatpush.bf16.msra.mxu0 %v6694
    %8141 = vmatpush.bf16.msra.mxu0 %v6686
    %8142 = vmatpush.bf16.msra.mxu0 %v6678
    %8143 = vmatmul.bf16.gmra.mxu0 %v3854
    %v8144 = vpop.f32.mrf.mxu0
    %v8145 = vadd.f32 %v8132, %v8144
    %v8146 = vpop.f32.mrf.mxu0
    %8147 = vdwg.mxu0
    %8148 = vmatpush.bf16.msra.mxu0 %v6223
    %8149 = vmatpush.bf16.msra.mxu0 %v6215
    %8150 = vmatpush.bf16.msra.mxu0 %v6207
    %8151 = vmatpush.bf16.msra.mxu0 %v6199
    %8152 = vmatpush.bf16.msra.mxu0 %v6191
    %8153 = vmatpush.bf16.msra.mxu0 %v6183
    %8154 = vmatpush.bf16.msra.mxu0 %v6175
    %8155 = vmatpush.bf16.msra.mxu0 %v6167
    %8156 = vmatmul.bf16.gmra.mxu0 %v3846
    %v8157 = vpop.f32.mrf.mxu0
    %v8158 = vadd.f32 %v7320, %v8157
    %v8159 = vpop.f32.mrf.mxu0
    %8160 = vdwg.mxu0
    %8161 = vmatpush.bf16.msra.mxu0 %v6287
    %8162 = vmatpush.bf16.msra.mxu0 %v6279
    %8163 = vmatpush.bf16.msra.mxu0 %v6271
    %8164 = vmatpush.bf16.msra.mxu0 %v6263
    %8165 = vmatpush.bf16.msra.mxu0 %v6255
    %8166 = vmatpush.bf16.msra.mxu0 %v6247
    %8167 = vmatpush.bf16.msra.mxu0 %v6239
    %8168 = vmatpush.bf16.msra.mxu0 %v6231
    %8169 = vmatmul.bf16.gmra.mxu0 %v3847
    %v8170 = vpop.f32.mrf.mxu0
    %v8171 = vadd.f32 %v8158, %v8170
    %v8172 = vpop.f32.mrf.mxu0
    %8173 = vdwg.mxu0
    %8174 = vmatpush.bf16.msra.mxu0 %v6351
    %8175 = vmatpush.bf16.msra.mxu0 %v6343
    %8176 = vmatpush.bf16.msra.mxu0 %v6335
    %8177 = vmatpush.bf16.msra.mxu0 %v6327
    %8178 = vmatpush.bf16.msra.mxu0 %v6319
    %8179 = vmatpush.bf16.msra.mxu0 %v6311
    %8180 = vmatpush.bf16.msra.mxu0 %v6303
    %8181 = vmatpush.bf16.msra.mxu0 %v6295
    %8182 = vmatmul.bf16.gmra.mxu0 %v3848
    %v8183 = vpop.f32.mrf.mxu0
    %v8184 = vadd.f32 %v8171, %v8183
    %v8185 = vpop.f32.mrf.mxu0
    %8186 = vdwg.mxu0
    %8187 = vmatpush.bf16.msra.mxu0 %v6415
    %8188 = vmatpush.bf16.msra.mxu0 %v6407
    %8189 = vmatpush.bf16.msra.mxu0 %v6399
    %8190 = vmatpush.bf16.msra.mxu0 %v6391
    %8191 = vmatpush.bf16.msra.mxu0 %v6383
    %8192 = vmatpush.bf16.msra.mxu0 %v6375
    %8193 = vmatpush.bf16.msra.mxu0 %v6367
    %8194 = vmatpush.bf16.msra.mxu0 %v6359
    %8195 = vmatmul.bf16.gmra.mxu0 %v3849
    %v8196 = vpop.f32.mrf.mxu0
    %v8197 = vadd.f32 %v8184, %v8196
    %v8198 = vpop.f32.mrf.mxu0
    %8199 = vdwg.mxu0
    %8200 = vmatpush.bf16.msra.mxu0 %v6479
    %8201 = vmatpush.bf16.msra.mxu0 %v6471
    %8202 = vmatpush.bf16.msra.mxu0 %v6463
    %8203 = vmatpush.bf16.msra.mxu0 %v6455
    %8204 = vmatpush.bf16.msra.mxu0 %v6447
    %8205 = vmatpush.bf16.msra.mxu0 %v6439
    %8206 = vmatpush.bf16.msra.mxu0 %v6431
    %8207 = vmatpush.bf16.msra.mxu0 %v6423
    %8208 = vmatmul.bf16.gmra.mxu0 %v3850
    %v8209 = vpop.f32.mrf.mxu0
    %v8210 = vadd.f32 %v8197, %v8209
    %v8211 = vpop.f32.mrf.mxu0
    %8212 = vdwg.mxu0
    %8213 = vmatpush.bf16.msra.mxu0 %v6543
    %8214 = vmatpush.bf16.msra.mxu0 %v6535
    %8215 = vmatpush.bf16.msra.mxu0 %v6527
    %8216 = vmatpush.bf16.msra.mxu0 %v6519
    %8217 = vmatpush.bf16.msra.mxu0 %v6511
    %8218 = vmatpush.bf16.msra.mxu0 %v6503
    %8219 = vmatpush.bf16.msra.mxu0 %v6495
    %8220 = vmatpush.bf16.msra.mxu0 %v6487
    %8221 = vmatmul.bf16.gmra.mxu0 %v3851
    %v8222 = vpop.f32.mrf.mxu0
    %v8223 = vadd.f32 %v8210, %v8222
    %v8224 = vpop.f32.mrf.mxu0
    %8225 = vdwg.mxu0
    %8226 = vmatpush.bf16.msra.mxu0 %v6607
    %8227 = vmatpush.bf16.msra.mxu0 %v6599
    %8228 = vmatpush.bf16.msra.mxu0 %v6591
    %8229 = vmatpush.bf16.msra.mxu0 %v6583
    %8230 = vmatpush.bf16.msra.mxu0 %v6575
    %8231 = vmatpush.bf16.msra.mxu0 %v6567
    %8232 = vmatpush.bf16.msra.mxu0 %v6559
    %8233 = vmatpush.bf16.msra.mxu0 %v6551
    %8234 = vmatmul.bf16.gmra.mxu0 %v3852
    %v8235 = vpop.f32.mrf.mxu0
    %v8236 = vadd.f32 %v8223, %v8235
    %v8237 = vpop.f32.mrf.mxu0
    %8238 = vdwg.mxu0
    %8239 = vmatpush.bf16.msra.mxu0 %v6671
    %8240 = vmatpush.bf16.msra.mxu0 %v6663
    %8241 = vmatpush.bf16.msra.mxu0 %v6655
    %8242 = vmatpush.bf16.msra.mxu0 %v6647
    %8243 = vmatpush.bf16.msra.mxu0 %v6639
    %8244 = vmatpush.bf16.msra.mxu0 %v6631
    %8245 = vmatpush.bf16.msra.mxu0 %v6623
    %8246 = vmatpush.bf16.msra.mxu0 %v6615
    %8247 = vmatmul.bf16.gmra.mxu0 %v3853
    %v8248 = vpop.f32.mrf.mxu0
    %v8249 = vadd.f32 %v8236, %v8248
    %v8250 = vpop.f32.mrf.mxu0
    %8251 = vdwg.mxu0
    %8252 = vmatpush.bf16.msra.mxu0 %v6735
    %8253 = vmatpush.bf16.msra.mxu0 %v6727
    %8254 = vmatpush.bf16.msra.mxu0 %v6719
    %8255 = vmatpush.bf16.msra.mxu0 %v6711
    %8256 = vmatpush.bf16.msra.mxu0 %v6703
    %8257 = vmatpush.bf16.msra.mxu0 %v6695
    %8258 = vmatpush.bf16.msra.mxu0 %v6687
    %8259 = vmatpush.bf16.msra.mxu0 %v6679
    %8260 = vmatmul.bf16.gmra.mxu0 %v3854
    %v8261 = vpop.f32.mrf.mxu0
    %v8262 = vadd.f32 %v8249, %v8261
    %v8263 = vpop.f32.mrf.mxu0
    %8264 = vdwg.mxu0
    %v8266 = vperm.slane %v3844, 0
    %v8267 = vperm.slane %v3844, 1
    %v8270 = vpack.c.bf16 %v8266, %v8266
    %v8271 = vpack.c.bf16 %v8267, %v8267
    %v8272 = vld [vmem:[#allocation29] sm:$0xff]
    %v8273 = vld [vmem:[#allocation29 + $0x8] sm:$0xff]
    %v8274 = vld [vmem:[#allocation29 + $0x10] sm:$0xff]
    %v8275 = vld [vmem:[#allocation29 + $0x18] sm:$0xff]
    %v8276 = vld [vmem:[#allocation29 + $0x20] sm:$0xff]
    %v8277 = vld [vmem:[#allocation29 + $0x28] sm:$0xff]
    %v8278 = vld [vmem:[#allocation29 + $0x30] sm:$0xff]
    %v8279 = vld [vmem:[#allocation29 + $0x38] sm:$0xff]
    %v8280 = vld [vmem:[#allocation29 + $0x40] sm:$0xff]
    %v8281 = vld [vmem:[#allocation29 + $0x48] sm:$0xff]
    %v8282 = vld [vmem:[#allocation29 + $0x50] sm:$0xff]
    %v8283 = vld [vmem:[#allocation29 + $0x58] sm:$0xff]
    %v8284 = vld [vmem:[#allocation29 + $0x60] sm:$0xff]
    %v8285 = vld [vmem:[#allocation29 + $0x68] sm:$0xff]
    %v8286 = vld [vmem:[#allocation29 + $0x70] sm:$0xff]
    %v8287 = vld [vmem:[#allocation29 + $0x78] sm:$0xff]
    %v8288 = vld [vmem:[#allocation29 + $0x80] sm:$0xff]
    %v8289 = vld [vmem:[#allocation29 + $0x88] sm:$0xff]
    %v8290 = vld [vmem:[#allocation29 + $0x90] sm:$0xff]
    %v8291 = vld [vmem:[#allocation29 + $0x98] sm:$0xff]
    %v8292 = vld [vmem:[#allocation29 + $0xa0] sm:$0xff]
    %v8293 = vld [vmem:[#allocation29 + $0xa8] sm:$0xff]
    %v8294 = vld [vmem:[#allocation29 + $0xb0] sm:$0xff]
    %v8295 = vld [vmem:[#allocation29 + $0xb8] sm:$0xff]
    %v8296 = vld [vmem:[#allocation29 + $0xc0] sm:$0xff]
    %v8297 = vld [vmem:[#allocation29 + $0xc8] sm:$0xff]
    %v8298 = vld [vmem:[#allocation29 + $0xd0] sm:$0xff]
    %v8299 = vld [vmem:[#allocation29 + $0xd8] sm:$0xff]
    %v8300 = vld [vmem:[#allocation29 + $0xe0] sm:$0xff]
    %v8301 = vld [vmem:[#allocation29 + $0xe8] sm:$0xff]
    %v8302 = vld [vmem:[#allocation29 + $0xf0] sm:$0xff]
    %v8303 = vld [vmem:[#allocation29 + $0xf8] sm:$0xff]
    %v8304 = vld [vmem:[#allocation29 + $0x100] sm:$0xff]
    %v8305 = vld [vmem:[#allocation29 + $0x108] sm:$0xff]
    %v8306 = vld [vmem:[#allocation29 + $0x110] sm:$0xff]
    %v8307 = vld [vmem:[#allocation29 + $0x118] sm:$0xff]
    %v8308 = vld [vmem:[#allocation29 + $0x120] sm:$0xff]
    %v8309 = vld [vmem:[#allocation29 + $0x128] sm:$0xff]
    %v8310 = vld [vmem:[#allocation29 + $0x130] sm:$0xff]
    %v8311 = vld [vmem:[#allocation29 + $0x138] sm:$0xff]
    %v8312 = vld [vmem:[#allocation29 + $0x140] sm:$0xff]
    %v8313 = vld [vmem:[#allocation29 + $0x148] sm:$0xff]
    %v8314 = vld [vmem:[#allocation29 + $0x150] sm:$0xff]
    %v8315 = vld [vmem:[#allocation29 + $0x158] sm:$0xff]
    %v8316 = vld [vmem:[#allocation29 + $0x160] sm:$0xff]
    %v8317 = vld [vmem:[#allocation29 + $0x168] sm:$0xff]
    %v8318 = vld [vmem:[#allocation29 + $0x170] sm:$0xff]
    %v8319 = vld [vmem:[#allocation29 + $0x178] sm:$0xff]
    %v8320 = vld [vmem:[#allocation29 + $0x180] sm:$0xff]
    %v8321 = vld [vmem:[#allocation29 + $0x188] sm:$0xff]
    %v8322 = vld [vmem:[#allocation29 + $0x190] sm:$0xff]
    %v8323 = vld [vmem:[#allocation29 + $0x198] sm:$0xff]
    %v8324 = vld [vmem:[#allocation29 + $0x1a0] sm:$0xff]
    %v8325 = vld [vmem:[#allocation29 + $0x1a8] sm:$0xff]
    %v8326 = vld [vmem:[#allocation29 + $0x1b0] sm:$0xff]
    %v8327 = vld [vmem:[#allocation29 + $0x1b8] sm:$0xff]
    %v8328 = vld [vmem:[#allocation29 + $0x1c0] sm:$0xff]
    %v8329 = vld [vmem:[#allocation29 + $0x1c8] sm:$0xff]
    %v8330 = vld [vmem:[#allocation29 + $0x1d0] sm:$0xff]
    %v8331 = vld [vmem:[#allocation29 + $0x1d8] sm:$0xff]
    %v8332 = vld [vmem:[#allocation29 + $0x1e0] sm:$0xff]
    %v8333 = vld [vmem:[#allocation29 + $0x1e8] sm:$0xff]
    %v8334 = vld [vmem:[#allocation29 + $0x1f0] sm:$0xff]
    %v8335 = vld [vmem:[#allocation29 + $0x1f8] sm:$0xff]
    %v8336 = vld [vmem:[#allocation29 + $0x200] sm:$0xff]
    %v8337 = vld [vmem:[#allocation29 + $0x208] sm:$0xff]
    %v8338 = vld [vmem:[#allocation29 + $0x210] sm:$0xff]
    %v8339 = vld [vmem:[#allocation29 + $0x218] sm:$0xff]
    %v8340 = vld [vmem:[#allocation29 + $0x220] sm:$0xff]
    %v8341 = vld [vmem:[#allocation29 + $0x228] sm:$0xff]
    %v8342 = vld [vmem:[#allocation29 + $0x230] sm:$0xff]
    %v8343 = vld [vmem:[#allocation29 + $0x238] sm:$0xff]
    %v8344 = vld [vmem:[#allocation29 + $0x240] sm:$0xff]
    %v8345 = vld [vmem:[#allocation29 + $0x248] sm:$0xff]
    %v8346 = vld [vmem:[#allocation29 + $0x250] sm:$0xff]
    %v8347 = vld [vmem:[#allocation29 + $0x258] sm:$0xff]
    %v8348 = vld [vmem:[#allocation29 + $0x260] sm:$0xff]
    %v8349 = vld [vmem:[#allocation29 + $0x268] sm:$0xff]
    %v8350 = vld [vmem:[#allocation29 + $0x270] sm:$0xff]
    %v8351 = vld [vmem:[#allocation29 + $0x278] sm:$0xff]
    %v8352 = vld [vmem:[#allocation29 + $0x280] sm:$0xff]
    %v8353 = vld [vmem:[#allocation29 + $0x288] sm:$0xff]
    %v8354 = vld [vmem:[#allocation29 + $0x290] sm:$0xff]
    %v8355 = vld [vmem:[#allocation29 + $0x298] sm:$0xff]
    %v8356 = vld [vmem:[#allocation29 + $0x2a0] sm:$0xff]
    %v8357 = vld [vmem:[#allocation29 + $0x2a8] sm:$0xff]
    %v8358 = vld [vmem:[#allocation29 + $0x2b0] sm:$0xff]
    %v8359 = vld [vmem:[#allocation29 + $0x2b8] sm:$0xff]
    %v8360 = vld [vmem:[#allocation29 + $0x2c0] sm:$0xff]
    %v8361 = vld [vmem:[#allocation29 + $0x2c8] sm:$0xff]
    %v8362 = vld [vmem:[#allocation29 + $0x2d0] sm:$0xff]
    %v8363 = vld [vmem:[#allocation29 + $0x2d8] sm:$0xff]
    %v8364 = vld [vmem:[#allocation29 + $0x2e0] sm:$0xff]
    %v8365 = vld [vmem:[#allocation29 + $0x2e8] sm:$0xff]
    %v8366 = vld [vmem:[#allocation29 + $0x2f0] sm:$0xff]
    %v8367 = vld [vmem:[#allocation29 + $0x2f8] sm:$0xff]
    %v8368 = vld [vmem:[#allocation29 + $0x300] sm:$0xff]
    %v8369 = vld [vmem:[#allocation29 + $0x308] sm:$0xff]
    %v8370 = vld [vmem:[#allocation29 + $0x310] sm:$0xff]
    %v8371 = vld [vmem:[#allocation29 + $0x318] sm:$0xff]
    %v8372 = vld [vmem:[#allocation29 + $0x320] sm:$0xff]
    %v8373 = vld [vmem:[#allocation29 + $0x328] sm:$0xff]
    %v8374 = vld [vmem:[#allocation29 + $0x330] sm:$0xff]
    %v8375 = vld [vmem:[#allocation29 + $0x338] sm:$0xff]
    %v8376 = vld [vmem:[#allocation29 + $0x340] sm:$0xff]
    %v8377 = vld [vmem:[#allocation29 + $0x348] sm:$0xff]
    %v8378 = vld [vmem:[#allocation29 + $0x350] sm:$0xff]
    %v8379 = vld [vmem:[#allocation29 + $0x358] sm:$0xff]
    %v8380 = vld [vmem:[#allocation29 + $0x360] sm:$0xff]
    %v8381 = vld [vmem:[#allocation29 + $0x368] sm:$0xff]
    %v8382 = vld [vmem:[#allocation29 + $0x370] sm:$0xff]
    %v8383 = vld [vmem:[#allocation29 + $0x378] sm:$0xff]
    %v8384 = vld [vmem:[#allocation29 + $0x380] sm:$0xff]
    %v8385 = vld [vmem:[#allocation29 + $0x388] sm:$0xff]
    %v8386 = vld [vmem:[#allocation29 + $0x390] sm:$0xff]
    %v8387 = vld [vmem:[#allocation29 + $0x398] sm:$0xff]
    %v8388 = vld [vmem:[#allocation29 + $0x3a0] sm:$0xff]
    %v8389 = vld [vmem:[#allocation29 + $0x3a8] sm:$0xff]
    %v8390 = vld [vmem:[#allocation29 + $0x3b0] sm:$0xff]
    %v8391 = vld [vmem:[#allocation29 + $0x3b8] sm:$0xff]
    %v8392 = vld [vmem:[#allocation29 + $0x3c0] sm:$0xff]
    %v8393 = vld [vmem:[#allocation29 + $0x3c8] sm:$0xff]
    %v8394 = vld [vmem:[#allocation29 + $0x3d0] sm:$0xff]
    %v8395 = vld [vmem:[#allocation29 + $0x3d8] sm:$0xff]
    %v8396 = vld [vmem:[#allocation29 + $0x3e0] sm:$0xff]
    %v8397 = vld [vmem:[#allocation29 + $0x3e8] sm:$0xff]
    %v8398 = vld [vmem:[#allocation29 + $0x3f0] sm:$0xff]
    %v8399 = vld [vmem:[#allocation29 + $0x3f8] sm:$0xff]
    %v8528 = vunpack.c.l.b16 %v8272
    %v8529 = vunpack.c.h.b16 %v8272
    %v8530 = vunpack.c.l.b16 %v8273
    %v8531 = vunpack.c.h.b16 %v8273
    %v8532 = vunpack.c.l.b16 %v8274
    %v8533 = vunpack.c.h.b16 %v8274
    %v8534 = vunpack.c.l.b16 %v8275
    %v8535 = vunpack.c.h.b16 %v8275
    %v8536 = vunpack.c.l.b16 %v8276
    %v8537 = vunpack.c.h.b16 %v8276
    %v8538 = vunpack.c.l.b16 %v8277
    %v8539 = vunpack.c.h.b16 %v8277
    %v8540 = vunpack.c.l.b16 %v8278
    %v8541 = vunpack.c.h.b16 %v8278
    %v8542 = vunpack.c.l.b16 %v8279
    %v8543 = vunpack.c.h.b16 %v8279
    %v8544 = vunpack.c.l.b16 %v8280
    %v8545 = vunpack.c.h.b16 %v8280
    %v8546 = vunpack.c.l.b16 %v8281
    %v8547 = vunpack.c.h.b16 %v8281
    %v8548 = vunpack.c.l.b16 %v8282
    %v8549 = vunpack.c.h.b16 %v8282
    %v8550 = vunpack.c.l.b16 %v8283
    %v8551 = vunpack.c.h.b16 %v8283
    %v8552 = vunpack.c.l.b16 %v8284
    %v8553 = vunpack.c.h.b16 %v8284
    %v8554 = vunpack.c.l.b16 %v8285
    %v8555 = vunpack.c.h.b16 %v8285
    %v8556 = vunpack.c.l.b16 %v8286
    %v8557 = vunpack.c.h.b16 %v8286
    %v8558 = vunpack.c.l.b16 %v8287
    %v8559 = vunpack.c.h.b16 %v8287
    %v8560 = vunpack.c.l.b16 %v8288
    %v8561 = vunpack.c.h.b16 %v8288
    %v8562 = vunpack.c.l.b16 %v8289
    %v8563 = vunpack.c.h.b16 %v8289
    %v8564 = vunpack.c.l.b16 %v8290
    %v8565 = vunpack.c.h.b16 %v8290
    %v8566 = vunpack.c.l.b16 %v8291
    %v8567 = vunpack.c.h.b16 %v8291
    %v8568 = vunpack.c.l.b16 %v8292
    %v8569 = vunpack.c.h.b16 %v8292
    %v8570 = vunpack.c.l.b16 %v8293
    %v8571 = vunpack.c.h.b16 %v8293
    %v8572 = vunpack.c.l.b16 %v8294
    %v8573 = vunpack.c.h.b16 %v8294
    %v8574 = vunpack.c.l.b16 %v8295
    %v8575 = vunpack.c.h.b16 %v8295
    %v8576 = vunpack.c.l.b16 %v8296
    %v8577 = vunpack.c.h.b16 %v8296
    %v8578 = vunpack.c.l.b16 %v8297
    %v8579 = vunpack.c.h.b16 %v8297
    %v8580 = vunpack.c.l.b16 %v8298
    %v8581 = vunpack.c.h.b16 %v8298
    %v8582 = vunpack.c.l.b16 %v8299
    %v8583 = vunpack.c.h.b16 %v8299
    %v8584 = vunpack.c.l.b16 %v8300
    %v8585 = vunpack.c.h.b16 %v8300
    %v8586 = vunpack.c.l.b16 %v8301
    %v8587 = vunpack.c.h.b16 %v8301
    %v8588 = vunpack.c.l.b16 %v8302
    %v8589 = vunpack.c.h.b16 %v8302
    %v8590 = vunpack.c.l.b16 %v8303
    %v8591 = vunpack.c.h.b16 %v8303
    %v8592 = vunpack.c.l.b16 %v8304
    %v8593 = vunpack.c.h.b16 %v8304
    %v8594 = vunpack.c.l.b16 %v8305
    %v8595 = vunpack.c.h.b16 %v8305
    %v8596 = vunpack.c.l.b16 %v8306
    %v8597 = vunpack.c.h.b16 %v8306
    %v8598 = vunpack.c.l.b16 %v8307
    %v8599 = vunpack.c.h.b16 %v8307
    %v8600 = vunpack.c.l.b16 %v8308
    %v8601 = vunpack.c.h.b16 %v8308
    %v8602 = vunpack.c.l.b16 %v8309
    %v8603 = vunpack.c.h.b16 %v8309
    %v8604 = vunpack.c.l.b16 %v8310
    %v8605 = vunpack.c.h.b16 %v8310
    %v8606 = vunpack.c.l.b16 %v8311
    %v8607 = vunpack.c.h.b16 %v8311
    %v8608 = vunpack.c.l.b16 %v8312
    %v8609 = vunpack.c.h.b16 %v8312
    %v8610 = vunpack.c.l.b16 %v8313
    %v8611 = vunpack.c.h.b16 %v8313
    %v8612 = vunpack.c.l.b16 %v8314
    %v8613 = vunpack.c.h.b16 %v8314
    %v8614 = vunpack.c.l.b16 %v8315
    %v8615 = vunpack.c.h.b16 %v8315
    %v8616 = vunpack.c.l.b16 %v8316
    %v8617 = vunpack.c.h.b16 %v8316
    %v8618 = vunpack.c.l.b16 %v8317
    %v8619 = vunpack.c.h.b16 %v8317
    %v8620 = vunpack.c.l.b16 %v8318
    %v8621 = vunpack.c.h.b16 %v8318
    %v8622 = vunpack.c.l.b16 %v8319
    %v8623 = vunpack.c.h.b16 %v8319
    %v8624 = vunpack.c.l.b16 %v8320
    %v8625 = vunpack.c.h.b16 %v8320
    %v8626 = vunpack.c.l.b16 %v8321
    %v8627 = vunpack.c.h.b16 %v8321
    %v8628 = vunpack.c.l.b16 %v8322
    %v8629 = vunpack.c.h.b16 %v8322
    %v8630 = vunpack.c.l.b16 %v8323
    %v8631 = vunpack.c.h.b16 %v8323
    %v8632 = vunpack.c.l.b16 %v8324
    %v8633 = vunpack.c.h.b16 %v8324
    %v8634 = vunpack.c.l.b16 %v8325
    %v8635 = vunpack.c.h.b16 %v8325
    %v8636 = vunpack.c.l.b16 %v8326
    %v8637 = vunpack.c.h.b16 %v8326
    %v8638 = vunpack.c.l.b16 %v8327
    %v8639 = vunpack.c.h.b16 %v8327
    %v8640 = vunpack.c.l.b16 %v8328
    %v8641 = vunpack.c.h.b16 %v8328
    %v8642 = vunpack.c.l.b16 %v8329
    %v8643 = vunpack.c.h.b16 %v8329
    %v8644 = vunpack.c.l.b16 %v8330
    %v8645 = vunpack.c.h.b16 %v8330
    %v8646 = vunpack.c.l.b16 %v8331
    %v8647 = vunpack.c.h.b16 %v8331
    %v8648 = vunpack.c.l.b16 %v8332
    %v8649 = vunpack.c.h.b16 %v8332
    %v8650 = vunpack.c.l.b16 %v8333
    %v8651 = vunpack.c.h.b16 %v8333
    %v8652 = vunpack.c.l.b16 %v8334
    %v8653 = vunpack.c.h.b16 %v8334
    %v8654 = vunpack.c.l.b16 %v8335
    %v8655 = vunpack.c.h.b16 %v8335
    %v8656 = vunpack.c.l.b16 %v8336
    %v8657 = vunpack.c.h.b16 %v8336
    %v8658 = vunpack.c.l.b16 %v8337
    %v8659 = vunpack.c.h.b16 %v8337
    %v8660 = vunpack.c.l.b16 %v8338
    %v8661 = vunpack.c.h.b16 %v8338
    %v8662 = vunpack.c.l.b16 %v8339
    %v8663 = vunpack.c.h.b16 %v8339
    %v8664 = vunpack.c.l.b16 %v8340
    %v8665 = vunpack.c.h.b16 %v8340
    %v8666 = vunpack.c.l.b16 %v8341
    %v8667 = vunpack.c.h.b16 %v8341
    %v8668 = vunpack.c.l.b16 %v8342
    %v8669 = vunpack.c.h.b16 %v8342
    %v8670 = vunpack.c.l.b16 %v8343
    %v8671 = vunpack.c.h.b16 %v8343
    %v8672 = vunpack.c.l.b16 %v8344
    %v8673 = vunpack.c.h.b16 %v8344
    %v8674 = vunpack.c.l.b16 %v8345
    %v8675 = vunpack.c.h.b16 %v8345
    %v8676 = vunpack.c.l.b16 %v8346
    %v8677 = vunpack.c.h.b16 %v8346
    %v8678 = vunpack.c.l.b16 %v8347
    %v8679 = vunpack.c.h.b16 %v8347
    %v8680 = vunpack.c.l.b16 %v8348
    %v8681 = vunpack.c.h.b16 %v8348
    %v8682 = vunpack.c.l.b16 %v8349
    %v8683 = vunpack.c.h.b16 %v8349
    %v8684 = vunpack.c.l.b16 %v8350
    %v8685 = vunpack.c.h.b16 %v8350
    %v8686 = vunpack.c.l.b16 %v8351
    %v8687 = vunpack.c.h.b16 %v8351
    %v8688 = vunpack.c.l.b16 %v8352
    %v8689 = vunpack.c.h.b16 %v8352
    %v8690 = vunpack.c.l.b16 %v8353
    %v8691 = vunpack.c.h.b16 %v8353
    %v8692 = vunpack.c.l.b16 %v8354
    %v8693 = vunpack.c.h.b16 %v8354
    %v8694 = vunpack.c.l.b16 %v8355
    %v8695 = vunpack.c.h.b16 %v8355
    %v8696 = vunpack.c.l.b16 %v8356
    %v8697 = vunpack.c.h.b16 %v8356
    %v8698 = vunpack.c.l.b16 %v8357
    %v8699 = vunpack.c.h.b16 %v8357
    %v8700 = vunpack.c.l.b16 %v8358
    %v8701 = vunpack.c.h.b16 %v8358
    %v8702 = vunpack.c.l.b16 %v8359
    %v8703 = vunpack.c.h.b16 %v8359
    %v8704 = vunpack.c.l.b16 %v8360
    %v8705 = vunpack.c.h.b16 %v8360
    %v8706 = vunpack.c.l.b16 %v8361
    %v8707 = vunpack.c.h.b16 %v8361
    %v8708 = vunpack.c.l.b16 %v8362
    %v8709 = vunpack.c.h.b16 %v8362
    %v8710 = vunpack.c.l.b16 %v8363
    %v8711 = vunpack.c.h.b16 %v8363
    %v8712 = vunpack.c.l.b16 %v8364
    %v8713 = vunpack.c.h.b16 %v8364
    %v8714 = vunpack.c.l.b16 %v8365
    %v8715 = vunpack.c.h.b16 %v8365
    %v8716 = vunpack.c.l.b16 %v8366
    %v8717 = vunpack.c.h.b16 %v8366
    %v8718 = vunpack.c.l.b16 %v8367
    %v8719 = vunpack.c.h.b16 %v8367
    %v8720 = vunpack.c.l.b16 %v8368
    %v8721 = vunpack.c.h.b16 %v8368
    %v8722 = vunpack.c.l.b16 %v8369
    %v8723 = vunpack.c.h.b16 %v8369
    %v8724 = vunpack.c.l.b16 %v8370
    %v8725 = vunpack.c.h.b16 %v8370
    %v8726 = vunpack.c.l.b16 %v8371
    %v8727 = vunpack.c.h.b16 %v8371
    %v8728 = vunpack.c.l.b16 %v8372
    %v8729 = vunpack.c.h.b16 %v8372
    %v8730 = vunpack.c.l.b16 %v8373
    %v8731 = vunpack.c.h.b16 %v8373
    %v8732 = vunpack.c.l.b16 %v8374
    %v8733 = vunpack.c.h.b16 %v8374
    %v8734 = vunpack.c.l.b16 %v8375
    %v8735 = vunpack.c.h.b16 %v8375
    %v8736 = vunpack.c.l.b16 %v8376
    %v8737 = vunpack.c.h.b16 %v8376
    %v8738 = vunpack.c.l.b16 %v8377
    %v8739 = vunpack.c.h.b16 %v8377
    %v8740 = vunpack.c.l.b16 %v8378
    %v8741 = vunpack.c.h.b16 %v8378
    %v8742 = vunpack.c.l.b16 %v8379
    %v8743 = vunpack.c.h.b16 %v8379
    %v8744 = vunpack.c.l.b16 %v8380
    %v8745 = vunpack.c.h.b16 %v8380
    %v8746 = vunpack.c.l.b16 %v8381
    %v8747 = vunpack.c.h.b16 %v8381
    %v8748 = vunpack.c.l.b16 %v8382
    %v8749 = vunpack.c.h.b16 %v8382
    %v8750 = vunpack.c.l.b16 %v8383
    %v8751 = vunpack.c.h.b16 %v8383
    %v8752 = vunpack.c.l.b16 %v8384
    %v8753 = vunpack.c.h.b16 %v8384
    %v8754 = vunpack.c.l.b16 %v8385
    %v8755 = vunpack.c.h.b16 %v8385
    %v8756 = vunpack.c.l.b16 %v8386
    %v8757 = vunpack.c.h.b16 %v8386
    %v8758 = vunpack.c.l.b16 %v8387
    %v8759 = vunpack.c.h.b16 %v8387
    %v8760 = vunpack.c.l.b16 %v8388
    %v8761 = vunpack.c.h.b16 %v8388
    %v8762 = vunpack.c.l.b16 %v8389
    %v8763 = vunpack.c.h.b16 %v8389
    %v8764 = vunpack.c.l.b16 %v8390
    %v8765 = vunpack.c.h.b16 %v8390
    %v8766 = vunpack.c.l.b16 %v8391
    %v8767 = vunpack.c.h.b16 %v8391
    %v8768 = vunpack.c.l.b16 %v8392
    %v8769 = vunpack.c.h.b16 %v8392
    %v8770 = vunpack.c.l.b16 %v8393
    %v8771 = vunpack.c.h.b16 %v8393
    %v8772 = vunpack.c.l.b16 %v8394
    %v8773 = vunpack.c.h.b16 %v8394
    %v8774 = vunpack.c.l.b16 %v8395
    %v8775 = vunpack.c.h.b16 %v8395
    %v8776 = vunpack.c.l.b16 %v8396
    %v8777 = vunpack.c.h.b16 %v8396
    %v8778 = vunpack.c.l.b16 %v8397
    %v8779 = vunpack.c.h.b16 %v8397
    %v8780 = vunpack.c.l.b16 %v8398
    %v8781 = vunpack.c.h.b16 %v8398
    %v8782 = vunpack.c.l.b16 %v8399
    %v8783 = vunpack.c.h.b16 %v8399
    %v8784 = vpack.c.b16 %v8536, %v8528
    %v8785 = vpack.c.b16 %v8537, %v8529
    %v8786 = vpack.c.b16 %v8538, %v8530
    %v8787 = vpack.c.b16 %v8539, %v8531
    %v8788 = vpack.c.b16 %v8540, %v8532
    %v8789 = vpack.c.b16 %v8541, %v8533
    %v8790 = vpack.c.b16 %v8542, %v8534
    %v8791 = vpack.c.b16 %v8543, %v8535
    %v8792 = vpack.c.b16 %v8552, %v8544
    %v8793 = vpack.c.b16 %v8553, %v8545
    %v8794 = vpack.c.b16 %v8554, %v8546
    %v8795 = vpack.c.b16 %v8555, %v8547
    %v8796 = vpack.c.b16 %v8556, %v8548
    %v8797 = vpack.c.b16 %v8557, %v8549
    %v8798 = vpack.c.b16 %v8558, %v8550
    %v8799 = vpack.c.b16 %v8559, %v8551
    %v8800 = vpack.c.b16 %v8568, %v8560
    %v8801 = vpack.c.b16 %v8569, %v8561
    %v8802 = vpack.c.b16 %v8570, %v8562
    %v8803 = vpack.c.b16 %v8571, %v8563
    %v8804 = vpack.c.b16 %v8572, %v8564
    %v8805 = vpack.c.b16 %v8573, %v8565
    %v8806 = vpack.c.b16 %v8574, %v8566
    %v8807 = vpack.c.b16 %v8575, %v8567
    %v8808 = vpack.c.b16 %v8584, %v8576
    %v8809 = vpack.c.b16 %v8585, %v8577
    %v8810 = vpack.c.b16 %v8586, %v8578
    %v8811 = vpack.c.b16 %v8587, %v8579
    %v8812 = vpack.c.b16 %v8588, %v8580
    %v8813 = vpack.c.b16 %v8589, %v8581
    %v8814 = vpack.c.b16 %v8590, %v8582
    %v8815 = vpack.c.b16 %v8591, %v8583
    %v8816 = vpack.c.b16 %v8600, %v8592
    %v8817 = vpack.c.b16 %v8601, %v8593
    %v8818 = vpack.c.b16 %v8602, %v8594
    %v8819 = vpack.c.b16 %v8603, %v8595
    %v8820 = vpack.c.b16 %v8604, %v8596
    %v8821 = vpack.c.b16 %v8605, %v8597
    %v8822 = vpack.c.b16 %v8606, %v8598
    %v8823 = vpack.c.b16 %v8607, %v8599
    %v8824 = vpack.c.b16 %v8616, %v8608
    %v8825 = vpack.c.b16 %v8617, %v8609
    %v8826 = vpack.c.b16 %v8618, %v8610
    %v8827 = vpack.c.b16 %v8619, %v8611
    %v8828 = vpack.c.b16 %v8620, %v8612
    %v8829 = vpack.c.b16 %v8621, %v8613
    %v8830 = vpack.c.b16 %v8622, %v8614
    %v8831 = vpack.c.b16 %v8623, %v8615
    %v8832 = vpack.c.b16 %v8632, %v8624
    %v8833 = vpack.c.b16 %v8633, %v8625
    %v8834 = vpack.c.b16 %v8634, %v8626
    %v8835 = vpack.c.b16 %v8635, %v8627
    %v8836 = vpack.c.b16 %v8636, %v8628
    %v8837 = vpack.c.b16 %v8637, %v8629
    %v8838 = vpack.c.b16 %v8638, %v8630
    %v8839 = vpack.c.b16 %v8639, %v8631
    %v8840 = vpack.c.b16 %v8648, %v8640
    %v8841 = vpack.c.b16 %v8649, %v8641
    %v8842 = vpack.c.b16 %v8650, %v8642
    %v8843 = vpack.c.b16 %v8651, %v8643
    %v8844 = vpack.c.b16 %v8652, %v8644
    %v8845 = vpack.c.b16 %v8653, %v8645
    %v8846 = vpack.c.b16 %v8654, %v8646
    %v8847 = vpack.c.b16 %v8655, %v8647
    %v8848 = vpack.c.b16 %v8664, %v8656
    %v8849 = vpack.c.b16 %v8665, %v8657
    %v8850 = vpack.c.b16 %v8666, %v8658
    %v8851 = vpack.c.b16 %v8667, %v8659
    %v8852 = vpack.c.b16 %v8668, %v8660
    %v8853 = vpack.c.b16 %v8669, %v8661
    %v8854 = vpack.c.b16 %v8670, %v8662
    %v8855 = vpack.c.b16 %v8671, %v8663
    %v8856 = vpack.c.b16 %v8680, %v8672
    %v8857 = vpack.c.b16 %v8681, %v8673
    %v8858 = vpack.c.b16 %v8682, %v8674
    %v8859 = vpack.c.b16 %v8683, %v8675
    %v8860 = vpack.c.b16 %v8684, %v8676
    %v8861 = vpack.c.b16 %v8685, %v8677
    %v8862 = vpack.c.b16 %v8686, %v8678
    %v8863 = vpack.c.b16 %v8687, %v8679
    %v8864 = vpack.c.b16 %v8696, %v8688
    %v8865 = vpack.c.b16 %v8697, %v8689
    %v8866 = vpack.c.b16 %v8698, %v8690
    %v8867 = vpack.c.b16 %v8699, %v8691
    %v8868 = vpack.c.b16 %v8700, %v8692
    %v8869 = vpack.c.b16 %v8701, %v8693
    %v8870 = vpack.c.b16 %v8702, %v8694
    %v8871 = vpack.c.b16 %v8703, %v8695
    %v8872 = vpack.c.b16 %v8712, %v8704
    %v8873 = vpack.c.b16 %v8713, %v8705
    %v8874 = vpack.c.b16 %v8714, %v8706
    %v8875 = vpack.c.b16 %v8715, %v8707
    %v8876 = vpack.c.b16 %v8716, %v8708
    %v8877 = vpack.c.b16 %v8717, %v8709
    %v8878 = vpack.c.b16 %v8718, %v8710
    %v8879 = vpack.c.b16 %v8719, %v8711
    %v8880 = vpack.c.b16 %v8728, %v8720
    %v8881 = vpack.c.b16 %v8729, %v8721
    %v8882 = vpack.c.b16 %v8730, %v8722
    %v8883 = vpack.c.b16 %v8731, %v8723
    %v8884 = vpack.c.b16 %v8732, %v8724
    %v8885 = vpack.c.b16 %v8733, %v8725
    %v8886 = vpack.c.b16 %v8734, %v8726
    %v8887 = vpack.c.b16 %v8735, %v8727
    %v8888 = vpack.c.b16 %v8744, %v8736
    %v8889 = vpack.c.b16 %v8745, %v8737
    %v8890 = vpack.c.b16 %v8746, %v8738
    %v8891 = vpack.c.b16 %v8747, %v8739
    %v8892 = vpack.c.b16 %v8748, %v8740
    %v8893 = vpack.c.b16 %v8749, %v8741
    %v8894 = vpack.c.b16 %v8750, %v8742
    %v8895 = vpack.c.b16 %v8751, %v8743
    %v8896 = vpack.c.b16 %v8760, %v8752
    %v8897 = vpack.c.b16 %v8761, %v8753
    %v8898 = vpack.c.b16 %v8762, %v8754
    %v8899 = vpack.c.b16 %v8763, %v8755
    %v8900 = vpack.c.b16 %v8764, %v8756
    %v8901 = vpack.c.b16 %v8765, %v8757
    %v8902 = vpack.c.b16 %v8766, %v8758
    %v8903 = vpack.c.b16 %v8767, %v8759
    %v8904 = vpack.c.b16 %v8776, %v8768
    %v8905 = vpack.c.b16 %v8777, %v8769
    %v8906 = vpack.c.b16 %v8778, %v8770
    %v8907 = vpack.c.b16 %v8779, %v8771
    %v8908 = vpack.c.b16 %v8780, %v8772
    %v8909 = vpack.c.b16 %v8781, %v8773
    %v8910 = vpack.c.b16 %v8782, %v8774
    %v8911 = vpack.c.b16 %v8783, %v8775
    %9040 = vmatpush.bf16.msra.mxu0 %v8840
    %9041 = vmatpush.bf16.msra.mxu0 %v8832
    %9042 = vmatpush.bf16.msra.mxu0 %v8824
    %9043 = vmatpush.bf16.msra.mxu0 %v8816
    %9044 = vmatpush.bf16.msra.mxu0 %v8808
    %9045 = vmatpush.bf16.msra.mxu0 %v8800
    %9046 = vmatpush.bf16.msra.mxu0 %v8792
    %9047 = vmatpush.bf16.msra.mxu0 %v8784
    %9048 = vmatmul.bf16.gmra.mxu0 %v8270
    %v9049 = vpop.f32.mrf.mxu0
    %v9050 = vadd.f32 0.0, %v9049
    %v9051 = vpop.f32.mrf.mxu0
    %9052 = vdwg.mxu0
    %9053 = vmatpush.bf16.msra.mxu0 %v8904
    %9054 = vmatpush.bf16.msra.mxu0 %v8896
    %9055 = vmatpush.bf16.msra.mxu0 %v8888
    %9056 = vmatpush.bf16.msra.mxu0 %v8880
    %9057 = vmatpush.bf16.msra.mxu0 %v8872
    %9058 = vmatpush.bf16.msra.mxu0 %v8864
    %9059 = vmatpush.bf16.msra.mxu0 %v8856
    %9060 = vmatpush.bf16.msra.mxu0 %v8848
    %9061 = vmatmul.bf16.gmra.mxu0 %v8271
    %v9062 = vpop.f32.mrf.mxu0
    %v9063 = vadd.f32 %v9050, %v9062
    %v9064 = vpop.f32.mrf.mxu0
    %9065 = vdwg.mxu0
    %9066 = vmatpush.bf16.msra.mxu0 %v8841
    %9067 = vmatpush.bf16.msra.mxu0 %v8833
    %9068 = vmatpush.bf16.msra.mxu0 %v8825
    %9069 = vmatpush.bf16.msra.mxu0 %v8817
    %9070 = vmatpush.bf16.msra.mxu0 %v8809
    %9071 = vmatpush.bf16.msra.mxu0 %v8801
    %9072 = vmatpush.bf16.msra.mxu0 %v8793
    %9073 = vmatpush.bf16.msra.mxu0 %v8785
    %9074 = vmatmul.bf16.gmra.mxu0 %v8270
    %v9075 = vpop.f32.mrf.mxu0
    %v9076 = vadd.f32 0.0, %v9075
    %v9077 = vpop.f32.mrf.mxu0
    %9078 = vdwg.mxu0
    %9079 = vmatpush.bf16.msra.mxu0 %v8905
    %9080 = vmatpush.bf16.msra.mxu0 %v8897
    %9081 = vmatpush.bf16.msra.mxu0 %v8889
    %9082 = vmatpush.bf16.msra.mxu0 %v8881
    %9083 = vmatpush.bf16.msra.mxu0 %v8873
    %9084 = vmatpush.bf16.msra.mxu0 %v8865
    %9085 = vmatpush.bf16.msra.mxu0 %v8857
    %9086 = vmatpush.bf16.msra.mxu0 %v8849
    %9087 = vmatmul.bf16.gmra.mxu0 %v8271
    %v9088 = vpop.f32.mrf.mxu0
    %v9089 = vadd.f32 %v9076, %v9088
    %v9090 = vpop.f32.mrf.mxu0
    %9091 = vdwg.mxu0
    %9092 = vmatpush.bf16.msra.mxu0 %v8842
    %9093 = vmatpush.bf16.msra.mxu0 %v8834
    %9094 = vmatpush.bf16.msra.mxu0 %v8826
    %9095 = vmatpush.bf16.msra.mxu0 %v8818
    %9096 = vmatpush.bf16.msra.mxu0 %v8810
    %9097 = vmatpush.bf16.msra.mxu0 %v8802
    %9098 = vmatpush.bf16.msra.mxu0 %v8794
    %9099 = vmatpush.bf16.msra.mxu0 %v8786
    %9100 = vmatmul.bf16.gmra.mxu0 %v8270
    %v9101 = vpop.f32.mrf.mxu0
    %v9102 = vadd.f32 0.0, %v9101
    %v9103 = vpop.f32.mrf.mxu0
    %9104 = vdwg.mxu0
    %9105 = vmatpush.bf16.msra.mxu0 %v8906
    %9106 = vmatpush.bf16.msra.mxu0 %v8898
    %9107 = vmatpush.bf16.msra.mxu0 %v8890
    %9108 = vmatpush.bf16.msra.mxu0 %v8882
    %9109 = vmatpush.bf16.msra.mxu0 %v8874
    %9110 = vmatpush.bf16.msra.mxu0 %v8866
    %9111 = vmatpush.bf16.msra.mxu0 %v8858
    %9112 = vmatpush.bf16.msra.mxu0 %v8850
    %9113 = vmatmul.bf16.gmra.mxu0 %v8271
    %v9114 = vpop.f32.mrf.mxu0
    %v9115 = vadd.f32 %v9102, %v9114
    %v9116 = vpop.f32.mrf.mxu0
    %9117 = vdwg.mxu0
    %9118 = vmatpush.bf16.msra.mxu0 %v8843
    %9119 = vmatpush.bf16.msra.mxu0 %v8835
    %9120 = vmatpush.bf16.msra.mxu0 %v8827
    %9121 = vmatpush.bf16.msra.mxu0 %v8819
    %9122 = vmatpush.bf16.msra.mxu0 %v8811
    %9123 = vmatpush.bf16.msra.mxu0 %v8803
    %9124 = vmatpush.bf16.msra.mxu0 %v8795
    %9125 = vmatpush.bf16.msra.mxu0 %v8787
    %9126 = vmatmul.bf16.gmra.mxu0 %v8270
    %v9127 = vpop.f32.mrf.mxu0
    %v9128 = vadd.f32 0.0, %v9127
    %v9129 = vpop.f32.mrf.mxu0
    %9130 = vdwg.mxu0
    %9131 = vmatpush.bf16.msra.mxu0 %v8907
    %9132 = vmatpush.bf16.msra.mxu0 %v8899
    %9133 = vmatpush.bf16.msra.mxu0 %v8891
    %9134 = vmatpush.bf16.msra.mxu0 %v8883
    %9135 = vmatpush.bf16.msra.mxu0 %v8875
    %9136 = vmatpush.bf16.msra.mxu0 %v8867
    %9137 = vmatpush.bf16.msra.mxu0 %v8859
    %9138 = vmatpush.bf16.msra.mxu0 %v8851
    %9139 = vmatmul.bf16.gmra.mxu0 %v8271
    %v9140 = vpop.f32.mrf.mxu0
    %v9141 = vadd.f32 %v9128, %v9140
    %v9142 = vpop.f32.mrf.mxu0
    %9143 = vdwg.mxu0
    %9144 = vmatpush.bf16.msra.mxu0 %v8844
    %9145 = vmatpush.bf16.msra.mxu0 %v8836
    %9146 = vmatpush.bf16.msra.mxu0 %v8828
    %9147 = vmatpush.bf16.msra.mxu0 %v8820
    %9148 = vmatpush.bf16.msra.mxu0 %v8812
    %9149 = vmatpush.bf16.msra.mxu0 %v8804
    %9150 = vmatpush.bf16.msra.mxu0 %v8796
    %9151 = vmatpush.bf16.msra.mxu0 %v8788
    %9152 = vmatmul.bf16.gmra.mxu0 %v8270
    %v9153 = vpop.f32.mrf.mxu0
    %v9154 = vadd.f32 0.0, %v9153
    %v9155 = vpop.f32.mrf.mxu0
    %9156 = vdwg.mxu0
    %9157 = vmatpush.bf16.msra.mxu0 %v8908
    %9158 = vmatpush.bf16.msra.mxu0 %v8900
    %9159 = vmatpush.bf16.msra.mxu0 %v8892
    %9160 = vmatpush.bf16.msra.mxu0 %v8884
    %9161 = vmatpush.bf16.msra.mxu0 %v8876
    %9162 = vmatpush.bf16.msra.mxu0 %v8868
    %9163 = vmatpush.bf16.msra.mxu0 %v8860
    %9164 = vmatpush.bf16.msra.mxu0 %v8852
    %9165 = vmatmul.bf16.gmra.mxu0 %v8271
    %v9166 = vpop.f32.mrf.mxu0
    %v9167 = vadd.f32 %v9154, %v9166
    %v9168 = vpop.f32.mrf.mxu0
    %9169 = vdwg.mxu0
    %9170 = vmatpush.bf16.msra.mxu0 %v8845
    %9171 = vmatpush.bf16.msra.mxu0 %v8837
    %9172 = vmatpush.bf16.msra.mxu0 %v8829
    %9173 = vmatpush.bf16.msra.mxu0 %v8821
    %9174 = vmatpush.bf16.msra.mxu0 %v8813
    %9175 = vmatpush.bf16.msra.mxu0 %v8805
    %9176 = vmatpush.bf16.msra.mxu0 %v8797
    %9177 = vmatpush.bf16.msra.mxu0 %v8789
    %9178 = vmatmul.bf16.gmra.mxu0 %v8270
    %v9179 = vpop.f32.mrf.mxu0
    %v9180 = vadd.f32 0.0, %v9179
    %v9181 = vpop.f32.mrf.mxu0
    %9182 = vdwg.mxu0
    %9183 = vmatpush.bf16.msra.mxu0 %v8909
    %9184 = vmatpush.bf16.msra.mxu0 %v8901
    %9185 = vmatpush.bf16.msra.mxu0 %v8893
    %9186 = vmatpush.bf16.msra.mxu0 %v8885
    %9187 = vmatpush.bf16.msra.mxu0 %v8877
    %9188 = vmatpush.bf16.msra.mxu0 %v8869
    %9189 = vmatpush.bf16.msra.mxu0 %v8861
    %9190 = vmatpush.bf16.msra.mxu0 %v8853
    %9191 = vmatmul.bf16.gmra.mxu0 %v8271
    %v9192 = vpop.f32.mrf.mxu0
    %v9193 = vadd.f32 %v9180, %v9192
    %v9194 = vpop.f32.mrf.mxu0
    %9195 = vdwg.mxu0
    %9196 = vmatpush.bf16.msra.mxu0 %v8846
    %9197 = vmatpush.bf16.msra.mxu0 %v8838
    %9198 = vmatpush.bf16.msra.mxu0 %v8830
    %9199 = vmatpush.bf16.msra.mxu0 %v8822
    %9200 = vmatpush.bf16.msra.mxu0 %v8814
    %9201 = vmatpush.bf16.msra.mxu0 %v8806
    %9202 = vmatpush.bf16.msra.mxu0 %v8798
    %9203 = vmatpush.bf16.msra.mxu0 %v8790
    %9204 = vmatmul.bf16.gmra.mxu0 %v8270
    %v9205 = vpop.f32.mrf.mxu0
    %v9206 = vadd.f32 0.0, %v9205
    %v9207 = vpop.f32.mrf.mxu0
    %9208 = vdwg.mxu0
    %9209 = vmatpush.bf16.msra.mxu0 %v8910
    %9210 = vmatpush.bf16.msra.mxu0 %v8902
    %9211 = vmatpush.bf16.msra.mxu0 %v8894
    %9212 = vmatpush.bf16.msra.mxu0 %v8886
    %9213 = vmatpush.bf16.msra.mxu0 %v8878
    %9214 = vmatpush.bf16.msra.mxu0 %v8870
    %9215 = vmatpush.bf16.msra.mxu0 %v8862
    %9216 = vmatpush.bf16.msra.mxu0 %v8854
    %9217 = vmatmul.bf16.gmra.mxu0 %v8271
    %v9218 = vpop.f32.mrf.mxu0
    %v9219 = vadd.f32 %v9206, %v9218
    %v9220 = vpop.f32.mrf.mxu0
    %9221 = vdwg.mxu0
    %9222 = vmatpush.bf16.msra.mxu0 %v8847
    %9223 = vmatpush.bf16.msra.mxu0 %v8839
    %9224 = vmatpush.bf16.msra.mxu0 %v8831
    %9225 = vmatpush.bf16.msra.mxu0 %v8823
    %9226 = vmatpush.bf16.msra.mxu0 %v8815
    %9227 = vmatpush.bf16.msra.mxu0 %v8807
    %9228 = vmatpush.bf16.msra.mxu0 %v8799
    %9229 = vmatpush.bf16.msra.mxu0 %v8791
    %9230 = vmatmul.bf16.gmra.mxu0 %v8270
    %v9231 = vpop.f32.mrf.mxu0
    %v9232 = vadd.f32 0.0, %v9231
    %v9233 = vpop.f32.mrf.mxu0
    %9234 = vdwg.mxu0
    %9235 = vmatpush.bf16.msra.mxu0 %v8911
    %9236 = vmatpush.bf16.msra.mxu0 %v8903
    %9237 = vmatpush.bf16.msra.mxu0 %v8895
    %9238 = vmatpush.bf16.msra.mxu0 %v8887
    %9239 = vmatpush.bf16.msra.mxu0 %v8879
    %9240 = vmatpush.bf16.msra.mxu0 %v8871
    %9241 = vmatpush.bf16.msra.mxu0 %v8863
    %9242 = vmatpush.bf16.msra.mxu0 %v8855
    %9243 = vmatmul.bf16.gmra.mxu0 %v8271
    %v9244 = vpop.f32.mrf.mxu0
    %v9245 = vadd.f32 %v9232, %v9244
    %v9246 = vpop.f32.mrf.mxu0
    %9247 = vdwg.mxu0
    %v9248 = vadd.f32 %v7443, %v9063
    %v9249 = vadd.f32 %v7560, %v9089
    %v9250 = vadd.f32 %v7677, %v9115
    %v9251 = vadd.f32 %v7794, %v9141
    %v9252 = vadd.f32 %v7911, %v9167
    %v9253 = vadd.f32 %v8028, %v9193
    %v9254 = vadd.f32 %v8145, %v9219
    %v9255 = vadd.f32 %v8262, %v9245
    %v9256 = vld [vmem:[#allocation30] sm:$0xff]
    %v9258 = vperm.slane %v9256, 0
    %v9259 = vperm.slane %v9256, 1
    %v9260 = vperm.slane %v9256, 2
    %v9261 = vperm.slane %v9256, 3
    %v9262 = vperm.slane %v9256, 4
    %v9263 = vperm.slane %v9256, 5
    %v9264 = vperm.slane %v9256, 6
    %v9265 = vperm.slane %v9256, 7
    %v9274 = vadd.f32 %v9248, %v9258
    %v9275 = vadd.f32 %v9249, %v9259
    %v9276 = vadd.f32 %v9250, %v9260
    %v9277 = vadd.f32 %v9251, %v9261
    %v9278 = vadd.f32 %v9252, %v9262
    %v9279 = vadd.f32 %v9253, %v9263
    %v9280 = vadd.f32 %v9254, %v9264
    %v9281 = vadd.f32 %v9255, %v9265
    %v9282 = vsub.f32 0.0, %v9274
    %v9283 = vsub.f32 0.0, %v9275
    %v9284 = vmul.f32 %v9282, 1.442695
    %v9285 = vpow.pop %v9284
    %v9286 = vmul.f32 %v9283, 1.442695
    %v9287 = vpow.pop %v9286
    %v9288 = vadd.f32 %v9285, 1.0
    %v9289 = vadd.f32 %v9287, 1.0
    %v9290 = vrcp.pop %v9288
    %v9291 = vmul.f32 %v9288, %v9290
    %v9292 = vsub.f32 1.0, %v9291
    %v9293 = vmul.f32 %v9290, %v9292
    %v9294 = vadd.f32 %v9290, %v9293
    %vm9295 = vweird.f32 %v9288
    %vm9296 = vweird.f32 %v9290
    %vm9297 = vmor %vm9295, %vm9296
    %v9298 = vsel %vm9297, %v9290, %v9294
    %v9299 = vand.u32 2147483647, %v9288
    %vm9300 = vcmp.eq.f32.partialorder %v9299, 8.507059e+37
    %v9301 = vand.u32 %v9288, 2147483648
    %v9302 = vor.u32 1.1754944e-38, %v9301
    %v9303 = vsel %vm9300, %v9302, %v9298
    %v9304 = vmul.f32 1.0, %v9303
    %v9305 = vrcp.pop %v9289
    %v9306 = vmul.f32 %v9289, %v9305
    %v9307 = vsub.f32 1.0, %v9306
    %v9308 = vmul.f32 %v9305, %v9307
    %v9309 = vadd.f32 %v9305, %v9308
    %vm9310 = vweird.f32 %v9289
    %vm9311 = vweird.f32 %v9305
    %vm9312 = vmor %vm9310, %vm9311
    %v9313 = vsel %vm9312, %v9305, %v9309
    %v9314 = vand.u32 2147483647, %v9289
    %vm9315 = vcmp.eq.f32.partialorder %v9314, 8.507059e+37
    %v9316 = vand.u32 %v9289, 2147483648
    %v9317 = vor.u32 1.1754944e-38, %v9316
    %v9318 = vsel %vm9315, %v9317, %v9313
    %v9319 = vmul.f32 1.0, %v9318
    %v9320 = vsub.f32 0.0, %v9276
    %v9321 = vsub.f32 0.0, %v9277
    %v9322 = vmul.f32 %v9320, 1.442695
    %v9323 = vpow.pop %v9322
    %v9324 = vmul.f32 %v9321, 1.442695
    %v9325 = vpow.pop %v9324
    %v9326 = vadd.f32 %v9323, 1.0
    %v9327 = vadd.f32 %v9325, 1.0
    %v9328 = vrcp.pop %v9326
    %v9329 = vmul.f32 %v9326, %v9328
    %v9330 = vsub.f32 1.0, %v9329
    %v9331 = vmul.f32 %v9328, %v9330
    %v9332 = vadd.f32 %v9328, %v9331
    %vm9333 = vweird.f32 %v9326
    %vm9334 = vweird.f32 %v9328
    %vm9335 = vmor %vm9333, %vm9334
    %v9336 = vsel %vm9335, %v9328, %v9332
    %v9337 = vand.u32 2147483647, %v9326
    %vm9338 = vcmp.eq.f32.partialorder %v9337, 8.507059e+37
    %v9339 = vand.u32 %v9326, 2147483648
    %v9340 = vor.u32 1.1754944e-38, %v9339
    %v9341 = vsel %vm9338, %v9340, %v9336
    %v9342 = vmul.f32 1.0, %v9341
    %v9343 = vrcp.pop %v9327
    %v9344 = vmul.f32 %v9327, %v9343
    %v9345 = vsub.f32 1.0, %v9344
    %v9346 = vmul.f32 %v9343, %v9345
    %v9347 = vadd.f32 %v9343, %v9346
    %vm9348 = vweird.f32 %v9327
    %vm9349 = vweird.f32 %v9343
    %vm9350 = vmor %vm9348, %vm9349
    %v9351 = vsel %vm9350, %v9343, %v9347
    %v9352 = vand.u32 2147483647, %v9327
    %vm9353 = vcmp.eq.f32.partialorder %v9352, 8.507059e+37
    %v9354 = vand.u32 %v9327, 2147483648
    %v9355 = vor.u32 1.1754944e-38, %v9354
    %v9356 = vsel %vm9353, %v9355, %v9351
    %v9357 = vmul.f32 1.0, %v9356
    %v9358 = vtanh.pop %v9278
    %v9359 = vtanh.pop %v9279
    %v9360 = vsub.f32 0.0, %v9280
    %v9361 = vsub.f32 0.0, %v9281
    %v9362 = vmul.f32 %v9360, 1.442695
    %v9363 = vpow.pop %v9362
    %v9364 = vmul.f32 %v9361, 1.442695
    %v9365 = vpow.pop %v9364
    %v9366 = vadd.f32 %v9363, 1.0
    %v9367 = vadd.f32 %v9365, 1.0
    %v9368 = vrcp.pop %v9366
    %v9369 = vmul.f32 %v9366, %v9368
    %v9370 = vsub.f32 1.0, %v9369
    %v9371 = vmul.f32 %v9368, %v9370
    %v9372 = vadd.f32 %v9368, %v9371
    %vm9373 = vweird.f32 %v9366
    %vm9374 = vweird.f32 %v9368
    %vm9375 = vmor %vm9373, %vm9374
    %v9376 = vsel %vm9375, %v9368, %v9372
    %v9377 = vand.u32 2147483647, %v9366
    %vm9378 = vcmp.eq.f32.partialorder %v9377, 8.507059e+37
    %v9379 = vand.u32 %v9366, 2147483648
    %v9380 = vor.u32 1.1754944e-38, %v9379
    %v9381 = vsel %vm9378, %v9380, %v9376
    %v9382 = vmul.f32 1.0, %v9381
    %v9383 = vrcp.pop %v9367
    %v9384 = vmul.f32 %v9367, %v9383
    %v9385 = vsub.f32 1.0, %v9384
    %v9386 = vmul.f32 %v9383, %v9385
    %v9387 = vadd.f32 %v9383, %v9386
    %vm9388 = vweird.f32 %v9367
    %vm9389 = vweird.f32 %v9383
    %vm9390 = vmor %vm9388, %vm9389
    %v9391 = vsel %vm9390, %v9383, %v9387
    %v9392 = vand.u32 2147483647, %v9367
    %vm9393 = vcmp.eq.f32.partialorder %v9392, 8.507059e+37
    %v9394 = vand.u32 %v9367, 2147483648
    %v9395 = vor.u32 1.1754944e-38, %v9394
    %v9396 = vsel %vm9393, %v9395, %v9391
    %v9397 = vmul.f32 1.0, %v9396
    %v9399 = vperm.slane %v3845, 0
    %v9400 = vperm.slane %v3845, 1
    %v9403 = vmul.f32 %v9342, %v9399
    %v9404 = vmul.f32 %v9357, %v9400
    %v9405 = vmul.f32 %v9304, %v9358
    %v9406 = vmul.f32 %v9319, %v9359
    %v9407 = vadd.f32 %v9403, %v9405
    %v9408 = vadd.f32 %v9404, %v9406
    %v9409 = vtanh.pop %v9407
    %v9410 = vtanh.pop %v9408
    %v9411 = vmul.f32 %v9382, %v9409
    %v9412 = vmul.f32 %v9397, %v9410
    %v9413 = vld [vmem:[%s21] sm:$0xff]
    %v9414 = vld [vmem:[%s21 + $0x8] sm:$0xff]
    %v9415 = vld [vmem:[%s21 + $0x10] sm:$0xff]
    %v9416 = vld [vmem:[%s21 + $0x18] sm:$0xff]
    %v9417 = vld [vmem:[%s21 + $0x20] sm:$0xff]
    %v9418 = vld [vmem:[%s21 + $0x28] sm:$0xff]
    %v9419 = vld [vmem:[%s21 + $0x30] sm:$0xff]
    %v9420 = vld [vmem:[%s21 + $0x38] sm:$0xff]
    %v9421 = vld [vmem:[%s21 + $0x40] sm:$0xff]
    %v9422 = vld [vmem:[%s21 + $0x48] sm:$0xff]
    %v9423 = vld [vmem:[%s21 + $0x50] sm:$0xff]
    %v9424 = vld [vmem:[%s21 + $0x58] sm:$0xff]
    %v9425 = vld [vmem:[%s21 + $0x60] sm:$0xff]
    %v9426 = vld [vmem:[%s21 + $0x68] sm:$0xff]
    %v9427 = vld [vmem:[%s21 + $0x70] sm:$0xff]
    %v9428 = vld [vmem:[%s21 + $0x78] sm:$0xff]
    %v9429 = vld [vmem:[%s21 + $0x80] sm:$0xff]
    %v9430 = vld [vmem:[%s21 + $0x88] sm:$0xff]
    %v9431 = vld [vmem:[%s21 + $0x90] sm:$0xff]
    %v9432 = vld [vmem:[%s21 + $0x98] sm:$0xff]
    %v9433 = vld [vmem:[%s21 + $0xa0] sm:$0xff]
    %v9434 = vld [vmem:[%s21 + $0xa8] sm:$0xff]
    %v9435 = vld [vmem:[%s21 + $0xb0] sm:$0xff]
    %v9436 = vld [vmem:[%s21 + $0xb8] sm:$0xff]
    %v9437 = vld [vmem:[%s21 + $0xc0] sm:$0xff]
    %v9438 = vld [vmem:[%s21 + $0xc8] sm:$0xff]
    %v9439 = vld [vmem:[%s21 + $0xd0] sm:$0xff]
    %v9440 = vld [vmem:[%s21 + $0xd8] sm:$0xff]
    %v9441 = vld [vmem:[%s21 + $0xe0] sm:$0xff]
    %v9442 = vld [vmem:[%s21 + $0xe8] sm:$0xff]
    %v9443 = vld [vmem:[%s21 + $0xf0] sm:$0xff]
    %v9444 = vld [vmem:[%s21 + $0xf8] sm:$0xff]
    %v9445 = vld [vmem:[#allocation32] sm:$0x1]
    %9446 = vmatpush.msra.mxu0 %v9428
    %9447 = vmatpush.msra.mxu0 %v9427
    %9448 = vmatpush.msra.mxu0 %v9426
    %9449 = vmatpush.msra.mxu0 %v9425
    %9450 = vmatpush.msra.mxu0 %v9424
    %9451 = vmatpush.msra.mxu0 %v9423
    %9452 = vmatpush.msra.mxu0 %v9422
    %9453 = vmatpush.msra.mxu0 %v9421
    %9454 = vmatpush.msra.mxu0 %v9420
    %9455 = vmatpush.msra.mxu0 %v9419
    %9456 = vmatpush.msra.mxu0 %v9418
    %9457 = vmatpush.msra.mxu0 %v9417
    %9458 = vmatpush.msra.mxu0 %v9416
    %9459 = vmatpush.msra.mxu0 %v9415
    %9460 = vmatpush.msra.mxu0 %v9414
    %9461 = vmatpush.msra.mxu0 %v9413
    %9462 = vmatmul.f32.gmra.mxu0 %v9411
    %v9463 = vpop.f32.mrf.mxu0
    %v9464 = vadd.f32 %v9445, %v9463
    %9465 = vdwg.mxu0
    %9466 = vmatpush.msra.mxu0 %v9444
    %9467 = vmatpush.msra.mxu0 %v9443
    %9468 = vmatpush.msra.mxu0 %v9442
    %9469 = vmatpush.msra.mxu0 %v9441
    %9470 = vmatpush.msra.mxu0 %v9440
    %9471 = vmatpush.msra.mxu0 %v9439
    %9472 = vmatpush.msra.mxu0 %v9438
    %9473 = vmatpush.msra.mxu0 %v9437
    %9474 = vmatpush.msra.mxu0 %v9436
    %9475 = vmatpush.msra.mxu0 %v9435
    %9476 = vmatpush.msra.mxu0 %v9434
    %9477 = vmatpush.msra.mxu0 %v9433
    %9478 = vmatpush.msra.mxu0 %v9432
    %9479 = vmatpush.msra.mxu0 %v9431
    %9480 = vmatpush.msra.mxu0 %v9430
    %9481 = vmatpush.msra.mxu0 %v9429
    %9482 = vmatmul.f32.gmra.mxu0 %v9412
    %v9483 = vpop.f32.mrf.mxu0
    %v9484 = vadd.f32 %v9464, %v9483
    %9485 = vdwg.mxu0
    %vm9486 = vcmask 57344
    %9487 = vst.msk [vmem:[#allocation34] sm:$0x1] %vm9486, %v9484
    %v9488 = vld [vmem:[%s23] sm:$0xff]
    %v9489 = vld [vmem:[%s23 + $0x8] sm:$0xff]
    %v9490 = vld [vmem:[%s23 + $0x10] sm:$0xff]
    %v9491 = vld [vmem:[%s23 + $0x18] sm:$0xff]
    %v9492 = vld [vmem:[%s23 + $0x20] sm:$0xff]
    %v9493 = vld [vmem:[%s23 + $0x28] sm:$0xff]
    %v9494 = vld [vmem:[%s23 + $0x30] sm:$0xff]
    %v9495 = vld [vmem:[%s23 + $0x38] sm:$0xff]
    %v9496 = vld [vmem:[%s23 + $0x40] sm:$0xff]
    %v9497 = vld [vmem:[%s23 + $0x48] sm:$0xff]
    %v9498 = vld [vmem:[%s23 + $0x50] sm:$0xff]
    %v9499 = vld [vmem:[%s23 + $0x58] sm:$0xff]
    %v9500 = vld [vmem:[%s23 + $0x60] sm:$0xff]
    %v9501 = vld [vmem:[%s23 + $0x68] sm:$0xff]
    %v9502 = vld [vmem:[%s23 + $0x70] sm:$0xff]
    %v9503 = vld [vmem:[%s23 + $0x78] sm:$0xff]
    %v9504 = vld [vmem:[%s23 + $0x80] sm:$0xff]
    %v9505 = vld [vmem:[%s23 + $0x88] sm:$0xff]
    %v9506 = vld [vmem:[%s23 + $0x90] sm:$0xff]
    %v9507 = vld [vmem:[%s23 + $0x98] sm:$0xff]
    %v9508 = vld [vmem:[%s23 + $0xa0] sm:$0xff]
    %v9509 = vld [vmem:[%s23 + $0xa8] sm:$0xff]
    %v9510 = vld [vmem:[%s23 + $0xb0] sm:$0xff]
    %v9511 = vld [vmem:[%s23 + $0xb8] sm:$0xff]
    %v9512 = vld [vmem:[%s23 + $0xc0] sm:$0xff]
    %v9513 = vld [vmem:[%s23 + $0xc8] sm:$0xff]
    %v9514 = vld [vmem:[%s23 + $0xd0] sm:$0xff]
    %v9515 = vld [vmem:[%s23 + $0xd8] sm:$0xff]
    %v9516 = vld [vmem:[%s23 + $0xe0] sm:$0xff]
    %v9517 = vld [vmem:[%s23 + $0xe8] sm:$0xff]
    %v9518 = vld [vmem:[%s23 + $0xf0] sm:$0xff]
    %v9519 = vld [vmem:[%s23 + $0xf8] sm:$0xff]
    %v9520 = vld [vmem:[#allocation2] sm:$0x1]
    %9521 = vmatpush.msra.mxu0 %v9503
    %9522 = vmatpush.msra.mxu0 %v9502
    %9523 = vmatpush.msra.mxu0 %v9501
    %9524 = vmatpush.msra.mxu0 %v9500
    %9525 = vmatpush.msra.mxu0 %v9499
    %9526 = vmatpush.msra.mxu0 %v9498
    %9527 = vmatpush.msra.mxu0 %v9497
    %9528 = vmatpush.msra.mxu0 %v9496
    %9529 = vmatpush.msra.mxu0 %v9495
    %9530 = vmatpush.msra.mxu0 %v9494
    %9531 = vmatpush.msra.mxu0 %v9493
    %9532 = vmatpush.msra.mxu0 %v9492
    %9533 = vmatpush.msra.mxu0 %v9491
    %9534 = vmatpush.msra.mxu0 %v9490
    %9535 = vmatpush.msra.mxu0 %v9489
    %9536 = vmatpush.msra.mxu0 %v9488
    %9537 = vmatmul.f32.gmra.mxu0 %v9411
    %v9538 = vpop.f32.mrf.mxu0
    %v9539 = vadd.f32 %v9520, %v9538
    %9540 = vdwg.mxu0
    %9541 = vmatpush.msra.mxu0 %v9519
    %9542 = vmatpush.msra.mxu0 %v9518
    %9543 = vmatpush.msra.mxu0 %v9517
    %9544 = vmatpush.msra.mxu0 %v9516
    %9545 = vmatpush.msra.mxu0 %v9515
    %9546 = vmatpush.msra.mxu0 %v9514
    %9547 = vmatpush.msra.mxu0 %v9513
    %9548 = vmatpush.msra.mxu0 %v9512
    %9549 = vmatpush.msra.mxu0 %v9511
    %9550 = vmatpush.msra.mxu0 %v9510
    %9551 = vmatpush.msra.mxu0 %v9509
    %9552 = vmatpush.msra.mxu0 %v9508
    %9553 = vmatpush.msra.mxu0 %v9507
    %9554 = vmatpush.msra.mxu0 %v9506
    %9555 = vmatpush.msra.mxu0 %v9505
    %9556 = vmatpush.msra.mxu0 %v9504
    %9557 = vmatmul.f32.gmra.mxu0 %v9412
    %v9558 = vpop.f32.mrf.mxu0
    %v9559 = vadd.f32 %v9539, %v9558
    %9560 = vdwg.mxu0
    %vm9561 = vcmask 0
    %9562 = vst.msk [vmem:[#allocation33] sm:$0x1] %vm9561, %v9559
    %v9565 = vrot.slane %v9412, 7
    %vm9566 = vcmask 1040384
    %v9567 = vsel %vm9566, %v9411, %v9565
    %v9569 = vlaneseq
    %vm9570 = vcmp.ge.s32.totalorder %v9569, 0
    %vm9571 = vcmp.lt.s32.totalorder %v9569, 256
    %vm9572 = vmand %vm9570, %vm9571
    %9573 = vst.msk [vmem:[#allocation36] sm:$0x3] %vm9572, %v9567
    %v9576 = vrot.slane %v9408, 7
    %v9577 = vsel %vm9566, %v9407, %v9576
    %9579 = vst.msk [vmem:[#allocation37] sm:$0x3] %vm9572, %v9577
    // Predicated region
    $region178: #{tpu_custom_call.1} parent=1 // pred_check
      _
    $region179: #{tpu_custom_call.1} parent=1 // pred_check_branch
      %9581 = sbr.rel (0) target = $region181
    $region180: #{tpu_custom_call.1} parent=1 // pred_region
      %9583 = vsyncadd [#allocation5], 0
      %s9585 = sshll.u32 [#allocation33], 4
      %s9586 = int_to_ptr.vmem [resolvable:$true] %s9585
      %s9587 = sshll.u32 %s25, 4
      %s9588 = int_to_ptr.hbm [resolvable:$true] %s9587
      %9590 = dma.vmem_to_hbm [thread:$0]  %s9586, 16, %s9588, [#allocation5]
    $region181: #{tpu_custom_call.1} parent=1 // pred_fallthru
      _
    // Predicated region
    $region182: #{tpu_custom_call.1} parent=1 // pred_check
      _
    $region183: #{tpu_custom_call.1} parent=1 // pred_check_branch
      %9592 = sbr.rel (0) target = $region185
    $region184: #{tpu_custom_call.1} parent=1 // pred_region
      %9594 = vsyncadd [#allocation35], 0
      %s9596 = sshll.u32 [#allocation34], 4
      %s9597 = int_to_ptr.vmem [resolvable:$true] %s9596
      %s9598 = sshll.u32 %s26, 4
      %s9599 = int_to_ptr.hbm [resolvable:$true] %s9598
      %9601 = dma.vmem_to_hbm [thread:$0]  %s9597, 16, %s9599, [#allocation35]
    $region185: #{tpu_custom_call.1} parent=1 // pred_fallthru
      _
    // Predicated region
    $region186: #{tpu_custom_call.1} parent=1 // pred_check
      _
    $region187: #{tpu_custom_call.1} parent=1 // pred_check_branch
      %9603 = sbr.rel (0) target = $region189
    $region188: #{tpu_custom_call.1} parent=1 // pred_region
      %9605 = vsyncadd [#allocation35], 0
      %s9607 = sshll.u32 [#allocation36], 4
      %s9608 = int_to_ptr.vmem [resolvable:$true] %s9607
      %s9609 = sshll.u32 %s27, 4
      %s9610 = int_to_ptr.hbm [resolvable:$true] %s9609
      %9612 = dma.vmem_to_hbm [thread:$0]  %s9608, 32, %s9610, [#allocation35]
    $region189: #{tpu_custom_call.1} parent=1 // pred_fallthru
      _
    // Predicated region
    $region190: #{tpu_custom_call.1} parent=1 // pred_check
      _
    $region191: #{tpu_custom_call.1} parent=1 // pred_check_branch
      %9614 = sbr.rel (0) target = $region193
    $region192: #{tpu_custom_call.1} parent=1 // pred_region
      %9616 = vsyncadd [#allocation38], 0
      %s9618 = sshll.u32 [#allocation37], 4
      %s9619 = int_to_ptr.vmem [resolvable:$true] %s9618
      %s9620 = sshll.u32 %s28, 4
      %s9621 = int_to_ptr.hbm [resolvable:$true] %s9620
      %9623 = dma.vmem_to_hbm [thread:$0]  %s9619, 32, %s9621, [#allocation38]
    $region193: #{tpu_custom_call.1} parent=1 // pred_fallthru
      _
    // Predicated region
    $region194: #{tpu_custom_call.1} parent=1 // pred_check
      _
    $region195: #{tpu_custom_call.1} parent=1 // pred_check_branch
      %9625 = sbr.rel (0) target = $region197
    $region196: #{tpu_custom_call.1} parent=1 // pred_region
      %9627 = dma.done [#allocation5], 16
    $region197: #{tpu_custom_call.1} parent=1 // pred_fallthru
      _
    // Predicated region
    $region198: #{tpu_custom_call.1} parent=1 // pred_check
      _
    $region199: #{tpu_custom_call.1} parent=1 // pred_check_branch
      %9629 = sbr.rel (0) target = $region201
    $region200: #{tpu_custom_call.1} parent=1 // pred_region
      %9631 = dma.done [#allocation35], 16
    $region201: #{tpu_custom_call.1} parent=1 // pred_fallthru
      _
    // Predicated region
    $region202: #{tpu_custom_call.1} parent=1 // pred_check
      _
    $region203: #{tpu_custom_call.1} parent=1 // pred_check_branch
      %9633 = sbr.rel (0) target = $region205
    $region204: #{tpu_custom_call.1} parent=1 // pred_region
      %9635 = dma.done [#allocation35], 32
    $region205: #{tpu_custom_call.1} parent=1 // pred_fallthru
      _
    // Predicated region
    $region206: #{tpu_custom_call.1} parent=1 // pred_check
      _
    $region207: #{tpu_custom_call.1} parent=1 // pred_check_branch
      %9637 = sbr.rel (0) target = $region209
    $region208: #{tpu_custom_call.1} parent=1 // pred_region
      %9639 = dma.done [#allocation38], 32
    $region209: #{tpu_custom_call.1} parent=1 // pred_fallthru
      _
    %9640 = vsyncpa [#allocation4], 1
    %9641 = vsyncpa [#allocation7], 1
    %9642 = vsyncpa [#allocation10], 1
    %9643 = vsyncpa [#allocation13], 1
    %9644 = vsyncpa [#allocation16], 1
    %9645 = vsyncpa [#allocation19], 1
    %9646 = vsyncpa [#allocation22], 1
    %9647 = vsyncpa [#allocation25], 1
    %9648 = vsyncpa [#allocation28], 1
    %9649 = vsyncpa [#allocation31], 1
    %9650 = vsyncpa [#allocation5], 1
    %9651 = vsyncpa [#allocation35], 1
    %9652 = vsyncpa [#allocation38], 1

</llo_original>
